<compile_context>
chip_gen: v5e
topology: v5e:2x2
jax: 0.10.0
libtpu: 0.0.40
codegen_flags: <defaults>
</compile_context>

<pallas_src>
import functools

import numpy as np
import jax
import jax.numpy as jnp
from jax.experimental import pallas as pl
from jax.experimental.pallas import tpu as pltpu

EPS = 1e-5  # nn.BatchNorm2d default eps


def _tile(dim, cap):
    """Largest tile <= cap dividing dim (dims here are powers of two * small ints)."""
    if dim <= cap:
        return dim
    t = cap
    while dim % t:
        t //= 2
    return t


# ----------------------------------------------------------------------------
# Fused matmul kernel
#   optional x-side prologue : x <- relu(x * scale_k + shift_k)  (fused BN+ReLU)
#   MXU matmul in bf16, f32 accumulation
#   optional epilogue        : + bias_n, activation ("none" | "leaky")
# ----------------------------------------------------------------------------
def _mm_kernel(*refs, x_bn, out_bias, act):
    it = iter(refs)
    x_ref = next(it)
    w_ref = next(it)
    sc_ref = next(it) if x_bn else None
    sh_ref = next(it) if x_bn else None
    b_ref = next(it) if out_bias else None
    o_ref = next(it)
    acc_ref = next(it)

    @pl.when(pl.program_id(2) == 0)
    def _():
        acc_ref[...] = jnp.zeros_like(acc_ref)

    x = x_ref[...]
    if x_bn:  # BatchNorm affine + ReLU of the previous layer, per K column (f32)
        x = jnp.maximum(x.astype(jnp.float32) * sc_ref[...] + sh_ref[...], 0.0)
    acc_ref[...] += jnp.dot(x.astype(jnp.bfloat16), w_ref[...],
                            preferred_element_type=jnp.float32)

    @pl.when(pl.program_id(2) == pl.num_programs(2) - 1)
    def _():
        y = acc_ref[...]
        if out_bias:
            y = y + b_ref[...]
        if act == "leaky":                       # LeakyReLU(0.2)
            y = jnp.where(y >= 0, y, 0.2 * y)
        o_ref[...] = y.astype(o_ref.dtype)


def fused_matmul(x, w, *, x_scale=None, x_shift=None, bias=None, act="none"):
    x_bn = x_scale is not None
    out_bias = bias is not None
    M, K = x.shape
    K2, N = w.shape
    assert K == K2

    tm = _tile(M, 512)
    tn = _tile(N, 512)
    tk = _tile(K, 512)
    # v7x megacore: make sure there are >= 2 parallel blocks when possible.
    if M // tm == 1 and N // tn == 1 and tm >= 16 and tm % 16 == 0:
        tm //= 2
    grid = (M // tm, N // tn, K // tk)

    in_arrays = [x if x_bn else x.astype(jnp.bfloat16), w.astype(jnp.bfloat16)]
    in_specs = [pl.BlockSpec((tm, tk), lambda i, j, k: (i, k)),
                pl.BlockSpec((tk, tn), lambda i, j, k: (k, j))]
    if x_bn:
        in_arrays += [x_scale.reshape(1, K).astype(jnp.float32),
                      x_shift.reshape(1, K).astype(jnp.float32)]
        in_specs += [pl.BlockSpec((1, tk), lambda i, j, k: (0, k)),
                     pl.BlockSpec((1, tk), lambda i, j, k: (0, k))]
    if out_bias:
        in_arrays.append(bias.reshape(1, N).astype(jnp.float32))
        in_specs.append(pl.BlockSpec((1, tn), lambda i, j, k: (0, j)))

    kernel = functools.partial(_mm_kernel, x_bn=x_bn, out_bias=out_bias, act=act)
    return pl.pallas_call(
        kernel,
        out_shape=jax.ShapeDtypeStruct((M, N), jnp.float32),
        grid_spec=pltpu.PrefetchScalarGridSpec(
            num_scalar_prefetch=0,
            grid=grid,
            in_specs=in_specs,
            out_specs=pl.BlockSpec((tm, tn), lambda i, j, k: (i, j)),
            scratch_shapes=[pltpu.VMEM((tm, tn), jnp.float32)],
        ),
        compiler_params=pltpu.CompilerParams(
            dimension_semantics=("parallel", "parallel", "arbitrary")),
    )(*in_arrays)


# ----------------------------------------------------------------------------
# BatchNorm statistics (per-channel sum / sum-of-squares) as one Pallas pass
# ----------------------------------------------------------------------------
def _stats_kernel(x_ref, s_ref, sq_ref):
    @pl.when(pl.program_id(0) == 0)
    def _():
        s_ref[...] = jnp.zeros_like(s_ref)
        sq_ref[...] = jnp.zeros_like(sq_ref)

    x = x_ref[...]
    s_ref[...] += jnp.sum(x, axis=0, keepdims=True)
    sq_ref[...] += jnp.sum(x * x, axis=0, keepdims=True)


def _stats_call(x2d):
    M, C = x2d.shape
    tm = _tile(M, 1024)
    return pl.pallas_call(
        _stats_kernel,
        out_shape=(jax.ShapeDtypeStruct((1, C), jnp.float32),
                   jax.ShapeDtypeStruct((1, C), jnp.float32)),
        grid_spec=pltpu.PrefetchScalarGridSpec(
            num_scalar_prefetch=0,
            grid=(M // tm,),
            in_specs=[pl.BlockSpec((tm, C), lambda i: (i, 0))],
            out_specs=(pl.BlockSpec((1, C), lambda i: (0, 0)),
                       pl.BlockSpec((1, C), lambda i: (0, 0))),
        ),
        compiler_params=pltpu.CompilerParams(dimension_semantics=("arbitrary",)),
    )(x2d)


def channel_sums(x2d):
    """Per-channel sum / sumsq; C<128 channels are folded into 128 lanes so the
    reduction runs lane-dense, then un-folded with tiny glue."""
    M, C = x2d.shape
    g = 1
    if C < 128 and 128 % C == 0 and M % (128 // C) == 0:
        g = 128 // C
    s, sq = _stats_call(x2d.reshape(M // g, g * C))
    if g > 1:
        s = s.reshape(g, C).sum(axis=0, keepdims=True)
        sq = sq.reshape(g, C).sum(axis=0, keepdims=True)
    return s, sq


def bn_scale_shift(x2d, gamma, beta):
    """Training-mode BatchNorm2d (batch mean, biased var) folded into a single
    per-channel scale/shift, consumed by the next matmul's fused prologue."""
    M, C = x2d.shape
    s, sq = channel_sums(x2d)
    mean = s / M
    var = sq / M - mean * mean
    scale = gamma.reshape(1, C) * jax.lax.rsqrt(var + EPS)
    shift = beta.reshape(1, C) - mean * scale
    return scale, shift


# ----------------------------------------------------------------------------
# Elementwise tanh (lane-dense)
# ----------------------------------------------------------------------------
def _tanh_kernel(x_ref, o_ref):
    o_ref[...] = jnp.tanh(x_ref[...])


def tanh_pallas(x2d):
    M, C = x2d.shape
    tm = _tile(M, 1024)
    return pl.pallas_call(
        _tanh_kernel,
        out_shape=jax.ShapeDtypeStruct((M, C), jnp.float32),
        grid_spec=pltpu.PrefetchScalarGridSpec(
            num_scalar_prefetch=0,
            grid=(M // tm,),
            in_specs=[pl.BlockSpec((tm, C), lambda i: (i, 0))],
            out_specs=pl.BlockSpec((tm, C), lambda i: (i, 0)),
        ),
        compiler_params=pltpu.CompilerParams(dimension_semantics=("parallel",)),
    )(x2d)


# ----------------------------------------------------------------------------
# ConvTranspose2d(k=4, s=2, p=1) glue: weight reshape + col2im overlap-add
# ----------------------------------------------------------------------------
def convT_weight_to_mat(W):
    """PyTorch ConvTranspose2d weight (Cin, Cout, 4, 4) -> (Cin, 16*Cout),
    column layout [ky, kx, co]."""
    Cin = W.shape[0]
    return jnp.transpose(W, (0, 2, 3, 1)).reshape(Cin, -1)


def col2im_s2k4(partial6):
    """Overlap-add for ConvTranspose2d k=4, s=2, p=1.
    partial6: (B, H, W, 4, 4, C) -> output (B, 2H, 2W, C).
    Output pixel p = 2*y + ky - 1; each output pixel sums <= 4 taps."""
    # TODO(synk): scatter-add col2im has no clean Pallas form; done as XLA glue.
    B, H, W, _, _, C = partial6.shape
    P = partial6.reshape(B, H, W, 2, 2, 2, 2, C)       # (b, y, x, ay, ry, ax, rx, c)
    q = jnp.zeros((B, H + 1, W + 1, 2, 2, C), partial6.dtype)
    for ay in (0, 1):
        for ax in (0, 1):
            q = q.at[:, ay:ay + H, ax:ax + W].add(P[:, :, :, ay, :, ax, :, :])
    out = q.transpose(0, 1, 3, 2, 4, 5).reshape(B, 2 * H + 2, 2 * W + 2, C)
    return out[:, 1:2 * H + 1, 1:2 * W + 1, :]


# ----------------------------------------------------------------------------
# Generator2 forward
# ----------------------------------------------------------------------------
def generator2_forward(params, noise, labels):
    B = noise.shape[0]

    # label_emb: Linear(n_classes -> nc) + LeakyReLU(0.2)
    emb = fused_matmul(labels, params["emb_w"].T, bias=params["emb_b"], act="leaky")
    gen_input = jnp.concatenate([emb, noise], axis=1)            # (B, nc + nz)

    # layer 1: ConvTranspose2d(nz+nc -> ngf*8, 4, 1, 0) on 1x1 input == matmul
    W1 = params["w1"]
    Cout = W1.shape[1]
    y = fused_matmul(gen_input, convT_weight_to_mat(W1))          # (B, 16*Cout)
    y = y.reshape(B * 16, Cout)                                   # NHWC-flat, 4x4
    H = 4
    scale, shift = bn_scale_shift(y, params["g1"], params["b1"])

    # layers 2-4: fused BN+ReLU prologue -> direct convT matmul -> col2im -> stats
    for idx in (2, 3, 4):
        W = params[f"w{idx}"]
        Cout = W.shape[1]
        partial = fused_matmul(y, convT_weight_to_mat(W),
                               x_scale=scale, x_shift=shift)      # (B*H*H, 16*Cout)
        y = col2im_s2k4(partial.reshape(B, H, H, 4, 4, Cout))     # (B, 2H, 2H, Cout)
        H *= 2
        y = y.reshape(B * H * H, Cout)
        scale, shift = bn_scale_shift(y, params[f"g{idx}"], params[f"b{idx}"])

    # layer 5: fused BN+ReLU prologue -> convT matmul (N padded to 128) -> col2im -> tanh
    W5 = params["w5"]
    w5_mat = convT_weight_to_mat(W5)                              # (ngf, 48)
    n5 = w5_mat.shape[1]
    w5_mat = jnp.pad(w5_mat, ((0, 0), (0, 128 - n5)))             # lane-dense output
    partial = fused_matmul(y, w5_mat, x_scale=scale, x_shift=shift)[:, :n5]
    out = col2im_s2k4(partial.reshape(B, H, H, 4, 4, 3))          # (B, 2H, 2H, 3)
    H *= 2

    total = out.size
    if total % 128 == 0:
        out = tanh_pallas(out.reshape(total // 128, 128)).reshape(B, H, H, 3)
    else:
        out = tanh_pallas(out.reshape(B * H * H, 3)).reshape(B, H, H, 3)
    return out.transpose(0, 3, 1, 2)                              # NCHW (B, 3, 64, 64)


# ----------------------------------------------------------------------------
# Pure-JAX reference (for validation)
# ----------------------------------------------------------------------------
def reference_forward(params, noise, labels):
    emb = labels @ params["emb_w"].T + params["emb_b"]
    emb = jnp.where(emb >= 0, emb, 0.2 * emb)
    x = jnp.concatenate([emb, noise], axis=1)[:, :, None, None]

    def convT(x, W, stride, pad):
        K = W.shape[2]
        Wc = jnp.transpose(W[:, :, ::-1, ::-1], (1, 0, 2, 3))  # OIHW
        return jax.lax.conv_general_dilated(
            x, Wc, window_strides=(1, 1),
            padding=[(K - 1 - pad, K - 1 - pad)] * 2,
            lhs_dilation=(stride, stride),
            dimension_numbers=("NCHW", "OIHW", "NCHW"))

    def bn_relu(x, g, b):
        mean = x.mean(axis=(0, 2, 3), keepdims=True)
        var = x.var(axis=(0, 2, 3), keepdims=True)
        y = (x - mean) / jnp.sqrt(var + EPS)
        y = y * g[None, :, None, None] + b[None, :, None, None]
        return jnp.maximum(y, 0.0)

    x = bn_relu(convT(x, params["w1"], 1, 0), params["g1"], params["b1"])
    x = bn_relu(convT(x, params["w2"], 2, 1), params["g2"], params["b2"])
    x = bn_relu(convT(x, params["w3"], 2, 1), params["g3"], params["b3"])
    x = bn_relu(convT(x, params["w4"], 2, 1), params["g4"], params["b4"])
    return jnp.tanh(convT(x, params["w5"], 2, 1))


# ----------------------------------------------------------------------------
# Deterministic parameter init (shapes from Generator2.__init__)
# ----------------------------------------------------------------------------
def init_params(key, z_dim, num_class):
    ngf, nc, nz = z_dim, 128, z_dim
    ks = jax.random.split(key, 8)
    p = {}
    p["emb_w"] = 0.05 * jax.random.normal(ks[0], (nc, num_class), jnp.float32)
    p["emb_b"] = 0.05 * jax.random.normal(ks[1], (nc,), jnp.float32)
    conv_shapes = [(nz + nc, ngf * 8), (ngf * 8, ngf * 4), (ngf * 4, ngf * 2),
                   (ngf * 2, ngf), (ngf, 3)]
    for i, (cin, cout) in enumerate(conv_shapes, start=1):
        p[f"w{i}"] = 0.05 * jax.random.normal(ks[1 + i], (cin, cout, 4, 4),
                                              jnp.float32)
    for i, (_, cout) in enumerate(conv_shapes[:-1], start=1):
        p[f"g{i}"] = jnp.ones((cout,), jnp.float32)   # BN gamma (default init)
        p[f"b{i}"] = jnp.zeros((cout,), jnp.float32)  # BN beta  (default init)
    return p


if __name__ == "__main__":
    # small shapes consistent with the module: z_dim=32 -> ngf=32, nc=128
    z_dim, num_class, B = 32, 8, 2
    key = jax.random.PRNGKey(0)
    kp, kn, kl = jax.random.split(key, 3)
    params = init_params(kp, z_dim, num_class)
    noise = jax.random.normal(kn, (B, z_dim), jnp.float32)
    labels = jax.random.normal(kl, (B, num_class), jnp.float32)

    fwd = jax.jit(generator2_forward)
    out = jax.block_until_ready(fwd(params, noise, labels))
    assert out.shape == (B, 3, 64, 64), out.shape

    ref = jax.block_until_ready(reference_forward(params, noise, labels))
    # tolerance accounts for bf16 MXU inputs (f32 accumulation)
    np.testing.assert_allclose(np.asarray(out), np.asarray(ref),
                               rtol=1e-1, atol=5e-2)
    print("KERNEL_OK")
</pallas_src>

<mosaic_0001>
module attributes {stable_mosaic.version = 11 : i64} {
  func.func @_mm_kernel(%arg0: i32, %arg1: i32, %arg2: i32, %arg3: memref<2x8xbf16, #tpu.memory_space<vmem>>, %arg4: memref<8x128xbf16, #tpu.memory_space<vmem>>, %arg5: memref<1x128xf32, #tpu.memory_space<vmem>>, %arg6: memref<2x128xf32, #tpu.memory_space<vmem>>, %arg7: memref<2x128xf32, #tpu.memory_space<vmem>>) attributes {dimension_semantics = [#tpu.dimension_semantics<parallel>, #tpu.dimension_semantics<parallel>, #tpu.dimension_semantics<arbitrary>], iteration_bounds = array<i64: 1, 1, 1>, scalar_prefetch = 0 : i64, scratch_operands = 1 : i64, tpu.core_type = #tpu.core_type<tc>, window_params = [{transform_indices = @transform_0, window_bounds = array<i64: 2, 8>}, {transform_indices = @transform_1, window_bounds = array<i64: 8, 128>}, {transform_indices = @transform_2, window_bounds = array<i64: 1, 128>}, {transform_indices = @transform_3, window_bounds = array<i64: 2, 128>}]} {
    %c0_i32 = arith.constant 0 : i32
    %0 = arith.cmpi eq, %arg2, %c0_i32 : i32
    %1 = arith.extui %0 : i1 to i32
    %c0_i32_0 = arith.constant 0 : i32
    %2 = arith.cmpi ne, %1, %c0_i32_0 : i32
    scf.if %2 {
      %cst_10 = arith.constant 0.000000e+00 : f32
      %12 = vector.broadcast %cst_10 : f32 to vector<2x128xf32>
      %c0_11 = arith.constant 0 : index
      %c0_12 = arith.constant 0 : index
      %13 = vector.load %arg7[%c0_11, %c0_12] : memref<2x128xf32, #tpu.memory_space<vmem>>, vector<2x128xf32>
      tpu.vector_store %arg7[%c0_11, %c0_12], %12 {strides = array<i32>} : memref<2x128xf32, #tpu.memory_space<vmem>>, vector<2x128xf32>,
    } else {
    }
    %c0 = arith.constant 0 : index
    %c0_1 = arith.constant 0 : index
    %3 = vector.load %arg3[%c0, %c0_1] : memref<2x8xbf16, #tpu.memory_space<vmem>>, vector<2x8xbf16>
    %c0_2 = arith.constant 0 : index
    %c0_3 = arith.constant 0 : index
    %4 = vector.load %arg7[%c0_2, %c0_3] : memref<2x128xf32, #tpu.memory_space<vmem>>, vector<2x128xf32>
    %c0_4 = arith.constant 0 : index
    %c0_5 = arith.constant 0 : index
    %5 = vector.load %arg4[%c0_4, %c0_5] : memref<8x128xbf16, #tpu.memory_space<vmem>>, vector<8x128xbf16>
    %cst = arith.constant dense<0.000000e+00> : vector<2x128xf32>
    %6 = tpu.matmul %3, %5, %cst {dimension_numbers = #tpu.dot_dimension_numbers<[1], [0], [0], [1], [0, 0, 1, 1], [], []>} : vector<2x8xbf16>, vector<8x128xbf16>, vector<2x128xf32> -> vector<2x128xf32>
    %7 = arith.addf %4, %6 : vector<2x128xf32>
    %c0_6 = arith.constant 0 : index
    %c0_7 = arith.constant 0 : index
    %8 = vector.load %arg7[%c0_6, %c0_7] : memref<2x128xf32, #tpu.memory_space<vmem>>, vector<2x128xf32>
    tpu.vector_store %arg7[%c0_6, %c0_7], %7 {strides = array<i32>} : memref<2x128xf32, #tpu.memory_space<vmem>>, vector<2x128xf32>,
    %c0_i32_8 = arith.constant 0 : i32
    %9 = arith.cmpi eq, %arg2, %c0_i32_8 : i32
    %10 = arith.extui %9 : i1 to i32
    %c0_i32_9 = arith.constant 0 : i32
    %11 = arith.cmpi ne, %10, %c0_i32_9 : i32
    scf.if %11 {
      %c0_10 = arith.constant 0 : index
      %c0_11 = arith.constant 0 : index
      %12 = vector.load %arg7[%c0_10, %c0_11] : memref<2x128xf32, #tpu.memory_space<vmem>>, vector<2x128xf32>
      %c0_12 = arith.constant 0 : index
      %c0_13 = arith.constant 0 : index
      %13 = vector.load %arg5[%c0_12, %c0_13] : memref<1x128xf32, #tpu.memory_space<vmem>>, vector<1x128xf32>
      %14 = vector.broadcast %13 : vector<1x128xf32> to vector<2x128xf32>
      %15 = arith.addf %12, %14 : vector<2x128xf32>
      %cst_14 = arith.constant 0.000000e+00 : f32
      %16 = vector.broadcast %cst_14 : f32 to vector<2x128xf32>
      %17 = arith.cmpf oge, %15, %16 : vector<2x128xf32>
      %cst_15 = arith.constant 2.000000e-01 : f32
      %18 = vector.broadcast %cst_15 : f32 to vector<2x128xf32>
      %19 = arith.mulf %18, %15 : vector<2x128xf32>
      %20 = arith.select %17, %15, %19 : vector<2x128xi1>, vector<2x128xf32>
      %c0_16 = arith.constant 0 : index
      %c0_17 = arith.constant 0 : index
      %21 = vector.load %arg6[%c0_16, %c0_17] : memref<2x128xf32, #tpu.memory_space<vmem>>, vector<2x128xf32>
      tpu.vector_store %arg6[%c0_16, %c0_17], %20 {strides = array<i32>} : memref<2x128xf32, #tpu.memory_space<vmem>>, vector<2x128xf32>,
    } else {
    }
    return
  }
  func.func @transform_0(%arg0: i32, %arg1: i32, %arg2: i32) -> (i32, i32) {
    %c0_i32 = arith.constant 0 : i32
    return %arg0, %arg2 : i32, i32
  }
  func.func @transform_1(%arg0: i32, %arg1: i32, %arg2: i32) -> (i32, i32) {
    %c0_i32 = arith.constant 0 : i32
    return %arg2, %arg1 : i32, i32
  }
  func.func @transform_2(%arg0: i32, %arg1: i32, %arg2: i32) -> (i32, i32) {
    %c0_i32 = arith.constant 0 : i32
    %c0_i32_0 = arith.constant 0 : i32
    return %c0_i32, %arg1 : i32, i32
  }
  func.func @transform_3(%arg0: i32, %arg1: i32, %arg2: i32) -> (i32, i32) {
    %c0_i32 = arith.constant 0 : i32
    return %arg0, %arg1 : i32, i32
  }
}

module attributes {stable_mosaic.version = 11 : i64} {
  func.func @_mm_kernel(%arg0: i32, %arg1: i32, %arg2: i32, %arg3: memref<2x160xbf16, #tpu.memory_space<vmem>>, %arg4: memref<160x512xbf16, #tpu.memory_space<vmem>>, %arg5: memref<2x512xf32, #tpu.memory_space<vmem>>, %arg6: memref<2x512xf32, #tpu.memory_space<vmem>>) attributes {dimension_semantics = [#tpu.dimension_semantics<parallel>, #tpu.dimension_semantics<parallel>, #tpu.dimension_semantics<arbitrary>], iteration_bounds = array<i64: 1, 8, 1>, scalar_prefetch = 0 : i64, scratch_operands = 1 : i64, tpu.core_type = #tpu.core_type<tc>, window_params = [{transform_indices = @transform_0, window_bounds = array<i64: 2, 160>}, {transform_indices = @transform_1, window_bounds = array<i64: 160, 512>}, {transform_indices = @transform_2, window_bounds = array<i64: 2, 512>}]} {
    %c0_i32 = arith.constant 0 : i32
    %0 = arith.cmpi eq, %arg2, %c0_i32 : i32
    %1 = arith.extui %0 : i1 to i32
    %c0_i32_0 = arith.constant 0 : i32
    %2 = arith.cmpi ne, %1, %c0_i32_0 : i32
    scf.if %2 {
      %cst_10 = arith.constant 0.000000e+00 : f32
      %12 = vector.broadcast %cst_10 : f32 to vector<2x512xf32>
      %c0_11 = arith.constant 0 : index
      %c0_12 = arith.constant 0 : index
      %13 = vector.load %arg6[%c0_11, %c0_12] : memref<2x512xf32, #tpu.memory_space<vmem>>, vector<2x512xf32>
      tpu.vector_store %arg6[%c0_11, %c0_12], %12 {strides = array<i32>} : memref<2x512xf32, #tpu.memory_space<vmem>>, vector<2x512xf32>,
    } else {
    }
    %c0 = arith.constant 0 : index
    %c0_1 = arith.constant 0 : index
    %3 = vector.load %arg3[%c0, %c0_1] : memref<2x160xbf16, #tpu.memory_space<vmem>>, vector<2x160xbf16>
    %c0_2 = arith.constant 0 : index
    %c0_3 = arith.constant 0 : index
    %4 = vector.load %arg6[%c0_2, %c0_3] : memref<2x512xf32, #tpu.memory_space<vmem>>, vector<2x512xf32>
    %c0_4 = arith.constant 0 : index
    %c0_5 = arith.constant 0 : index
    %5 = vector.load %arg4[%c0_4, %c0_5] : memref<160x512xbf16, #tpu.memory_space<vmem>>, vector<160x512xbf16>
    %cst = arith.constant dense<0.000000e+00> : vector<2x512xf32>
    %6 = tpu.matmul %3, %5, %cst {dimension_numbers = #tpu.dot_dimension_numbers<[1], [0], [0], [1], [0, 0, 1, 1], [], []>} : vector<2x160xbf16>, vector<160x512xbf16>, vector<2x512xf32> -> vector<2x512xf32>
    %7 = arith.addf %4, %6 : vector<2x512xf32>
    %c0_6 = arith.constant 0 : index
    %c0_7 = arith.constant 0 : index
    %8 = vector.load %arg6[%c0_6, %c0_7] : memref<2x512xf32, #tpu.memory_space<vmem>>, vector<2x512xf32>
    tpu.vector_store %arg6[%c0_6, %c0_7], %7 {strides = array<i32>} : memref<2x512xf32, #tpu.memory_space<vmem>>, vector<2x512xf32>,
    %c0_i32_8 = arith.constant 0 : i32
    %9 = arith.cmpi eq, %arg2, %c0_i32_8 : i32
    %10 = arith.extui %9 : i1 to i32
    %c0_i32_9 = arith.constant 0 : i32
    %11 = arith.cmpi ne, %10, %c0_i32_9 : i32
    scf.if %11 {
      %c0_10 = arith.constant 0 : index
      %c0_11 = arith.constant 0 : index
      %12 = vector.load %arg6[%c0_10, %c0_11] : memref<2x512xf32, #tpu.memory_space<vmem>>, vector<2x512xf32>
      %c0_12 = arith.constant 0 : index
      %c0_13 = arith.constant 0 : index
      %13 = vector.load %arg5[%c0_12, %c0_13] : memref<2x512xf32, #tpu.memory_space<vmem>>, vector<2x512xf32>
      tpu.vector_store %arg5[%c0_12, %c0_13], %12 {strides = array<i32>} : memref<2x512xf32, #tpu.memory_space<vmem>>, vector<2x512xf32>,
    } else {
    }
    return
  }
  func.func @transform_0(%arg0: i32, %arg1: i32, %arg2: i32) -> (i32, i32) {
    %c0_i32 = arith.constant 0 : i32
    return %arg0, %arg2 : i32, i32
  }
  func.func @transform_1(%arg0: i32, %arg1: i32, %arg2: i32) -> (i32, i32) {
    %c0_i32 = arith.constant 0 : i32
    return %arg2, %arg1 : i32, i32
  }
  func.func @transform_2(%arg0: i32, %arg1: i32, %arg2: i32) -> (i32, i32) {
    %c0_i32 = arith.constant 0 : i32
    return %arg0, %arg1 : i32, i32
  }
}

module attributes {stable_mosaic.version = 11 : i64} {
  func.func @_stats_kernel(%arg0: i32, %arg1: memref<32x256xf32, #tpu.memory_space<vmem>>, %arg2: memref<1x256xf32, #tpu.memory_space<vmem>>, %arg3: memref<1x256xf32, #tpu.memory_space<vmem>>) attributes {dimension_semantics = [#tpu.dimension_semantics<arbitrary>], iteration_bounds = array<i64: 1>, scalar_prefetch = 0 : i64, scratch_operands = 0 : i64, tpu.core_type = #tpu.core_type<tc>, window_params = [{transform_indices = @transform_0, window_bounds = array<i64: 32, 256>}, {pipeline_mode = #tpu.pipeline_mode<synchronous>, transform_indices = @transform_1, window_bounds = array<i64: 1, 256>}, {pipeline_mode = #tpu.pipeline_mode<synchronous>, transform_indices = @transform_2, window_bounds = array<i64: 1, 256>}]} {
    %c0_i32 = arith.constant 0 : i32
    %0 = arith.cmpi eq, %arg0, %c0_i32 : i32
    %1 = arith.extui %0 : i1 to i32
    %c0_i32_0 = arith.constant 0 : i32
    %2 = arith.cmpi ne, %1, %c0_i32_0 : i32
    scf.if %2 {
      %cst_11 = arith.constant 0.000000e+00 : f32
      %15 = vector.broadcast %cst_11 : f32 to vector<1x256xf32>
      %c0_12 = arith.constant 0 : index
      %c0_13 = arith.constant 0 : index
      %16 = vector.load %arg2[%c0_12, %c0_13] : memref<1x256xf32, #tpu.memory_space<vmem>>, vector<1x256xf32>
      tpu.vector_store %arg2[%c0_12, %c0_13], %15 {strides = array<i32>} : memref<1x256xf32, #tpu.memory_space<vmem>>, vector<1x256xf32>,
      %cst_14 = arith.constant 0.000000e+00 : f32
      %17 = vector.broadcast %cst_14 : f32 to vector<1x256xf32>
      %c0_15 = arith.constant 0 : index
      %c0_16 = arith.constant 0 : index
      %18 = vector.load %arg3[%c0_15, %c0_16] : memref<1x256xf32, #tpu.memory_space<vmem>>, vector<1x256xf32>
      tpu.vector_store %arg3[%c0_15, %c0_16], %17 {strides = array<i32>} : memref<1x256xf32, #tpu.memory_space<vmem>>, vector<1x256xf32>,
    } else {
    }
    %c0 = arith.constant 0 : index
    %c0_1 = arith.constant 0 : index
    %3 = vector.load %arg1[%c0, %c0_1] : memref<32x256xf32, #tpu.memory_space<vmem>>, vector<32x256xf32>
    %c0_2 = arith.constant 0 : index
    %c0_3 = arith.constant 0 : index
    %4 = vector.load %arg2[%c0_2, %c0_3] : memref<1x256xf32, #tpu.memory_space<vmem>>, vector<1x256xf32>
    %cst = arith.constant dense<0.000000e+00> : vector<256xf32>
    %5 = vector.multi_reduction <add>, %3, %cst [0] : vector<32x256xf32> to vector<256xf32>
    %6 = vector.shape_cast %5 : vector<256xf32> to vector<1x256xf32>
    %7 = arith.addf %4, %6 : vector<1x256xf32>
    %c0_4 = arith.constant 0 : index
    %c0_5 = arith.constant 0 : index
    %8 = vector.load %arg2[%c0_4, %c0_5] : memref<1x256xf32, #tpu.memory_space<vmem>>, vector<1x256xf32>
    tpu.vector_store %arg2[%c0_4, %c0_5], %7 {strides = array<i32>} : memref<1x256xf32, #tpu.memory_space<vmem>>, vector<1x256xf32>,
    %c0_6 = arith.constant 0 : index
    %c0_7 = arith.constant 0 : index
    %9 = vector.load %arg3[%c0_6, %c0_7] : memref<1x256xf32, #tpu.memory_space<vmem>>, vector<1x256xf32>
    %10 = arith.mulf %3, %3 : vector<32x256xf32>
    %cst_8 = arith.constant dense<0.000000e+00> : vector<256xf32>
    %11 = vector.multi_reduction <add>, %10, %cst_8 [0] : vector<32x256xf32> to vector<256xf32>
    %12 = vector.shape_cast %11 : vector<256xf32> to vector<1x256xf32>
    %13 = arith.addf %9, %12 : vector<1x256xf32>
    %c0_9 = arith.constant 0 : index
    %c0_10 = arith.constant 0 : index
    %14 = vector.load %arg3[%c0_9, %c0_10] : memref<1x256xf32, #tpu.memory_space<vmem>>, vector<1x256xf32>
    tpu.vector_store %arg3[%c0_9, %c0_10], %13 {strides = array<i32>} : memref<1x256xf32, #tpu.memory_space<vmem>>, vector<1x256xf32>,
    return
  }
  func.func @transform_0(%arg0: i32) -> (i32, i32) {
    %c0_i32 = arith.constant 0 : i32
    %c0_i32_0 = arith.constant 0 : i32
    return %arg0, %c0_i32 : i32, i32
  }
  func.func @transform_1(%arg0: i32) -> (i32, i32) {
    %c0_i32 = arith.constant 0 : i32
    %c0_i32_0 = arith.constant 0 : i32
    %c0_i32_1 = arith.constant 0 : i32
    return %c0_i32, %c0_i32_0 : i32, i32
  }
  func.func @transform_2(%arg0: i32) -> (i32, i32) {
    %c0_i32 = arith.constant 0 : i32
    %c0_i32_0 = arith.constant 0 : i32
    %c0_i32_1 = arith.constant 0 : i32
    return %c0_i32, %c0_i32_0 : i32, i32
  }
}

module attributes {stable_mosaic.version = 11 : i64} {
  func.func @_mm_kernel(%arg0: i32, %arg1: i32, %arg2: i32, %arg3: memref<32x256xf32, #tpu.memory_space<vmem>>, %arg4: memref<256x512xbf16, #tpu.memory_space<vmem>>, %arg5: memref<1x256xf32, #tpu.memory_space<vmem>>, %arg6: memref<1x256xf32, #tpu.memory_space<vmem>>, %arg7: memref<32x512xf32, #tpu.memory_space<vmem>>, %arg8: memref<32x512xf32, #tpu.memory_space<vmem>>) attributes {dimension_semantics = [#tpu.dimension_semantics<parallel>, #tpu.dimension_semantics<parallel>, #tpu.dimension_semantics<arbitrary>], iteration_bounds = array<i64: 1, 4, 1>, scalar_prefetch = 0 : i64, scratch_operands = 1 : i64, tpu.core_type = #tpu.core_type<tc>, window_params = [{transform_indices = @transform_0, window_bounds = array<i64: 32, 256>}, {transform_indices = @transform_1, window_bounds = array<i64: 256, 512>}, {transform_indices = @transform_2, window_bounds = array<i64: 1, 256>}, {transform_indices = @transform_3, window_bounds = array<i64: 1, 256>}, {transform_indices = @transform_4, window_bounds = array<i64: 32, 512>}]} {
    %c0_i32 = arith.constant 0 : i32
    %0 = arith.cmpi eq, %arg2, %c0_i32 : i32
    %1 = arith.extui %0 : i1 to i32
    %c0_i32_0 = arith.constant 0 : i32
    %2 = arith.cmpi ne, %1, %c0_i32_0 : i32
    scf.if %2 {
      %cst_15 = arith.constant 0.000000e+00 : f32
      %21 = vector.broadcast %cst_15 : f32 to vector<32x512xf32>
      %c0_16 = arith.constant 0 : index
      %c0_17 = arith.constant 0 : index
      %22 = vector.load %arg8[%c0_16, %c0_17] : memref<32x512xf32, #tpu.memory_space<vmem>>, vector<32x512xf32>
      tpu.vector_store %arg8[%c0_16, %c0_17], %21 {strides = array<i32>} : memref<32x512xf32, #tpu.memory_space<vmem>>, vector<32x512xf32>,
    } else {
    }
    %c0 = arith.constant 0 : index
    %c0_1 = arith.constant 0 : index
    %3 = vector.load %arg3[%c0, %c0_1] : memref<32x256xf32, #tpu.memory_space<vmem>>, vector<32x256xf32>
    %c0_2 = arith.constant 0 : index
    %c0_3 = arith.constant 0 : index
    %4 = vector.load %arg5[%c0_2, %c0_3] : memref<1x256xf32, #tpu.memory_space<vmem>>, vector<1x256xf32>
    %5 = vector.broadcast %4 : vector<1x256xf32> to vector<32x256xf32>
    %6 = arith.mulf %3, %5 : vector<32x256xf32>
    %c0_4 = arith.constant 0 : index
    %c0_5 = arith.constant 0 : index
    %7 = vector.load %arg6[%c0_4, %c0_5] : memref<1x256xf32, #tpu.memory_space<vmem>>, vector<1x256xf32>
    %8 = vector.broadcast %7 : vector<1x256xf32> to vector<32x256xf32>
    %9 = arith.addf %6, %8 : vector<32x256xf32>
    %cst = arith.constant 0.000000e+00 : f32
    %10 = vector.broadcast %cst : f32 to vector<32x256xf32>
    %11 = arith.maximumf %9, %10 : vector<32x256xf32>
    %c0_6 = arith.constant 0 : index
    %c0_7 = arith.constant 0 : index
    %12 = vector.load %arg8[%c0_6, %c0_7] : memref<32x512xf32, #tpu.memory_space<vmem>>, vector<32x512xf32>
    %13 = arith.truncf %11 : vector<32x256xf32> to vector<32x256xbf16>
    %c0_8 = arith.constant 0 : index
    %c0_9 = arith.constant 0 : index
    %14 = vector.load %arg4[%c0_8, %c0_9] : memref<256x512xbf16, #tpu.memory_space<vmem>>, vector<256x512xbf16>
    %cst_10 = arith.constant dense<0.000000e+00> : vector<32x512xf32>
    %15 = tpu.matmul %13, %14, %cst_10 {dimension_numbers = #tpu.dot_dimension_numbers<[1], [0], [0], [1], [0, 0, 1, 1], [], []>} : vector<32x256xbf16>, vector<256x512xbf16>, vector<32x512xf32> -> vector<32x512xf32>
    %16 = arith.addf %12, %15 : vector<32x512xf32>
    %c0_11 = arith.constant 0 : index
    %c0_12 = arith.constant 0 : index
    %17 = vector.load %arg8[%c0_11, %c0_12] : memref<32x512xf32, #tpu.memory_space<vmem>>, vector<32x512xf32>
    tpu.vector_store %arg8[%c0_11, %c0_12], %16 {strides = array<i32>} : memref<32x512xf32, #tpu.memory_space<vmem>>, vector<32x512xf32>,
    %c0_i32_13 = arith.constant 0 : i32
    %18 = arith.cmpi eq, %arg2, %c0_i32_13 : i32
    %19 = arith.extui %18 : i1 to i32
    %c0_i32_14 = arith.constant 0 : i32
    %20 = arith.cmpi ne, %19, %c0_i32_14 : i32
    scf.if %20 {
      %c0_15 = arith.constant 0 : index
      %c0_16 = arith.constant 0 : index
      %21 = vector.load %arg8[%c0_15, %c0_16] : memref<32x512xf32, #tpu.memory_space<vmem>>, vector<32x512xf32>
      %c0_17 = arith.constant 0 : index
      %c0_18 = arith.constant 0 : index
      %22 = vector.load %arg7[%c0_17, %c0_18] : memref<32x512xf32, #tpu.memory_space<vmem>>, vector<32x512xf32>
      tpu.vector_store %arg7[%c0_17, %c0_18], %21 {strides = array<i32>} : memref<32x512xf32, #tpu.memory_space<vmem>>, vector<32x512xf32>,
    } else {
    }
    return
  }
  func.func @transform_0(%arg0: i32, %arg1: i32, %arg2: i32) -> (i32, i32) {
    %c0_i32 = arith.constant 0 : i32
    return %arg0, %arg2 : i32, i32
  }
  func.func @transform_1(%arg0: i32, %arg1: i32, %arg2: i32) -> (i32, i32) {
    %c0_i32 = arith.constant 0 : i32
    return %arg2, %arg1 : i32, i32
  }
  func.func @transform_2(%arg0: i32, %arg1: i32, %arg2: i32) -> (i32, i32) {
    %c0_i32 = arith.constant 0 : i32
    %c0_i32_0 = arith.constant 0 : i32
    return %c0_i32, %arg2 : i32, i32
  }
  func.func @transform_3(%arg0: i32, %arg1: i32, %arg2: i32) -> (i32, i32) {
    %c0_i32 = arith.constant 0 : i32
    %c0_i32_0 = arith.constant 0 : i32
    return %c0_i32, %arg2 : i32, i32
  }
  func.func @transform_4(%arg0: i32, %arg1: i32, %arg2: i32) -> (i32, i32) {
    %c0_i32 = arith.constant 0 : i32
    return %arg0, %arg1 : i32, i32
  }
}

module attributes {stable_mosaic.version = 11 : i64} {
  func.func @_stats_kernel(%arg0: i32, %arg1: memref<128x128xf32, #tpu.memory_space<vmem>>, %arg2: memref<1x128xf32, #tpu.memory_space<vmem>>, %arg3: memref<1x128xf32, #tpu.memory_space<vmem>>) attributes {dimension_semantics = [#tpu.dimension_semantics<arbitrary>], iteration_bounds = array<i64: 1>, scalar_prefetch = 0 : i64, scratch_operands = 0 : i64, tpu.core_type = #tpu.core_type<tc>, window_params = [{transform_indices = @transform_0, window_bounds = array<i64: 128, 128>}, {pipeline_mode = #tpu.pipeline_mode<synchronous>, transform_indices = @transform_1, window_bounds = array<i64: 1, 128>}, {pipeline_mode = #tpu.pipeline_mode<synchronous>, transform_indices = @transform_2, window_bounds = array<i64: 1, 128>}]} {
    %c0_i32 = arith.constant 0 : i32
    %0 = arith.cmpi eq, %arg0, %c0_i32 : i32
    %1 = arith.extui %0 : i1 to i32
    %c0_i32_0 = arith.constant 0 : i32
    %2 = arith.cmpi ne, %1, %c0_i32_0 : i32
    scf.if %2 {
      %cst_11 = arith.constant 0.000000e+00 : f32
      %15 = vector.broadcast %cst_11 : f32 to vector<1x128xf32>
      %c0_12 = arith.constant 0 : index
      %c0_13 = arith.constant 0 : index
      %16 = vector.load %arg2[%c0_12, %c0_13] : memref<1x128xf32, #tpu.memory_space<vmem>>, vector<1x128xf32>
      tpu.vector_store %arg2[%c0_12, %c0_13], %15 {strides = array<i32>} : memref<1x128xf32, #tpu.memory_space<vmem>>, vector<1x128xf32>,
      %cst_14 = arith.constant 0.000000e+00 : f32
      %17 = vector.broadcast %cst_14 : f32 to vector<1x128xf32>
      %c0_15 = arith.constant 0 : index
      %c0_16 = arith.constant 0 : index
      %18 = vector.load %arg3[%c0_15, %c0_16] : memref<1x128xf32, #tpu.memory_space<vmem>>, vector<1x128xf32>
      tpu.vector_store %arg3[%c0_15, %c0_16], %17 {strides = array<i32>} : memref<1x128xf32, #tpu.memory_space<vmem>>, vector<1x128xf32>,
    } else {
    }
    %c0 = arith.constant 0 : index
    %c0_1 = arith.constant 0 : index
    %3 = vector.load %arg1[%c0, %c0_1] : memref<128x128xf32, #tpu.memory_space<vmem>>, vector<128x128xf32>
    %c0_2 = arith.constant 0 : index
    %c0_3 = arith.constant 0 : index
    %4 = vector.load %arg2[%c0_2, %c0_3] : memref<1x128xf32, #tpu.memory_space<vmem>>, vector<1x128xf32>
    %cst = arith.constant dense<0.000000e+00> : vector<128xf32>
    %5 = vector.multi_reduction <add>, %3, %cst [0] : vector<128x128xf32> to vector<128xf32>
    %6 = vector.shape_cast %5 : vector<128xf32> to vector<1x128xf32>
    %7 = arith.addf %4, %6 : vector<1x128xf32>
    %c0_4 = arith.constant 0 : index
    %c0_5 = arith.constant 0 : index
    %8 = vector.load %arg2[%c0_4, %c0_5] : memref<1x128xf32, #tpu.memory_space<vmem>>, vector<1x128xf32>
    tpu.vector_store %arg2[%c0_4, %c0_5], %7 {strides = array<i32>} : memref<1x128xf32, #tpu.memory_space<vmem>>, vector<1x128xf32>,
    %c0_6 = arith.constant 0 : index
    %c0_7 = arith.constant 0 : index
    %9 = vector.load %arg3[%c0_6, %c0_7] : memref<1x128xf32, #tpu.memory_space<vmem>>, vector<1x128xf32>
    %10 = arith.mulf %3, %3 : vector<128x128xf32>
    %cst_8 = arith.constant dense<0.000000e+00> : vector<128xf32>
    %11 = vector.multi_reduction <add>, %10, %cst_8 [0] : vector<128x128xf32> to vector<128xf32>
    %12 = vector.shape_cast %11 : vector<128xf32> to vector<1x128xf32>
    %13 = arith.addf %9, %12 : vector<1x128xf32>
    %c0_9 = arith.constant 0 : index
    %c0_10 = arith.constant 0 : index
    %14 = vector.load %arg3[%c0_9, %c0_10] : memref<1x128xf32, #tpu.memory_space<vmem>>, vector<1x128xf32>
    tpu.vector_store %arg3[%c0_9, %c0_10], %13 {strides = array<i32>} : memref<1x128xf32, #tpu.memory_space<vmem>>, vector<1x128xf32>,
    return
  }
  func.func @transform_0(%arg0: i32) -> (i32, i32) {
    %c0_i32 = arith.constant 0 : i32
    %c0_i32_0 = arith.constant 0 : i32
    return %arg0, %c0_i32 : i32, i32
  }
  func.func @transform_1(%arg0: i32) -> (i32, i32) {
    %c0_i32 = arith.constant 0 : i32
    %c0_i32_0 = arith.constant 0 : i32
    %c0_i32_1 = arith.constant 0 : i32
    return %c0_i32, %c0_i32_0 : i32, i32
  }
  func.func @transform_2(%arg0: i32) -> (i32, i32) {
    %c0_i32 = arith.constant 0 : i32
    %c0_i32_0 = arith.constant 0 : i32
    %c0_i32_1 = arith.constant 0 : i32
    return %c0_i32, %c0_i32_0 : i32, i32
  }
}

module attributes {stable_mosaic.version = 11 : i64} {
  func.func @_mm_kernel(%arg0: i32, %arg1: i32, %arg2: i32, %arg3: memref<128x128xf32, #tpu.memory_space<vmem>>, %arg4: memref<128x512xbf16, #tpu.memory_space<vmem>>, %arg5: memref<1x128xf32, #tpu.memory_space<vmem>>, %arg6: memref<1x128xf32, #tpu.memory_space<vmem>>, %arg7: memref<128x512xf32, #tpu.memory_space<vmem>>, %arg8: memref<128x512xf32, #tpu.memory_space<vmem>>) attributes {dimension_semantics = [#tpu.dimension_semantics<parallel>, #tpu.dimension_semantics<parallel>, #tpu.dimension_semantics<arbitrary>], iteration_bounds = array<i64: 1, 2, 1>, scalar_prefetch = 0 : i64, scratch_operands = 1 : i64, tpu.core_type = #tpu.core_type<tc>, window_params = [{transform_indices = @transform_0, window_bounds = array<i64: 128, 128>}, {transform_indices = @transform_1, window_bounds = array<i64: 128, 512>}, {transform_indices = @transform_2, window_bounds = array<i64: 1, 128>}, {transform_indices = @transform_3, window_bounds = array<i64: 1, 128>}, {transform_indices = @transform_4, window_bounds = array<i64: 128, 512>}]} {
    %c0_i32 = arith.constant 0 : i32
    %0 = arith.cmpi eq, %arg2, %c0_i32 : i32
    %1 = arith.extui %0 : i1 to i32
    %c0_i32_0 = arith.constant 0 : i32
    %2 = arith.cmpi ne, %1, %c0_i32_0 : i32
    scf.if %2 {
      %cst_15 = arith.constant 0.000000e+00 : f32
      %21 = vector.broadcast %cst_15 : f32 to vector<128x512xf32>
      %c0_16 = arith.constant 0 : index
      %c0_17 = arith.constant 0 : index
      %22 = vector.load %arg8[%c0_16, %c0_17] : memref<128x512xf32, #tpu.memory_space<vmem>>, vector<128x512xf32>
      tpu.vector_store %arg8[%c0_16, %c0_17], %21 {strides = array<i32>} : memref<128x512xf32, #tpu.memory_space<vmem>>, vector<128x512xf32>,
    } else {
    }
    %c0 = arith.constant 0 : index
    %c0_1 = arith.constant 0 : index
    %3 = vector.load %arg3[%c0, %c0_1] : memref<128x128xf32, #tpu.memory_space<vmem>>, vector<128x128xf32>
    %c0_2 = arith.constant 0 : index
    %c0_3 = arith.constant 0 : index
    %4 = vector.load %arg5[%c0_2, %c0_3] : memref<1x128xf32, #tpu.memory_space<vmem>>, vector<1x128xf32>
    %5 = vector.broadcast %4 : vector<1x128xf32> to vector<128x128xf32>
    %6 = arith.mulf %3, %5 : vector<128x128xf32>
    %c0_4 = arith.constant 0 : index
    %c0_5 = arith.constant 0 : index
    %7 = vector.load %arg6[%c0_4, %c0_5] : memref<1x128xf32, #tpu.memory_space<vmem>>, vector<1x128xf32>
    %8 = vector.broadcast %7 : vector<1x128xf32> to vector<128x128xf32>
    %9 = arith.addf %6, %8 : vector<128x128xf32>
    %cst = arith.constant 0.000000e+00 : f32
    %10 = vector.broadcast %cst : f32 to vector<128x128xf32>
    %11 = arith.maximumf %9, %10 : vector<128x128xf32>
    %c0_6 = arith.constant 0 : index
    %c0_7 = arith.constant 0 : index
    %12 = vector.load %arg8[%c0_6, %c0_7] : memref<128x512xf32, #tpu.memory_space<vmem>>, vector<128x512xf32>
    %13 = arith.truncf %11 : vector<128x128xf32> to vector<128x128xbf16>
    %c0_8 = arith.constant 0 : index
    %c0_9 = arith.constant 0 : index
    %14 = vector.load %arg4[%c0_8, %c0_9] : memref<128x512xbf16, #tpu.memory_space<vmem>>, vector<128x512xbf16>
    %cst_10 = arith.constant dense<0.000000e+00> : vector<128x512xf32>
    %15 = tpu.matmul %13, %14, %cst_10 {dimension_numbers = #tpu.dot_dimension_numbers<[1], [0], [0], [1], [0, 0, 1, 1], [], []>} : vector<128x128xbf16>, vector<128x512xbf16>, vector<128x512xf32> -> vector<128x512xf32>
    %16 = arith.addf %12, %15 : vector<128x512xf32>
    %c0_11 = arith.constant 0 : index
    %c0_12 = arith.constant 0 : index
    %17 = vector.load %arg8[%c0_11, %c0_12] : memref<128x512xf32, #tpu.memory_space<vmem>>, vector<128x512xf32>
    tpu.vector_store %arg8[%c0_11, %c0_12], %16 {strides = array<i32>} : memref<128x512xf32, #tpu.memory_space<vmem>>, vector<128x512xf32>,
    %c0_i32_13 = arith.constant 0 : i32
    %18 = arith.cmpi eq, %arg2, %c0_i32_13 : i32
    %19 = arith.extui %18 : i1 to i32
    %c0_i32_14 = arith.constant 0 : i32
    %20 = arith.cmpi ne, %19, %c0_i32_14 : i32
    scf.if %20 {
      %c0_15 = arith.constant 0 : index
      %c0_16 = arith.constant 0 : index
      %21 = vector.load %arg8[%c0_15, %c0_16] : memref<128x512xf32, #tpu.memory_space<vmem>>, vector<128x512xf32>
      %c0_17 = arith.constant 0 : index
      %c0_18 = arith.constant 0 : index
      %22 = vector.load %arg7[%c0_17, %c0_18] : memref<128x512xf32, #tpu.memory_space<vmem>>, vector<128x512xf32>
      tpu.vector_store %arg7[%c0_17, %c0_18], %21 {strides = array<i32>} : memref<128x512xf32, #tpu.memory_space<vmem>>, vector<128x512xf32>,
    } else {
    }
    return
  }
  func.func @transform_0(%arg0: i32, %arg1: i32, %arg2: i32) -> (i32, i32) {
    %c0_i32 = arith.constant 0 : i32
    return %arg0, %arg2 : i32, i32
  }
  func.func @transform_1(%arg0: i32, %arg1: i32, %arg2: i32) -> (i32, i32) {
    %c0_i32 = arith.constant 0 : i32
    return %arg2, %arg1 : i32, i32
  }
  func.func @transform_2(%arg0: i32, %arg1: i32, %arg2: i32) -> (i32, i32) {
    %c0_i32 = arith.constant 0 : i32
    %c0_i32_0 = arith.constant 0 : i32
    return %c0_i32, %arg2 : i32, i32
  }
  func.func @transform_3(%arg0: i32, %arg1: i32, %arg2: i32) -> (i32, i32) {
    %c0_i32 = arith.constant 0 : i32
    %c0_i32_0 = arith.constant 0 : i32
    return %c0_i32, %arg2 : i32, i32
  }
  func.func @transform_4(%arg0: i32, %arg1: i32, %arg2: i32) -> (i32, i32) {
    %c0_i32 = arith.constant 0 : i32
    return %arg0, %arg1 : i32, i32
  }
}

module attributes {stable_mosaic.version = 11 : i64} {
  func.func @_stats_kernel(%arg0: i32, %arg1: memref<256x128xf32, #tpu.memory_space<vmem>>, %arg2: memref<1x128xf32, #tpu.memory_space<vmem>>, %arg3: memref<1x128xf32, #tpu.memory_space<vmem>>) attributes {dimension_semantics = [#tpu.dimension_semantics<arbitrary>], iteration_bounds = array<i64: 1>, scalar_prefetch = 0 : i64, scratch_operands = 0 : i64, tpu.core_type = #tpu.core_type<tc>, window_params = [{transform_indices = @transform_0, window_bounds = array<i64: 256, 128>}, {pipeline_mode = #tpu.pipeline_mode<synchronous>, transform_indices = @transform_1, window_bounds = array<i64: 1, 128>}, {pipeline_mode = #tpu.pipeline_mode<synchronous>, transform_indices = @transform_2, window_bounds = array<i64: 1, 128>}]} {
    %c0_i32 = arith.constant 0 : i32
    %0 = arith.cmpi eq, %arg0, %c0_i32 : i32
    %1 = arith.extui %0 : i1 to i32
    %c0_i32_0 = arith.constant 0 : i32
    %2 = arith.cmpi ne, %1, %c0_i32_0 : i32
    scf.if %2 {
      %cst_11 = arith.constant 0.000000e+00 : f32
      %15 = vector.broadcast %cst_11 : f32 to vector<1x128xf32>
      %c0_12 = arith.constant 0 : index
      %c0_13 = arith.constant 0 : index
      %16 = vector.load %arg2[%c0_12, %c0_13] : memref<1x128xf32, #tpu.memory_space<vmem>>, vector<1x128xf32>
      tpu.vector_store %arg2[%c0_12, %c0_13], %15 {strides = array<i32>} : memref<1x128xf32, #tpu.memory_space<vmem>>, vector<1x128xf32>,
      %cst_14 = arith.constant 0.000000e+00 : f32
      %17 = vector.broadcast %cst_14 : f32 to vector<1x128xf32>
      %c0_15 = arith.constant 0 : index
      %c0_16 = arith.constant 0 : index
      %18 = vector.load %arg3[%c0_15, %c0_16] : memref<1x128xf32, #tpu.memory_space<vmem>>, vector<1x128xf32>
      tpu.vector_store %arg3[%c0_15, %c0_16], %17 {strides = array<i32>} : memref<1x128xf32, #tpu.memory_space<vmem>>, vector<1x128xf32>,
    } else {
    }
    %c0 = arith.constant 0 : index
    %c0_1 = arith.constant 0 : index
    %3 = vector.load %arg1[%c0, %c0_1] : memref<256x128xf32, #tpu.memory_space<vmem>>, vector<256x128xf32>
    %c0_2 = arith.constant 0 : index
    %c0_3 = arith.constant 0 : index
    %4 = vector.load %arg2[%c0_2, %c0_3] : memref<1x128xf32, #tpu.memory_space<vmem>>, vector<1x128xf32>
    %cst = arith.constant dense<0.000000e+00> : vector<128xf32>
    %5 = vector.multi_reduction <add>, %3, %cst [0] : vector<256x128xf32> to vector<128xf32>
    %6 = vector.shape_cast %5 : vector<128xf32> to vector<1x128xf32>
    %7 = arith.addf %4, %6 : vector<1x128xf32>
    %c0_4 = arith.constant 0 : index
    %c0_5 = arith.constant 0 : index
    %8 = vector.load %arg2[%c0_4, %c0_5] : memref<1x128xf32, #tpu.memory_space<vmem>>, vector<1x128xf32>
    tpu.vector_store %arg2[%c0_4, %c0_5], %7 {strides = array<i32>} : memref<1x128xf32, #tpu.memory_space<vmem>>, vector<1x128xf32>,
    %c0_6 = arith.constant 0 : index
    %c0_7 = arith.constant 0 : index
    %9 = vector.load %arg3[%c0_6, %c0_7] : memref<1x128xf32, #tpu.memory_space<vmem>>, vector<1x128xf32>
    %10 = arith.mulf %3, %3 : vector<256x128xf32>
    %cst_8 = arith.constant dense<0.000000e+00> : vector<128xf32>
    %11 = vector.multi_reduction <add>, %10, %cst_8 [0] : vector<256x128xf32> to vector<128xf32>
    %12 = vector.shape_cast %11 : vector<128xf32> to vector<1x128xf32>
    %13 = arith.addf %9, %12 : vector<1x128xf32>
    %c0_9 = arith.constant 0 : index
    %c0_10 = arith.constant 0 : index
    %14 = vector.load %arg3[%c0_9, %c0_10] : memref<1x128xf32, #tpu.memory_space<vmem>>, vector<1x128xf32>
    tpu.vector_store %arg3[%c0_9, %c0_10], %13 {strides = array<i32>} : memref<1x128xf32, #tpu.memory_space<vmem>>, vector<1x128xf32>,
    return
  }
  func.func @transform_0(%arg0: i32) -> (i32, i32) {
    %c0_i32 = arith.constant 0 : i32
    %c0_i32_0 = arith.constant 0 : i32
    return %arg0, %c0_i32 : i32, i32
  }
  func.func @transform_1(%arg0: i32) -> (i32, i32) {
    %c0_i32 = arith.constant 0 : i32
    %c0_i32_0 = arith.constant 0 : i32
    %c0_i32_1 = arith.constant 0 : i32
    return %c0_i32, %c0_i32_0 : i32, i32
  }
  func.func @transform_2(%arg0: i32) -> (i32, i32) {
    %c0_i32 = arith.constant 0 : i32
    %c0_i32_0 = arith.constant 0 : i32
    %c0_i32_1 = arith.constant 0 : i32
    return %c0_i32, %c0_i32_0 : i32, i32
  }
}

module attributes {stable_mosaic.version = 11 : i64} {
  func.func @_mm_kernel(%arg0: i32, %arg1: i32, %arg2: i32, %arg3: memref<256x64xf32, #tpu.memory_space<vmem>>, %arg4: memref<64x512xbf16, #tpu.memory_space<vmem>>, %arg5: memref<1x64xf32, #tpu.memory_space<vmem>>, %arg6: memref<1x64xf32, #tpu.memory_space<vmem>>, %arg7: memref<256x512xf32, #tpu.memory_space<vmem>>, %arg8: memref<256x512xf32, #tpu.memory_space<vmem>>) attributes {dimension_semantics = [#tpu.dimension_semantics<parallel>, #tpu.dimension_semantics<parallel>, #tpu.dimension_semantics<arbitrary>], iteration_bounds = array<i64: 2, 1, 1>, scalar_prefetch = 0 : i64, scratch_operands = 1 : i64, tpu.core_type = #tpu.core_type<tc>, window_params = [{transform_indices = @transform_0, window_bounds = array<i64: 256, 64>}, {transform_indices = @transform_1, window_bounds = array<i64: 64, 512>}, {transform_indices = @transform_2, window_bounds = array<i64: 1, 64>}, {transform_indices = @transform_3, window_bounds = array<i64: 1, 64>}, {transform_indices = @transform_4, window_bounds = array<i64: 256, 512>}]} {
    %c0_i32 = arith.constant 0 : i32
    %0 = arith.cmpi eq, %arg2, %c0_i32 : i32
    %1 = arith.extui %0 : i1 to i32
    %c0_i32_0 = arith.constant 0 : i32
    %2 = arith.cmpi ne, %1, %c0_i32_0 : i32
    scf.if %2 {
      %cst_15 = arith.constant 0.000000e+00 : f32
      %21 = vector.broadcast %cst_15 : f32 to vector<256x512xf32>
      %c0_16 = arith.constant 0 : index
      %c0_17 = arith.constant 0 : index
      %22 = vector.load %arg8[%c0_16, %c0_17] : memref<256x512xf32, #tpu.memory_space<vmem>>, vector<256x512xf32>
      tpu.vector_store %arg8[%c0_16, %c0_17], %21 {strides = array<i32>} : memref<256x512xf32, #tpu.memory_space<vmem>>, vector<256x512xf32>,
    } else {
    }
    %c0 = arith.constant 0 : index
    %c0_1 = arith.constant 0 : index
    %3 = vector.load %arg3[%c0, %c0_1] : memref<256x64xf32, #tpu.memory_space<vmem>>, vector<256x64xf32>
    %c0_2 = arith.constant 0 : index
    %c0_3 = arith.constant 0 : index
    %4 = vector.load %arg5[%c0_2, %c0_3] : memref<1x64xf32, #tpu.memory_space<vmem>>, vector<1x64xf32>
    %5 = vector.broadcast %4 : vector<1x64xf32> to vector<256x64xf32>
    %6 = arith.mulf %3, %5 : vector<256x64xf32>
    %c0_4 = arith.constant 0 : index
    %c0_5 = arith.constant 0 : index
    %7 = vector.load %arg6[%c0_4, %c0_5] : memref<1x64xf32, #tpu.memory_space<vmem>>, vector<1x64xf32>
    %8 = vector.broadcast %7 : vector<1x64xf32> to vector<256x64xf32>
    %9 = arith.addf %6, %8 : vector<256x64xf32>
    %cst = arith.constant 0.000000e+00 : f32
    %10 = vector.broadcast %cst : f32 to vector<256x64xf32>
    %11 = arith.maximumf %9, %10 : vector<256x64xf32>
    %c0_6 = arith.constant 0 : index
    %c0_7 = arith.constant 0 : index
    %12 = vector.load %arg8[%c0_6, %c0_7] : memref<256x512xf32, #tpu.memory_space<vmem>>, vector<256x512xf32>
    %13 = arith.truncf %11 : vector<256x64xf32> to vector<256x64xbf16>
    %c0_8 = arith.constant 0 : index
    %c0_9 = arith.constant 0 : index
    %14 = vector.load %arg4[%c0_8, %c0_9] : memref<64x512xbf16, #tpu.memory_space<vmem>>, vector<64x512xbf16>
    %cst_10 = arith.constant dense<0.000000e+00> : vector<256x512xf32>
    %15 = tpu.matmul %13, %14, %cst_10 {dimension_numbers = #tpu.dot_dimension_numbers<[1], [0], [0], [1], [0, 0, 1, 1], [], []>} : vector<256x64xbf16>, vector<64x512xbf16>, vector<256x512xf32> -> vector<256x512xf32>
    %16 = arith.addf %12, %15 : vector<256x512xf32>
    %c0_11 = arith.constant 0 : index
    %c0_12 = arith.constant 0 : index
    %17 = vector.load %arg8[%c0_11, %c0_12] : memref<256x512xf32, #tpu.memory_space<vmem>>, vector<256x512xf32>
    tpu.vector_store %arg8[%c0_11, %c0_12], %16 {strides = array<i32>} : memref<256x512xf32, #tpu.memory_space<vmem>>, vector<256x512xf32>,
    %c0_i32_13 = arith.constant 0 : i32
    %18 = arith.cmpi eq, %arg2, %c0_i32_13 : i32
    %19 = arith.extui %18 : i1 to i32
    %c0_i32_14 = arith.constant 0 : i32
    %20 = arith.cmpi ne, %19, %c0_i32_14 : i32
    scf.if %20 {
      %c0_15 = arith.constant 0 : index
      %c0_16 = arith.constant 0 : index
      %21 = vector.load %arg8[%c0_15, %c0_16] : memref<256x512xf32, #tpu.memory_space<vmem>>, vector<256x512xf32>
      %c0_17 = arith.constant 0 : index
      %c0_18 = arith.constant 0 : index
      %22 = vector.load %arg7[%c0_17, %c0_18] : memref<256x512xf32, #tpu.memory_space<vmem>>, vector<256x512xf32>
      tpu.vector_store %arg7[%c0_17, %c0_18], %21 {strides = array<i32>} : memref<256x512xf32, #tpu.memory_space<vmem>>, vector<256x512xf32>,
    } else {
    }
    return
  }
  func.func @transform_0(%arg0: i32, %arg1: i32, %arg2: i32) -> (i32, i32) {
    %c0_i32 = arith.constant 0 : i32
    return %arg0, %arg2 : i32, i32
  }
  func.func @transform_1(%arg0: i32, %arg1: i32, %arg2: i32) -> (i32, i32) {
    %c0_i32 = arith.constant 0 : i32
    return %arg2, %arg1 : i32, i32
  }
  func.func @transform_2(%arg0: i32, %arg1: i32, %arg2: i32) -> (i32, i32) {
    %c0_i32 = arith.constant 0 : i32
    %c0_i32_0 = arith.constant 0 : i32
    return %c0_i32, %arg2 : i32, i32
  }
  func.func @transform_3(%arg0: i32, %arg1: i32, %arg2: i32) -> (i32, i32) {
    %c0_i32 = arith.constant 0 : i32
    %c0_i32_0 = arith.constant 0 : i32
    return %c0_i32, %arg2 : i32, i32
  }
  func.func @transform_4(%arg0: i32, %arg1: i32, %arg2: i32) -> (i32, i32) {
    %c0_i32 = arith.constant 0 : i32
    return %arg0, %arg1 : i32, i32
  }
}

module attributes {stable_mosaic.version = 11 : i64} {
  func.func @_stats_kernel(%arg0: i32, %arg1: memref<512x128xf32, #tpu.memory_space<vmem>>, %arg2: memref<1x128xf32, #tpu.memory_space<vmem>>, %arg3: memref<1x128xf32, #tpu.memory_space<vmem>>) attributes {dimension_semantics = [#tpu.dimension_semantics<arbitrary>], iteration_bounds = array<i64: 1>, scalar_prefetch = 0 : i64, scratch_operands = 0 : i64, tpu.core_type = #tpu.core_type<tc>, window_params = [{transform_indices = @transform_0, window_bounds = array<i64: 512, 128>}, {pipeline_mode = #tpu.pipeline_mode<synchronous>, transform_indices = @transform_1, window_bounds = array<i64: 1, 128>}, {pipeline_mode = #tpu.pipeline_mode<synchronous>, transform_indices = @transform_2, window_bounds = array<i64: 1, 128>}]} {
    %c0_i32 = arith.constant 0 : i32
    %0 = arith.cmpi eq, %arg0, %c0_i32 : i32
    %1 = arith.extui %0 : i1 to i32
    %c0_i32_0 = arith.constant 0 : i32
    %2 = arith.cmpi ne, %1, %c0_i32_0 : i32
    scf.if %2 {
      %cst_11 = arith.constant 0.000000e+00 : f32
      %15 = vector.broadcast %cst_11 : f32 to vector<1x128xf32>
      %c0_12 = arith.constant 0 : index
      %c0_13 = arith.constant 0 : index
      %16 = vector.load %arg2[%c0_12, %c0_13] : memref<1x128xf32, #tpu.memory_space<vmem>>, vector<1x128xf32>
      tpu.vector_store %arg2[%c0_12, %c0_13], %15 {strides = array<i32>} : memref<1x128xf32, #tpu.memory_space<vmem>>, vector<1x128xf32>,
      %cst_14 = arith.constant 0.000000e+00 : f32
      %17 = vector.broadcast %cst_14 : f32 to vector<1x128xf32>
      %c0_15 = arith.constant 0 : index
      %c0_16 = arith.constant 0 : index
      %18 = vector.load %arg3[%c0_15, %c0_16] : memref<1x128xf32, #tpu.memory_space<vmem>>, vector<1x128xf32>
      tpu.vector_store %arg3[%c0_15, %c0_16], %17 {strides = array<i32>} : memref<1x128xf32, #tpu.memory_space<vmem>>, vector<1x128xf32>,
    } else {
    }
    %c0 = arith.constant 0 : index
    %c0_1 = arith.constant 0 : index
    %3 = vector.load %arg1[%c0, %c0_1] : memref<512x128xf32, #tpu.memory_space<vmem>>, vector<512x128xf32>
    %c0_2 = arith.constant 0 : index
    %c0_3 = arith.constant 0 : index
    %4 = vector.load %arg2[%c0_2, %c0_3] : memref<1x128xf32, #tpu.memory_space<vmem>>, vector<1x128xf32>
    %cst = arith.constant dense<0.000000e+00> : vector<128xf32>
    %5 = vector.multi_reduction <add>, %3, %cst [0] : vector<512x128xf32> to vector<128xf32>
    %6 = vector.shape_cast %5 : vector<128xf32> to vector<1x128xf32>
    %7 = arith.addf %4, %6 : vector<1x128xf32>
    %c0_4 = arith.constant 0 : index
    %c0_5 = arith.constant 0 : index
    %8 = vector.load %arg2[%c0_4, %c0_5] : memref<1x128xf32, #tpu.memory_space<vmem>>, vector<1x128xf32>
    tpu.vector_store %arg2[%c0_4, %c0_5], %7 {strides = array<i32>} : memref<1x128xf32, #tpu.memory_space<vmem>>, vector<1x128xf32>,
    %c0_6 = arith.constant 0 : index
    %c0_7 = arith.constant 0 : index
    %9 = vector.load %arg3[%c0_6, %c0_7] : memref<1x128xf32, #tpu.memory_space<vmem>>, vector<1x128xf32>
    %10 = arith.mulf %3, %3 : vector<512x128xf32>
    %cst_8 = arith.constant dense<0.000000e+00> : vector<128xf32>
    %11 = vector.multi_reduction <add>, %10, %cst_8 [0] : vector<512x128xf32> to vector<128xf32>
    %12 = vector.shape_cast %11 : vector<128xf32> to vector<1x128xf32>
    %13 = arith.addf %9, %12 : vector<1x128xf32>
    %c0_9 = arith.constant 0 : index
    %c0_10 = arith.constant 0 : index
    %14 = vector.load %arg3[%c0_9, %c0_10] : memref<1x128xf32, #tpu.memory_space<vmem>>, vector<1x128xf32>
    tpu.vector_store %arg3[%c0_9, %c0_10], %13 {strides = array<i32>} : memref<1x128xf32, #tpu.memory_space<vmem>>, vector<1x128xf32>,
    return
  }
  func.func @transform_0(%arg0: i32) -> (i32, i32) {
    %c0_i32 = arith.constant 0 : i32
    %c0_i32_0 = arith.constant 0 : i32
    return %arg0, %c0_i32 : i32, i32
  }
  func.func @transform_1(%arg0: i32) -> (i32, i32) {
    %c0_i32 = arith.constant 0 : i32
    %c0_i32_0 = arith.constant 0 : i32
    %c0_i32_1 = arith.constant 0 : i32
    return %c0_i32, %c0_i32_0 : i32, i32
  }
  func.func @transform_2(%arg0: i32) -> (i32, i32) {
    %c0_i32 = arith.constant 0 : i32
    %c0_i32_0 = arith.constant 0 : i32
    %c0_i32_1 = arith.constant 0 : i32
    return %c0_i32, %c0_i32_0 : i32, i32
  }
}

module attributes {stable_mosaic.version = 11 : i64} {
  func.func @_mm_kernel(%arg0: i32, %arg1: i32, %arg2: i32, %arg3: memref<512x32xf32, #tpu.memory_space<vmem>>, %arg4: memref<32x128xbf16, #tpu.memory_space<vmem>>, %arg5: memref<1x32xf32, #tpu.memory_space<vmem>>, %arg6: memref<1x32xf32, #tpu.memory_space<vmem>>, %arg7: memref<512x128xf32, #tpu.memory_space<vmem>>, %arg8: memref<512x128xf32, #tpu.memory_space<vmem>>) attributes {dimension_semantics = [#tpu.dimension_semantics<parallel>, #tpu.dimension_semantics<parallel>, #tpu.dimension_semantics<arbitrary>], iteration_bounds = array<i64: 4, 1, 1>, scalar_prefetch = 0 : i64, scratch_operands = 1 : i64, tpu.core_type = #tpu.core_type<tc>, window_params = [{transform_indices = @transform_0, window_bounds = array<i64: 512, 32>}, {transform_indices = @transform_1, window_bounds = array<i64: 32, 128>}, {transform_indices = @transform_2, window_bounds = array<i64: 1, 32>}, {transform_indices = @transform_3, window_bounds = array<i64: 1, 32>}, {transform_indices = @transform_4, window_bounds = array<i64: 512, 128>}]} {
    %c0_i32 = arith.constant 0 : i32
    %0 = arith.cmpi eq, %arg2, %c0_i32 : i32
    %1 = arith.extui %0 : i1 to i32
    %c0_i32_0 = arith.constant 0 : i32
    %2 = arith.cmpi ne, %1, %c0_i32_0 : i32
    scf.if %2 {
      %cst_15 = arith.constant 0.000000e+00 : f32
      %21 = vector.broadcast %cst_15 : f32 to vector<512x128xf32>
      %c0_16 = arith.constant 0 : index
      %c0_17 = arith.constant 0 : index
      %22 = vector.load %arg8[%c0_16, %c0_17] : memref<512x128xf32, #tpu.memory_space<vmem>>, vector<512x128xf32>
      tpu.vector_store %arg8[%c0_16, %c0_17], %21 {strides = array<i32>} : memref<512x128xf32, #tpu.memory_space<vmem>>, vector<512x128xf32>,
    } else {
    }
    %c0 = arith.constant 0 : index
    %c0_1 = arith.constant 0 : index
    %3 = vector.load %arg3[%c0, %c0_1] : memref<512x32xf32, #tpu.memory_space<vmem>>, vector<512x32xf32>
    %c0_2 = arith.constant 0 : index
    %c0_3 = arith.constant 0 : index
    %4 = vector.load %arg5[%c0_2, %c0_3] : memref<1x32xf32, #tpu.memory_space<vmem>>, vector<1x32xf32>
    %5 = vector.broadcast %4 : vector<1x32xf32> to vector<512x32xf32>
    %6 = arith.mulf %3, %5 : vector<512x32xf32>
    %c0_4 = arith.constant 0 : index
    %c0_5 = arith.constant 0 : index
    %7 = vector.load %arg6[%c0_4, %c0_5] : memref<1x32xf32, #tpu.memory_space<vmem>>, vector<1x32xf32>
    %8 = vector.broadcast %7 : vector<1x32xf32> to vector<512x32xf32>
    %9 = arith.addf %6, %8 : vector<512x32xf32>
    %cst = arith.constant 0.000000e+00 : f32
    %10 = vector.broadcast %cst : f32 to vector<512x32xf32>
    %11 = arith.maximumf %9, %10 : vector<512x32xf32>
    %c0_6 = arith.constant 0 : index
    %c0_7 = arith.constant 0 : index
    %12 = vector.load %arg8[%c0_6, %c0_7] : memref<512x128xf32, #tpu.memory_space<vmem>>, vector<512x128xf32>
    %13 = arith.truncf %11 : vector<512x32xf32> to vector<512x32xbf16>
    %c0_8 = arith.constant 0 : index
    %c0_9 = arith.constant 0 : index
    %14 = vector.load %arg4[%c0_8, %c0_9] : memref<32x128xbf16, #tpu.memory_space<vmem>>, vector<32x128xbf16>
    %cst_10 = arith.constant dense<0.000000e+00> : vector<512x128xf32>
    %15 = tpu.matmul %13, %14, %cst_10 {dimension_numbers = #tpu.dot_dimension_numbers<[1], [0], [0], [1], [0, 0, 1, 1], [], []>} : vector<512x32xbf16>, vector<32x128xbf16>, vector<512x128xf32> -> vector<512x128xf32>
    %16 = arith.addf %12, %15 : vector<512x128xf32>
    %c0_11 = arith.constant 0 : index
    %c0_12 = arith.constant 0 : index
    %17 = vector.load %arg8[%c0_11, %c0_12] : memref<512x128xf32, #tpu.memory_space<vmem>>, vector<512x128xf32>
    tpu.vector_store %arg8[%c0_11, %c0_12], %16 {strides = array<i32>} : memref<512x128xf32, #tpu.memory_space<vmem>>, vector<512x128xf32>,
    %c0_i32_13 = arith.constant 0 : i32
    %18 = arith.cmpi eq, %arg2, %c0_i32_13 : i32
    %19 = arith.extui %18 : i1 to i32
    %c0_i32_14 = arith.constant 0 : i32
    %20 = arith.cmpi ne, %19, %c0_i32_14 : i32
    scf.if %20 {
      %c0_15 = arith.constant 0 : index
      %c0_16 = arith.constant 0 : index
      %21 = vector.load %arg8[%c0_15, %c0_16] : memref<512x128xf32, #tpu.memory_space<vmem>>, vector<512x128xf32>
      %c0_17 = arith.constant 0 : index
      %c0_18 = arith.constant 0 : index
      %22 = vector.load %arg7[%c0_17, %c0_18] : memref<512x128xf32, #tpu.memory_space<vmem>>, vector<512x128xf32>
      tpu.vector_store %arg7[%c0_17, %c0_18], %21 {strides = array<i32>} : memref<512x128xf32, #tpu.memory_space<vmem>>, vector<512x128xf32>,
    } else {
    }
    return
  }
  func.func @transform_0(%arg0: i32, %arg1: i32, %arg2: i32) -> (i32, i32) {
    %c0_i32 = arith.constant 0 : i32
    return %arg0, %arg2 : i32, i32
  }
  func.func @transform_1(%arg0: i32, %arg1: i32, %arg2: i32) -> (i32, i32) {
    %c0_i32 = arith.constant 0 : i32
    return %arg2, %arg1 : i32, i32
  }
  func.func @transform_2(%arg0: i32, %arg1: i32, %arg2: i32) -> (i32, i32) {
    %c0_i32 = arith.constant 0 : i32
    %c0_i32_0 = arith.constant 0 : i32
    return %c0_i32, %arg2 : i32, i32
  }
  func.func @transform_3(%arg0: i32, %arg1: i32, %arg2: i32) -> (i32, i32) {
    %c0_i32 = arith.constant 0 : i32
    %c0_i32_0 = arith.constant 0 : i32
    return %c0_i32, %arg2 : i32, i32
  }
  func.func @transform_4(%arg0: i32, %arg1: i32, %arg2: i32) -> (i32, i32) {
    %c0_i32 = arith.constant 0 : i32
    return %arg0, %arg1 : i32, i32
  }
}

module attributes {stable_mosaic.version = 11 : i64} {
  func.func @_tanh_kernel(%arg0: i32, %arg1: memref<192x128xf32, #tpu.memory_space<vmem>>, %arg2: memref<192x128xf32, #tpu.memory_space<vmem>>) attributes {dimension_semantics = [#tpu.dimension_semantics<parallel>], iteration_bounds = array<i64: 1>, scalar_prefetch = 0 : i64, scratch_operands = 0 : i64, tpu.core_type = #tpu.core_type<tc>, window_params = [{transform_indices = @transform_0, window_bounds = array<i64: 192, 128>}, {transform_indices = @transform_1, window_bounds = array<i64: 192, 128>}]} {
    %c0 = arith.constant 0 : index
    %c0_0 = arith.constant 0 : index
    %0 = vector.load %arg1[%c0, %c0_0] : memref<192x128xf32, #tpu.memory_space<vmem>>, vector<192x128xf32>
    %1 = math.tanh %0 : vector<192x128xf32>
    %c0_1 = arith.constant 0 : index
    %c0_2 = arith.constant 0 : index
    %2 = vector.load %arg2[%c0_1, %c0_2] : memref<192x128xf32, #tpu.memory_space<vmem>>, vector<192x128xf32>
    tpu.vector_store %arg2[%c0_1, %c0_2], %1 {strides = array<i32>} : memref<192x128xf32, #tpu.memory_space<vmem>>, vector<192x128xf32>,
    return
  }
  func.func @transform_0(%arg0: i32) -> (i32, i32) {
    %c0_i32 = arith.constant 0 : i32
    %c0_i32_0 = arith.constant 0 : i32
    return %arg0, %c0_i32 : i32, i32
  }
  func.func @transform_1(%arg0: i32) -> (i32, i32) {
    %c0_i32 = arith.constant 0 : i32
    %c0_i32_0 = arith.constant 0 : i32
    return %arg0, %c0_i32 : i32, i32
  }
}

</mosaic_0001>

<llo_original>
// kernel: generator2_forward.11
$region0: #{generator2_forward.11}
  #allocation0 [shape = 'u32[]', space=smem, size = 0x4, offset = 0x4, fixed_abs, tag = 'smem constant byte address 0x4 - core index']
  #allocation1 [shape = 'u32[72,128]{1,0:T(1,128)}', space=vmem, size = 0x9000, scoped, tag = 'internal scratch']
  #allocation2 [shape = 'f32[2,128]{1,0:T(2,128)}', space=vmem, size = 0x400, scoped, tag = 'scratch operand']
  %s0 = inlined_call_operand.vmem [shape: bf16[2,8], index: 0, kind: input, shape index: {}]
  %s1 = inlined_call_operand.vmem [shape: bf16[8,128], index: 1, kind: input, shape index: {}]
  %s2 = inlined_call_operand.hbm [shape: f32[1,128], index: 2, kind: input, shape index: {}]
  %s3 = inlined_call_operand.vmem [shape: f32[2,128], index: 3, kind: output, shape index: {}]
  %s4 = sld [smem:[#allocation0]]
  $region34: #{generator2_forward.11} parent=0
    _
  %s6 = ssub.s32 1, %s4
  %s7 = scalar_select 0, %s6, %s4
  $region1: #{generator2_forward.11} parent=0
    #allocation3 [shape = 'u8[512]{0}', space=vmem, size = 0x400, scoped, tag = 'input window, operand 2, single buffered']
    #allocation4 [shape = 's32[1]{0}', space=sflag, size = 0x4, scoped, tag = 'scoped memory for generator2_forward.11']
    %8 = vsyncpa [#allocation4], 0
    // Predicated region
    $region2: #{generator2_forward.11} parent=1 // pred_check
      _
    $region3: #{generator2_forward.11} parent=1 // pred_check_branch
      %10 = sbr.rel (0) target = $region5
    $region4: #{generator2_forward.11} parent=1 // pred_region
      _
    $region5: #{generator2_forward.11} parent=1 // pred_fallthru
      _
    // Predicated region
    $region6: #{generator2_forward.11} parent=1 // pred_check
      _
    $region7: #{generator2_forward.11} parent=1 // pred_check_branch
      %12 = sbr.rel (0) target = $region9
    $region8: #{generator2_forward.11} parent=1 // pred_region
      _
    $region9: #{generator2_forward.11} parent=1 // pred_fallthru
      _
    // Predicated region
    $region10: #{generator2_forward.11} parent=1 // pred_check
      _
    $region11: #{generator2_forward.11} parent=1 // pred_check_branch
      %14 = sbr.rel (0) target = $region13
    $region12: #{generator2_forward.11} parent=1 // pred_region
      %16 = vsyncadd [#allocation4], 0
      %s18 = sshll.u32 %s2, 4
      %s19 = int_to_ptr.hbm [resolvable:$true] %s18
      %s20 = sshll.u32 [#allocation3], 4
      %s21 = int_to_ptr.vmem [resolvable:$true] %s20
      %23 = dma.hbm_to_vmem [thread:$0]  %s19, 16, %s21, [#allocation4]
    $region13: #{generator2_forward.11} parent=1 // pred_fallthru
      _
    // Predicated region
    $region14: #{generator2_forward.11} parent=1 // pred_check
      _
    $region15: #{generator2_forward.11} parent=1 // pred_check_branch
      %25 = sbr.rel (0) target = $region17
    $region16: #{generator2_forward.11} parent=1 // pred_region
      %27 = dma.done [#allocation4], 16
    $region17: #{generator2_forward.11} parent=1 // pred_fallthru
      _
    %p29 = scmp.eq.s32.totalorder 0, 0
    // Predicated region
    $region18: #{generator2_forward.11} parent=1 // pred_check
      %p30 = pneg %p29
    $region19: #{generator2_forward.11} parent=1 // pred_check_branch
      %32 = sbr.rel (%p30) target = $region21
    $region20: #{generator2_forward.11} parent=1 // pred_region
      %33 = vst [vmem:[#allocation2] sm:$0x3] 0.0
    $region21: #{generator2_forward.11} parent=1 // pred_fallthru
      _
    %v34 = vld [vmem:[%s0] sm:$0x1]
    %v35 = vld [vmem:[#allocation2] sm:$0x3]
    %v36 = vld [vmem:[%s1] sm:$0xf]
    %vm37 = vcmask 64512
    %v39 = vsel %vm37, %v34, 0
    %vm41 = vcmask 1043456
    %v43 = vsel %vm41, %v36, 0
    %45 = vmatpush.bf16.msra.mxu0 0
    %46 = vmatpush.bf16.msra.mxu0 0
    %47 = vmatpush.bf16.msra.mxu0 0
    %48 = vmatpush.bf16.msra.mxu0 0
    %49 = vmatpush.bf16.msra.mxu0 0
    %50 = vmatpush.bf16.msra.mxu0 0
    %51 = vmatpush.bf16.msra.mxu0 0
    %52 = vmatpush.bf16.msra.mxu0 %v43
    %53 = vmatmul.bf16.gmra.mxu0 %v39
    %v54 = vpop.f32.mrf.mxu0
    %v55 = vadd.f32 0.0, %v54
    %v56 = vpop.f32.mrf.mxu0
    %57 = vdwg.mxu0
    %v58 = vadd.f32 %v35, %v55
    %59 = vst [vmem:[#allocation2] sm:$0x3] %v58
    // Predicated region
    $region22: #{generator2_forward.11} parent=1 // pred_check
      %p60 = pneg %p29
    $region23: #{generator2_forward.11} parent=1 // pred_check_branch
      %62 = sbr.rel (%p60) target = $region25
    $region24: #{generator2_forward.11} parent=1 // pred_region
      %v63 = vld [vmem:[#allocation2] sm:$0x3]
      %v64 = vld [vmem:[#allocation3] sm:$0x1]
      %v66 = vperm.slane %v64, 0
      %v68 = vadd.f32 %v63, %v66
      %vm69 = vcmp.ge.f32.partialorder %v68, 0.0
      %v70 = vmul.f32 %v68, 0.2
      %v71 = vsel %vm69, %v68, %v70
      %72 = vst [vmem:[%s3] sm:$0x3] %v71
    $region25: #{generator2_forward.11} parent=1 // pred_fallthru
      _
    // Predicated region
    $region26: #{generator2_forward.11} parent=1 // pred_check
      _
    $region27: #{generator2_forward.11} parent=1 // pred_check_branch
      %74 = sbr.rel (0) target = $region29
    $region28: #{generator2_forward.11} parent=1 // pred_region
      _
    $region29: #{generator2_forward.11} parent=1 // pred_fallthru
      _
    // Predicated region
    $region30: #{generator2_forward.11} parent=1 // pred_check
      _
    $region31: #{generator2_forward.11} parent=1 // pred_check_branch
      %76 = sbr.rel (0) target = $region33
    $region32: #{generator2_forward.11} parent=1 // pred_region
      _
    $region33: #{generator2_forward.11} parent=1 // pred_fallthru
      _
    %77 = vsyncpa [#allocation4], 1

// kernel: generator2_forward.12
$region0: #{generator2_forward.12}
  #allocation0 [shape = 'u32[]', space=smem, size = 0x4, offset = 0x4, fixed_abs, tag = 'smem constant byte address 0x4 - core index']
  #allocation1 [shape = 'u32[72,128]{1,0:T(1,128)}', space=vmem, size = 0x9000, scoped, tag = 'internal scratch']
  #allocation2 [shape = 'f32[2,512]{1,0:T(2,128)}', space=vmem, size = 0x1000, scoped, tag = 'scratch operand']
  %s0 = inlined_call_operand.vmem [shape: bf16[2,160], index: 0, kind: input, shape index: {}]
  %s1 = inlined_call_operand.vmem [shape: bf16[160,4096], index: 1, kind: input, shape index: {}]
  %s2 = inlined_call_operand.vmem [shape: f32[2,4096], index: 2, kind: output, shape index: {}]
  %s3 = sld [smem:[#allocation0]]
  $region72: #{generator2_forward.12} parent=0
    _
  %s5 = ssub.s32 1, %s3
  %s6 = scalar_select 0, %s5, %s3
  $region1: #{generator2_forward.12} parent=0
    #allocation3 [shape = 'u8[327680]{0}', space=vmem, size = 0x50000, scoped, tag = 'input window, operand 1']
    loop: start=0, step=1, limit=10
    $region2: #{generator2_forward.12} parent=1 // loop_pre_header
      _
    $region3: #{generator2_forward.12} parent=1 // loop_header
      %s8 = sphi 0, %s12
      %p9 = scmp.ge.s32.totalorder %s8, 10
      %s15 = sphi 0, %s34
      %s16 = sphi 0, %s30
      %s17 = sphi 0, %s26
      %s18 = sphi 0, %s15
      %s19 = sphi 0, %s16
      %s20 = sphi 0, %s17
      %s21 = sphi 0, %s18
      %s22 = sphi 0, %s19
      %s23 = sphi 0, %s20
      %s39 = sphi 0, %s41
      %s42 = sphi 0, %s39
      %s43 = sphi 0, %s42
      %s59 = sphi 0, %s43
      %s67 = sphi 0, %s69
      %s70 = sphi 0, %s67
      %s71 = sphi 0, %s70
      %s87 = sphi 0, %s71
      %s95 = sphi 0, %s97
      %s98 = sphi 0, %s95
      %s99 = sphi 0, %s98
      %s115 = sphi 0, %s99
    $region4: #{generator2_forward.12} parent=1 // loop_header_branch
      %11 = sbr.rel (%p9) target = $region8
    $region5: #{generator2_forward.12} parent=1 // loop_body
      %s13 = ssub.s32 %s8, 1
      %s14 = ssub.s32 %s8, 2
      %s24 = sadd.s32 1, %s17
      %p25 = scmp.ge.s32.totalorder %s24, 1
      %s26 = scalar_select %p25, 0, %s24
      %s27 = sadd.s32 1, %s16
      %s28 = scalar_select %p25, %s27, %s16
      %p29 = scmp.ge.s32.totalorder %s28, 8
      %s30 = scalar_select %p29, 0, %s28
      %s31 = sadd.s32 1, %s15
      %s32 = scalar_select %p29, %s31, %s15
      %p33 = scmp.ge.s32.totalorder %s32, 1
      %s34 = scalar_select %p33, 0, %s32
      %s35 = ssub.s32 %s15, %s34
      %s36 = ssub.s32 %s17, %s26
      %s37 = sor.u32 %s35, %s36
      %p38 = scmp.eq.s32.totalorder %s37, 0
      %s40 = sadd.s32 %s39, 1
      %s41 = scalar_select %p38, %s39, %s40
      %p44 = pneg %p38
      %p45 = scmp.eq.s32.totalorder %s8, 7
      %p46 = por %p44, %p45
      %p47 = scmp.ne.s32.totalorder %s39, %s42
      %p48 = scmp.eq.s32.totalorder %s8, 0
      %p49 = por %p47, %p48
      %p50 = scmp.ne.s32.totalorder %s39, %s42
      %p51 = scmp.eq.s32.totalorder %s13, 7
      %p52 = por %p50, %p51
      %p53 = scmp.ne.s32.totalorder %s42, %s43
      %p54 = scmp.eq.s32.totalorder %s13, 0
      %p55 = por %p53, %p54
      %p56 = scmp.ne.s32.totalorder %s42, %s43
      %p57 = scmp.eq.s32.totalorder %s14, 7
      %p58 = por %p56, %p57
      %p60 = scmp.ne.s32.totalorder %s43, %s59
      %p61 = scmp.eq.s32.totalorder %s14, 0
      %p62 = por %p60, %p61
      %s63 = ssub.s32 %s17, %s26
      %s64 = ssub.s32 %s16, %s30
      %s65 = sor.u32 %s63, %s64
      %p66 = scmp.eq.s32.totalorder %s65, 0
      %s68 = sadd.s32 %s67, 1
      %s69 = scalar_select %p66, %s67, %s68
      %p72 = pneg %p66
      %p73 = scmp.eq.s32.totalorder %s8, 7
      %p74 = por %p72, %p73
      %p75 = scmp.ne.s32.totalorder %s67, %s70
      %p76 = scmp.eq.s32.totalorder %s8, 0
      %p77 = por %p75, %p76
      %p78 = scmp.ne.s32.totalorder %s67, %s70
      %p79 = scmp.eq.s32.totalorder %s13, 7
      %p80 = por %p78, %p79
      %p81 = scmp.ne.s32.totalorder %s70, %s71
      %p82 = scmp.eq.s32.totalorder %s13, 0
      %p83 = por %p81, %p82
      %p84 = scmp.ne.s32.totalorder %s70, %s71
      %p85 = scmp.eq.s32.totalorder %s14, 7
      %p86 = por %p84, %p85
      %p88 = scmp.ne.s32.totalorder %s71, %s87
      %p89 = scmp.eq.s32.totalorder %s14, 0
      %p90 = por %p88, %p89
      %s91 = ssub.s32 %s15, %s34
      %s92 = ssub.s32 %s16, %s30
      %s93 = sor.u32 %s91, %s92
      %p94 = scmp.eq.s32.totalorder %s93, 0
      %s96 = sadd.s32 %s95, 1
      %s97 = scalar_select %p94, %s95, %s96
      %p100 = pneg %p94
      %p101 = scmp.eq.s32.totalorder %s8, 7
      %p102 = por %p100, %p101
      %p103 = scmp.ne.s32.totalorder %s95, %s98
      %p104 = scmp.eq.s32.totalorder %s8, 0
      %p105 = por %p103, %p104
      %p106 = scmp.ne.s32.totalorder %s95, %s98
      %p107 = scmp.eq.s32.totalorder %s13, 7
      %p108 = por %p106, %p107
      %p109 = scmp.ne.s32.totalorder %s98, %s99
      %p110 = scmp.eq.s32.totalorder %s13, 0
      %p111 = por %p109, %p110
      %p112 = scmp.ne.s32.totalorder %s98, %s99
      %p113 = scmp.eq.s32.totalorder %s14, 7
      %p114 = por %p112, %p113
      %p116 = scmp.ne.s32.totalorder %s99, %s115
      %p117 = scmp.eq.s32.totalorder %s14, 0
      %p118 = por %p116, %p117
      %p119 = scmp.le.s32.totalorder 1, %s8
      %p120 = scmp.lt.s32.totalorder %s8, 9
      %p121 = pnand %p119, %p120
      %p122 = pneg %p121
      // Predicated region
      $region9: #{generator2_forward.12} parent=5 // pred_check
        _
      $region10: #{generator2_forward.12} parent=5 // pred_check_branch
        %124 = sbr.rel (%p121) target = $region12
      $region11: #{generator2_forward.12} parent=5 // pred_region
        %s125 = ssub.s32 %s8, 1
        // Predicated region
        $region13: #{generator2_forward.12} parent=11 // pred_check
          %p126 = pneg %p55
        $region14: #{generator2_forward.12} parent=11 // pred_check_branch
          %128 = sbr.rel (%p126) target = $region16
        $region15: #{generator2_forward.12} parent=11 // pred_region
          %s129 = smul.u32 2, %s20
          %p130 = scmp.lt.s32.totalorder %s18, 0
          %s131 = scalar_select %p130, %s18, 0
          %p132 = scmp.lt.s32.totalorder %s129, 1
          %s133 = scalar_select %p132, %s129, 1
          %s134 = smul.addr %s131, 2
          %s135 = sadd.s32 %s133, %s134
          %s136 = scalar_lea.vmem %s0, %s135
          %s137 = smul.u32 2, %s20
        $region16: #{generator2_forward.12} parent=11 // pred_fallthru
          _
      $region12: #{generator2_forward.12} parent=5 // pred_fallthru
        _
      %p138 = scmp.lt.s32.totalorder %s8, 8
      // Predicated region
      $region17: #{generator2_forward.12} parent=5 // pred_check
        %p139 = pneg %p138
      $region18: #{generator2_forward.12} parent=5 // pred_check_branch
        %141 = sbr.rel (%p139) target = $region20
      $region19: #{generator2_forward.12} parent=5 // pred_region
        // Predicated region
        $region21: #{generator2_forward.12} parent=19 // pred_check
          %p142 = pneg %p77
        $region22: #{generator2_forward.12} parent=19 // pred_check_branch
          %144 = sbr.rel (%p142) target = $region24
        $region23: #{generator2_forward.12} parent=19 // pred_region
          %s145 = sand.u32 %s67, 1
          %s146 = sand.u32 %s67, 1
          %s147 = smul.addr %s146, 320
          %s148 = scalar_lea.vmem [#allocation3], %s147
          %s149 = smul.u32 20, %s17
          %s150 = smul.u32 4, %s16
          %s151 = smul.addr %s149, 32
          %s152 = sadd.s32 %s150, %s151
          %s153 = smul.addr %s152, 4
          %s154 = scalar_lea.vmem %s1, %s153
          // Predicated region
          $region25: #{generator2_forward.12} parent=23 // pred_check
            _
          $region26: #{generator2_forward.12} parent=23 // pred_check_branch
            %156 = sbr.rel (0) target = $region28
          $region27: #{generator2_forward.12} parent=23 // pred_region
            // Predicated region
            $region29: #{generator2_forward.12} parent=27 // pred_check
              _
            $region30: #{generator2_forward.12} parent=27 // pred_check_branch
              %158 = sbr.rel (0) target = $region32
            $region31: #{generator2_forward.12} parent=27 // pred_region
              loop: start=0, step=1, limit=1
              $region33: #{generator2_forward.12} parent=31 // loop_pre_header
                _
              $region34: #{generator2_forward.12} parent=31 // loop_header
                %s160 = sphi 0, %s164
                %p161 = scmp.ge.s32.totalorder %s160, 1
                %s165 = sphi %s154, %s154
                %s166 = sphi %s148, %s148
              $region35: #{generator2_forward.12} parent=31 // loop_header_branch
                %163 = sbr.rel (%p161) target = $region39
              $region36: #{generator2_forward.12} parent=31 // loop_body
                %v167 = vld [vmem:[%s165] sm:$0xff]
                %168 = vst [vmem:[%s166] sm:$0xff] %v167
                %v169 = vld [vmem:[%s165 + $0x8] sm:$0xff]
                %170 = vst [vmem:[%s166 + $0x8] sm:$0xff] %v169
                %v171 = vld [vmem:[%s165 + $0x80] sm:$0xff]
                %172 = vst [vmem:[%s166 + $0x10] sm:$0xff] %v171
                %v173 = vld [vmem:[%s165 + $0x88] sm:$0xff]
                %174 = vst [vmem:[%s166 + $0x18] sm:$0xff] %v173
                %v175 = vld [vmem:[%s165 + $0x100] sm:$0xff]
                %176 = vst [vmem:[%s166 + $0x20] sm:$0xff] %v175
                %v177 = vld [vmem:[%s165 + $0x108] sm:$0xff]
                %178 = vst [vmem:[%s166 + $0x28] sm:$0xff] %v177
                %v179 = vld [vmem:[%s165 + $0x180] sm:$0xff]
                %180 = vst [vmem:[%s166 + $0x30] sm:$0xff] %v179
                %v181 = vld [vmem:[%s165 + $0x188] sm:$0xff]
                %182 = vst [vmem:[%s166 + $0x38] sm:$0xff] %v181
                %v183 = vld [vmem:[%s165 + $0x200] sm:$0xff]
                %184 = vst [vmem:[%s166 + $0x40] sm:$0xff] %v183
                %v185 = vld [vmem:[%s165 + $0x208] sm:$0xff]
                %186 = vst [vmem:[%s166 + $0x48] sm:$0xff] %v185
                %v187 = vld [vmem:[%s165 + $0x280] sm:$0xff]
                %188 = vst [vmem:[%s166 + $0x50] sm:$0xff] %v187
                %v189 = vld [vmem:[%s165 + $0x288] sm:$0xff]
                %190 = vst [vmem:[%s166 + $0x58] sm:$0xff] %v189
                %v191 = vld [vmem:[%s165 + $0x300] sm:$0xff]
                %192 = vst [vmem:[%s166 + $0x60] sm:$0xff] %v191
                %v193 = vld [vmem:[%s165 + $0x308] sm:$0xff]
                %194 = vst [vmem:[%s166 + $0x68] sm:$0xff] %v193
                %v195 = vld [vmem:[%s165 + $0x380] sm:$0xff]
                %196 = vst [vmem:[%s166 + $0x70] sm:$0xff] %v195
                %v197 = vld [vmem:[%s165 + $0x388] sm:$0xff]
                %198 = vst [vmem:[%s166 + $0x78] sm:$0xff] %v197
                %v199 = vld [vmem:[%s165 + $0x400] sm:$0xff]
                %200 = vst [vmem:[%s166 + $0x80] sm:$0xff] %v199
                %v201 = vld [vmem:[%s165 + $0x408] sm:$0xff]
                %202 = vst [vmem:[%s166 + $0x88] sm:$0xff] %v201
                %v203 = vld [vmem:[%s165 + $0x480] sm:$0xff]
                %204 = vst [vmem:[%s166 + $0x90] sm:$0xff] %v203
                %v205 = vld [vmem:[%s165 + $0x488] sm:$0xff]
                %206 = vst [vmem:[%s166 + $0x98] sm:$0xff] %v205
                %v207 = vld [vmem:[%s165 + $0x500] sm:$0xff]
                %208 = vst [vmem:[%s166 + $0xa0] sm:$0xff] %v207
                %v209 = vld [vmem:[%s165 + $0x508] sm:$0xff]
                %210 = vst [vmem:[%s166 + $0xa8] sm:$0xff] %v209
                %v211 = vld [vmem:[%s165 + $0x580] sm:$0xff]
                %212 = vst [vmem:[%s166 + $0xb0] sm:$0xff] %v211
                %v213 = vld [vmem:[%s165 + $0x588] sm:$0xff]
                %214 = vst [vmem:[%s166 + $0xb8] sm:$0xff] %v213
                %v215 = vld [vmem:[%s165 + $0x600] sm:$0xff]
                %216 = vst [vmem:[%s166 + $0xc0] sm:$0xff] %v215
                %v217 = vld [vmem:[%s165 + $0x608] sm:$0xff]
                %218 = vst [vmem:[%s166 + $0xc8] sm:$0xff] %v217
                %v219 = vld [vmem:[%s165 + $0x680] sm:$0xff]
                %220 = vst [vmem:[%s166 + $0xd0] sm:$0xff] %v219
                %v221 = vld [vmem:[%s165 + $0x688] sm:$0xff]
                %222 = vst [vmem:[%s166 + $0xd8] sm:$0xff] %v221
                %v223 = vld [vmem:[%s165 + $0x700] sm:$0xff]
                %224 = vst [vmem:[%s166 + $0xe0] sm:$0xff] %v223
                %v225 = vld [vmem:[%s165 + $0x708] sm:$0xff]
                %226 = vst [vmem:[%s166 + $0xe8] sm:$0xff] %v225
                %v227 = vld [vmem:[%s165 + $0x780] sm:$0xff]
                %228 = vst [vmem:[%s166 + $0xf0] sm:$0xff] %v227
                %v229 = vld [vmem:[%s165 + $0x788] sm:$0xff]
                %230 = vst [vmem:[%s166 + $0xf8] sm:$0xff] %v229
                %v231 = vld [vmem:[%s165 + $0x800] sm:$0xff]
                %232 = vst [vmem:[%s166 + $0x100] sm:$0xff] %v231
                %v233 = vld [vmem:[%s165 + $0x808] sm:$0xff]
                %234 = vst [vmem:[%s166 + $0x108] sm:$0xff] %v233
                %v235 = vld [vmem:[%s165 + $0x880] sm:$0xff]
                %236 = vst [vmem:[%s166 + $0x110] sm:$0xff] %v235
                %v237 = vld [vmem:[%s165 + $0x888] sm:$0xff]
                %238 = vst [vmem:[%s166 + $0x118] sm:$0xff] %v237
                %v239 = vld [vmem:[%s165 + $0x900] sm:$0xff]
                %240 = vst [vmem:[%s166 + $0x120] sm:$0xff] %v239
                %v241 = vld [vmem:[%s165 + $0x908] sm:$0xff]
                %242 = vst [vmem:[%s166 + $0x128] sm:$0xff] %v241
                %v243 = vld [vmem:[%s165 + $0x980] sm:$0xff]
                %244 = vst [vmem:[%s166 + $0x130] sm:$0xff] %v243
                %v245 = vld [vmem:[%s165 + $0x988] sm:$0xff]
                %246 = vst [vmem:[%s166 + $0x138] sm:$0xff] %v245
              $region37: #{generator2_forward.12} parent=31 // loop_footer
                %s164 = sadd.s32 1, %s160
              $region38: #{generator2_forward.12} parent=31 // loop_footer_branch
                %159 = sbr.rel target = $region34
              $region39: #{generator2_forward.12} parent=31 // loop_exit
                _
            $region32: #{generator2_forward.12} parent=27 // pred_fallthru
              _
            // Predicated region
            $region40: #{generator2_forward.12} parent=27 // pred_check
              _
            $region41: #{generator2_forward.12} parent=27 // pred_check_branch
              %248 = sbr.rel target = $region43
            $region42: #{generator2_forward.12} parent=27 // pred_region
              _
            $region43: #{generator2_forward.12} parent=27 // pred_fallthru
              _
          $region28: #{generator2_forward.12} parent=23 // pred_fallthru
            _
          %249 = vnop
        $region24: #{generator2_forward.12} parent=19 // pred_fallthru
          _
      $region20: #{generator2_forward.12} parent=5 // pred_fallthru
        _
      %p250 = scmp.le.s32.totalorder 1, %s8
      %p251 = scmp.lt.s32.totalorder %s8, 9
      %p252 = pnand %p250, %p251
      %p253 = pneg %p252
      // Predicated region
      $region44: #{generator2_forward.12} parent=5 // pred_check
        _
      $region45: #{generator2_forward.12} parent=5 // pred_check_branch
        %255 = sbr.rel (%p252) target = $region47
      $region46: #{generator2_forward.12} parent=5 // pred_region
        %s256 = ssub.s32 %s8, 1
        %s257 = sand.u32 %s70, 1
        %s258 = sand.u32 %s70, 1
        %s259 = smul.addr %s258, 320
        %s260 = scalar_lea.vmem [#allocation3], %s259
        // Predicated region
        $region48: #{generator2_forward.12} parent=46 // pred_check
          %p261 = pneg %p83
        $region49: #{generator2_forward.12} parent=46 // pred_check_branch
          %263 = sbr.rel (%p261) target = $region51
        $region50: #{generator2_forward.12} parent=46 // pred_region
          _
        $region51: #{generator2_forward.12} parent=46 // pred_fallthru
          _
        %s264 = smul.u32 2, %s20
        %p265 = scmp.lt.s32.totalorder %s18, 0
        %s266 = scalar_select %p265, %s18, 0
        %p267 = scmp.lt.s32.totalorder %s264, 1
        %s268 = scalar_select %p267, %s264, 1
        %s269 = smul.addr %s266, 2
        %s270 = sadd.s32 %s268, %s269
        %s271 = scalar_lea.vmem %s0, %s270
        %p272 = pneg %p55
        %p273 = pneg %p52
        %s274 = sand.u32 %s70, 1
        %s275 = sand.u32 %s70, 1
        %s276 = smul.addr %s275, 320
        %s277 = scalar_lea.vmem [#allocation3], %s276
        %p278 = pneg %p83
        %p279 = pneg %p80
        %p280 = pneg %p111
        %p281 = pneg %p108
        %s282 = smul.u32 4, %s19
        %p283 = scmp.lt.s32.totalorder %s18, 0
        %s284 = scalar_select %p283, %s18, 0
        %p285 = scmp.lt.s32.totalorder %s282, 31
        %s286 = scalar_select %p285, %s282, 31
        %s287 = smul.addr %s284, 32
        %s288 = sadd.s32 %s286, %s287
        %s289 = smul.addr %s288, 2
        %s290 = scalar_lea.vmem %s2, %s289
        %s291 = smul.u32 2, %s20
        %p292 = scmp.lt.s32.totalorder %s18, 0
        %s293 = scalar_select %p292, %s18, 0
        %p294 = scmp.lt.s32.totalorder %s291, 1
        %s295 = scalar_select %p294, %s291, 1
        %s296 = smul.addr %s293, 2
        %s297 = sadd.s32 %s295, %s296
        %s298 = scalar_lea.vmem %s0, %s297
        %s299 = smul.u32 2, %s20
        %s300 = smul.u32 20, %s20
        %s301 = smul.u32 4, %s19
        %s302 = smul.u32 4, %s19
        %p303 = scmp.lt.s32.totalorder %s18, 0
        %s304 = scalar_select %p303, %s18, 0
        %p305 = scmp.lt.s32.totalorder %s302, 31
        %s306 = scalar_select %p305, %s302, 31
        %s307 = smul.addr %s304, 32
        %s308 = sadd.s32 %s306, %s307
        %s309 = smul.addr %s308, 2
        %s310 = scalar_lea.vmem %s2, %s309
        %s311 = smul.u32 4, %s19
        %p313 = scmp.eq.s32.totalorder %s20, 0
        // Predicated region
        $region52: #{generator2_forward.12} parent=46 // pred_check
          %p314 = pneg %p313
        $region53: #{generator2_forward.12} parent=46 // pred_check_branch
          %316 = sbr.rel (%p314) target = $region55
        $region54: #{generator2_forward.12} parent=46 // pred_region
          %317 = vst [vmem:[#allocation2] sm:$0xff] 0.0
        $region55: #{generator2_forward.12} parent=46 // pred_fallthru
          _
        %v318 = vld [vmem:[%s298] sm:$0x3]
        %v319 = vld [vmem:[#allocation2] sm:$0xff]
        %v320 = vld [vmem:[%s260] sm:$0xff]
        %v321 = vld [vmem:[%s260 + $0x8] sm:$0xff]
        %v322 = vld [vmem:[%s260 + $0x10] sm:$0xff]
        %v323 = vld [vmem:[%s260 + $0x18] sm:$0xff]
        %v324 = vld [vmem:[%s260 + $0x20] sm:$0xff]
        %v325 = vld [vmem:[%s260 + $0x28] sm:$0xff]
        %v326 = vld [vmem:[%s260 + $0x30] sm:$0xff]
        %v327 = vld [vmem:[%s260 + $0x38] sm:$0xff]
        %v328 = vld [vmem:[%s260 + $0x40] sm:$0xff]
        %v329 = vld [vmem:[%s260 + $0x48] sm:$0xff]
        %v330 = vld [vmem:[%s260 + $0x50] sm:$0xff]
        %v331 = vld [vmem:[%s260 + $0x58] sm:$0xff]
        %v332 = vld [vmem:[%s260 + $0x60] sm:$0xff]
        %v333 = vld [vmem:[%s260 + $0x68] sm:$0xff]
        %v334 = vld [vmem:[%s260 + $0x70] sm:$0xff]
        %v335 = vld [vmem:[%s260 + $0x78] sm:$0xff]
        %v336 = vld [vmem:[%s260 + $0x80] sm:$0xff]
        %v337 = vld [vmem:[%s260 + $0x88] sm:$0xff]
        %v338 = vld [vmem:[%s260 + $0x90] sm:$0xff]
        %v339 = vld [vmem:[%s260 + $0x98] sm:$0xff]
        %v340 = vld [vmem:[%s260 + $0xa0] sm:$0xff]
        %v341 = vld [vmem:[%s260 + $0xa8] sm:$0xff]
        %v342 = vld [vmem:[%s260 + $0xb0] sm:$0xff]
        %v343 = vld [vmem:[%s260 + $0xb8] sm:$0xff]
        %v344 = vld [vmem:[%s260 + $0xc0] sm:$0xff]
        %v345 = vld [vmem:[%s260 + $0xc8] sm:$0xff]
        %v346 = vld [vmem:[%s260 + $0xd0] sm:$0xff]
        %v347 = vld [vmem:[%s260 + $0xd8] sm:$0xff]
        %v348 = vld [vmem:[%s260 + $0xe0] sm:$0xff]
        %v349 = vld [vmem:[%s260 + $0xe8] sm:$0xff]
        %v350 = vld [vmem:[%s260 + $0xf0] sm:$0xff]
        %v351 = vld [vmem:[%s260 + $0xf8] sm:$0xff]
        %v352 = vld [vmem:[%s260 + $0x100] sm:$0xff]
        %v353 = vld [vmem:[%s260 + $0x108] sm:$0xff]
        %v354 = vld [vmem:[%s260 + $0x110] sm:$0xff]
        %v355 = vld [vmem:[%s260 + $0x118] sm:$0xff]
        %v356 = vld [vmem:[%s260 + $0x120] sm:$0xff]
        %v357 = vld [vmem:[%s260 + $0x128] sm:$0xff]
        %v358 = vld [vmem:[%s260 + $0x130] sm:$0xff]
        %v359 = vld [vmem:[%s260 + $0x138] sm:$0xff]
        %361 = vst [vmem:[#allocation1] ss:$9 sm:$0xff] %v318
        %v362 = vld [vmem:[#allocation1] sm:$0xff]
        %v363 = vld [vmem:[#allocation1 + $0x9] sm:$0xff]
        %v405 = vunpack.c.l.b16 %v320
        %v406 = vunpack.c.h.b16 %v320
        %v407 = vunpack.c.l.b16 %v321
        %v408 = vunpack.c.h.b16 %v321
        %v409 = vunpack.c.l.b16 %v322
        %v410 = vunpack.c.h.b16 %v322
        %v411 = vunpack.c.l.b16 %v323
        %v412 = vunpack.c.h.b16 %v323
        %v413 = vunpack.c.l.b16 %v324
        %v414 = vunpack.c.h.b16 %v324
        %v415 = vunpack.c.l.b16 %v325
        %v416 = vunpack.c.h.b16 %v325
        %v417 = vunpack.c.l.b16 %v326
        %v418 = vunpack.c.h.b16 %v326
        %v419 = vunpack.c.l.b16 %v327
        %v420 = vunpack.c.h.b16 %v327
        %v421 = vunpack.c.l.b16 %v328
        %v422 = vunpack.c.h.b16 %v328
        %v423 = vunpack.c.l.b16 %v329
        %v424 = vunpack.c.h.b16 %v329
        %v425 = vunpack.c.l.b16 %v330
        %v426 = vunpack.c.h.b16 %v330
        %v427 = vunpack.c.l.b16 %v331
        %v428 = vunpack.c.h.b16 %v331
        %v429 = vunpack.c.l.b16 %v332
        %v430 = vunpack.c.h.b16 %v332
        %v431 = vunpack.c.l.b16 %v333
        %v432 = vunpack.c.h.b16 %v333
        %v433 = vunpack.c.l.b16 %v334
        %v434 = vunpack.c.h.b16 %v334
        %v435 = vunpack.c.l.b16 %v335
        %v436 = vunpack.c.h.b16 %v335
        %v437 = vunpack.c.l.b16 %v336
        %v438 = vunpack.c.h.b16 %v336
        %v439 = vunpack.c.l.b16 %v337
        %v440 = vunpack.c.h.b16 %v337
        %v441 = vunpack.c.l.b16 %v338
        %v442 = vunpack.c.h.b16 %v338
        %v443 = vunpack.c.l.b16 %v339
        %v444 = vunpack.c.h.b16 %v339
        %v445 = vunpack.c.l.b16 %v340
        %v446 = vunpack.c.h.b16 %v340
        %v447 = vunpack.c.l.b16 %v341
        %v448 = vunpack.c.h.b16 %v341
        %v449 = vunpack.c.l.b16 %v342
        %v450 = vunpack.c.h.b16 %v342
        %v451 = vunpack.c.l.b16 %v343
        %v452 = vunpack.c.h.b16 %v343
        %v453 = vunpack.c.l.b16 %v344
        %v454 = vunpack.c.h.b16 %v344
        %v455 = vunpack.c.l.b16 %v345
        %v456 = vunpack.c.h.b16 %v345
        %v457 = vunpack.c.l.b16 %v346
        %v458 = vunpack.c.h.b16 %v346
        %v459 = vunpack.c.l.b16 %v347
        %v460 = vunpack.c.h.b16 %v347
        %v461 = vunpack.c.l.b16 %v348
        %v462 = vunpack.c.h.b16 %v348
        %v463 = vunpack.c.l.b16 %v349
        %v464 = vunpack.c.h.b16 %v349
        %v465 = vunpack.c.l.b16 %v350
        %v466 = vunpack.c.h.b16 %v350
        %v467 = vunpack.c.l.b16 %v351
        %v468 = vunpack.c.h.b16 %v351
        %v469 = vunpack.c.l.b16 %v352
        %v470 = vunpack.c.h.b16 %v352
        %v471 = vunpack.c.l.b16 %v353
        %v472 = vunpack.c.h.b16 %v353
        %v473 = vunpack.c.l.b16 %v354
        %v474 = vunpack.c.h.b16 %v354
        %v475 = vunpack.c.l.b16 %v355
        %v476 = vunpack.c.h.b16 %v355
        %v477 = vunpack.c.l.b16 %v356
        %v478 = vunpack.c.h.b16 %v356
        %v479 = vunpack.c.l.b16 %v357
        %v480 = vunpack.c.h.b16 %v357
        %v481 = vunpack.c.l.b16 %v358
        %v482 = vunpack.c.h.b16 %v358
        %v483 = vunpack.c.l.b16 %v359
        %v484 = vunpack.c.h.b16 %v359
        %v485 = vpack.c.b16 %v409, %v405
        %v486 = vpack.c.b16 %v410, %v406
        %v487 = vpack.c.b16 %v411, %v407
        %v488 = vpack.c.b16 %v412, %v408
        %v489 = vpack.c.b16 %v417, %v413
        %v490 = vpack.c.b16 %v418, %v414
        %v491 = vpack.c.b16 %v419, %v415
        %v492 = vpack.c.b16 %v420, %v416
        %v493 = vpack.c.b16 %v425, %v421
        %v494 = vpack.c.b16 %v426, %v422
        %v495 = vpack.c.b16 %v427, %v423
        %v496 = vpack.c.b16 %v428, %v424
        %v497 = vpack.c.b16 %v433, %v429
        %v498 = vpack.c.b16 %v434, %v430
        %v499 = vpack.c.b16 %v435, %v431
        %v500 = vpack.c.b16 %v436, %v432
        %v501 = vpack.c.b16 %v441, %v437
        %v502 = vpack.c.b16 %v442, %v438
        %v503 = vpack.c.b16 %v443, %v439
        %v504 = vpack.c.b16 %v444, %v440
        %v505 = vpack.c.b16 %v449, %v445
        %v506 = vpack.c.b16 %v450, %v446
        %v507 = vpack.c.b16 %v451, %v447
        %v508 = vpack.c.b16 %v452, %v448
        %v509 = vpack.c.b16 %v457, %v453
        %v510 = vpack.c.b16 %v458, %v454
        %v511 = vpack.c.b16 %v459, %v455
        %v512 = vpack.c.b16 %v460, %v456
        %v513 = vpack.c.b16 %v465, %v461
        %v514 = vpack.c.b16 %v466, %v462
        %v515 = vpack.c.b16 %v467, %v463
        %v516 = vpack.c.b16 %v468, %v464
        %v517 = vpack.c.b16 %v473, %v469
        %v518 = vpack.c.b16 %v474, %v470
        %v519 = vpack.c.b16 %v475, %v471
        %v520 = vpack.c.b16 %v476, %v472
        %v521 = vpack.c.b16 %v481, %v477
        %v522 = vpack.c.b16 %v482, %v478
        %v523 = vpack.c.b16 %v483, %v479
        %v524 = vpack.c.b16 %v484, %v480
        %vm565 = vcmask 261120
        %v566 = vsel %vm565, %v363, 0
        %568 = vmatpush.bf16.msra.mxu0 %v513
        %569 = vmatpush.bf16.msra.mxu0 %v509
        %570 = vmatpush.bf16.msra.mxu0 %v505
        %571 = vmatpush.bf16.msra.mxu0 %v501
        %572 = vmatpush.bf16.msra.mxu0 %v497
        %573 = vmatpush.bf16.msra.mxu0 %v493
        %574 = vmatpush.bf16.msra.mxu0 %v489
        %575 = vmatpush.bf16.msra.mxu0 %v485
        %576 = vmatmul.bf16.gmra.mxu0 %v362
        %v577 = vpop.f32.mrf.mxu0
        %v578 = vadd.f32 0.0, %v577
        %v579 = vpop.f32.mrf.mxu0
        %580 = vdwg.mxu0
        %581 = vmatpush.bf16.msra.mxu0 0
        %582 = vmatpush.bf16.msra.mxu0 0
        %583 = vmatpush.bf16.msra.mxu0 0
        %584 = vmatpush.bf16.msra.mxu0 0
        %585 = vmatpush.bf16.msra.mxu0 0
        %586 = vmatpush.bf16.msra.mxu0 0
        %587 = vmatpush.bf16.msra.mxu0 %v521
        %588 = vmatpush.bf16.msra.mxu0 %v517
        %589 = vmatmul.bf16.gmra.mxu0 %v566
        %v590 = vpop.f32.mrf.mxu0
        %v591 = vadd.f32 %v578, %v590
        %v592 = vpop.f32.mrf.mxu0
        %593 = vdwg.mxu0
        %594 = vmatpush.bf16.msra.mxu0 %v514
        %595 = vmatpush.bf16.msra.mxu0 %v510
        %596 = vmatpush.bf16.msra.mxu0 %v506
        %597 = vmatpush.bf16.msra.mxu0 %v502
        %598 = vmatpush.bf16.msra.mxu0 %v498
        %599 = vmatpush.bf16.msra.mxu0 %v494
        %600 = vmatpush.bf16.msra.mxu0 %v490
        %601 = vmatpush.bf16.msra.mxu0 %v486
        %602 = vmatmul.bf16.gmra.mxu0 %v362
        %v603 = vpop.f32.mrf.mxu0
        %v604 = vadd.f32 0.0, %v603
        %v605 = vpop.f32.mrf.mxu0
        %606 = vdwg.mxu0
        %607 = vmatpush.bf16.msra.mxu0 0
        %608 = vmatpush.bf16.msra.mxu0 0
        %609 = vmatpush.bf16.msra.mxu0 0
        %610 = vmatpush.bf16.msra.mxu0 0
        %611 = vmatpush.bf16.msra.mxu0 0
        %612 = vmatpush.bf16.msra.mxu0 0
        %613 = vmatpush.bf16.msra.mxu0 %v522
        %614 = vmatpush.bf16.msra.mxu0 %v518
        %615 = vmatmul.bf16.gmra.mxu0 %v566
        %v616 = vpop.f32.mrf.mxu0
        %v617 = vadd.f32 %v604, %v616
        %v618 = vpop.f32.mrf.mxu0
        %619 = vdwg.mxu0
        %620 = vmatpush.bf16.msra.mxu0 %v515
        %621 = vmatpush.bf16.msra.mxu0 %v511
        %622 = vmatpush.bf16.msra.mxu0 %v507
        %623 = vmatpush.bf16.msra.mxu0 %v503
        %624 = vmatpush.bf16.msra.mxu0 %v499
        %625 = vmatpush.bf16.msra.mxu0 %v495
        %626 = vmatpush.bf16.msra.mxu0 %v491
        %627 = vmatpush.bf16.msra.mxu0 %v487
        %628 = vmatmul.bf16.gmra.mxu0 %v362
        %v629 = vpop.f32.mrf.mxu0
        %v630 = vadd.f32 0.0, %v629
        %v631 = vpop.f32.mrf.mxu0
        %632 = vdwg.mxu0
        %633 = vmatpush.bf16.msra.mxu0 0
        %634 = vmatpush.bf16.msra.mxu0 0
        %635 = vmatpush.bf16.msra.mxu0 0
        %636 = vmatpush.bf16.msra.mxu0 0
        %637 = vmatpush.bf16.msra.mxu0 0
        %638 = vmatpush.bf16.msra.mxu0 0
        %639 = vmatpush.bf16.msra.mxu0 %v523
        %640 = vmatpush.bf16.msra.mxu0 %v519
        %641 = vmatmul.bf16.gmra.mxu0 %v566
        %v642 = vpop.f32.mrf.mxu0
        %v643 = vadd.f32 %v630, %v642
        %v644 = vpop.f32.mrf.mxu0
        %645 = vdwg.mxu0
        %646 = vmatpush.bf16.msra.mxu0 %v516
        %647 = vmatpush.bf16.msra.mxu0 %v512
        %648 = vmatpush.bf16.msra.mxu0 %v508
        %649 = vmatpush.bf16.msra.mxu0 %v504
        %650 = vmatpush.bf16.msra.mxu0 %v500
        %651 = vmatpush.bf16.msra.mxu0 %v496
        %652 = vmatpush.bf16.msra.mxu0 %v492
        %653 = vmatpush.bf16.msra.mxu0 %v488
        %654 = vmatmul.bf16.gmra.mxu0 %v362
        %v655 = vpop.f32.mrf.mxu0
        %v656 = vadd.f32 0.0, %v655
        %v657 = vpop.f32.mrf.mxu0
        %658 = vdwg.mxu0
        %659 = vmatpush.bf16.msra.mxu0 0
        %660 = vmatpush.bf16.msra.mxu0 0
        %661 = vmatpush.bf16.msra.mxu0 0
        %662 = vmatpush.bf16.msra.mxu0 0
        %663 = vmatpush.bf16.msra.mxu0 0
        %664 = vmatpush.bf16.msra.mxu0 0
        %665 = vmatpush.bf16.msra.mxu0 %v524
        %666 = vmatpush.bf16.msra.mxu0 %v520
        %667 = vmatmul.bf16.gmra.mxu0 %v566
        %v668 = vpop.f32.mrf.mxu0
        %v669 = vadd.f32 %v656, %v668
        %v670 = vpop.f32.mrf.mxu0
        %671 = vdwg.mxu0
        %v676 = vrot.slane %v617, 6
        %v677 = vrot.slane %v643, 4
        %v678 = vrot.slane %v669, 2
        %vm679 = vcmask 1041408
        %v680 = vsel %vm679, %v591, %v676
        %vm681 = vcmask 1045508
        %v682 = vsel %vm681, %v677, %v678
        %vm683 = vcmask 1043456
        %v684 = vsel %vm683, %v680, %v682
        %v686 = vadd.f32 %v319, %v684
        %687 = vst [vmem:[#allocation2] sm:$0xff] %v686
        // Predicated region
        $region56: #{generator2_forward.12} parent=46 // pred_check
          %p688 = pneg %p313
        $region57: #{generator2_forward.12} parent=46 // pred_check_branch
          %690 = sbr.rel (%p688) target = $region59
        $region58: #{generator2_forward.12} parent=46 // pred_region
          %v691 = vld [vmem:[#allocation2] sm:$0xff]
          %692 = vst [vmem:[%s310] sm:$0xff] %v691
        $region59: #{generator2_forward.12} parent=46 // pred_fallthru
          _
        %s693 = smul.u32 4, %s19
        %p694 = scmp.lt.s32.totalorder %s18, 0
        %s695 = scalar_select %p694, %s18, 0
        %p696 = scmp.lt.s32.totalorder %s693, 31
        %s697 = scalar_select %p696, %s693, 31
        %s698 = smul.addr %s695, 32
        %s699 = sadd.s32 %s697, %s698
        %s700 = smul.addr %s699, 2
        %s701 = scalar_lea.vmem %s2, %s700
        // Predicated region
        $region60: #{generator2_forward.12} parent=46 // pred_check
          %p702 = pneg %p108
        $region61: #{generator2_forward.12} parent=46 // pred_check_branch
          %704 = sbr.rel (%p702) target = $region63
        $region62: #{generator2_forward.12} parent=46 // pred_region
          %s705 = smul.u32 4, %s19
        $region63: #{generator2_forward.12} parent=46 // pred_fallthru
          _
      $region47: #{generator2_forward.12} parent=5 // pred_fallthru
        _
      %p706 = scmp.le.s32.totalorder 2, %s8
      // Predicated region
      $region64: #{generator2_forward.12} parent=5 // pred_check
        %p707 = pneg %p706
      $region65: #{generator2_forward.12} parent=5 // pred_check_branch
        %709 = sbr.rel (%p707) target = $region67
      $region66: #{generator2_forward.12} parent=5 // pred_region
        %s710 = ssub.s32 %s8, 2
        // Predicated region
        $region68: #{generator2_forward.12} parent=66 // pred_check
          %p711 = pneg %p114
        $region69: #{generator2_forward.12} parent=66 // pred_check_branch
          %713 = sbr.rel (%p711) target = $region71
        $region70: #{generator2_forward.12} parent=66 // pred_region
          %s714 = smul.u32 4, %s22
          %p715 = scmp.lt.s32.totalorder %s21, 0
          %s716 = scalar_select %p715, %s21, 0
          %p717 = scmp.lt.s32.totalorder %s714, 31
          %s718 = scalar_select %p717, %s714, 31
          %s719 = smul.addr %s716, 32
          %s720 = sadd.s32 %s718, %s719
          %s721 = smul.addr %s720, 2
          %s722 = scalar_lea.vmem %s2, %s721
        $region71: #{generator2_forward.12} parent=66 // pred_fallthru
          _
      $region67: #{generator2_forward.12} parent=5 // pred_fallthru
        _
    $region6: #{generator2_forward.12} parent=1 // loop_footer
      %s12 = sadd.s32 1, %s8
    $region7: #{generator2_forward.12} parent=1 // loop_footer_branch
      %7 = sbr.rel target = $region3
    $region8: #{generator2_forward.12} parent=1 // loop_exit
      _

// kernel: generator2_forward.13
$region0: #{generator2_forward.13}
  #allocation0 [shape = 'u32[]', space=smem, size = 0x4, offset = 0x4, fixed_abs, tag = 'smem constant byte address 0x4 - core index']
  #allocation1 [shape = 'u32[72,128]{1,0:T(1,128)}', space=vmem, size = 0x9000, scoped, tag = 'internal scratch']
  %s0 = inlined_call_operand.vmem [shape: f32[32,256], index: 0, kind: input, shape index: {}]
  %s1 = inlined_call_operand.vmem [shape: f32[1,256], index: 1, kind: output, shape index: {0}]
  %s2 = inlined_call_operand.vmem [shape: f32[1,256], index: 2, kind: output, shape index: {1}]
  %3 = xla_tuple %s1, %s2
  %s4 = sld [smem:[#allocation0]]
  $region26: #{generator2_forward.13} parent=0
    _
  %s6 = ssub.s32 1, %s4
  %s7 = scalar_select 0, %s6, %s4
  // Predicated region
  $region2: #{generator2_forward.13} parent=0 // pred_check
    _
  $region3: #{generator2_forward.13} parent=0 // pred_check_branch
    %9 = sbr.rel (0) target = $region5
  $region4: #{generator2_forward.13} parent=0 // pred_region
    _
  $region5: #{generator2_forward.13} parent=0 // pred_fallthru
    _
  %p10 = scmp.eq.s32.totalorder 0, 0
  // Predicated region
  $region6: #{generator2_forward.13} parent=0 // pred_check
    %p11 = pneg %p10
  $region7: #{generator2_forward.13} parent=0 // pred_check_branch
    %13 = sbr.rel (%p11) target = $region9
  $region8: #{generator2_forward.13} parent=0 // pred_region
    %v14 = vlaneseq
    %vm15 = vcmp.ge.s32.totalorder %v14, 0
    %vm16 = vcmp.lt.s32.totalorder %v14, 256
    %vm17 = vmand %vm15, %vm16
    %18 = vst.msk [vmem:[%s1] sm:$0x3] %vm17, 0.0
    %19 = vst.msk [vmem:[%s2] sm:$0x3] %vm17, 0.0
  $region9: #{generator2_forward.13} parent=0 // pred_fallthru
    _
  %v20 = vld [vmem:[%s0] sm:$0xff]
  %v21 = vld [vmem:[%s0 + $0x8] sm:$0xff]
  %v22 = vld [vmem:[%s0 + $0x10] sm:$0xff]
  %v23 = vld [vmem:[%s0 + $0x18] sm:$0xff]
  %v24 = vld [vmem:[%s0 + $0x20] sm:$0xff]
  %v25 = vld [vmem:[%s0 + $0x28] sm:$0xff]
  %v26 = vld [vmem:[%s0 + $0x30] sm:$0xff]
  %v27 = vld [vmem:[%s0 + $0x38] sm:$0xff]
  %v28 = vld [vmem:[%s1] sm:$0x3]
  %v29 = vadd.f32 %v20, %v22
  %v30 = vadd.f32 %v29, %v24
  %v31 = vadd.f32 %v30, %v26
  %v32 = vrot.slane %v31, 4
  %v33 = vadd.f32 %v31, %v32
  %v34 = vrot.slane %v33, 2
  %v35 = vadd.f32 %v33, %v34
  %v36 = vrot.slane %v35, 1
  %v37 = vadd.f32 %v35, %v36
  %v38 = vadd.f32 %v21, %v23
  %v39 = vadd.f32 %v38, %v25
  %v40 = vadd.f32 %v39, %v27
  %v41 = vrot.slane %v40, 4
  %v42 = vadd.f32 %v40, %v41
  %v43 = vrot.slane %v42, 2
  %v44 = vadd.f32 %v42, %v43
  %v45 = vrot.slane %v44, 1
  %v46 = vadd.f32 %v44, %v45
  %v49 = vrot.slane %v46, 7
  %vm50 = vcmask 1040384
  %v51 = vsel %vm50, %v37, %v49
  %v53 = vadd.f32 %v28, %v51
  %v54 = vlaneseq
  %vm55 = vcmp.ge.s32.totalorder %v54, 0
  %vm56 = vcmp.lt.s32.totalorder %v54, 256
  %vm57 = vmand %vm55, %vm56
  %58 = vst.msk [vmem:[%s1] sm:$0x3] %vm57, %v53
  %v59 = vld [vmem:[%s2] sm:$0x3]
  %v60 = vmul.f32 %v20, %v20
  %v61 = vmul.f32 %v21, %v21
  %v62 = vmul.f32 %v22, %v22
  %v63 = vmul.f32 %v23, %v23
  %v64 = vmul.f32 %v24, %v24
  %v65 = vmul.f32 %v25, %v25
  %v66 = vmul.f32 %v26, %v26
  %v67 = vmul.f32 %v27, %v27
  %v68 = vadd.f32 %v60, %v62
  %v69 = vadd.f32 %v68, %v64
  %v70 = vadd.f32 %v69, %v66
  %v71 = vrot.slane %v70, 4
  %v72 = vadd.f32 %v70, %v71
  %v73 = vrot.slane %v72, 2
  %v74 = vadd.f32 %v72, %v73
  %v75 = vrot.slane %v74, 1
  %v76 = vadd.f32 %v74, %v75
  %v77 = vadd.f32 %v61, %v63
  %v78 = vadd.f32 %v77, %v65
  %v79 = vadd.f32 %v78, %v67
  %v80 = vrot.slane %v79, 4
  %v81 = vadd.f32 %v79, %v80
  %v82 = vrot.slane %v81, 2
  %v83 = vadd.f32 %v81, %v82
  %v84 = vrot.slane %v83, 1
  %v85 = vadd.f32 %v83, %v84
  %v88 = vrot.slane %v85, 7
  %v89 = vsel %vm50, %v76, %v88
  %v91 = vadd.f32 %v59, %v89
  %92 = vst.msk [vmem:[%s2] sm:$0x3] %vm57, %v91
  // Predicated region
  $region10: #{generator2_forward.13} parent=0 // pred_check
    _
  $region11: #{generator2_forward.13} parent=0 // pred_check_branch
    %94 = sbr.rel (0) target = $region13
  $region12: #{generator2_forward.13} parent=0 // pred_region
    _
  $region13: #{generator2_forward.13} parent=0 // pred_fallthru
    _
  // Predicated region
  $region14: #{generator2_forward.13} parent=0 // pred_check
    _
  $region15: #{generator2_forward.13} parent=0 // pred_check_branch
    %96 = sbr.rel (0) target = $region17
  $region16: #{generator2_forward.13} parent=0 // pred_region
    _
  $region17: #{generator2_forward.13} parent=0 // pred_fallthru
    _
  // Predicated region
  $region18: #{generator2_forward.13} parent=0 // pred_check
    _
  $region19: #{generator2_forward.13} parent=0 // pred_check_branch
    %98 = sbr.rel (0) target = $region21
  $region20: #{generator2_forward.13} parent=0 // pred_region
    _
  $region21: #{generator2_forward.13} parent=0 // pred_fallthru
    _
  // Predicated region
  $region22: #{generator2_forward.13} parent=0 // pred_check
    _
  $region23: #{generator2_forward.13} parent=0 // pred_check_branch
    %100 = sbr.rel (0) target = $region25
  $region24: #{generator2_forward.13} parent=0 // pred_region
    _
  $region25: #{generator2_forward.13} parent=0 // pred_fallthru
    _

// kernel: generator2_forward.14
$region0: #{generator2_forward.14}
  #allocation0 [shape = 'u32[]', space=smem, size = 0x4, offset = 0x4, fixed_abs, tag = 'smem constant byte address 0x4 - core index']
  #allocation1 [shape = 'u32[72,128]{1,0:T(1,128)}', space=vmem, size = 0x9000, scoped, tag = 'internal scratch']
  #allocation2 [shape = 'f32[32,512]{1,0:T(8,128)}', space=vmem, size = 0x10000, scoped, tag = 'scratch operand']
  %s0 = inlined_call_operand.vmem [shape: f32[32,256], index: 0, kind: input, shape index: {}]
  %s1 = inlined_call_operand.vmem [shape: bf16[256,2048], index: 1, kind: input, shape index: {}]
  %s2 = inlined_call_operand.vmem [shape: f32[1,256], index: 2, kind: input, shape index: {}]
  %s3 = inlined_call_operand.vmem [shape: f32[1,256], index: 3, kind: input, shape index: {}]
  %s4 = inlined_call_operand.vmem [shape: f32[32,2048], index: 4, kind: output, shape index: {}]
  %s5 = sld [smem:[#allocation0]]
  $region99: #{generator2_forward.14} parent=0
    _
  %s7 = ssub.s32 1, %s5
  %s8 = scalar_select 0, %s7, %s5
  $region1: #{generator2_forward.14} parent=0
    #allocation3 [shape = 'u8[524288]{0}', space=vmem, size = 0x80000, scoped, tag = 'input window, operand 1']
    #allocation4 [shape = 'u8[131072]{0}', space=vmem, size = 0x20000, scoped, tag = 'output window, operand 0']
    loop: start=0, step=1, limit=6
    $region2: #{generator2_forward.14} parent=1 // loop_pre_header
      _
    $region3: #{generator2_forward.14} parent=1 // loop_header
      %s10 = sphi 0, %s14
      %p11 = scmp.ge.s32.totalorder %s10, 6
      %s17 = sphi 0, %s36
      %s18 = sphi 0, %s32
      %s19 = sphi 0, %s28
      %s20 = sphi 0, %s17
      %s21 = sphi 0, %s18
      %s22 = sphi 0, %s19
      %s23 = sphi 0, %s20
      %s24 = sphi 0, %s21
      %s25 = sphi 0, %s22
      %s41 = sphi 0, %s43
      %s44 = sphi 0, %s41
      %s45 = sphi 0, %s44
      %s61 = sphi 0, %s45
      %s69 = sphi 0, %s71
      %s72 = sphi 0, %s69
      %s73 = sphi 0, %s72
      %s89 = sphi 0, %s73
      %s95 = sphi 0, %s97
      %s98 = sphi 0, %s95
      %s99 = sphi 0, %s98
      %s115 = sphi 0, %s99
      %s121 = sphi 0, %s123
      %s124 = sphi 0, %s121
      %s125 = sphi 0, %s124
      %s141 = sphi 0, %s125
      %s149 = sphi 0, %s151
      %s152 = sphi 0, %s149
      %s153 = sphi 0, %s152
      %s169 = sphi 0, %s153
    $region4: #{generator2_forward.14} parent=1 // loop_header_branch
      %13 = sbr.rel (%p11) target = $region8
    $region5: #{generator2_forward.14} parent=1 // loop_body
      %s15 = ssub.s32 %s10, 1
      %s16 = ssub.s32 %s10, 2
      %s26 = sadd.s32 1, %s19
      %p27 = scmp.ge.s32.totalorder %s26, 1
      %s28 = scalar_select %p27, 0, %s26
      %s29 = sadd.s32 1, %s18
      %s30 = scalar_select %p27, %s29, %s18
      %p31 = scmp.ge.s32.totalorder %s30, 4
      %s32 = scalar_select %p31, 0, %s30
      %s33 = sadd.s32 1, %s17
      %s34 = scalar_select %p31, %s33, %s17
      %p35 = scmp.ge.s32.totalorder %s34, 1
      %s36 = scalar_select %p35, 0, %s34
      %s37 = ssub.s32 %s17, %s36
      %s38 = ssub.s32 %s19, %s28
      %s39 = sor.u32 %s37, %s38
      %p40 = scmp.eq.s32.totalorder %s39, 0
      %s42 = sadd.s32 %s41, 1
      %s43 = scalar_select %p40, %s41, %s42
      %p46 = pneg %p40
      %p47 = scmp.eq.s32.totalorder %s10, 3
      %p48 = por %p46, %p47
      %p49 = scmp.ne.s32.totalorder %s41, %s44
      %p50 = scmp.eq.s32.totalorder %s10, 0
      %p51 = por %p49, %p50
      %p52 = scmp.ne.s32.totalorder %s41, %s44
      %p53 = scmp.eq.s32.totalorder %s15, 3
      %p54 = por %p52, %p53
      %p55 = scmp.ne.s32.totalorder %s44, %s45
      %p56 = scmp.eq.s32.totalorder %s15, 0
      %p57 = por %p55, %p56
      %p58 = scmp.ne.s32.totalorder %s44, %s45
      %p59 = scmp.eq.s32.totalorder %s16, 3
      %p60 = por %p58, %p59
      %p62 = scmp.ne.s32.totalorder %s45, %s61
      %p63 = scmp.eq.s32.totalorder %s16, 0
      %p64 = por %p62, %p63
      %s65 = ssub.s32 %s19, %s28
      %s66 = ssub.s32 %s18, %s32
      %s67 = sor.u32 %s65, %s66
      %p68 = scmp.eq.s32.totalorder %s67, 0
      %s70 = sadd.s32 %s69, 1
      %s71 = scalar_select %p68, %s69, %s70
      %p74 = pneg %p68
      %p75 = scmp.eq.s32.totalorder %s10, 3
      %p76 = por %p74, %p75
      %p77 = scmp.ne.s32.totalorder %s69, %s72
      %p78 = scmp.eq.s32.totalorder %s10, 0
      %p79 = por %p77, %p78
      %p80 = scmp.ne.s32.totalorder %s69, %s72
      %p81 = scmp.eq.s32.totalorder %s15, 3
      %p82 = por %p80, %p81
      %p83 = scmp.ne.s32.totalorder %s72, %s73
      %p84 = scmp.eq.s32.totalorder %s15, 0
      %p85 = por %p83, %p84
      %p86 = scmp.ne.s32.totalorder %s72, %s73
      %p87 = scmp.eq.s32.totalorder %s16, 3
      %p88 = por %p86, %p87
      %p90 = scmp.ne.s32.totalorder %s73, %s89
      %p91 = scmp.eq.s32.totalorder %s16, 0
      %p92 = por %p90, %p91
      %s93 = ssub.s32 %s19, %s28
      %p94 = scmp.eq.s32.totalorder %s93, 0
      %s96 = sadd.s32 %s95, 1
      %s97 = scalar_select %p94, %s95, %s96
      %p100 = pneg %p94
      %p101 = scmp.eq.s32.totalorder %s10, 3
      %p102 = por %p100, %p101
      %p103 = scmp.ne.s32.totalorder %s95, %s98
      %p104 = scmp.eq.s32.totalorder %s10, 0
      %p105 = por %p103, %p104
      %p106 = scmp.ne.s32.totalorder %s95, %s98
      %p107 = scmp.eq.s32.totalorder %s15, 3
      %p108 = por %p106, %p107
      %p109 = scmp.ne.s32.totalorder %s98, %s99
      %p110 = scmp.eq.s32.totalorder %s15, 0
      %p111 = por %p109, %p110
      %p112 = scmp.ne.s32.totalorder %s98, %s99
      %p113 = scmp.eq.s32.totalorder %s16, 3
      %p114 = por %p112, %p113
      %p116 = scmp.ne.s32.totalorder %s99, %s115
      %p117 = scmp.eq.s32.totalorder %s16, 0
      %p118 = por %p116, %p117
      %s119 = ssub.s32 %s19, %s28
      %p120 = scmp.eq.s32.totalorder %s119, 0
      %s122 = sadd.s32 %s121, 1
      %s123 = scalar_select %p120, %s121, %s122
      %p126 = pneg %p120
      %p127 = scmp.eq.s32.totalorder %s10, 3
      %p128 = por %p126, %p127
      %p129 = scmp.ne.s32.totalorder %s121, %s124
      %p130 = scmp.eq.s32.totalorder %s10, 0
      %p131 = por %p129, %p130
      %p132 = scmp.ne.s32.totalorder %s121, %s124
      %p133 = scmp.eq.s32.totalorder %s15, 3
      %p134 = por %p132, %p133
      %p135 = scmp.ne.s32.totalorder %s124, %s125
      %p136 = scmp.eq.s32.totalorder %s15, 0
      %p137 = por %p135, %p136
      %p138 = scmp.ne.s32.totalorder %s124, %s125
      %p139 = scmp.eq.s32.totalorder %s16, 3
      %p140 = por %p138, %p139
      %p142 = scmp.ne.s32.totalorder %s125, %s141
      %p143 = scmp.eq.s32.totalorder %s16, 0
      %p144 = por %p142, %p143
      %s145 = ssub.s32 %s17, %s36
      %s146 = ssub.s32 %s18, %s32
      %s147 = sor.u32 %s145, %s146
      %p148 = scmp.eq.s32.totalorder %s147, 0
      %s150 = sadd.s32 %s149, 1
      %s151 = scalar_select %p148, %s149, %s150
      %p154 = pneg %p148
      %p155 = scmp.eq.s32.totalorder %s10, 3
      %p156 = por %p154, %p155
      %p157 = scmp.ne.s32.totalorder %s149, %s152
      %p158 = scmp.eq.s32.totalorder %s10, 0
      %p159 = por %p157, %p158
      %p160 = scmp.ne.s32.totalorder %s149, %s152
      %p161 = scmp.eq.s32.totalorder %s15, 3
      %p162 = por %p160, %p161
      %p163 = scmp.ne.s32.totalorder %s152, %s153
      %p164 = scmp.eq.s32.totalorder %s15, 0
      %p165 = por %p163, %p164
      %p166 = scmp.ne.s32.totalorder %s152, %s153
      %p167 = scmp.eq.s32.totalorder %s16, 3
      %p168 = por %p166, %p167
      %p170 = scmp.ne.s32.totalorder %s153, %s169
      %p171 = scmp.eq.s32.totalorder %s16, 0
      %p172 = por %p170, %p171
      %p173 = scmp.le.s32.totalorder 1, %s10
      %p174 = scmp.lt.s32.totalorder %s10, 5
      %p175 = pnand %p173, %p174
      %p176 = pneg %p175
      // Predicated region
      $region9: #{generator2_forward.14} parent=5 // pred_check
        _
      $region10: #{generator2_forward.14} parent=5 // pred_check_branch
        %178 = sbr.rel (%p175) target = $region12
      $region11: #{generator2_forward.14} parent=5 // pred_region
        %s179 = ssub.s32 %s10, 1
        // Predicated region
        $region13: #{generator2_forward.14} parent=11 // pred_check
          %p180 = pneg %p57
        $region14: #{generator2_forward.14} parent=11 // pred_check_branch
          %182 = sbr.rel (%p180) target = $region16
        $region15: #{generator2_forward.14} parent=11 // pred_region
          %s183 = smul.u32 4, %s20
          %s184 = smul.u32 2, %s22
          %p185 = scmp.lt.s32.totalorder %s183, 3
          %s186 = scalar_select %p185, %s183, 3
          %p187 = scmp.lt.s32.totalorder %s184, 1
          %s188 = scalar_select %p187, %s184, 1
          %s189 = smul.addr %s186, 2
          %s190 = sadd.s32 %s188, %s189
          %s191 = smul.addr %s190, 8
          %s192 = scalar_lea.vmem %s0, %s191
          %s193 = smul.u32 4, %s20
          %s194 = smul.u32 2, %s22
        $region16: #{generator2_forward.14} parent=11 // pred_fallthru
          _
        // Predicated region
        $region17: #{generator2_forward.14} parent=11 // pred_check
          %p195 = pneg %p111
        $region18: #{generator2_forward.14} parent=11 // pred_check_branch
          %197 = sbr.rel (%p195) target = $region20
        $region19: #{generator2_forward.14} parent=11 // pred_region
          %s198 = smul.u32 2, %s22
          %p199 = scmp.lt.s32.totalorder %s198, 1
          %s200 = scalar_select %p199, %s198, 1
          %s201 = scalar_lea.vmem %s2, %s200
          %s202 = smul.u32 2, %s22
        $region20: #{generator2_forward.14} parent=11 // pred_fallthru
          _
        // Predicated region
        $region21: #{generator2_forward.14} parent=11 // pred_check
          %p203 = pneg %p137
        $region22: #{generator2_forward.14} parent=11 // pred_check_branch
          %205 = sbr.rel (%p203) target = $region24
        $region23: #{generator2_forward.14} parent=11 // pred_region
          %s206 = smul.u32 2, %s22
          %p207 = scmp.lt.s32.totalorder %s206, 1
          %s208 = scalar_select %p207, %s206, 1
          %s209 = scalar_lea.vmem %s3, %s208
          %s210 = smul.u32 2, %s22
        $region24: #{generator2_forward.14} parent=11 // pred_fallthru
          _
      $region12: #{generator2_forward.14} parent=5 // pred_fallthru
        _
      %p211 = scmp.lt.s32.totalorder %s10, 4
      // Predicated region
      $region25: #{generator2_forward.14} parent=5 // pred_check
        %p212 = pneg %p211
      $region26: #{generator2_forward.14} parent=5 // pred_check_branch
        %214 = sbr.rel (%p212) target = $region28
      $region27: #{generator2_forward.14} parent=5 // pred_region
        // Predicated region
        $region29: #{generator2_forward.14} parent=27 // pred_check
          %p215 = pneg %p79
        $region30: #{generator2_forward.14} parent=27 // pred_check_branch
          %217 = sbr.rel (%p215) target = $region32
        $region31: #{generator2_forward.14} parent=27 // pred_region
          %s218 = sand.u32 %s69, 1
          %s219 = sand.u32 %s69, 1
          %s220 = smul.addr %s219, 512
          %s221 = scalar_lea.vmem [#allocation3], %s220
          %s222 = smul.u32 32, %s19
          %s223 = smul.u32 4, %s18
          %s224 = smul.addr %s222, 16
          %s225 = sadd.s32 %s223, %s224
          %s226 = smul.addr %s225, 4
          %s227 = scalar_lea.vmem %s1, %s226
          // Predicated region
          $region33: #{generator2_forward.14} parent=31 // pred_check
            _
          $region34: #{generator2_forward.14} parent=31 // pred_check_branch
            %229 = sbr.rel (0) target = $region36
          $region35: #{generator2_forward.14} parent=31 // pred_region
            // Predicated region
            $region37: #{generator2_forward.14} parent=35 // pred_check
              _
            $region38: #{generator2_forward.14} parent=35 // pred_check_branch
              %231 = sbr.rel (0) target = $region40
            $region39: #{generator2_forward.14} parent=35 // pred_region
              loop: start=0, step=1, limit=1
              $region41: #{generator2_forward.14} parent=39 // loop_pre_header
                _
              $region42: #{generator2_forward.14} parent=39 // loop_header
                %s233 = sphi 0, %s237
                %p234 = scmp.ge.s32.totalorder %s233, 1
                %s238 = sphi %s227, %s227
                %s239 = sphi %s221, %s221
              $region43: #{generator2_forward.14} parent=39 // loop_header_branch
                %236 = sbr.rel (%p234) target = $region47
              $region44: #{generator2_forward.14} parent=39 // loop_body
                %v240 = vld [vmem:[%s238] sm:$0xff]
                %241 = vst [vmem:[%s239] sm:$0xff] %v240
                %v242 = vld [vmem:[%s238 + $0x8] sm:$0xff]
                %243 = vst [vmem:[%s239 + $0x8] sm:$0xff] %v242
                %v244 = vld [vmem:[%s238 + $0x40] sm:$0xff]
                %245 = vst [vmem:[%s239 + $0x10] sm:$0xff] %v244
                %v246 = vld [vmem:[%s238 + $0x48] sm:$0xff]
                %247 = vst [vmem:[%s239 + $0x18] sm:$0xff] %v246
                %v248 = vld [vmem:[%s238 + $0x80] sm:$0xff]
                %249 = vst [vmem:[%s239 + $0x20] sm:$0xff] %v248
                %v250 = vld [vmem:[%s238 + $0x88] sm:$0xff]
                %251 = vst [vmem:[%s239 + $0x28] sm:$0xff] %v250
                %v252 = vld [vmem:[%s238 + $0xc0] sm:$0xff]
                %253 = vst [vmem:[%s239 + $0x30] sm:$0xff] %v252
                %v254 = vld [vmem:[%s238 + $0xc8] sm:$0xff]
                %255 = vst [vmem:[%s239 + $0x38] sm:$0xff] %v254
                %v256 = vld [vmem:[%s238 + $0x100] sm:$0xff]
                %257 = vst [vmem:[%s239 + $0x40] sm:$0xff] %v256
                %v258 = vld [vmem:[%s238 + $0x108] sm:$0xff]
                %259 = vst [vmem:[%s239 + $0x48] sm:$0xff] %v258
                %v260 = vld [vmem:[%s238 + $0x140] sm:$0xff]
                %261 = vst [vmem:[%s239 + $0x50] sm:$0xff] %v260
                %v262 = vld [vmem:[%s238 + $0x148] sm:$0xff]
                %263 = vst [vmem:[%s239 + $0x58] sm:$0xff] %v262
                %v264 = vld [vmem:[%s238 + $0x180] sm:$0xff]
                %265 = vst [vmem:[%s239 + $0x60] sm:$0xff] %v264
                %v266 = vld [vmem:[%s238 + $0x188] sm:$0xff]
                %267 = vst [vmem:[%s239 + $0x68] sm:$0xff] %v266
                %v268 = vld [vmem:[%s238 + $0x1c0] sm:$0xff]
                %269 = vst [vmem:[%s239 + $0x70] sm:$0xff] %v268
                %v270 = vld [vmem:[%s238 + $0x1c8] sm:$0xff]
                %271 = vst [vmem:[%s239 + $0x78] sm:$0xff] %v270
                %v272 = vld [vmem:[%s238 + $0x200] sm:$0xff]
                %273 = vst [vmem:[%s239 + $0x80] sm:$0xff] %v272
                %v274 = vld [vmem:[%s238 + $0x208] sm:$0xff]
                %275 = vst [vmem:[%s239 + $0x88] sm:$0xff] %v274
                %v276 = vld [vmem:[%s238 + $0x240] sm:$0xff]
                %277 = vst [vmem:[%s239 + $0x90] sm:$0xff] %v276
                %v278 = vld [vmem:[%s238 + $0x248] sm:$0xff]
                %279 = vst [vmem:[%s239 + $0x98] sm:$0xff] %v278
                %v280 = vld [vmem:[%s238 + $0x280] sm:$0xff]
                %281 = vst [vmem:[%s239 + $0xa0] sm:$0xff] %v280
                %v282 = vld [vmem:[%s238 + $0x288] sm:$0xff]
                %283 = vst [vmem:[%s239 + $0xa8] sm:$0xff] %v282
                %v284 = vld [vmem:[%s238 + $0x2c0] sm:$0xff]
                %285 = vst [vmem:[%s239 + $0xb0] sm:$0xff] %v284
                %v286 = vld [vmem:[%s238 + $0x2c8] sm:$0xff]
                %287 = vst [vmem:[%s239 + $0xb8] sm:$0xff] %v286
                %v288 = vld [vmem:[%s238 + $0x300] sm:$0xff]
                %289 = vst [vmem:[%s239 + $0xc0] sm:$0xff] %v288
                %v290 = vld [vmem:[%s238 + $0x308] sm:$0xff]
                %291 = vst [vmem:[%s239 + $0xc8] sm:$0xff] %v290
                %v292 = vld [vmem:[%s238 + $0x340] sm:$0xff]
                %293 = vst [vmem:[%s239 + $0xd0] sm:$0xff] %v292
                %v294 = vld [vmem:[%s238 + $0x348] sm:$0xff]
                %295 = vst [vmem:[%s239 + $0xd8] sm:$0xff] %v294
                %v296 = vld [vmem:[%s238 + $0x380] sm:$0xff]
                %297 = vst [vmem:[%s239 + $0xe0] sm:$0xff] %v296
                %v298 = vld [vmem:[%s238 + $0x388] sm:$0xff]
                %299 = vst [vmem:[%s239 + $0xe8] sm:$0xff] %v298
                %v300 = vld [vmem:[%s238 + $0x3c0] sm:$0xff]
                %301 = vst [vmem:[%s239 + $0xf0] sm:$0xff] %v300
                %v302 = vld [vmem:[%s238 + $0x3c8] sm:$0xff]
                %303 = vst [vmem:[%s239 + $0xf8] sm:$0xff] %v302
                %v304 = vld [vmem:[%s238 + $0x400] sm:$0xff]
                %305 = vst [vmem:[%s239 + $0x100] sm:$0xff] %v304
                %v306 = vld [vmem:[%s238 + $0x408] sm:$0xff]
                %307 = vst [vmem:[%s239 + $0x108] sm:$0xff] %v306
                %v308 = vld [vmem:[%s238 + $0x440] sm:$0xff]
                %309 = vst [vmem:[%s239 + $0x110] sm:$0xff] %v308
                %v310 = vld [vmem:[%s238 + $0x448] sm:$0xff]
                %311 = vst [vmem:[%s239 + $0x118] sm:$0xff] %v310
                %v312 = vld [vmem:[%s238 + $0x480] sm:$0xff]
                %313 = vst [vmem:[%s239 + $0x120] sm:$0xff] %v312
                %v314 = vld [vmem:[%s238 + $0x488] sm:$0xff]
                %315 = vst [vmem:[%s239 + $0x128] sm:$0xff] %v314
                %v316 = vld [vmem:[%s238 + $0x4c0] sm:$0xff]
                %317 = vst [vmem:[%s239 + $0x130] sm:$0xff] %v316
                %v318 = vld [vmem:[%s238 + $0x4c8] sm:$0xff]
                %319 = vst [vmem:[%s239 + $0x138] sm:$0xff] %v318
                %v320 = vld [vmem:[%s238 + $0x500] sm:$0xff]
                %321 = vst [vmem:[%s239 + $0x140] sm:$0xff] %v320
                %v322 = vld [vmem:[%s238 + $0x508] sm:$0xff]
                %323 = vst [vmem:[%s239 + $0x148] sm:$0xff] %v322
                %v324 = vld [vmem:[%s238 + $0x540] sm:$0xff]
                %325 = vst [vmem:[%s239 + $0x150] sm:$0xff] %v324
                %v326 = vld [vmem:[%s238 + $0x548] sm:$0xff]
                %327 = vst [vmem:[%s239 + $0x158] sm:$0xff] %v326
                %v328 = vld [vmem:[%s238 + $0x580] sm:$0xff]
                %329 = vst [vmem:[%s239 + $0x160] sm:$0xff] %v328
                %v330 = vld [vmem:[%s238 + $0x588] sm:$0xff]
                %331 = vst [vmem:[%s239 + $0x168] sm:$0xff] %v330
                %v332 = vld [vmem:[%s238 + $0x5c0] sm:$0xff]
                %333 = vst [vmem:[%s239 + $0x170] sm:$0xff] %v332
                %v334 = vld [vmem:[%s238 + $0x5c8] sm:$0xff]
                %335 = vst [vmem:[%s239 + $0x178] sm:$0xff] %v334
                %v336 = vld [vmem:[%s238 + $0x600] sm:$0xff]
                %337 = vst [vmem:[%s239 + $0x180] sm:$0xff] %v336
                %v338 = vld [vmem:[%s238 + $0x608] sm:$0xff]
                %339 = vst [vmem:[%s239 + $0x188] sm:$0xff] %v338
                %v340 = vld [vmem:[%s238 + $0x640] sm:$0xff]
                %341 = vst [vmem:[%s239 + $0x190] sm:$0xff] %v340
                %v342 = vld [vmem:[%s238 + $0x648] sm:$0xff]
                %343 = vst [vmem:[%s239 + $0x198] sm:$0xff] %v342
                %v344 = vld [vmem:[%s238 + $0x680] sm:$0xff]
                %345 = vst [vmem:[%s239 + $0x1a0] sm:$0xff] %v344
                %v346 = vld [vmem:[%s238 + $0x688] sm:$0xff]
                %347 = vst [vmem:[%s239 + $0x1a8] sm:$0xff] %v346
                %v348 = vld [vmem:[%s238 + $0x6c0] sm:$0xff]
                %349 = vst [vmem:[%s239 + $0x1b0] sm:$0xff] %v348
                %v350 = vld [vmem:[%s238 + $0x6c8] sm:$0xff]
                %351 = vst [vmem:[%s239 + $0x1b8] sm:$0xff] %v350
                %v352 = vld [vmem:[%s238 + $0x700] sm:$0xff]
                %353 = vst [vmem:[%s239 + $0x1c0] sm:$0xff] %v352
                %v354 = vld [vmem:[%s238 + $0x708] sm:$0xff]
                %355 = vst [vmem:[%s239 + $0x1c8] sm:$0xff] %v354
                %v356 = vld [vmem:[%s238 + $0x740] sm:$0xff]
                %357 = vst [vmem:[%s239 + $0x1d0] sm:$0xff] %v356
                %v358 = vld [vmem:[%s238 + $0x748] sm:$0xff]
                %359 = vst [vmem:[%s239 + $0x1d8] sm:$0xff] %v358
                %v360 = vld [vmem:[%s238 + $0x780] sm:$0xff]
                %361 = vst [vmem:[%s239 + $0x1e0] sm:$0xff] %v360
                %v362 = vld [vmem:[%s238 + $0x788] sm:$0xff]
                %363 = vst [vmem:[%s239 + $0x1e8] sm:$0xff] %v362
                %v364 = vld [vmem:[%s238 + $0x7c0] sm:$0xff]
                %365 = vst [vmem:[%s239 + $0x1f0] sm:$0xff] %v364
                %v366 = vld [vmem:[%s238 + $0x7c8] sm:$0xff]
                %367 = vst [vmem:[%s239 + $0x1f8] sm:$0xff] %v366
              $region45: #{generator2_forward.14} parent=39 // loop_footer
                %s237 = sadd.s32 1, %s233
              $region46: #{generator2_forward.14} parent=39 // loop_footer_branch
                %232 = sbr.rel target = $region42
              $region47: #{generator2_forward.14} parent=39 // loop_exit
                _
            $region40: #{generator2_forward.14} parent=35 // pred_fallthru
              _
            // Predicated region
            $region48: #{generator2_forward.14} parent=35 // pred_check
              _
            $region49: #{generator2_forward.14} parent=35 // pred_check_branch
              %369 = sbr.rel target = $region51
            $region50: #{generator2_forward.14} parent=35 // pred_region
              _
            $region51: #{generator2_forward.14} parent=35 // pred_fallthru
              _
          $region36: #{generator2_forward.14} parent=31 // pred_fallthru
            _
          %370 = vnop
        $region32: #{generator2_forward.14} parent=27 // pred_fallthru
          _
      $region28: #{generator2_forward.14} parent=5 // pred_fallthru
        _
      %p371 = scmp.le.s32.totalorder 1, %s10
      %p372 = scmp.lt.s32.totalorder %s10, 5
      %p373 = pnand %p371, %p372
      %p374 = pneg %p373
      // Predicated region
      $region52: #{generator2_forward.14} parent=5 // pred_check
        _
      $region53: #{generator2_forward.14} parent=5 // pred_check_branch
        %376 = sbr.rel (%p373) target = $region55
      $region54: #{generator2_forward.14} parent=5 // pred_region
        %s377 = ssub.s32 %s10, 1
        %s378 = sand.u32 %s72, 1
        %s379 = sand.u32 %s72, 1
        %s380 = smul.addr %s379, 512
        %s381 = scalar_lea.vmem [#allocation3], %s380
        // Predicated region
        $region56: #{generator2_forward.14} parent=54 // pred_check
          %p382 = pneg %p85
        $region57: #{generator2_forward.14} parent=54 // pred_check_branch
          %384 = sbr.rel (%p382) target = $region59
        $region58: #{generator2_forward.14} parent=54 // pred_region
          _
        $region59: #{generator2_forward.14} parent=54 // pred_fallthru
          _
        %s385 = smul.u32 4, %s20
        %s386 = smul.u32 2, %s22
        %p387 = scmp.lt.s32.totalorder %s385, 3
        %s388 = scalar_select %p387, %s385, 3
        %p389 = scmp.lt.s32.totalorder %s386, 1
        %s390 = scalar_select %p389, %s386, 1
        %s391 = smul.addr %s388, 2
        %s392 = sadd.s32 %s390, %s391
        %s393 = smul.addr %s392, 8
        %s394 = scalar_lea.vmem %s0, %s393
        %p395 = pneg %p57
        %p396 = pneg %p54
        %s397 = sand.u32 %s72, 1
        %s398 = sand.u32 %s72, 1
        %s399 = smul.addr %s398, 512
        %s400 = scalar_lea.vmem [#allocation3], %s399
        %p401 = pneg %p85
        %p402 = pneg %p82
        %s403 = smul.u32 2, %s22
        %p404 = scmp.lt.s32.totalorder %s403, 1
        %s405 = scalar_select %p404, %s403, 1
        %s406 = scalar_lea.vmem %s2, %s405
        %p407 = pneg %p111
        %p408 = pneg %p108
        %s409 = smul.u32 2, %s22
        %p410 = scmp.lt.s32.totalorder %s409, 1
        %s411 = scalar_select %p410, %s409, 1
        %s412 = scalar_lea.vmem %s3, %s411
        %p413 = pneg %p137
        %p414 = pneg %p134
        %p415 = pneg %p165
        %p416 = pneg %p162
        %s417 = sand.u32 %s152, 1
        %s418 = sand.u32 %s152, 1
        %s419 = smul.addr %s418, 128
        %s420 = scalar_lea.vmem [#allocation4], %s419
        %s421 = smul.u32 4, %s20
        %s422 = smul.u32 2, %s22
        %p423 = scmp.lt.s32.totalorder %s421, 3
        %s424 = scalar_select %p423, %s421, 3
        %p425 = scmp.lt.s32.totalorder %s422, 1
        %s426 = scalar_select %p425, %s422, 1
        %s427 = smul.addr %s424, 2
        %s428 = sadd.s32 %s426, %s427
        %s429 = smul.addr %s428, 8
        %s430 = scalar_lea.vmem %s0, %s429
        %s431 = smul.u32 4, %s20
        %s432 = smul.u32 2, %s22
        %s433 = smul.u32 32, %s22
        %s434 = smul.u32 4, %s21
        %s435 = smul.u32 2, %s22
        %p436 = scmp.lt.s32.totalorder %s435, 1
        %s437 = scalar_select %p436, %s435, 1
        %s438 = scalar_lea.vmem %s2, %s437
        %s439 = smul.u32 2, %s22
        %s440 = smul.u32 2, %s22
        %p441 = scmp.lt.s32.totalorder %s440, 1
        %s442 = scalar_select %p441, %s440, 1
        %s443 = scalar_lea.vmem %s3, %s442
        %s444 = smul.u32 2, %s22
        %s445 = smul.u32 4, %s20
        %s446 = smul.u32 4, %s21
        %p447 = scmp.eq.s32.totalorder %s22, 0
        // Predicated region
        $region60: #{generator2_forward.14} parent=54 // pred_check
          %p448 = pneg %p447
        $region61: #{generator2_forward.14} parent=54 // pred_check_branch
          %450 = sbr.rel (%p448) target = $region63
        $region62: #{generator2_forward.14} parent=54 // pred_region
          %451 = vst [vmem:[#allocation2] sm:$0xff] 0.0
          %452 = vst [vmem:[#allocation2 + $0x8] sm:$0xff] 0.0
          %453 = vst [vmem:[#allocation2 + $0x10] sm:$0xff] 0.0
          %454 = vst [vmem:[#allocation2 + $0x18] sm:$0xff] 0.0
          %455 = vst [vmem:[#allocation2 + $0x20] sm:$0xff] 0.0
          %456 = vst [vmem:[#allocation2 + $0x28] sm:$0xff] 0.0
          %457 = vst [vmem:[#allocation2 + $0x30] sm:$0xff] 0.0
          %458 = vst [vmem:[#allocation2 + $0x38] sm:$0xff] 0.0
          %459 = vst [vmem:[#allocation2 + $0x40] sm:$0xff] 0.0
          %460 = vst [vmem:[#allocation2 + $0x48] sm:$0xff] 0.0
          %461 = vst [vmem:[#allocation2 + $0x50] sm:$0xff] 0.0
          %462 = vst [vmem:[#allocation2 + $0x58] sm:$0xff] 0.0
          %463 = vst [vmem:[#allocation2 + $0x60] sm:$0xff] 0.0
          %464 = vst [vmem:[#allocation2 + $0x68] sm:$0xff] 0.0
          %465 = vst [vmem:[#allocation2 + $0x70] sm:$0xff] 0.0
          %466 = vst [vmem:[#allocation2 + $0x78] sm:$0xff] 0.0
        $region63: #{generator2_forward.14} parent=54 // pred_fallthru
          _
        %v467 = vld [vmem:[%s430] sm:$0xff]
        %v468 = vld [vmem:[%s430 + $0x8] sm:$0xff]
        %v469 = vld [vmem:[%s430 + $0x10] sm:$0xff]
        %v470 = vld [vmem:[%s430 + $0x18] sm:$0xff]
        %v471 = vld [vmem:[%s430 + $0x20] sm:$0xff]
        %v472 = vld [vmem:[%s430 + $0x28] sm:$0xff]
        %v473 = vld [vmem:[%s430 + $0x30] sm:$0xff]
        %v474 = vld [vmem:[%s430 + $0x38] sm:$0xff]
        %v475 = vld [vmem:[%s438] sm:$0x3]
        %v477 = vperm.slane %v475, 0
        %v478 = vperm.slane %v475, 1
        %v481 = vmul.f32 %v467, %v477
        %v482 = vmul.f32 %v468, %v478
        %v483 = vmul.f32 %v469, %v477
        %v484 = vmul.f32 %v470, %v478
        %v485 = vmul.f32 %v471, %v477
        %v486 = vmul.f32 %v472, %v478
        %v487 = vmul.f32 %v473, %v477
        %v488 = vmul.f32 %v474, %v478
        %v489 = vld [vmem:[%s443] sm:$0x3]
        %v491 = vperm.slane %v489, 0
        %v492 = vperm.slane %v489, 1
        %v495 = vadd.f32 %v481, %v491
        %v496 = vadd.f32 %v482, %v492
        %v497 = vadd.f32 %v483, %v491
        %v498 = vadd.f32 %v484, %v492
        %v499 = vadd.f32 %v485, %v491
        %v500 = vadd.f32 %v486, %v492
        %v501 = vadd.f32 %v487, %v491
        %v502 = vadd.f32 %v488, %v492
        %v503 = vmax.f32 %v495, 0.0
        %v504 = vmax.f32 %v496, 0.0
        %v505 = vmax.f32 %v497, 0.0
        %v506 = vmax.f32 %v498, 0.0
        %v507 = vmax.f32 %v499, 0.0
        %v508 = vmax.f32 %v500, 0.0
        %v509 = vmax.f32 %v501, 0.0
        %v510 = vmax.f32 %v502, 0.0
        %v511 = vld [vmem:[#allocation2] sm:$0xff]
        %v512 = vld [vmem:[#allocation2 + $0x8] sm:$0xff]
        %v513 = vld [vmem:[#allocation2 + $0x10] sm:$0xff]
        %v514 = vld [vmem:[#allocation2 + $0x18] sm:$0xff]
        %v515 = vld [vmem:[#allocation2 + $0x20] sm:$0xff]
        %v516 = vld [vmem:[#allocation2 + $0x28] sm:$0xff]
        %v517 = vld [vmem:[#allocation2 + $0x30] sm:$0xff]
        %v518 = vld [vmem:[#allocation2 + $0x38] sm:$0xff]
        %v519 = vld [vmem:[#allocation2 + $0x40] sm:$0xff]
        %v520 = vld [vmem:[#allocation2 + $0x48] sm:$0xff]
        %v521 = vld [vmem:[#allocation2 + $0x50] sm:$0xff]
        %v522 = vld [vmem:[#allocation2 + $0x58] sm:$0xff]
        %v523 = vld [vmem:[#allocation2 + $0x60] sm:$0xff]
        %v524 = vld [vmem:[#allocation2 + $0x68] sm:$0xff]
        %v525 = vld [vmem:[#allocation2 + $0x70] sm:$0xff]
        %v526 = vld [vmem:[#allocation2 + $0x78] sm:$0xff]
        %v527 = vpack.c.bf16 %v505, %v503
        %v528 = vpack.c.bf16 %v506, %v504
        %v529 = vpack.c.bf16 %v509, %v507
        %v530 = vpack.c.bf16 %v510, %v508
        %v531 = vld [vmem:[%s381] sm:$0xff]
        %v532 = vld [vmem:[%s381 + $0x8] sm:$0xff]
        %v533 = vld [vmem:[%s381 + $0x10] sm:$0xff]
        %v534 = vld [vmem:[%s381 + $0x18] sm:$0xff]
        %v535 = vld [vmem:[%s381 + $0x20] sm:$0xff]
        %v536 = vld [vmem:[%s381 + $0x28] sm:$0xff]
        %v537 = vld [vmem:[%s381 + $0x30] sm:$0xff]
        %v538 = vld [vmem:[%s381 + $0x38] sm:$0xff]
        %v539 = vld [vmem:[%s381 + $0x40] sm:$0xff]
        %v540 = vld [vmem:[%s381 + $0x48] sm:$0xff]
        %v541 = vld [vmem:[%s381 + $0x50] sm:$0xff]
        %v542 = vld [vmem:[%s381 + $0x58] sm:$0xff]
        %v543 = vld [vmem:[%s381 + $0x60] sm:$0xff]
        %v544 = vld [vmem:[%s381 + $0x68] sm:$0xff]
        %v545 = vld [vmem:[%s381 + $0x70] sm:$0xff]
        %v546 = vld [vmem:[%s381 + $0x78] sm:$0xff]
        %v547 = vld [vmem:[%s381 + $0x80] sm:$0xff]
        %v548 = vld [vmem:[%s381 + $0x88] sm:$0xff]
        %v549 = vld [vmem:[%s381 + $0x90] sm:$0xff]
        %v550 = vld [vmem:[%s381 + $0x98] sm:$0xff]
        %v551 = vld [vmem:[%s381 + $0xa0] sm:$0xff]
        %v552 = vld [vmem:[%s381 + $0xa8] sm:$0xff]
        %v553 = vld [vmem:[%s381 + $0xb0] sm:$0xff]
        %v554 = vld [vmem:[%s381 + $0xb8] sm:$0xff]
        %v555 = vld [vmem:[%s381 + $0xc0] sm:$0xff]
        %v556 = vld [vmem:[%s381 + $0xc8] sm:$0xff]
        %v557 = vld [vmem:[%s381 + $0xd0] sm:$0xff]
        %v558 = vld [vmem:[%s381 + $0xd8] sm:$0xff]
        %v559 = vld [vmem:[%s381 + $0xe0] sm:$0xff]
        %v560 = vld [vmem:[%s381 + $0xe8] sm:$0xff]
        %v561 = vld [vmem:[%s381 + $0xf0] sm:$0xff]
        %v562 = vld [vmem:[%s381 + $0xf8] sm:$0xff]
        %v563 = vld [vmem:[%s381 + $0x100] sm:$0xff]
        %v564 = vld [vmem:[%s381 + $0x108] sm:$0xff]
        %v565 = vld [vmem:[%s381 + $0x110] sm:$0xff]
        %v566 = vld [vmem:[%s381 + $0x118] sm:$0xff]
        %v567 = vld [vmem:[%s381 + $0x120] sm:$0xff]
        %v568 = vld [vmem:[%s381 + $0x128] sm:$0xff]
        %v569 = vld [vmem:[%s381 + $0x130] sm:$0xff]
        %v570 = vld [vmem:[%s381 + $0x138] sm:$0xff]
        %v571 = vld [vmem:[%s381 + $0x140] sm:$0xff]
        %v572 = vld [vmem:[%s381 + $0x148] sm:$0xff]
        %v573 = vld [vmem:[%s381 + $0x150] sm:$0xff]
        %v574 = vld [vmem:[%s381 + $0x158] sm:$0xff]
        %v575 = vld [vmem:[%s381 + $0x160] sm:$0xff]
        %v576 = vld [vmem:[%s381 + $0x168] sm:$0xff]
        %v577 = vld [vmem:[%s381 + $0x170] sm:$0xff]
        %v578 = vld [vmem:[%s381 + $0x178] sm:$0xff]
        %v579 = vld [vmem:[%s381 + $0x180] sm:$0xff]
        %v580 = vld [vmem:[%s381 + $0x188] sm:$0xff]
        %v581 = vld [vmem:[%s381 + $0x190] sm:$0xff]
        %v582 = vld [vmem:[%s381 + $0x198] sm:$0xff]
        %v583 = vld [vmem:[%s381 + $0x1a0] sm:$0xff]
        %v584 = vld [vmem:[%s381 + $0x1a8] sm:$0xff]
        %v585 = vld [vmem:[%s381 + $0x1b0] sm:$0xff]
        %v586 = vld [vmem:[%s381 + $0x1b8] sm:$0xff]
        %v587 = vld [vmem:[%s381 + $0x1c0] sm:$0xff]
        %v588 = vld [vmem:[%s381 + $0x1c8] sm:$0xff]
        %v589 = vld [vmem:[%s381 + $0x1d0] sm:$0xff]
        %v590 = vld [vmem:[%s381 + $0x1d8] sm:$0xff]
        %v591 = vld [vmem:[%s381 + $0x1e0] sm:$0xff]
        %v592 = vld [vmem:[%s381 + $0x1e8] sm:$0xff]
        %v593 = vld [vmem:[%s381 + $0x1f0] sm:$0xff]
        %v594 = vld [vmem:[%s381 + $0x1f8] sm:$0xff]
        %v659 = vunpack.c.l.b16 %v531
        %v660 = vunpack.c.h.b16 %v531
        %v661 = vunpack.c.l.b16 %v532
        %v662 = vunpack.c.h.b16 %v532
        %v663 = vunpack.c.l.b16 %v533
        %v664 = vunpack.c.h.b16 %v533
        %v665 = vunpack.c.l.b16 %v534
        %v666 = vunpack.c.h.b16 %v534
        %v667 = vunpack.c.l.b16 %v535
        %v668 = vunpack.c.h.b16 %v535
        %v669 = vunpack.c.l.b16 %v536
        %v670 = vunpack.c.h.b16 %v536
        %v671 = vunpack.c.l.b16 %v537
        %v672 = vunpack.c.h.b16 %v537
        %v673 = vunpack.c.l.b16 %v538
        %v674 = vunpack.c.h.b16 %v538
        %v675 = vunpack.c.l.b16 %v539
        %v676 = vunpack.c.h.b16 %v539
        %v677 = vunpack.c.l.b16 %v540
        %v678 = vunpack.c.h.b16 %v540
        %v679 = vunpack.c.l.b16 %v541
        %v680 = vunpack.c.h.b16 %v541
        %v681 = vunpack.c.l.b16 %v542
        %v682 = vunpack.c.h.b16 %v542
        %v683 = vunpack.c.l.b16 %v543
        %v684 = vunpack.c.h.b16 %v543
        %v685 = vunpack.c.l.b16 %v544
        %v686 = vunpack.c.h.b16 %v544
        %v687 = vunpack.c.l.b16 %v545
        %v688 = vunpack.c.h.b16 %v545
        %v689 = vunpack.c.l.b16 %v546
        %v690 = vunpack.c.h.b16 %v546
        %v691 = vunpack.c.l.b16 %v547
        %v692 = vunpack.c.h.b16 %v547
        %v693 = vunpack.c.l.b16 %v548
        %v694 = vunpack.c.h.b16 %v548
        %v695 = vunpack.c.l.b16 %v549
        %v696 = vunpack.c.h.b16 %v549
        %v697 = vunpack.c.l.b16 %v550
        %v698 = vunpack.c.h.b16 %v550
        %v699 = vunpack.c.l.b16 %v551
        %v700 = vunpack.c.h.b16 %v551
        %v701 = vunpack.c.l.b16 %v552
        %v702 = vunpack.c.h.b16 %v552
        %v703 = vunpack.c.l.b16 %v553
        %v704 = vunpack.c.h.b16 %v553
        %v705 = vunpack.c.l.b16 %v554
        %v706 = vunpack.c.h.b16 %v554
        %v707 = vunpack.c.l.b16 %v555
        %v708 = vunpack.c.h.b16 %v555
        %v709 = vunpack.c.l.b16 %v556
        %v710 = vunpack.c.h.b16 %v556
        %v711 = vunpack.c.l.b16 %v557
        %v712 = vunpack.c.h.b16 %v557
        %v713 = vunpack.c.l.b16 %v558
        %v714 = vunpack.c.h.b16 %v558
        %v715 = vunpack.c.l.b16 %v559
        %v716 = vunpack.c.h.b16 %v559
        %v717 = vunpack.c.l.b16 %v560
        %v718 = vunpack.c.h.b16 %v560
        %v719 = vunpack.c.l.b16 %v561
        %v720 = vunpack.c.h.b16 %v561
        %v721 = vunpack.c.l.b16 %v562
        %v722 = vunpack.c.h.b16 %v562
        %v723 = vunpack.c.l.b16 %v563
        %v724 = vunpack.c.h.b16 %v563
        %v725 = vunpack.c.l.b16 %v564
        %v726 = vunpack.c.h.b16 %v564
        %v727 = vunpack.c.l.b16 %v565
        %v728 = vunpack.c.h.b16 %v565
        %v729 = vunpack.c.l.b16 %v566
        %v730 = vunpack.c.h.b16 %v566
        %v731 = vunpack.c.l.b16 %v567
        %v732 = vunpack.c.h.b16 %v567
        %v733 = vunpack.c.l.b16 %v568
        %v734 = vunpack.c.h.b16 %v568
        %v735 = vunpack.c.l.b16 %v569
        %v736 = vunpack.c.h.b16 %v569
        %v737 = vunpack.c.l.b16 %v570
        %v738 = vunpack.c.h.b16 %v570
        %v739 = vunpack.c.l.b16 %v571
        %v740 = vunpack.c.h.b16 %v571
        %v741 = vunpack.c.l.b16 %v572
        %v742 = vunpack.c.h.b16 %v572
        %v743 = vunpack.c.l.b16 %v573
        %v744 = vunpack.c.h.b16 %v573
        %v745 = vunpack.c.l.b16 %v574
        %v746 = vunpack.c.h.b16 %v574
        %v747 = vunpack.c.l.b16 %v575
        %v748 = vunpack.c.h.b16 %v575
        %v749 = vunpack.c.l.b16 %v576
        %v750 = vunpack.c.h.b16 %v576
        %v751 = vunpack.c.l.b16 %v577
        %v752 = vunpack.c.h.b16 %v577
        %v753 = vunpack.c.l.b16 %v578
        %v754 = vunpack.c.h.b16 %v578
        %v755 = vunpack.c.l.b16 %v579
        %v756 = vunpack.c.h.b16 %v579
        %v757 = vunpack.c.l.b16 %v580
        %v758 = vunpack.c.h.b16 %v580
        %v759 = vunpack.c.l.b16 %v581
        %v760 = vunpack.c.h.b16 %v581
        %v761 = vunpack.c.l.b16 %v582
        %v762 = vunpack.c.h.b16 %v582
        %v763 = vunpack.c.l.b16 %v583
        %v764 = vunpack.c.h.b16 %v583
        %v765 = vunpack.c.l.b16 %v584
        %v766 = vunpack.c.h.b16 %v584
        %v767 = vunpack.c.l.b16 %v585
        %v768 = vunpack.c.h.b16 %v585
        %v769 = vunpack.c.l.b16 %v586
        %v770 = vunpack.c.h.b16 %v586
        %v771 = vunpack.c.l.b16 %v587
        %v772 = vunpack.c.h.b16 %v587
        %v773 = vunpack.c.l.b16 %v588
        %v774 = vunpack.c.h.b16 %v588
        %v775 = vunpack.c.l.b16 %v589
        %v776 = vunpack.c.h.b16 %v589
        %v777 = vunpack.c.l.b16 %v590
        %v778 = vunpack.c.h.b16 %v590
        %v779 = vunpack.c.l.b16 %v591
        %v780 = vunpack.c.h.b16 %v591
        %v781 = vunpack.c.l.b16 %v592
        %v782 = vunpack.c.h.b16 %v592
        %v783 = vunpack.c.l.b16 %v593
        %v784 = vunpack.c.h.b16 %v593
        %v785 = vunpack.c.l.b16 %v594
        %v786 = vunpack.c.h.b16 %v594
        %v787 = vpack.c.b16 %v663, %v659
        %v788 = vpack.c.b16 %v664, %v660
        %v789 = vpack.c.b16 %v665, %v661
        %v790 = vpack.c.b16 %v666, %v662
        %v791 = vpack.c.b16 %v671, %v667
        %v792 = vpack.c.b16 %v672, %v668
        %v793 = vpack.c.b16 %v673, %v669
        %v794 = vpack.c.b16 %v674, %v670
        %v795 = vpack.c.b16 %v679, %v675
        %v796 = vpack.c.b16 %v680, %v676
        %v797 = vpack.c.b16 %v681, %v677
        %v798 = vpack.c.b16 %v682, %v678
        %v799 = vpack.c.b16 %v687, %v683
        %v800 = vpack.c.b16 %v688, %v684
        %v801 = vpack.c.b16 %v689, %v685
        %v802 = vpack.c.b16 %v690, %v686
        %v803 = vpack.c.b16 %v695, %v691
        %v804 = vpack.c.b16 %v696, %v692
        %v805 = vpack.c.b16 %v697, %v693
        %v806 = vpack.c.b16 %v698, %v694
        %v807 = vpack.c.b16 %v703, %v699
        %v808 = vpack.c.b16 %v704, %v700
        %v809 = vpack.c.b16 %v705, %v701
        %v810 = vpack.c.b16 %v706, %v702
        %v811 = vpack.c.b16 %v711, %v707
        %v812 = vpack.c.b16 %v712, %v708
        %v813 = vpack.c.b16 %v713, %v709
        %v814 = vpack.c.b16 %v714, %v710
        %v815 = vpack.c.b16 %v719, %v715
        %v816 = vpack.c.b16 %v720, %v716
        %v817 = vpack.c.b16 %v721, %v717
        %v818 = vpack.c.b16 %v722, %v718
        %v819 = vpack.c.b16 %v727, %v723
        %v820 = vpack.c.b16 %v728, %v724
        %v821 = vpack.c.b16 %v729, %v725
        %v822 = vpack.c.b16 %v730, %v726
        %v823 = vpack.c.b16 %v735, %v731
        %v824 = vpack.c.b16 %v736, %v732
        %v825 = vpack.c.b16 %v737, %v733
        %v826 = vpack.c.b16 %v738, %v734
        %v827 = vpack.c.b16 %v743, %v739
        %v828 = vpack.c.b16 %v744, %v740
        %v829 = vpack.c.b16 %v745, %v741
        %v830 = vpack.c.b16 %v746, %v742
        %v831 = vpack.c.b16 %v751, %v747
        %v832 = vpack.c.b16 %v752, %v748
        %v833 = vpack.c.b16 %v753, %v749
        %v834 = vpack.c.b16 %v754, %v750
        %v835 = vpack.c.b16 %v759, %v755
        %v836 = vpack.c.b16 %v760, %v756
        %v837 = vpack.c.b16 %v761, %v757
        %v838 = vpack.c.b16 %v762, %v758
        %v839 = vpack.c.b16 %v767, %v763
        %v840 = vpack.c.b16 %v768, %v764
        %v841 = vpack.c.b16 %v769, %v765
        %v842 = vpack.c.b16 %v770, %v766
        %v843 = vpack.c.b16 %v775, %v771
        %v844 = vpack.c.b16 %v776, %v772
        %v845 = vpack.c.b16 %v777, %v773
        %v846 = vpack.c.b16 %v778, %v774
        %v847 = vpack.c.b16 %v783, %v779
        %v848 = vpack.c.b16 %v784, %v780
        %v849 = vpack.c.b16 %v785, %v781
        %v850 = vpack.c.b16 %v786, %v782
        %915 = vmatpush.bf16.msra.mxu0 %v815
        %916 = vmatpush.bf16.msra.mxu0 %v811
        %917 = vmatpush.bf16.msra.mxu0 %v807
        %918 = vmatpush.bf16.msra.mxu0 %v803
        %919 = vmatpush.bf16.msra.mxu0 %v799
        %920 = vmatpush.bf16.msra.mxu0 %v795
        %921 = vmatpush.bf16.msra.mxu0 %v791
        %922 = vmatpush.bf16.msra.mxu0 %v787
        %923 = vmatmul.bf16.gmra.mxu0 %v527
        %v924 = vpop.f32.mrf.mxu0
        %v925 = vadd.f32 0.0, %v924
        %v926 = vpop.f32.mrf.mxu0
        %v927 = vadd.f32 0.0, %v926
        %928 = vmatmul.bf16.gmra.mxu0 %v529
        %v929 = vpop.f32.mrf.mxu0
        %v930 = vadd.f32 0.0, %v929
        %v931 = vpop.f32.mrf.mxu0
        %v932 = vadd.f32 0.0, %v931
        %933 = vdwg.mxu0
        %934 = vmatpush.bf16.msra.mxu0 %v847
        %935 = vmatpush.bf16.msra.mxu0 %v843
        %936 = vmatpush.bf16.msra.mxu0 %v839
        %937 = vmatpush.bf16.msra.mxu0 %v835
        %938 = vmatpush.bf16.msra.mxu0 %v831
        %939 = vmatpush.bf16.msra.mxu0 %v827
        %940 = vmatpush.bf16.msra.mxu0 %v823
        %941 = vmatpush.bf16.msra.mxu0 %v819
        %942 = vmatmul.bf16.gmra.mxu0 %v528
        %v943 = vpop.f32.mrf.mxu0
        %v944 = vadd.f32 %v925, %v943
        %v945 = vpop.f32.mrf.mxu0
        %v946 = vadd.f32 %v927, %v945
        %947 = vmatmul.bf16.gmra.mxu0 %v530
        %v948 = vpop.f32.mrf.mxu0
        %v949 = vadd.f32 %v930, %v948
        %v950 = vpop.f32.mrf.mxu0
        %v951 = vadd.f32 %v932, %v950
        %952 = vdwg.mxu0
        %953 = vmatpush.bf16.msra.mxu0 %v816
        %954 = vmatpush.bf16.msra.mxu0 %v812
        %955 = vmatpush.bf16.msra.mxu0 %v808
        %956 = vmatpush.bf16.msra.mxu0 %v804
        %957 = vmatpush.bf16.msra.mxu0 %v800
        %958 = vmatpush.bf16.msra.mxu0 %v796
        %959 = vmatpush.bf16.msra.mxu0 %v792
        %960 = vmatpush.bf16.msra.mxu0 %v788
        %961 = vmatmul.bf16.gmra.mxu0 %v527
        %v962 = vpop.f32.mrf.mxu0
        %v963 = vadd.f32 0.0, %v962
        %v964 = vpop.f32.mrf.mxu0
        %v965 = vadd.f32 0.0, %v964
        %966 = vmatmul.bf16.gmra.mxu0 %v529
        %v967 = vpop.f32.mrf.mxu0
        %v968 = vadd.f32 0.0, %v967
        %v969 = vpop.f32.mrf.mxu0
        %v970 = vadd.f32 0.0, %v969
        %971 = vdwg.mxu0
        %972 = vmatpush.bf16.msra.mxu0 %v848
        %973 = vmatpush.bf16.msra.mxu0 %v844
        %974 = vmatpush.bf16.msra.mxu0 %v840
        %975 = vmatpush.bf16.msra.mxu0 %v836
        %976 = vmatpush.bf16.msra.mxu0 %v832
        %977 = vmatpush.bf16.msra.mxu0 %v828
        %978 = vmatpush.bf16.msra.mxu0 %v824
        %979 = vmatpush.bf16.msra.mxu0 %v820
        %980 = vmatmul.bf16.gmra.mxu0 %v528
        %v981 = vpop.f32.mrf.mxu0
        %v982 = vadd.f32 %v963, %v981
        %v983 = vpop.f32.mrf.mxu0
        %v984 = vadd.f32 %v965, %v983
        %985 = vmatmul.bf16.gmra.mxu0 %v530
        %v986 = vpop.f32.mrf.mxu0
        %v987 = vadd.f32 %v968, %v986
        %v988 = vpop.f32.mrf.mxu0
        %v989 = vadd.f32 %v970, %v988
        %990 = vdwg.mxu0
        %991 = vmatpush.bf16.msra.mxu0 %v817
        %992 = vmatpush.bf16.msra.mxu0 %v813
        %993 = vmatpush.bf16.msra.mxu0 %v809
        %994 = vmatpush.bf16.msra.mxu0 %v805
        %995 = vmatpush.bf16.msra.mxu0 %v801
        %996 = vmatpush.bf16.msra.mxu0 %v797
        %997 = vmatpush.bf16.msra.mxu0 %v793
        %998 = vmatpush.bf16.msra.mxu0 %v789
        %999 = vmatmul.bf16.gmra.mxu0 %v527
        %v1000 = vpop.f32.mrf.mxu0
        %v1001 = vadd.f32 0.0, %v1000
        %v1002 = vpop.f32.mrf.mxu0
        %v1003 = vadd.f32 0.0, %v1002
        %1004 = vmatmul.bf16.gmra.mxu0 %v529
        %v1005 = vpop.f32.mrf.mxu0
        %v1006 = vadd.f32 0.0, %v1005
        %v1007 = vpop.f32.mrf.mxu0
        %v1008 = vadd.f32 0.0, %v1007
        %1009 = vdwg.mxu0
        %1010 = vmatpush.bf16.msra.mxu0 %v849
        %1011 = vmatpush.bf16.msra.mxu0 %v845
        %1012 = vmatpush.bf16.msra.mxu0 %v841
        %1013 = vmatpush.bf16.msra.mxu0 %v837
        %1014 = vmatpush.bf16.msra.mxu0 %v833
        %1015 = vmatpush.bf16.msra.mxu0 %v829
        %1016 = vmatpush.bf16.msra.mxu0 %v825
        %1017 = vmatpush.bf16.msra.mxu0 %v821
        %1018 = vmatmul.bf16.gmra.mxu0 %v528
        %v1019 = vpop.f32.mrf.mxu0
        %v1020 = vadd.f32 %v1001, %v1019
        %v1021 = vpop.f32.mrf.mxu0
        %v1022 = vadd.f32 %v1003, %v1021
        %1023 = vmatmul.bf16.gmra.mxu0 %v530
        %v1024 = vpop.f32.mrf.mxu0
        %v1025 = vadd.f32 %v1006, %v1024
        %v1026 = vpop.f32.mrf.mxu0
        %v1027 = vadd.f32 %v1008, %v1026
        %1028 = vdwg.mxu0
        %1029 = vmatpush.bf16.msra.mxu0 %v818
        %1030 = vmatpush.bf16.msra.mxu0 %v814
        %1031 = vmatpush.bf16.msra.mxu0 %v810
        %1032 = vmatpush.bf16.msra.mxu0 %v806
        %1033 = vmatpush.bf16.msra.mxu0 %v802
        %1034 = vmatpush.bf16.msra.mxu0 %v798
        %1035 = vmatpush.bf16.msra.mxu0 %v794
        %1036 = vmatpush.bf16.msra.mxu0 %v790
        %1037 = vmatmul.bf16.gmra.mxu0 %v527
        %v1038 = vpop.f32.mrf.mxu0
        %v1039 = vadd.f32 0.0, %v1038
        %v1040 = vpop.f32.mrf.mxu0
        %v1041 = vadd.f32 0.0, %v1040
        %1042 = vmatmul.bf16.gmra.mxu0 %v529
        %v1043 = vpop.f32.mrf.mxu0
        %v1044 = vadd.f32 0.0, %v1043
        %v1045 = vpop.f32.mrf.mxu0
        %v1046 = vadd.f32 0.0, %v1045
        %1047 = vdwg.mxu0
        %1048 = vmatpush.bf16.msra.mxu0 %v850
        %1049 = vmatpush.bf16.msra.mxu0 %v846
        %1050 = vmatpush.bf16.msra.mxu0 %v842
        %1051 = vmatpush.bf16.msra.mxu0 %v838
        %1052 = vmatpush.bf16.msra.mxu0 %v834
        %1053 = vmatpush.bf16.msra.mxu0 %v830
        %1054 = vmatpush.bf16.msra.mxu0 %v826
        %1055 = vmatpush.bf16.msra.mxu0 %v822
        %1056 = vmatmul.bf16.gmra.mxu0 %v528
        %v1057 = vpop.f32.mrf.mxu0
        %v1058 = vadd.f32 %v1039, %v1057
        %v1059 = vpop.f32.mrf.mxu0
        %v1060 = vadd.f32 %v1041, %v1059
        %1061 = vmatmul.bf16.gmra.mxu0 %v530
        %v1062 = vpop.f32.mrf.mxu0
        %v1063 = vadd.f32 %v1044, %v1062
        %v1064 = vpop.f32.mrf.mxu0
        %v1065 = vadd.f32 %v1046, %v1064
        %1066 = vdwg.mxu0
        %v1067 = vadd.f32 %v511, %v944
        %v1068 = vadd.f32 %v512, %v982
        %v1069 = vadd.f32 %v513, %v1020
        %v1070 = vadd.f32 %v514, %v1058
        %v1071 = vadd.f32 %v515, %v946
        %v1072 = vadd.f32 %v516, %v984
        %v1073 = vadd.f32 %v517, %v1022
        %v1074 = vadd.f32 %v518, %v1060
        %v1075 = vadd.f32 %v519, %v949
        %v1076 = vadd.f32 %v520, %v987
        %v1077 = vadd.f32 %v521, %v1025
        %v1078 = vadd.f32 %v522, %v1063
        %v1079 = vadd.f32 %v523, %v951
        %v1080 = vadd.f32 %v524, %v989
        %v1081 = vadd.f32 %v525, %v1027
        %v1082 = vadd.f32 %v526, %v1065
        %1083 = vst [vmem:[#allocation2] sm:$0xff] %v1067
        %1084 = vst [vmem:[#allocation2 + $0x8] sm:$0xff] %v1068
        %1085 = vst [vmem:[#allocation2 + $0x10] sm:$0xff] %v1069
        %1086 = vst [vmem:[#allocation2 + $0x18] sm:$0xff] %v1070
        %1087 = vst [vmem:[#allocation2 + $0x20] sm:$0xff] %v1071
        %1088 = vst [vmem:[#allocation2 + $0x28] sm:$0xff] %v1072
        %1089 = vst [vmem:[#allocation2 + $0x30] sm:$0xff] %v1073
        %1090 = vst [vmem:[#allocation2 + $0x38] sm:$0xff] %v1074
        %1091 = vst [vmem:[#allocation2 + $0x40] sm:$0xff] %v1075
        %1092 = vst [vmem:[#allocation2 + $0x48] sm:$0xff] %v1076
        %1093 = vst [vmem:[#allocation2 + $0x50] sm:$0xff] %v1077
        %1094 = vst [vmem:[#allocation2 + $0x58] sm:$0xff] %v1078
        %1095 = vst [vmem:[#allocation2 + $0x60] sm:$0xff] %v1079
        %1096 = vst [vmem:[#allocation2 + $0x68] sm:$0xff] %v1080
        %1097 = vst [vmem:[#allocation2 + $0x70] sm:$0xff] %v1081
        %1098 = vst [vmem:[#allocation2 + $0x78] sm:$0xff] %v1082
        // Predicated region
        $region64: #{generator2_forward.14} parent=54 // pred_check
          %p1099 = pneg %p447
        $region65: #{generator2_forward.14} parent=54 // pred_check_branch
          %1101 = sbr.rel (%p1099) target = $region67
        $region66: #{generator2_forward.14} parent=54 // pred_region
          %v1102 = vld [vmem:[#allocation2] sm:$0xff]
          %v1103 = vld [vmem:[#allocation2 + $0x8] sm:$0xff]
          %v1104 = vld [vmem:[#allocation2 + $0x10] sm:$0xff]
          %v1105 = vld [vmem:[#allocation2 + $0x18] sm:$0xff]
          %v1106 = vld [vmem:[#allocation2 + $0x20] sm:$0xff]
          %v1107 = vld [vmem:[#allocation2 + $0x28] sm:$0xff]
          %v1108 = vld [vmem:[#allocation2 + $0x30] sm:$0xff]
          %v1109 = vld [vmem:[#allocation2 + $0x38] sm:$0xff]
          %v1110 = vld [vmem:[#allocation2 + $0x40] sm:$0xff]
          %v1111 = vld [vmem:[#allocation2 + $0x48] sm:$0xff]
          %v1112 = vld [vmem:[#allocation2 + $0x50] sm:$0xff]
          %v1113 = vld [vmem:[#allocation2 + $0x58] sm:$0xff]
          %v1114 = vld [vmem:[#allocation2 + $0x60] sm:$0xff]
          %v1115 = vld [vmem:[#allocation2 + $0x68] sm:$0xff]
          %v1116 = vld [vmem:[#allocation2 + $0x70] sm:$0xff]
          %v1117 = vld [vmem:[#allocation2 + $0x78] sm:$0xff]
          %1118 = vst [vmem:[%s420] sm:$0xff] %v1102
          %1119 = vst [vmem:[%s420 + $0x8] sm:$0xff] %v1103
          %1120 = vst [vmem:[%s420 + $0x10] sm:$0xff] %v1104
          %1121 = vst [vmem:[%s420 + $0x18] sm:$0xff] %v1105
          %1122 = vst [vmem:[%s420 + $0x20] sm:$0xff] %v1106
          %1123 = vst [vmem:[%s420 + $0x28] sm:$0xff] %v1107
          %1124 = vst [vmem:[%s420 + $0x30] sm:$0xff] %v1108
          %1125 = vst [vmem:[%s420 + $0x38] sm:$0xff] %v1109
          %1126 = vst [vmem:[%s420 + $0x40] sm:$0xff] %v1110
          %1127 = vst [vmem:[%s420 + $0x48] sm:$0xff] %v1111
          %1128 = vst [vmem:[%s420 + $0x50] sm:$0xff] %v1112
          %1129 = vst [vmem:[%s420 + $0x58] sm:$0xff] %v1113
          %1130 = vst [vmem:[%s420 + $0x60] sm:$0xff] %v1114
          %1131 = vst [vmem:[%s420 + $0x68] sm:$0xff] %v1115
          %1132 = vst [vmem:[%s420 + $0x70] sm:$0xff] %v1116
          %1133 = vst [vmem:[%s420 + $0x78] sm:$0xff] %v1117
        $region67: #{generator2_forward.14} parent=54 // pred_fallthru
          _
        %s1134 = sand.u32 %s152, 1
        %s1135 = sand.u32 %s152, 1
        %s1136 = smul.addr %s1135, 128
        %s1137 = scalar_lea.vmem [#allocation4], %s1136
        // Predicated region
        $region68: #{generator2_forward.14} parent=54 // pred_check
          %p1138 = pneg %p162
        $region69: #{generator2_forward.14} parent=54 // pred_check_branch
          %1140 = sbr.rel (%p1138) target = $region71
        $region70: #{generator2_forward.14} parent=54 // pred_region
          %s1141 = smul.u32 4, %s20
          %s1142 = smul.u32 4, %s21
          %s1143 = smul.addr %s1141, 16
          %s1144 = sadd.s32 %s1142, %s1143
          %s1145 = smul.addr %s1144, 8
          %s1146 = scalar_lea.vmem %s4, %s1145
          // Predicated region
          $region72: #{generator2_forward.14} parent=70 // pred_check
            _
          $region73: #{generator2_forward.14} parent=70 // pred_check_branch
            %1148 = sbr.rel (0) target = $region75
          $region74: #{generator2_forward.14} parent=70 // pred_region
            // Predicated region
            $region76: #{generator2_forward.14} parent=74 // pred_check
              _
            $region77: #{generator2_forward.14} parent=74 // pred_check_branch
              %1150 = sbr.rel (0) target = $region79
            $region78: #{generator2_forward.14} parent=74 // pred_region
              loop: start=0, step=1, limit=1
              $region80: #{generator2_forward.14} parent=78 // loop_pre_header
                _
              $region81: #{generator2_forward.14} parent=78 // loop_header
                %s1152 = sphi 0, %s1156
                %p1153 = scmp.ge.s32.totalorder %s1152, 1
                %s1157 = sphi %s1137, %s1137
                %s1158 = sphi %s1146, %s1146
              $region82: #{generator2_forward.14} parent=78 // loop_header_branch
                %1155 = sbr.rel (%p1153) target = $region86
              $region83: #{generator2_forward.14} parent=78 // loop_body
                %v1159 = vld [vmem:[%s1157] sm:$0xff]
                %1160 = vst [vmem:[%s1158] sm:$0xff] %v1159
                %v1161 = vld [vmem:[%s1157 + $0x8] sm:$0xff]
                %1162 = vst [vmem:[%s1158 + $0x8] sm:$0xff] %v1161
                %v1163 = vld [vmem:[%s1157 + $0x10] sm:$0xff]
                %1164 = vst [vmem:[%s1158 + $0x10] sm:$0xff] %v1163
                %v1165 = vld [vmem:[%s1157 + $0x18] sm:$0xff]
                %1166 = vst [vmem:[%s1158 + $0x18] sm:$0xff] %v1165
                %v1167 = vld [vmem:[%s1157 + $0x20] sm:$0xff]
                %1168 = vst [vmem:[%s1158 + $0x80] sm:$0xff] %v1167
                %v1169 = vld [vmem:[%s1157 + $0x28] sm:$0xff]
                %1170 = vst [vmem:[%s1158 + $0x88] sm:$0xff] %v1169
                %v1171 = vld [vmem:[%s1157 + $0x30] sm:$0xff]
                %1172 = vst [vmem:[%s1158 + $0x90] sm:$0xff] %v1171
                %v1173 = vld [vmem:[%s1157 + $0x38] sm:$0xff]
                %1174 = vst [vmem:[%s1158 + $0x98] sm:$0xff] %v1173
                %v1175 = vld [vmem:[%s1157 + $0x40] sm:$0xff]
                %1176 = vst [vmem:[%s1158 + $0x100] sm:$0xff] %v1175
                %v1177 = vld [vmem:[%s1157 + $0x48] sm:$0xff]
                %1178 = vst [vmem:[%s1158 + $0x108] sm:$0xff] %v1177
                %v1179 = vld [vmem:[%s1157 + $0x50] sm:$0xff]
                %1180 = vst [vmem:[%s1158 + $0x110] sm:$0xff] %v1179
                %v1181 = vld [vmem:[%s1157 + $0x58] sm:$0xff]
                %1182 = vst [vmem:[%s1158 + $0x118] sm:$0xff] %v1181
                %v1183 = vld [vmem:[%s1157 + $0x60] sm:$0xff]
                %1184 = vst [vmem:[%s1158 + $0x180] sm:$0xff] %v1183
                %v1185 = vld [vmem:[%s1157 + $0x68] sm:$0xff]
                %1186 = vst [vmem:[%s1158 + $0x188] sm:$0xff] %v1185
                %v1187 = vld [vmem:[%s1157 + $0x70] sm:$0xff]
                %1188 = vst [vmem:[%s1158 + $0x190] sm:$0xff] %v1187
                %v1189 = vld [vmem:[%s1157 + $0x78] sm:$0xff]
                %1190 = vst [vmem:[%s1158 + $0x198] sm:$0xff] %v1189
              $region84: #{generator2_forward.14} parent=78 // loop_footer
                %s1156 = sadd.s32 1, %s1152
              $region85: #{generator2_forward.14} parent=78 // loop_footer_branch
                %1151 = sbr.rel target = $region81
              $region86: #{generator2_forward.14} parent=78 // loop_exit
                _
            $region79: #{generator2_forward.14} parent=74 // pred_fallthru
              _
            // Predicated region
            $region87: #{generator2_forward.14} parent=74 // pred_check
              _
            $region88: #{generator2_forward.14} parent=74 // pred_check_branch
              %1192 = sbr.rel target = $region90
            $region89: #{generator2_forward.14} parent=74 // pred_region
              _
            $region90: #{generator2_forward.14} parent=74 // pred_fallthru
              _
          $region75: #{generator2_forward.14} parent=70 // pred_fallthru
            _
          %1193 = vnop
        $region71: #{generator2_forward.14} parent=54 // pred_fallthru
          _
      $region55: #{generator2_forward.14} parent=5 // pred_fallthru
        _
      %p1194 = scmp.le.s32.totalorder 2, %s10
      // Predicated region
      $region91: #{generator2_forward.14} parent=5 // pred_check
        %p1195 = pneg %p1194
      $region92: #{generator2_forward.14} parent=5 // pred_check_branch
        %1197 = sbr.rel (%p1195) target = $region94
      $region93: #{generator2_forward.14} parent=5 // pred_region
        %s1198 = ssub.s32 %s10, 2
        // Predicated region
        $region95: #{generator2_forward.14} parent=93 // pred_check
          %p1199 = pneg %p168
        $region96: #{generator2_forward.14} parent=93 // pred_check_branch
          %1201 = sbr.rel (%p1199) target = $region98
        $region97: #{generator2_forward.14} parent=93 // pred_region
          %s1202 = sand.u32 %s153, 1
          %s1203 = sand.u32 %s153, 1
          %s1204 = smul.addr %s1203, 128
          %s1205 = scalar_lea.vmem [#allocation4], %s1204
        $region98: #{generator2_forward.14} parent=93 // pred_fallthru
          _
      $region94: #{generator2_forward.14} parent=5 // pred_fallthru
        _
    $region6: #{generator2_forward.14} parent=1 // loop_footer
      %s14 = sadd.s32 1, %s10
    $region7: #{generator2_forward.14} parent=1 // loop_footer_branch
      %9 = sbr.rel target = $region3
    $region8: #{generator2_forward.14} parent=1 // loop_exit
      _

// kernel: generator2_forward.15
$region0: #{generator2_forward.15}
  #allocation0 [shape = 'u32[]', space=smem, size = 0x4, offset = 0x4, fixed_abs, tag = 'smem constant byte address 0x4 - core index']
  #allocation1 [shape = 'u32[72,128]{1,0:T(1,128)}', space=vmem, size = 0x9000, scoped, tag = 'internal scratch']
  %s0 = inlined_call_operand.vmem [shape: f32[128,128], index: 0, kind: input, shape index: {}]
  %s1 = inlined_call_operand.vmem [shape: f32[1,128], index: 1, kind: output, shape index: {0}]
  %s2 = inlined_call_operand.vmem [shape: f32[1,128], index: 2, kind: output, shape index: {1}]
  %3 = xla_tuple %s1, %s2
  %s4 = sld [smem:[#allocation0]]
  $region26: #{generator2_forward.15} parent=0
    _
  %s6 = ssub.s32 1, %s4
  %s7 = scalar_select 0, %s6, %s4
  // Predicated region
  $region2: #{generator2_forward.15} parent=0 // pred_check
    _
  $region3: #{generator2_forward.15} parent=0 // pred_check_branch
    %9 = sbr.rel (0) target = $region5
  $region4: #{generator2_forward.15} parent=0 // pred_region
    _
  $region5: #{generator2_forward.15} parent=0 // pred_fallthru
    _
  %p10 = scmp.eq.s32.totalorder 0, 0
  // Predicated region
  $region6: #{generator2_forward.15} parent=0 // pred_check
    %p11 = pneg %p10
  $region7: #{generator2_forward.15} parent=0 // pred_check_branch
    %13 = sbr.rel (%p11) target = $region9
  $region8: #{generator2_forward.15} parent=0 // pred_region
    %14 = vst [vmem:[%s1] sm:$0x1] 0.0
    %15 = vst [vmem:[%s2] sm:$0x1] 0.0
  $region9: #{generator2_forward.15} parent=0 // pred_fallthru
    _
  %v16 = vld [vmem:[%s0] sm:$0xff]
  %v17 = vld [vmem:[%s0 + $0x8] sm:$0xff]
  %v18 = vld [vmem:[%s0 + $0x10] sm:$0xff]
  %v19 = vld [vmem:[%s0 + $0x18] sm:$0xff]
  %v20 = vld [vmem:[%s0 + $0x20] sm:$0xff]
  %v21 = vld [vmem:[%s0 + $0x28] sm:$0xff]
  %v22 = vld [vmem:[%s0 + $0x30] sm:$0xff]
  %v23 = vld [vmem:[%s0 + $0x38] sm:$0xff]
  %v24 = vld [vmem:[%s0 + $0x40] sm:$0xff]
  %v25 = vld [vmem:[%s0 + $0x48] sm:$0xff]
  %v26 = vld [vmem:[%s0 + $0x50] sm:$0xff]
  %v27 = vld [vmem:[%s0 + $0x58] sm:$0xff]
  %v28 = vld [vmem:[%s0 + $0x60] sm:$0xff]
  %v29 = vld [vmem:[%s0 + $0x68] sm:$0xff]
  %v30 = vld [vmem:[%s0 + $0x70] sm:$0xff]
  %v31 = vld [vmem:[%s0 + $0x78] sm:$0xff]
  %v32 = vld [vmem:[%s1] sm:$0x1]
  %v33 = vadd.f32 %v16, %v17
  %v34 = vadd.f32 %v33, %v18
  %v35 = vadd.f32 %v34, %v19
  %v36 = vadd.f32 %v35, %v20
  %v37 = vadd.f32 %v36, %v21
  %v38 = vadd.f32 %v37, %v22
  %v39 = vadd.f32 %v38, %v23
  %v40 = vadd.f32 %v39, %v24
  %v41 = vadd.f32 %v40, %v25
  %v42 = vadd.f32 %v41, %v26
  %v43 = vadd.f32 %v42, %v27
  %v44 = vadd.f32 %v43, %v28
  %v45 = vadd.f32 %v44, %v29
  %v46 = vadd.f32 %v45, %v30
  %v47 = vadd.f32 %v46, %v31
  %v48 = vrot.slane %v47, 4
  %v49 = vadd.f32 %v47, %v48
  %v50 = vrot.slane %v49, 2
  %v51 = vadd.f32 %v49, %v50
  %v52 = vrot.slane %v51, 1
  %v53 = vadd.f32 %v51, %v52
  %v54 = vadd.f32 %v32, %v53
  %55 = vst [vmem:[%s1] sm:$0x1] %v54
  %v56 = vld [vmem:[%s2] sm:$0x1]
  %v57 = vmul.f32 %v16, %v16
  %v58 = vmul.f32 %v17, %v17
  %v59 = vmul.f32 %v18, %v18
  %v60 = vmul.f32 %v19, %v19
  %v61 = vmul.f32 %v20, %v20
  %v62 = vmul.f32 %v21, %v21
  %v63 = vmul.f32 %v22, %v22
  %v64 = vmul.f32 %v23, %v23
  %v65 = vmul.f32 %v24, %v24
  %v66 = vmul.f32 %v25, %v25
  %v67 = vmul.f32 %v26, %v26
  %v68 = vmul.f32 %v27, %v27
  %v69 = vmul.f32 %v28, %v28
  %v70 = vmul.f32 %v29, %v29
  %v71 = vmul.f32 %v30, %v30
  %v72 = vmul.f32 %v31, %v31
  %v73 = vadd.f32 %v57, %v58
  %v74 = vadd.f32 %v73, %v59
  %v75 = vadd.f32 %v74, %v60
  %v76 = vadd.f32 %v75, %v61
  %v77 = vadd.f32 %v76, %v62
  %v78 = vadd.f32 %v77, %v63
  %v79 = vadd.f32 %v78, %v64
  %v80 = vadd.f32 %v79, %v65
  %v81 = vadd.f32 %v80, %v66
  %v82 = vadd.f32 %v81, %v67
  %v83 = vadd.f32 %v82, %v68
  %v84 = vadd.f32 %v83, %v69
  %v85 = vadd.f32 %v84, %v70
  %v86 = vadd.f32 %v85, %v71
  %v87 = vadd.f32 %v86, %v72
  %v88 = vrot.slane %v87, 4
  %v89 = vadd.f32 %v87, %v88
  %v90 = vrot.slane %v89, 2
  %v91 = vadd.f32 %v89, %v90
  %v92 = vrot.slane %v91, 1
  %v93 = vadd.f32 %v91, %v92
  %v94 = vadd.f32 %v56, %v93
  %95 = vst [vmem:[%s2] sm:$0x1] %v94
  // Predicated region
  $region10: #{generator2_forward.15} parent=0 // pred_check
    _
  $region11: #{generator2_forward.15} parent=0 // pred_check_branch
    %97 = sbr.rel (0) target = $region13
  $region12: #{generator2_forward.15} parent=0 // pred_region
    _
  $region13: #{generator2_forward.15} parent=0 // pred_fallthru
    _
  // Predicated region
  $region14: #{generator2_forward.15} parent=0 // pred_check
    _
  $region15: #{generator2_forward.15} parent=0 // pred_check_branch
    %99 = sbr.rel (0) target = $region17
  $region16: #{generator2_forward.15} parent=0 // pred_region
    _
  $region17: #{generator2_forward.15} parent=0 // pred_fallthru
    _
  // Predicated region
  $region18: #{generator2_forward.15} parent=0 // pred_check
    _
  $region19: #{generator2_forward.15} parent=0 // pred_check_branch
    %101 = sbr.rel (0) target = $region21
  $region20: #{generator2_forward.15} parent=0 // pred_region
    _
  $region21: #{generator2_forward.15} parent=0 // pred_fallthru
    _
  // Predicated region
  $region22: #{generator2_forward.15} parent=0 // pred_check
    _
  $region23: #{generator2_forward.15} parent=0 // pred_check_branch
    %103 = sbr.rel (0) target = $region25
  $region24: #{generator2_forward.15} parent=0 // pred_region
    _
  $region25: #{generator2_forward.15} parent=0 // pred_fallthru
    _

// kernel: generator2_forward.16
$region0: #{generator2_forward.16}
  #allocation0 [shape = 'u32[]', space=smem, size = 0x4, offset = 0x4, fixed_abs, tag = 'smem constant byte address 0x4 - core index']
  #allocation1 [shape = 'u32[72,128]{1,0:T(1,128)}', space=vmem, size = 0x9000, scoped, tag = 'internal scratch']
  #allocation2 [shape = 'f32[128,512]{1,0:T(8,128)}', space=vmem, size = 0x40000, scoped, tag = 'scratch operand']
  %s0 = inlined_call_operand.vmem [shape: f32[128,128], index: 0, kind: input, shape index: {}]
  %s1 = inlined_call_operand.vmem [shape: bf16[128,1024], index: 1, kind: input, shape index: {}]
  %s2 = inlined_call_operand.vmem [shape: f32[1,128], index: 2, kind: input, shape index: {}]
  %s3 = inlined_call_operand.vmem [shape: f32[1,128], index: 3, kind: input, shape index: {}]
  %s4 = inlined_call_operand.vmem [shape: f32[128,1024], index: 4, kind: output, shape index: {}]
  %s5 = sld [smem:[#allocation0]]
  $region99: #{generator2_forward.16} parent=0
    _
  %s7 = ssub.s32 1, %s5
  %s8 = scalar_select 0, %s7, %s5
  $region1: #{generator2_forward.16} parent=0
    #allocation3 [shape = 'u8[262144]{0}', space=vmem, size = 0x40000, scoped, tag = 'input window, operand 1']
    #allocation4 [shape = 'u8[524288]{0}', space=vmem, size = 0x80000, scoped, tag = 'output window, operand 0']
    loop: start=0, step=1, limit=4
    $region2: #{generator2_forward.16} parent=1 // loop_pre_header
      _
    $region3: #{generator2_forward.16} parent=1 // loop_header
      %s10 = sphi 0, %s14
      %p11 = scmp.ge.s32.totalorder %s10, 4
      %s17 = sphi 0, %s36
      %s18 = sphi 0, %s32
      %s19 = sphi 0, %s28
      %s20 = sphi 0, %s17
      %s21 = sphi 0, %s18
      %s22 = sphi 0, %s19
      %s23 = sphi 0, %s20
      %s24 = sphi 0, %s21
      %s25 = sphi 0, %s22
      %s41 = sphi 0, %s43
      %s44 = sphi 0, %s41
      %s45 = sphi 0, %s44
      %s61 = sphi 0, %s45
      %s69 = sphi 0, %s71
      %s72 = sphi 0, %s69
      %s73 = sphi 0, %s72
      %s89 = sphi 0, %s73
      %s95 = sphi 0, %s97
      %s98 = sphi 0, %s95
      %s99 = sphi 0, %s98
      %s115 = sphi 0, %s99
      %s121 = sphi 0, %s123
      %s124 = sphi 0, %s121
      %s125 = sphi 0, %s124
      %s141 = sphi 0, %s125
      %s149 = sphi 0, %s151
      %s152 = sphi 0, %s149
      %s153 = sphi 0, %s152
      %s169 = sphi 0, %s153
    $region4: #{generator2_forward.16} parent=1 // loop_header_branch
      %13 = sbr.rel (%p11) target = $region8
    $region5: #{generator2_forward.16} parent=1 // loop_body
      %s15 = ssub.s32 %s10, 1
      %s16 = ssub.s32 %s10, 2
      %s26 = sadd.s32 1, %s19
      %p27 = scmp.ge.s32.totalorder %s26, 1
      %s28 = scalar_select %p27, 0, %s26
      %s29 = sadd.s32 1, %s18
      %s30 = scalar_select %p27, %s29, %s18
      %p31 = scmp.ge.s32.totalorder %s30, 2
      %s32 = scalar_select %p31, 0, %s30
      %s33 = sadd.s32 1, %s17
      %s34 = scalar_select %p31, %s33, %s17
      %p35 = scmp.ge.s32.totalorder %s34, 1
      %s36 = scalar_select %p35, 0, %s34
      %s37 = ssub.s32 %s17, %s36
      %s38 = ssub.s32 %s19, %s28
      %s39 = sor.u32 %s37, %s38
      %p40 = scmp.eq.s32.totalorder %s39, 0
      %s42 = sadd.s32 %s41, 1
      %s43 = scalar_select %p40, %s41, %s42
      %p46 = pneg %p40
      %p47 = scmp.eq.s32.totalorder %s10, 1
      %p48 = por %p46, %p47
      %p49 = scmp.ne.s32.totalorder %s41, %s44
      %p50 = scmp.eq.s32.totalorder %s10, 0
      %p51 = por %p49, %p50
      %p52 = scmp.ne.s32.totalorder %s41, %s44
      %p53 = scmp.eq.s32.totalorder %s15, 1
      %p54 = por %p52, %p53
      %p55 = scmp.ne.s32.totalorder %s44, %s45
      %p56 = scmp.eq.s32.totalorder %s15, 0
      %p57 = por %p55, %p56
      %p58 = scmp.ne.s32.totalorder %s44, %s45
      %p59 = scmp.eq.s32.totalorder %s16, 1
      %p60 = por %p58, %p59
      %p62 = scmp.ne.s32.totalorder %s45, %s61
      %p63 = scmp.eq.s32.totalorder %s16, 0
      %p64 = por %p62, %p63
      %s65 = ssub.s32 %s19, %s28
      %s66 = ssub.s32 %s18, %s32
      %s67 = sor.u32 %s65, %s66
      %p68 = scmp.eq.s32.totalorder %s67, 0
      %s70 = sadd.s32 %s69, 1
      %s71 = scalar_select %p68, %s69, %s70
      %p74 = pneg %p68
      %p75 = scmp.eq.s32.totalorder %s10, 1
      %p76 = por %p74, %p75
      %p77 = scmp.ne.s32.totalorder %s69, %s72
      %p78 = scmp.eq.s32.totalorder %s10, 0
      %p79 = por %p77, %p78
      %p80 = scmp.ne.s32.totalorder %s69, %s72
      %p81 = scmp.eq.s32.totalorder %s15, 1
      %p82 = por %p80, %p81
      %p83 = scmp.ne.s32.totalorder %s72, %s73
      %p84 = scmp.eq.s32.totalorder %s15, 0
      %p85 = por %p83, %p84
      %p86 = scmp.ne.s32.totalorder %s72, %s73
      %p87 = scmp.eq.s32.totalorder %s16, 1
      %p88 = por %p86, %p87
      %p90 = scmp.ne.s32.totalorder %s73, %s89
      %p91 = scmp.eq.s32.totalorder %s16, 0
      %p92 = por %p90, %p91
      %s93 = ssub.s32 %s19, %s28
      %p94 = scmp.eq.s32.totalorder %s93, 0
      %s96 = sadd.s32 %s95, 1
      %s97 = scalar_select %p94, %s95, %s96
      %p100 = pneg %p94
      %p101 = scmp.eq.s32.totalorder %s10, 1
      %p102 = por %p100, %p101
      %p103 = scmp.ne.s32.totalorder %s95, %s98
      %p104 = scmp.eq.s32.totalorder %s10, 0
      %p105 = por %p103, %p104
      %p106 = scmp.ne.s32.totalorder %s95, %s98
      %p107 = scmp.eq.s32.totalorder %s15, 1
      %p108 = por %p106, %p107
      %p109 = scmp.ne.s32.totalorder %s98, %s99
      %p110 = scmp.eq.s32.totalorder %s15, 0
      %p111 = por %p109, %p110
      %p112 = scmp.ne.s32.totalorder %s98, %s99
      %p113 = scmp.eq.s32.totalorder %s16, 1
      %p114 = por %p112, %p113
      %p116 = scmp.ne.s32.totalorder %s99, %s115
      %p117 = scmp.eq.s32.totalorder %s16, 0
      %p118 = por %p116, %p117
      %s119 = ssub.s32 %s19, %s28
      %p120 = scmp.eq.s32.totalorder %s119, 0
      %s122 = sadd.s32 %s121, 1
      %s123 = scalar_select %p120, %s121, %s122
      %p126 = pneg %p120
      %p127 = scmp.eq.s32.totalorder %s10, 1
      %p128 = por %p126, %p127
      %p129 = scmp.ne.s32.totalorder %s121, %s124
      %p130 = scmp.eq.s32.totalorder %s10, 0
      %p131 = por %p129, %p130
      %p132 = scmp.ne.s32.totalorder %s121, %s124
      %p133 = scmp.eq.s32.totalorder %s15, 1
      %p134 = por %p132, %p133
      %p135 = scmp.ne.s32.totalorder %s124, %s125
      %p136 = scmp.eq.s32.totalorder %s15, 0
      %p137 = por %p135, %p136
      %p138 = scmp.ne.s32.totalorder %s124, %s125
      %p139 = scmp.eq.s32.totalorder %s16, 1
      %p140 = por %p138, %p139
      %p142 = scmp.ne.s32.totalorder %s125, %s141
      %p143 = scmp.eq.s32.totalorder %s16, 0
      %p144 = por %p142, %p143
      %s145 = ssub.s32 %s17, %s36
      %s146 = ssub.s32 %s18, %s32
      %s147 = sor.u32 %s145, %s146
      %p148 = scmp.eq.s32.totalorder %s147, 0
      %s150 = sadd.s32 %s149, 1
      %s151 = scalar_select %p148, %s149, %s150
      %p154 = pneg %p148
      %p155 = scmp.eq.s32.totalorder %s10, 1
      %p156 = por %p154, %p155
      %p157 = scmp.ne.s32.totalorder %s149, %s152
      %p158 = scmp.eq.s32.totalorder %s10, 0
      %p159 = por %p157, %p158
      %p160 = scmp.ne.s32.totalorder %s149, %s152
      %p161 = scmp.eq.s32.totalorder %s15, 1
      %p162 = por %p160, %p161
      %p163 = scmp.ne.s32.totalorder %s152, %s153
      %p164 = scmp.eq.s32.totalorder %s15, 0
      %p165 = por %p163, %p164
      %p166 = scmp.ne.s32.totalorder %s152, %s153
      %p167 = scmp.eq.s32.totalorder %s16, 1
      %p168 = por %p166, %p167
      %p170 = scmp.ne.s32.totalorder %s153, %s169
      %p171 = scmp.eq.s32.totalorder %s16, 0
      %p172 = por %p170, %p171
      %p173 = scmp.le.s32.totalorder 1, %s10
      %p174 = scmp.lt.s32.totalorder %s10, 3
      %p175 = pnand %p173, %p174
      %p176 = pneg %p175
      // Predicated region
      $region9: #{generator2_forward.16} parent=5 // pred_check
        _
      $region10: #{generator2_forward.16} parent=5 // pred_check_branch
        %178 = sbr.rel (%p175) target = $region12
      $region11: #{generator2_forward.16} parent=5 // pred_region
        %s179 = ssub.s32 %s10, 1
        // Predicated region
        $region13: #{generator2_forward.16} parent=11 // pred_check
          %p180 = pneg %p57
        $region14: #{generator2_forward.16} parent=11 // pred_check_branch
          %182 = sbr.rel (%p180) target = $region16
        $region15: #{generator2_forward.16} parent=11 // pred_region
          %s183 = smul.u32 16, %s20
          %p184 = scmp.lt.s32.totalorder %s183, 15
          %s185 = scalar_select %p184, %s183, 15
          %p186 = scmp.lt.s32.totalorder %s22, 0
          %s187 = scalar_select %p186, %s22, 0
          %s188 = sadd.s32 %s187, %s185
          %s189 = smul.addr %s188, 8
          %s190 = scalar_lea.vmem %s0, %s189
          %s191 = smul.u32 16, %s20
        $region16: #{generator2_forward.16} parent=11 // pred_fallthru
          _
        // Predicated region
        $region17: #{generator2_forward.16} parent=11 // pred_check
          %p192 = pneg %p111
        $region18: #{generator2_forward.16} parent=11 // pred_check_branch
          %194 = sbr.rel (%p192) target = $region20
        $region19: #{generator2_forward.16} parent=11 // pred_region
          %p195 = scmp.lt.s32.totalorder %s22, 0
          %s196 = scalar_select %p195, %s22, 0
          %s197 = scalar_lea.vmem %s2, %s196
        $region20: #{generator2_forward.16} parent=11 // pred_fallthru
          _
        // Predicated region
        $region21: #{generator2_forward.16} parent=11 // pred_check
          %p198 = pneg %p137
        $region22: #{generator2_forward.16} parent=11 // pred_check_branch
          %200 = sbr.rel (%p198) target = $region24
        $region23: #{generator2_forward.16} parent=11 // pred_region
          %p201 = scmp.lt.s32.totalorder %s22, 0
          %s202 = scalar_select %p201, %s22, 0
          %s203 = scalar_lea.vmem %s3, %s202
        $region24: #{generator2_forward.16} parent=11 // pred_fallthru
          _
      $region12: #{generator2_forward.16} parent=5 // pred_fallthru
        _
      %p204 = scmp.lt.s32.totalorder %s10, 2
      // Predicated region
      $region25: #{generator2_forward.16} parent=5 // pred_check
        %p205 = pneg %p204
      $region26: #{generator2_forward.16} parent=5 // pred_check_branch
        %207 = sbr.rel (%p205) target = $region28
      $region27: #{generator2_forward.16} parent=5 // pred_region
        // Predicated region
        $region29: #{generator2_forward.16} parent=27 // pred_check
          %p208 = pneg %p79
        $region30: #{generator2_forward.16} parent=27 // pred_check_branch
          %210 = sbr.rel (%p208) target = $region32
        $region31: #{generator2_forward.16} parent=27 // pred_region
          %s211 = sand.u32 %s69, 1
          %s212 = sand.u32 %s69, 1
          %s213 = smul.addr %s212, 256
          %s214 = scalar_lea.vmem [#allocation3], %s213
          %s215 = smul.u32 16, %s19
          %s216 = smul.u32 4, %s18
          %s217 = smul.addr %s215, 8
          %s218 = sadd.s32 %s216, %s217
          %s219 = smul.addr %s218, 4
          %s220 = scalar_lea.vmem %s1, %s219
          // Predicated region
          $region33: #{generator2_forward.16} parent=31 // pred_check
            _
          $region34: #{generator2_forward.16} parent=31 // pred_check_branch
            %222 = sbr.rel (0) target = $region36
          $region35: #{generator2_forward.16} parent=31 // pred_region
            // Predicated region
            $region37: #{generator2_forward.16} parent=35 // pred_check
              _
            $region38: #{generator2_forward.16} parent=35 // pred_check_branch
              %224 = sbr.rel (0) target = $region40
            $region39: #{generator2_forward.16} parent=35 // pred_region
              loop: start=0, step=1, limit=1
              $region41: #{generator2_forward.16} parent=39 // loop_pre_header
                _
              $region42: #{generator2_forward.16} parent=39 // loop_header
                %s226 = sphi 0, %s230
                %p227 = scmp.ge.s32.totalorder %s226, 1
                %s231 = sphi %s220, %s220
                %s232 = sphi %s214, %s214
              $region43: #{generator2_forward.16} parent=39 // loop_header_branch
                %229 = sbr.rel (%p227) target = $region47
              $region44: #{generator2_forward.16} parent=39 // loop_body
                %v233 = vld [vmem:[%s231] sm:$0xff]
                %234 = vst [vmem:[%s232] sm:$0xff] %v233
                %v235 = vld [vmem:[%s231 + $0x8] sm:$0xff]
                %236 = vst [vmem:[%s232 + $0x8] sm:$0xff] %v235
                %v237 = vld [vmem:[%s231 + $0x20] sm:$0xff]
                %238 = vst [vmem:[%s232 + $0x10] sm:$0xff] %v237
                %v239 = vld [vmem:[%s231 + $0x28] sm:$0xff]
                %240 = vst [vmem:[%s232 + $0x18] sm:$0xff] %v239
                %v241 = vld [vmem:[%s231 + $0x40] sm:$0xff]
                %242 = vst [vmem:[%s232 + $0x20] sm:$0xff] %v241
                %v243 = vld [vmem:[%s231 + $0x48] sm:$0xff]
                %244 = vst [vmem:[%s232 + $0x28] sm:$0xff] %v243
                %v245 = vld [vmem:[%s231 + $0x60] sm:$0xff]
                %246 = vst [vmem:[%s232 + $0x30] sm:$0xff] %v245
                %v247 = vld [vmem:[%s231 + $0x68] sm:$0xff]
                %248 = vst [vmem:[%s232 + $0x38] sm:$0xff] %v247
                %v249 = vld [vmem:[%s231 + $0x80] sm:$0xff]
                %250 = vst [vmem:[%s232 + $0x40] sm:$0xff] %v249
                %v251 = vld [vmem:[%s231 + $0x88] sm:$0xff]
                %252 = vst [vmem:[%s232 + $0x48] sm:$0xff] %v251
                %v253 = vld [vmem:[%s231 + $0xa0] sm:$0xff]
                %254 = vst [vmem:[%s232 + $0x50] sm:$0xff] %v253
                %v255 = vld [vmem:[%s231 + $0xa8] sm:$0xff]
                %256 = vst [vmem:[%s232 + $0x58] sm:$0xff] %v255
                %v257 = vld [vmem:[%s231 + $0xc0] sm:$0xff]
                %258 = vst [vmem:[%s232 + $0x60] sm:$0xff] %v257
                %v259 = vld [vmem:[%s231 + $0xc8] sm:$0xff]
                %260 = vst [vmem:[%s232 + $0x68] sm:$0xff] %v259
                %v261 = vld [vmem:[%s231 + $0xe0] sm:$0xff]
                %262 = vst [vmem:[%s232 + $0x70] sm:$0xff] %v261
                %v263 = vld [vmem:[%s231 + $0xe8] sm:$0xff]
                %264 = vst [vmem:[%s232 + $0x78] sm:$0xff] %v263
                %v265 = vld [vmem:[%s231 + $0x100] sm:$0xff]
                %266 = vst [vmem:[%s232 + $0x80] sm:$0xff] %v265
                %v267 = vld [vmem:[%s231 + $0x108] sm:$0xff]
                %268 = vst [vmem:[%s232 + $0x88] sm:$0xff] %v267
                %v269 = vld [vmem:[%s231 + $0x120] sm:$0xff]
                %270 = vst [vmem:[%s232 + $0x90] sm:$0xff] %v269
                %v271 = vld [vmem:[%s231 + $0x128] sm:$0xff]
                %272 = vst [vmem:[%s232 + $0x98] sm:$0xff] %v271
                %v273 = vld [vmem:[%s231 + $0x140] sm:$0xff]
                %274 = vst [vmem:[%s232 + $0xa0] sm:$0xff] %v273
                %v275 = vld [vmem:[%s231 + $0x148] sm:$0xff]
                %276 = vst [vmem:[%s232 + $0xa8] sm:$0xff] %v275
                %v277 = vld [vmem:[%s231 + $0x160] sm:$0xff]
                %278 = vst [vmem:[%s232 + $0xb0] sm:$0xff] %v277
                %v279 = vld [vmem:[%s231 + $0x168] sm:$0xff]
                %280 = vst [vmem:[%s232 + $0xb8] sm:$0xff] %v279
                %v281 = vld [vmem:[%s231 + $0x180] sm:$0xff]
                %282 = vst [vmem:[%s232 + $0xc0] sm:$0xff] %v281
                %v283 = vld [vmem:[%s231 + $0x188] sm:$0xff]
                %284 = vst [vmem:[%s232 + $0xc8] sm:$0xff] %v283
                %v285 = vld [vmem:[%s231 + $0x1a0] sm:$0xff]
                %286 = vst [vmem:[%s232 + $0xd0] sm:$0xff] %v285
                %v287 = vld [vmem:[%s231 + $0x1a8] sm:$0xff]
                %288 = vst [vmem:[%s232 + $0xd8] sm:$0xff] %v287
                %v289 = vld [vmem:[%s231 + $0x1c0] sm:$0xff]
                %290 = vst [vmem:[%s232 + $0xe0] sm:$0xff] %v289
                %v291 = vld [vmem:[%s231 + $0x1c8] sm:$0xff]
                %292 = vst [vmem:[%s232 + $0xe8] sm:$0xff] %v291
                %v293 = vld [vmem:[%s231 + $0x1e0] sm:$0xff]
                %294 = vst [vmem:[%s232 + $0xf0] sm:$0xff] %v293
                %v295 = vld [vmem:[%s231 + $0x1e8] sm:$0xff]
                %296 = vst [vmem:[%s232 + $0xf8] sm:$0xff] %v295
              $region45: #{generator2_forward.16} parent=39 // loop_footer
                %s230 = sadd.s32 1, %s226
              $region46: #{generator2_forward.16} parent=39 // loop_footer_branch
                %225 = sbr.rel target = $region42
              $region47: #{generator2_forward.16} parent=39 // loop_exit
                _
            $region40: #{generator2_forward.16} parent=35 // pred_fallthru
              _
            // Predicated region
            $region48: #{generator2_forward.16} parent=35 // pred_check
              _
            $region49: #{generator2_forward.16} parent=35 // pred_check_branch
              %298 = sbr.rel target = $region51
            $region50: #{generator2_forward.16} parent=35 // pred_region
              _
            $region51: #{generator2_forward.16} parent=35 // pred_fallthru
              _
          $region36: #{generator2_forward.16} parent=31 // pred_fallthru
            _
          %299 = vnop
        $region32: #{generator2_forward.16} parent=27 // pred_fallthru
          _
      $region28: #{generator2_forward.16} parent=5 // pred_fallthru
        _
      %p300 = scmp.le.s32.totalorder 1, %s10
      %p301 = scmp.lt.s32.totalorder %s10, 3
      %p302 = pnand %p300, %p301
      %p303 = pneg %p302
      // Predicated region
      $region52: #{generator2_forward.16} parent=5 // pred_check
        _
      $region53: #{generator2_forward.16} parent=5 // pred_check_branch
        %305 = sbr.rel (%p302) target = $region55
      $region54: #{generator2_forward.16} parent=5 // pred_region
        %s306 = ssub.s32 %s10, 1
        %s307 = sand.u32 %s72, 1
        %s308 = sand.u32 %s72, 1
        %s309 = smul.addr %s308, 256
        %s310 = scalar_lea.vmem [#allocation3], %s309
        // Predicated region
        $region56: #{generator2_forward.16} parent=54 // pred_check
          %p311 = pneg %p85
        $region57: #{generator2_forward.16} parent=54 // pred_check_branch
          %313 = sbr.rel (%p311) target = $region59
        $region58: #{generator2_forward.16} parent=54 // pred_region
          _
        $region59: #{generator2_forward.16} parent=54 // pred_fallthru
          _
        %s314 = smul.u32 16, %s20
        %p315 = scmp.lt.s32.totalorder %s314, 15
        %s316 = scalar_select %p315, %s314, 15
        %p317 = scmp.lt.s32.totalorder %s22, 0
        %s318 = scalar_select %p317, %s22, 0
        %s319 = sadd.s32 %s318, %s316
        %s320 = smul.addr %s319, 8
        %s321 = scalar_lea.vmem %s0, %s320
        %p322 = pneg %p57
        %p323 = pneg %p54
        %s324 = sand.u32 %s72, 1
        %s325 = sand.u32 %s72, 1
        %s326 = smul.addr %s325, 256
        %s327 = scalar_lea.vmem [#allocation3], %s326
        %p328 = pneg %p85
        %p329 = pneg %p82
        %p330 = scmp.lt.s32.totalorder %s22, 0
        %s331 = scalar_select %p330, %s22, 0
        %s332 = scalar_lea.vmem %s2, %s331
        %p333 = pneg %p111
        %p334 = pneg %p108
        %p335 = scmp.lt.s32.totalorder %s22, 0
        %s336 = scalar_select %p335, %s22, 0
        %s337 = scalar_lea.vmem %s3, %s336
        %p338 = pneg %p137
        %p339 = pneg %p134
        %p340 = pneg %p165
        %p341 = pneg %p162
        %s342 = sand.u32 %s152, 1
        %s343 = sand.u32 %s152, 1
        %s344 = smul.addr %s343, 512
        %s345 = scalar_lea.vmem [#allocation4], %s344
        %s346 = smul.u32 16, %s20
        %p347 = scmp.lt.s32.totalorder %s346, 15
        %s348 = scalar_select %p347, %s346, 15
        %p349 = scmp.lt.s32.totalorder %s22, 0
        %s350 = scalar_select %p349, %s22, 0
        %s351 = sadd.s32 %s350, %s348
        %s352 = smul.addr %s351, 8
        %s353 = scalar_lea.vmem %s0, %s352
        %s354 = smul.u32 16, %s20
        %s355 = smul.u32 16, %s22
        %s356 = smul.u32 4, %s21
        %p357 = scmp.lt.s32.totalorder %s22, 0
        %s358 = scalar_select %p357, %s22, 0
        %s359 = scalar_lea.vmem %s2, %s358
        %p360 = scmp.lt.s32.totalorder %s22, 0
        %s361 = scalar_select %p360, %s22, 0
        %s362 = scalar_lea.vmem %s3, %s361
        %s363 = smul.u32 16, %s20
        %s364 = smul.u32 4, %s21
        %p365 = scmp.eq.s32.totalorder %s22, 0
        // Predicated region
        $region60: #{generator2_forward.16} parent=54 // pred_check
          %p366 = pneg %p365
        $region61: #{generator2_forward.16} parent=54 // pred_check_branch
          %368 = sbr.rel (%p366) target = $region63
        $region62: #{generator2_forward.16} parent=54 // pred_region
          %369 = vst [vmem:[#allocation2] sm:$0xff] 0.0
          %370 = vst [vmem:[#allocation2 + $0x8] sm:$0xff] 0.0
          %371 = vst [vmem:[#allocation2 + $0x10] sm:$0xff] 0.0
          %372 = vst [vmem:[#allocation2 + $0x18] sm:$0xff] 0.0
          %373 = vst [vmem:[#allocation2 + $0x20] sm:$0xff] 0.0
          %374 = vst [vmem:[#allocation2 + $0x28] sm:$0xff] 0.0
          %375 = vst [vmem:[#allocation2 + $0x30] sm:$0xff] 0.0
          %376 = vst [vmem:[#allocation2 + $0x38] sm:$0xff] 0.0
          %377 = vst [vmem:[#allocation2 + $0x40] sm:$0xff] 0.0
          %378 = vst [vmem:[#allocation2 + $0x48] sm:$0xff] 0.0
          %379 = vst [vmem:[#allocation2 + $0x50] sm:$0xff] 0.0
          %380 = vst [vmem:[#allocation2 + $0x58] sm:$0xff] 0.0
          %381 = vst [vmem:[#allocation2 + $0x60] sm:$0xff] 0.0
          %382 = vst [vmem:[#allocation2 + $0x68] sm:$0xff] 0.0
          %383 = vst [vmem:[#allocation2 + $0x70] sm:$0xff] 0.0
          %384 = vst [vmem:[#allocation2 + $0x78] sm:$0xff] 0.0
          %385 = vst [vmem:[#allocation2 + $0x80] sm:$0xff] 0.0
          %386 = vst [vmem:[#allocation2 + $0x88] sm:$0xff] 0.0
          %387 = vst [vmem:[#allocation2 + $0x90] sm:$0xff] 0.0
          %388 = vst [vmem:[#allocation2 + $0x98] sm:$0xff] 0.0
          %389 = vst [vmem:[#allocation2 + $0xa0] sm:$0xff] 0.0
          %390 = vst [vmem:[#allocation2 + $0xa8] sm:$0xff] 0.0
          %391 = vst [vmem:[#allocation2 + $0xb0] sm:$0xff] 0.0
          %392 = vst [vmem:[#allocation2 + $0xb8] sm:$0xff] 0.0
          %393 = vst [vmem:[#allocation2 + $0xc0] sm:$0xff] 0.0
          %394 = vst [vmem:[#allocation2 + $0xc8] sm:$0xff] 0.0
          %395 = vst [vmem:[#allocation2 + $0xd0] sm:$0xff] 0.0
          %396 = vst [vmem:[#allocation2 + $0xd8] sm:$0xff] 0.0
          %397 = vst [vmem:[#allocation2 + $0xe0] sm:$0xff] 0.0
          %398 = vst [vmem:[#allocation2 + $0xe8] sm:$0xff] 0.0
          %399 = vst [vmem:[#allocation2 + $0xf0] sm:$0xff] 0.0
          %400 = vst [vmem:[#allocation2 + $0xf8] sm:$0xff] 0.0
          %401 = vst [vmem:[#allocation2 + $0x100] sm:$0xff] 0.0
          %402 = vst [vmem:[#allocation2 + $0x108] sm:$0xff] 0.0
          %403 = vst [vmem:[#allocation2 + $0x110] sm:$0xff] 0.0
          %404 = vst [vmem:[#allocation2 + $0x118] sm:$0xff] 0.0
          %405 = vst [vmem:[#allocation2 + $0x120] sm:$0xff] 0.0
          %406 = vst [vmem:[#allocation2 + $0x128] sm:$0xff] 0.0
          %407 = vst [vmem:[#allocation2 + $0x130] sm:$0xff] 0.0
          %408 = vst [vmem:[#allocation2 + $0x138] sm:$0xff] 0.0
          %409 = vst [vmem:[#allocation2 + $0x140] sm:$0xff] 0.0
          %410 = vst [vmem:[#allocation2 + $0x148] sm:$0xff] 0.0
          %411 = vst [vmem:[#allocation2 + $0x150] sm:$0xff] 0.0
          %412 = vst [vmem:[#allocation2 + $0x158] sm:$0xff] 0.0
          %413 = vst [vmem:[#allocation2 + $0x160] sm:$0xff] 0.0
          %414 = vst [vmem:[#allocation2 + $0x168] sm:$0xff] 0.0
          %415 = vst [vmem:[#allocation2 + $0x170] sm:$0xff] 0.0
          %416 = vst [vmem:[#allocation2 + $0x178] sm:$0xff] 0.0
          %417 = vst [vmem:[#allocation2 + $0x180] sm:$0xff] 0.0
          %418 = vst [vmem:[#allocation2 + $0x188] sm:$0xff] 0.0
          %419 = vst [vmem:[#allocation2 + $0x190] sm:$0xff] 0.0
          %420 = vst [vmem:[#allocation2 + $0x198] sm:$0xff] 0.0
          %421 = vst [vmem:[#allocation2 + $0x1a0] sm:$0xff] 0.0
          %422 = vst [vmem:[#allocation2 + $0x1a8] sm:$0xff] 0.0
          %423 = vst [vmem:[#allocation2 + $0x1b0] sm:$0xff] 0.0
          %424 = vst [vmem:[#allocation2 + $0x1b8] sm:$0xff] 0.0
          %425 = vst [vmem:[#allocation2 + $0x1c0] sm:$0xff] 0.0
          %426 = vst [vmem:[#allocation2 + $0x1c8] sm:$0xff] 0.0
          %427 = vst [vmem:[#allocation2 + $0x1d0] sm:$0xff] 0.0
          %428 = vst [vmem:[#allocation2 + $0x1d8] sm:$0xff] 0.0
          %429 = vst [vmem:[#allocation2 + $0x1e0] sm:$0xff] 0.0
          %430 = vst [vmem:[#allocation2 + $0x1e8] sm:$0xff] 0.0
          %431 = vst [vmem:[#allocation2 + $0x1f0] sm:$0xff] 0.0
          %432 = vst [vmem:[#allocation2 + $0x1f8] sm:$0xff] 0.0
        $region63: #{generator2_forward.16} parent=54 // pred_fallthru
          _
        %v433 = vld [vmem:[%s353] sm:$0xff]
        %v434 = vld [vmem:[%s353 + $0x8] sm:$0xff]
        %v435 = vld [vmem:[%s353 + $0x10] sm:$0xff]
        %v436 = vld [vmem:[%s353 + $0x18] sm:$0xff]
        %v437 = vld [vmem:[%s353 + $0x20] sm:$0xff]
        %v438 = vld [vmem:[%s353 + $0x28] sm:$0xff]
        %v439 = vld [vmem:[%s353 + $0x30] sm:$0xff]
        %v440 = vld [vmem:[%s353 + $0x38] sm:$0xff]
        %v441 = vld [vmem:[%s353 + $0x40] sm:$0xff]
        %v442 = vld [vmem:[%s353 + $0x48] sm:$0xff]
        %v443 = vld [vmem:[%s353 + $0x50] sm:$0xff]
        %v444 = vld [vmem:[%s353 + $0x58] sm:$0xff]
        %v445 = vld [vmem:[%s353 + $0x60] sm:$0xff]
        %v446 = vld [vmem:[%s353 + $0x68] sm:$0xff]
        %v447 = vld [vmem:[%s353 + $0x70] sm:$0xff]
        %v448 = vld [vmem:[%s353 + $0x78] sm:$0xff]
        %v449 = vld [vmem:[%s359] sm:$0x1]
        %v451 = vperm.slane %v449, 0
        %v453 = vmul.f32 %v433, %v451
        %v454 = vmul.f32 %v434, %v451
        %v455 = vmul.f32 %v435, %v451
        %v456 = vmul.f32 %v436, %v451
        %v457 = vmul.f32 %v437, %v451
        %v458 = vmul.f32 %v438, %v451
        %v459 = vmul.f32 %v439, %v451
        %v460 = vmul.f32 %v440, %v451
        %v461 = vmul.f32 %v441, %v451
        %v462 = vmul.f32 %v442, %v451
        %v463 = vmul.f32 %v443, %v451
        %v464 = vmul.f32 %v444, %v451
        %v465 = vmul.f32 %v445, %v451
        %v466 = vmul.f32 %v446, %v451
        %v467 = vmul.f32 %v447, %v451
        %v468 = vmul.f32 %v448, %v451
        %v469 = vld [vmem:[%s362] sm:$0x1]
        %v471 = vperm.slane %v469, 0
        %v473 = vadd.f32 %v453, %v471
        %v474 = vadd.f32 %v454, %v471
        %v475 = vadd.f32 %v455, %v471
        %v476 = vadd.f32 %v456, %v471
        %v477 = vadd.f32 %v457, %v471
        %v478 = vadd.f32 %v458, %v471
        %v479 = vadd.f32 %v459, %v471
        %v480 = vadd.f32 %v460, %v471
        %v481 = vadd.f32 %v461, %v471
        %v482 = vadd.f32 %v462, %v471
        %v483 = vadd.f32 %v463, %v471
        %v484 = vadd.f32 %v464, %v471
        %v485 = vadd.f32 %v465, %v471
        %v486 = vadd.f32 %v466, %v471
        %v487 = vadd.f32 %v467, %v471
        %v488 = vadd.f32 %v468, %v471
        %v489 = vmax.f32 %v473, 0.0
        %v490 = vmax.f32 %v474, 0.0
        %v491 = vmax.f32 %v475, 0.0
        %v492 = vmax.f32 %v476, 0.0
        %v493 = vmax.f32 %v477, 0.0
        %v494 = vmax.f32 %v478, 0.0
        %v495 = vmax.f32 %v479, 0.0
        %v496 = vmax.f32 %v480, 0.0
        %v497 = vmax.f32 %v481, 0.0
        %v498 = vmax.f32 %v482, 0.0
        %v499 = vmax.f32 %v483, 0.0
        %v500 = vmax.f32 %v484, 0.0
        %v501 = vmax.f32 %v485, 0.0
        %v502 = vmax.f32 %v486, 0.0
        %v503 = vmax.f32 %v487, 0.0
        %v504 = vmax.f32 %v488, 0.0
        %v505 = vld [vmem:[#allocation2] sm:$0xff]
        %v506 = vld [vmem:[#allocation2 + $0x8] sm:$0xff]
        %v507 = vld [vmem:[#allocation2 + $0x10] sm:$0xff]
        %v508 = vld [vmem:[#allocation2 + $0x18] sm:$0xff]
        %v509 = vld [vmem:[#allocation2 + $0x20] sm:$0xff]
        %v510 = vld [vmem:[#allocation2 + $0x28] sm:$0xff]
        %v511 = vld [vmem:[#allocation2 + $0x30] sm:$0xff]
        %v512 = vld [vmem:[#allocation2 + $0x38] sm:$0xff]
        %v513 = vld [vmem:[#allocation2 + $0x40] sm:$0xff]
        %v514 = vld [vmem:[#allocation2 + $0x48] sm:$0xff]
        %v515 = vld [vmem:[#allocation2 + $0x50] sm:$0xff]
        %v516 = vld [vmem:[#allocation2 + $0x58] sm:$0xff]
        %v517 = vld [vmem:[#allocation2 + $0x60] sm:$0xff]
        %v518 = vld [vmem:[#allocation2 + $0x68] sm:$0xff]
        %v519 = vld [vmem:[#allocation2 + $0x70] sm:$0xff]
        %v520 = vld [vmem:[#allocation2 + $0x78] sm:$0xff]
        %v521 = vld [vmem:[#allocation2 + $0x80] sm:$0xff]
        %v522 = vld [vmem:[#allocation2 + $0x88] sm:$0xff]
        %v523 = vld [vmem:[#allocation2 + $0x90] sm:$0xff]
        %v524 = vld [vmem:[#allocation2 + $0x98] sm:$0xff]
        %v525 = vld [vmem:[#allocation2 + $0xa0] sm:$0xff]
        %v526 = vld [vmem:[#allocation2 + $0xa8] sm:$0xff]
        %v527 = vld [vmem:[#allocation2 + $0xb0] sm:$0xff]
        %v528 = vld [vmem:[#allocation2 + $0xb8] sm:$0xff]
        %v529 = vld [vmem:[#allocation2 + $0xc0] sm:$0xff]
        %v530 = vld [vmem:[#allocation2 + $0xc8] sm:$0xff]
        %v531 = vld [vmem:[#allocation2 + $0xd0] sm:$0xff]
        %v532 = vld [vmem:[#allocation2 + $0xd8] sm:$0xff]
        %v533 = vld [vmem:[#allocation2 + $0xe0] sm:$0xff]
        %v534 = vld [vmem:[#allocation2 + $0xe8] sm:$0xff]
        %v535 = vld [vmem:[#allocation2 + $0xf0] sm:$0xff]
        %v536 = vld [vmem:[#allocation2 + $0xf8] sm:$0xff]
        %v537 = vld [vmem:[#allocation2 + $0x100] sm:$0xff]
        %v538 = vld [vmem:[#allocation2 + $0x108] sm:$0xff]
        %v539 = vld [vmem:[#allocation2 + $0x110] sm:$0xff]
        %v540 = vld [vmem:[#allocation2 + $0x118] sm:$0xff]
        %v541 = vld [vmem:[#allocation2 + $0x120] sm:$0xff]
        %v542 = vld [vmem:[#allocation2 + $0x128] sm:$0xff]
        %v543 = vld [vmem:[#allocation2 + $0x130] sm:$0xff]
        %v544 = vld [vmem:[#allocation2 + $0x138] sm:$0xff]
        %v545 = vld [vmem:[#allocation2 + $0x140] sm:$0xff]
        %v546 = vld [vmem:[#allocation2 + $0x148] sm:$0xff]
        %v547 = vld [vmem:[#allocation2 + $0x150] sm:$0xff]
        %v548 = vld [vmem:[#allocation2 + $0x158] sm:$0xff]
        %v549 = vld [vmem:[#allocation2 + $0x160] sm:$0xff]
        %v550 = vld [vmem:[#allocation2 + $0x168] sm:$0xff]
        %v551 = vld [vmem:[#allocation2 + $0x170] sm:$0xff]
        %v552 = vld [vmem:[#allocation2 + $0x178] sm:$0xff]
        %v553 = vld [vmem:[#allocation2 + $0x180] sm:$0xff]
        %v554 = vld [vmem:[#allocation2 + $0x188] sm:$0xff]
        %v555 = vld [vmem:[#allocation2 + $0x190] sm:$0xff]
        %v556 = vld [vmem:[#allocation2 + $0x198] sm:$0xff]
        %v557 = vld [vmem:[#allocation2 + $0x1a0] sm:$0xff]
        %v558 = vld [vmem:[#allocation2 + $0x1a8] sm:$0xff]
        %v559 = vld [vmem:[#allocation2 + $0x1b0] sm:$0xff]
        %v560 = vld [vmem:[#allocation2 + $0x1b8] sm:$0xff]
        %v561 = vld [vmem:[#allocation2 + $0x1c0] sm:$0xff]
        %v562 = vld [vmem:[#allocation2 + $0x1c8] sm:$0xff]
        %v563 = vld [vmem:[#allocation2 + $0x1d0] sm:$0xff]
        %v564 = vld [vmem:[#allocation2 + $0x1d8] sm:$0xff]
        %v565 = vld [vmem:[#allocation2 + $0x1e0] sm:$0xff]
        %v566 = vld [vmem:[#allocation2 + $0x1e8] sm:$0xff]
        %v567 = vld [vmem:[#allocation2 + $0x1f0] sm:$0xff]
        %v568 = vld [vmem:[#allocation2 + $0x1f8] sm:$0xff]
        %v569 = vpack.c.bf16 %v490, %v489
        %v570 = vpack.c.bf16 %v492, %v491
        %v571 = vpack.c.bf16 %v494, %v493
        %v572 = vpack.c.bf16 %v496, %v495
        %v573 = vpack.c.bf16 %v498, %v497
        %v574 = vpack.c.bf16 %v500, %v499
        %v575 = vpack.c.bf16 %v502, %v501
        %v576 = vpack.c.bf16 %v504, %v503
        %v577 = vld [vmem:[%s310] sm:$0xff]
        %v578 = vld [vmem:[%s310 + $0x8] sm:$0xff]
        %v579 = vld [vmem:[%s310 + $0x10] sm:$0xff]
        %v580 = vld [vmem:[%s310 + $0x18] sm:$0xff]
        %v581 = vld [vmem:[%s310 + $0x20] sm:$0xff]
        %v582 = vld [vmem:[%s310 + $0x28] sm:$0xff]
        %v583 = vld [vmem:[%s310 + $0x30] sm:$0xff]
        %v584 = vld [vmem:[%s310 + $0x38] sm:$0xff]
        %v585 = vld [vmem:[%s310 + $0x40] sm:$0xff]
        %v586 = vld [vmem:[%s310 + $0x48] sm:$0xff]
        %v587 = vld [vmem:[%s310 + $0x50] sm:$0xff]
        %v588 = vld [vmem:[%s310 + $0x58] sm:$0xff]
        %v589 = vld [vmem:[%s310 + $0x60] sm:$0xff]
        %v590 = vld [vmem:[%s310 + $0x68] sm:$0xff]
        %v591 = vld [vmem:[%s310 + $0x70] sm:$0xff]
        %v592 = vld [vmem:[%s310 + $0x78] sm:$0xff]
        %v593 = vld [vmem:[%s310 + $0x80] sm:$0xff]
        %v594 = vld [vmem:[%s310 + $0x88] sm:$0xff]
        %v595 = vld [vmem:[%s310 + $0x90] sm:$0xff]
        %v596 = vld [vmem:[%s310 + $0x98] sm:$0xff]
        %v597 = vld [vmem:[%s310 + $0xa0] sm:$0xff]
        %v598 = vld [vmem:[%s310 + $0xa8] sm:$0xff]
        %v599 = vld [vmem:[%s310 + $0xb0] sm:$0xff]
        %v600 = vld [vmem:[%s310 + $0xb8] sm:$0xff]
        %v601 = vld [vmem:[%s310 + $0xc0] sm:$0xff]
        %v602 = vld [vmem:[%s310 + $0xc8] sm:$0xff]
        %v603 = vld [vmem:[%s310 + $0xd0] sm:$0xff]
        %v604 = vld [vmem:[%s310 + $0xd8] sm:$0xff]
        %v605 = vld [vmem:[%s310 + $0xe0] sm:$0xff]
        %v606 = vld [vmem:[%s310 + $0xe8] sm:$0xff]
        %v607 = vld [vmem:[%s310 + $0xf0] sm:$0xff]
        %v608 = vld [vmem:[%s310 + $0xf8] sm:$0xff]
        %v641 = vunpack.c.l.b16 %v577
        %v642 = vunpack.c.h.b16 %v577
        %v643 = vunpack.c.l.b16 %v578
        %v644 = vunpack.c.h.b16 %v578
        %v645 = vunpack.c.l.b16 %v579
        %v646 = vunpack.c.h.b16 %v579
        %v647 = vunpack.c.l.b16 %v580
        %v648 = vunpack.c.h.b16 %v580
        %v649 = vunpack.c.l.b16 %v581
        %v650 = vunpack.c.h.b16 %v581
        %v651 = vunpack.c.l.b16 %v582
        %v652 = vunpack.c.h.b16 %v582
        %v653 = vunpack.c.l.b16 %v583
        %v654 = vunpack.c.h.b16 %v583
        %v655 = vunpack.c.l.b16 %v584
        %v656 = vunpack.c.h.b16 %v584
        %v657 = vunpack.c.l.b16 %v585
        %v658 = vunpack.c.h.b16 %v585
        %v659 = vunpack.c.l.b16 %v586
        %v660 = vunpack.c.h.b16 %v586
        %v661 = vunpack.c.l.b16 %v587
        %v662 = vunpack.c.h.b16 %v587
        %v663 = vunpack.c.l.b16 %v588
        %v664 = vunpack.c.h.b16 %v588
        %v665 = vunpack.c.l.b16 %v589
        %v666 = vunpack.c.h.b16 %v589
        %v667 = vunpack.c.l.b16 %v590
        %v668 = vunpack.c.h.b16 %v590
        %v669 = vunpack.c.l.b16 %v591
        %v670 = vunpack.c.h.b16 %v591
        %v671 = vunpack.c.l.b16 %v592
        %v672 = vunpack.c.h.b16 %v592
        %v673 = vunpack.c.l.b16 %v593
        %v674 = vunpack.c.h.b16 %v593
        %v675 = vunpack.c.l.b16 %v594
        %v676 = vunpack.c.h.b16 %v594
        %v677 = vunpack.c.l.b16 %v595
        %v678 = vunpack.c.h.b16 %v595
        %v679 = vunpack.c.l.b16 %v596
        %v680 = vunpack.c.h.b16 %v596
        %v681 = vunpack.c.l.b16 %v597
        %v682 = vunpack.c.h.b16 %v597
        %v683 = vunpack.c.l.b16 %v598
        %v684 = vunpack.c.h.b16 %v598
        %v685 = vunpack.c.l.b16 %v599
        %v686 = vunpack.c.h.b16 %v599
        %v687 = vunpack.c.l.b16 %v600
        %v688 = vunpack.c.h.b16 %v600
        %v689 = vunpack.c.l.b16 %v601
        %v690 = vunpack.c.h.b16 %v601
        %v691 = vunpack.c.l.b16 %v602
        %v692 = vunpack.c.h.b16 %v602
        %v693 = vunpack.c.l.b16 %v603
        %v694 = vunpack.c.h.b16 %v603
        %v695 = vunpack.c.l.b16 %v604
        %v696 = vunpack.c.h.b16 %v604
        %v697 = vunpack.c.l.b16 %v605
        %v698 = vunpack.c.h.b16 %v605
        %v699 = vunpack.c.l.b16 %v606
        %v700 = vunpack.c.h.b16 %v606
        %v701 = vunpack.c.l.b16 %v607
        %v702 = vunpack.c.h.b16 %v607
        %v703 = vunpack.c.l.b16 %v608
        %v704 = vunpack.c.h.b16 %v608
        %v705 = vpack.c.b16 %v645, %v641
        %v706 = vpack.c.b16 %v646, %v642
        %v707 = vpack.c.b16 %v647, %v643
        %v708 = vpack.c.b16 %v648, %v644
        %v709 = vpack.c.b16 %v653, %v649
        %v710 = vpack.c.b16 %v654, %v650
        %v711 = vpack.c.b16 %v655, %v651
        %v712 = vpack.c.b16 %v656, %v652
        %v713 = vpack.c.b16 %v661, %v657
        %v714 = vpack.c.b16 %v662, %v658
        %v715 = vpack.c.b16 %v663, %v659
        %v716 = vpack.c.b16 %v664, %v660
        %v717 = vpack.c.b16 %v669, %v665
        %v718 = vpack.c.b16 %v670, %v666
        %v719 = vpack.c.b16 %v671, %v667
        %v720 = vpack.c.b16 %v672, %v668
        %v721 = vpack.c.b16 %v677, %v673
        %v722 = vpack.c.b16 %v678, %v674
        %v723 = vpack.c.b16 %v679, %v675
        %v724 = vpack.c.b16 %v680, %v676
        %v725 = vpack.c.b16 %v685, %v681
        %v726 = vpack.c.b16 %v686, %v682
        %v727 = vpack.c.b16 %v687, %v683
        %v728 = vpack.c.b16 %v688, %v684
        %v729 = vpack.c.b16 %v693, %v689
        %v730 = vpack.c.b16 %v694, %v690
        %v731 = vpack.c.b16 %v695, %v691
        %v732 = vpack.c.b16 %v696, %v692
        %v733 = vpack.c.b16 %v701, %v697
        %v734 = vpack.c.b16 %v702, %v698
        %v735 = vpack.c.b16 %v703, %v699
        %v736 = vpack.c.b16 %v704, %v700
        %769 = vmatpush.bf16.msra.mxu0 %v733
        %770 = vmatpush.bf16.msra.mxu0 %v729
        %771 = vmatpush.bf16.msra.mxu0 %v725
        %772 = vmatpush.bf16.msra.mxu0 %v721
        %773 = vmatpush.bf16.msra.mxu0 %v717
        %774 = vmatpush.bf16.msra.mxu0 %v713
        %775 = vmatpush.bf16.msra.mxu0 %v709
        %776 = vmatpush.bf16.msra.mxu0 %v705
        %777 = vmatmul.bf16.gmra.mxu0 %v569
        %v778 = vpop.f32.mrf.mxu0
        %v779 = vadd.f32 0.0, %v778
        %v780 = vpop.f32.mrf.mxu0
        %v781 = vadd.f32 0.0, %v780
        %782 = vmatmul.bf16.gmra.mxu0 %v570
        %v783 = vpop.f32.mrf.mxu0
        %v784 = vadd.f32 0.0, %v783
        %v785 = vpop.f32.mrf.mxu0
        %v786 = vadd.f32 0.0, %v785
        %787 = vmatmul.bf16.gmra.mxu0 %v571
        %v788 = vpop.f32.mrf.mxu0
        %v789 = vadd.f32 0.0, %v788
        %v790 = vpop.f32.mrf.mxu0
        %v791 = vadd.f32 0.0, %v790
        %792 = vmatmul.bf16.gmra.mxu0 %v572
        %v793 = vpop.f32.mrf.mxu0
        %v794 = vadd.f32 0.0, %v793
        %v795 = vpop.f32.mrf.mxu0
        %v796 = vadd.f32 0.0, %v795
        %797 = vmatmul.bf16.gmra.mxu0 %v573
        %v798 = vpop.f32.mrf.mxu0
        %v799 = vadd.f32 0.0, %v798
        %v800 = vpop.f32.mrf.mxu0
        %v801 = vadd.f32 0.0, %v800
        %802 = vmatmul.bf16.gmra.mxu0 %v574
        %v803 = vpop.f32.mrf.mxu0
        %v804 = vadd.f32 0.0, %v803
        %v805 = vpop.f32.mrf.mxu0
        %v806 = vadd.f32 0.0, %v805
        %807 = vmatmul.bf16.gmra.mxu0 %v575
        %v808 = vpop.f32.mrf.mxu0
        %v809 = vadd.f32 0.0, %v808
        %v810 = vpop.f32.mrf.mxu0
        %v811 = vadd.f32 0.0, %v810
        %812 = vmatmul.bf16.gmra.mxu0 %v576
        %v813 = vpop.f32.mrf.mxu0
        %v814 = vadd.f32 0.0, %v813
        %v815 = vpop.f32.mrf.mxu0
        %v816 = vadd.f32 0.0, %v815
        %817 = vdwg.mxu0
        %818 = vmatpush.bf16.msra.mxu0 %v734
        %819 = vmatpush.bf16.msra.mxu0 %v730
        %820 = vmatpush.bf16.msra.mxu0 %v726
        %821 = vmatpush.bf16.msra.mxu0 %v722
        %822 = vmatpush.bf16.msra.mxu0 %v718
        %823 = vmatpush.bf16.msra.mxu0 %v714
        %824 = vmatpush.bf16.msra.mxu0 %v710
        %825 = vmatpush.bf16.msra.mxu0 %v706
        %826 = vmatmul.bf16.gmra.mxu0 %v569
        %v827 = vpop.f32.mrf.mxu0
        %v828 = vadd.f32 0.0, %v827
        %v829 = vpop.f32.mrf.mxu0
        %v830 = vadd.f32 0.0, %v829
        %831 = vmatmul.bf16.gmra.mxu0 %v570
        %v832 = vpop.f32.mrf.mxu0
        %v833 = vadd.f32 0.0, %v832
        %v834 = vpop.f32.mrf.mxu0
        %v835 = vadd.f32 0.0, %v834
        %836 = vmatmul.bf16.gmra.mxu0 %v571
        %v837 = vpop.f32.mrf.mxu0
        %v838 = vadd.f32 0.0, %v837
        %v839 = vpop.f32.mrf.mxu0
        %v840 = vadd.f32 0.0, %v839
        %841 = vmatmul.bf16.gmra.mxu0 %v572
        %v842 = vpop.f32.mrf.mxu0
        %v843 = vadd.f32 0.0, %v842
        %v844 = vpop.f32.mrf.mxu0
        %v845 = vadd.f32 0.0, %v844
        %846 = vmatmul.bf16.gmra.mxu0 %v573
        %v847 = vpop.f32.mrf.mxu0
        %v848 = vadd.f32 0.0, %v847
        %v849 = vpop.f32.mrf.mxu0
        %v850 = vadd.f32 0.0, %v849
        %851 = vmatmul.bf16.gmra.mxu0 %v574
        %v852 = vpop.f32.mrf.mxu0
        %v853 = vadd.f32 0.0, %v852
        %v854 = vpop.f32.mrf.mxu0
        %v855 = vadd.f32 0.0, %v854
        %856 = vmatmul.bf16.gmra.mxu0 %v575
        %v857 = vpop.f32.mrf.mxu0
        %v858 = vadd.f32 0.0, %v857
        %v859 = vpop.f32.mrf.mxu0
        %v860 = vadd.f32 0.0, %v859
        %861 = vmatmul.bf16.gmra.mxu0 %v576
        %v862 = vpop.f32.mrf.mxu0
        %v863 = vadd.f32 0.0, %v862
        %v864 = vpop.f32.mrf.mxu0
        %v865 = vadd.f32 0.0, %v864
        %866 = vdwg.mxu0
        %867 = vmatpush.bf16.msra.mxu0 %v735
        %868 = vmatpush.bf16.msra.mxu0 %v731
        %869 = vmatpush.bf16.msra.mxu0 %v727
        %870 = vmatpush.bf16.msra.mxu0 %v723
        %871 = vmatpush.bf16.msra.mxu0 %v719
        %872 = vmatpush.bf16.msra.mxu0 %v715
        %873 = vmatpush.bf16.msra.mxu0 %v711
        %874 = vmatpush.bf16.msra.mxu0 %v707
        %875 = vmatmul.bf16.gmra.mxu0 %v569
        %v876 = vpop.f32.mrf.mxu0
        %v877 = vadd.f32 0.0, %v876
        %v878 = vpop.f32.mrf.mxu0
        %v879 = vadd.f32 0.0, %v878
        %880 = vmatmul.bf16.gmra.mxu0 %v570
        %v881 = vpop.f32.mrf.mxu0
        %v882 = vadd.f32 0.0, %v881
        %v883 = vpop.f32.mrf.mxu0
        %v884 = vadd.f32 0.0, %v883
        %885 = vmatmul.bf16.gmra.mxu0 %v571
        %v886 = vpop.f32.mrf.mxu0
        %v887 = vadd.f32 0.0, %v886
        %v888 = vpop.f32.mrf.mxu0
        %v889 = vadd.f32 0.0, %v888
        %890 = vmatmul.bf16.gmra.mxu0 %v572
        %v891 = vpop.f32.mrf.mxu0
        %v892 = vadd.f32 0.0, %v891
        %v893 = vpop.f32.mrf.mxu0
        %v894 = vadd.f32 0.0, %v893
        %895 = vmatmul.bf16.gmra.mxu0 %v573
        %v896 = vpop.f32.mrf.mxu0
        %v897 = vadd.f32 0.0, %v896
        %v898 = vpop.f32.mrf.mxu0
        %v899 = vadd.f32 0.0, %v898
        %900 = vmatmul.bf16.gmra.mxu0 %v574
        %v901 = vpop.f32.mrf.mxu0
        %v902 = vadd.f32 0.0, %v901
        %v903 = vpop.f32.mrf.mxu0
        %v904 = vadd.f32 0.0, %v903
        %905 = vmatmul.bf16.gmra.mxu0 %v575
        %v906 = vpop.f32.mrf.mxu0
        %v907 = vadd.f32 0.0, %v906
        %v908 = vpop.f32.mrf.mxu0
        %v909 = vadd.f32 0.0, %v908
        %910 = vmatmul.bf16.gmra.mxu0 %v576
        %v911 = vpop.f32.mrf.mxu0
        %v912 = vadd.f32 0.0, %v911
        %v913 = vpop.f32.mrf.mxu0
        %v914 = vadd.f32 0.0, %v913
        %915 = vdwg.mxu0
        %916 = vmatpush.bf16.msra.mxu0 %v736
        %917 = vmatpush.bf16.msra.mxu0 %v732
        %918 = vmatpush.bf16.msra.mxu0 %v728
        %919 = vmatpush.bf16.msra.mxu0 %v724
        %920 = vmatpush.bf16.msra.mxu0 %v720
        %921 = vmatpush.bf16.msra.mxu0 %v716
        %922 = vmatpush.bf16.msra.mxu0 %v712
        %923 = vmatpush.bf16.msra.mxu0 %v708
        %924 = vmatmul.bf16.gmra.mxu0 %v569
        %v925 = vpop.f32.mrf.mxu0
        %v926 = vadd.f32 0.0, %v925
        %v927 = vpop.f32.mrf.mxu0
        %v928 = vadd.f32 0.0, %v927
        %929 = vmatmul.bf16.gmra.mxu0 %v570
        %v930 = vpop.f32.mrf.mxu0
        %v931 = vadd.f32 0.0, %v930
        %v932 = vpop.f32.mrf.mxu0
        %v933 = vadd.f32 0.0, %v932
        %934 = vmatmul.bf16.gmra.mxu0 %v571
        %v935 = vpop.f32.mrf.mxu0
        %v936 = vadd.f32 0.0, %v935
        %v937 = vpop.f32.mrf.mxu0
        %v938 = vadd.f32 0.0, %v937
        %939 = vmatmul.bf16.gmra.mxu0 %v572
        %v940 = vpop.f32.mrf.mxu0
        %v941 = vadd.f32 0.0, %v940
        %v942 = vpop.f32.mrf.mxu0
        %v943 = vadd.f32 0.0, %v942
        %944 = vmatmul.bf16.gmra.mxu0 %v573
        %v945 = vpop.f32.mrf.mxu0
        %v946 = vadd.f32 0.0, %v945
        %v947 = vpop.f32.mrf.mxu0
        %v948 = vadd.f32 0.0, %v947
        %949 = vmatmul.bf16.gmra.mxu0 %v574
        %v950 = vpop.f32.mrf.mxu0
        %v951 = vadd.f32 0.0, %v950
        %v952 = vpop.f32.mrf.mxu0
        %v953 = vadd.f32 0.0, %v952
        %954 = vmatmul.bf16.gmra.mxu0 %v575
        %v955 = vpop.f32.mrf.mxu0
        %v956 = vadd.f32 0.0, %v955
        %v957 = vpop.f32.mrf.mxu0
        %v958 = vadd.f32 0.0, %v957
        %959 = vmatmul.bf16.gmra.mxu0 %v576
        %v960 = vpop.f32.mrf.mxu0
        %v961 = vadd.f32 0.0, %v960
        %v962 = vpop.f32.mrf.mxu0
        %v963 = vadd.f32 0.0, %v962
        %964 = vdwg.mxu0
        %v965 = vadd.f32 %v505, %v779
        %v966 = vadd.f32 %v506, %v828
        %v967 = vadd.f32 %v507, %v877
        %v968 = vadd.f32 %v508, %v926
        %v969 = vadd.f32 %v509, %v781
        %v970 = vadd.f32 %v510, %v830
        %v971 = vadd.f32 %v511, %v879
        %v972 = vadd.f32 %v512, %v928
        %v973 = vadd.f32 %v513, %v784
        %v974 = vadd.f32 %v514, %v833
        %v975 = vadd.f32 %v515, %v882
        %v976 = vadd.f32 %v516, %v931
        %v977 = vadd.f32 %v517, %v786
        %v978 = vadd.f32 %v518, %v835
        %v979 = vadd.f32 %v519, %v884
        %v980 = vadd.f32 %v520, %v933
        %v981 = vadd.f32 %v521, %v789
        %v982 = vadd.f32 %v522, %v838
        %v983 = vadd.f32 %v523, %v887
        %v984 = vadd.f32 %v524, %v936
        %v985 = vadd.f32 %v525, %v791
        %v986 = vadd.f32 %v526, %v840
        %v987 = vadd.f32 %v527, %v889
        %v988 = vadd.f32 %v528, %v938
        %v989 = vadd.f32 %v529, %v794
        %v990 = vadd.f32 %v530, %v843
        %v991 = vadd.f32 %v531, %v892
        %v992 = vadd.f32 %v532, %v941
        %v993 = vadd.f32 %v533, %v796
        %v994 = vadd.f32 %v534, %v845
        %v995 = vadd.f32 %v535, %v894
        %v996 = vadd.f32 %v536, %v943
        %v997 = vadd.f32 %v537, %v799
        %v998 = vadd.f32 %v538, %v848
        %v999 = vadd.f32 %v539, %v897
        %v1000 = vadd.f32 %v540, %v946
        %v1001 = vadd.f32 %v541, %v801
        %v1002 = vadd.f32 %v542, %v850
        %v1003 = vadd.f32 %v543, %v899
        %v1004 = vadd.f32 %v544, %v948
        %v1005 = vadd.f32 %v545, %v804
        %v1006 = vadd.f32 %v546, %v853
        %v1007 = vadd.f32 %v547, %v902
        %v1008 = vadd.f32 %v548, %v951
        %v1009 = vadd.f32 %v549, %v806
        %v1010 = vadd.f32 %v550, %v855
        %v1011 = vadd.f32 %v551, %v904
        %v1012 = vadd.f32 %v552, %v953
        %v1013 = vadd.f32 %v553, %v809
        %v1014 = vadd.f32 %v554, %v858
        %v1015 = vadd.f32 %v555, %v907
        %v1016 = vadd.f32 %v556, %v956
        %v1017 = vadd.f32 %v557, %v811
        %v1018 = vadd.f32 %v558, %v860
        %v1019 = vadd.f32 %v559, %v909
        %v1020 = vadd.f32 %v560, %v958
        %v1021 = vadd.f32 %v561, %v814
        %v1022 = vadd.f32 %v562, %v863
        %v1023 = vadd.f32 %v563, %v912
        %v1024 = vadd.f32 %v564, %v961
        %v1025 = vadd.f32 %v565, %v816
        %v1026 = vadd.f32 %v566, %v865
        %v1027 = vadd.f32 %v567, %v914
        %v1028 = vadd.f32 %v568, %v963
        %1029 = vst [vmem:[#allocation2] sm:$0xff] %v965
        %1030 = vst [vmem:[#allocation2 + $0x8] sm:$0xff] %v966
        %1031 = vst [vmem:[#allocation2 + $0x10] sm:$0xff] %v967
        %1032 = vst [vmem:[#allocation2 + $0x18] sm:$0xff] %v968
        %1033 = vst [vmem:[#allocation2 + $0x20] sm:$0xff] %v969
        %1034 = vst [vmem:[#allocation2 + $0x28] sm:$0xff] %v970
        %1035 = vst [vmem:[#allocation2 + $0x30] sm:$0xff] %v971
        %1036 = vst [vmem:[#allocation2 + $0x38] sm:$0xff] %v972
        %1037 = vst [vmem:[#allocation2 + $0x40] sm:$0xff] %v973
        %1038 = vst [vmem:[#allocation2 + $0x48] sm:$0xff] %v974
        %1039 = vst [vmem:[#allocation2 + $0x50] sm:$0xff] %v975
        %1040 = vst [vmem:[#allocation2 + $0x58] sm:$0xff] %v976
        %1041 = vst [vmem:[#allocation2 + $0x60] sm:$0xff] %v977
        %1042 = vst [vmem:[#allocation2 + $0x68] sm:$0xff] %v978
        %1043 = vst [vmem:[#allocation2 + $0x70] sm:$0xff] %v979
        %1044 = vst [vmem:[#allocation2 + $0x78] sm:$0xff] %v980
        %1045 = vst [vmem:[#allocation2 + $0x80] sm:$0xff] %v981
        %1046 = vst [vmem:[#allocation2 + $0x88] sm:$0xff] %v982
        %1047 = vst [vmem:[#allocation2 + $0x90] sm:$0xff] %v983
        %1048 = vst [vmem:[#allocation2 + $0x98] sm:$0xff] %v984
        %1049 = vst [vmem:[#allocation2 + $0xa0] sm:$0xff] %v985
        %1050 = vst [vmem:[#allocation2 + $0xa8] sm:$0xff] %v986
        %1051 = vst [vmem:[#allocation2 + $0xb0] sm:$0xff] %v987
        %1052 = vst [vmem:[#allocation2 + $0xb8] sm:$0xff] %v988
        %1053 = vst [vmem:[#allocation2 + $0xc0] sm:$0xff] %v989
        %1054 = vst [vmem:[#allocation2 + $0xc8] sm:$0xff] %v990
        %1055 = vst [vmem:[#allocation2 + $0xd0] sm:$0xff] %v991
        %1056 = vst [vmem:[#allocation2 + $0xd8] sm:$0xff] %v992
        %1057 = vst [vmem:[#allocation2 + $0xe0] sm:$0xff] %v993
        %1058 = vst [vmem:[#allocation2 + $0xe8] sm:$0xff] %v994
        %1059 = vst [vmem:[#allocation2 + $0xf0] sm:$0xff] %v995
        %1060 = vst [vmem:[#allocation2 + $0xf8] sm:$0xff] %v996
        %1061 = vst [vmem:[#allocation2 + $0x100] sm:$0xff] %v997
        %1062 = vst [vmem:[#allocation2 + $0x108] sm:$0xff] %v998
        %1063 = vst [vmem:[#allocation2 + $0x110] sm:$0xff] %v999
        %1064 = vst [vmem:[#allocation2 + $0x118] sm:$0xff] %v1000
        %1065 = vst [vmem:[#allocation2 + $0x120] sm:$0xff] %v1001
        %1066 = vst [vmem:[#allocation2 + $0x128] sm:$0xff] %v1002
        %1067 = vst [vmem:[#allocation2 + $0x130] sm:$0xff] %v1003
        %1068 = vst [vmem:[#allocation2 + $0x138] sm:$0xff] %v1004
        %1069 = vst [vmem:[#allocation2 + $0x140] sm:$0xff] %v1005
        %1070 = vst [vmem:[#allocation2 + $0x148] sm:$0xff] %v1006
        %1071 = vst [vmem:[#allocation2 + $0x150] sm:$0xff] %v1007
        %1072 = vst [vmem:[#allocation2 + $0x158] sm:$0xff] %v1008
        %1073 = vst [vmem:[#allocation2 + $0x160] sm:$0xff] %v1009
        %1074 = vst [vmem:[#allocation2 + $0x168] sm:$0xff] %v1010
        %1075 = vst [vmem:[#allocation2 + $0x170] sm:$0xff] %v1011
        %1076 = vst [vmem:[#allocation2 + $0x178] sm:$0xff] %v1012
        %1077 = vst [vmem:[#allocation2 + $0x180] sm:$0xff] %v1013
        %1078 = vst [vmem:[#allocation2 + $0x188] sm:$0xff] %v1014
        %1079 = vst [vmem:[#allocation2 + $0x190] sm:$0xff] %v1015
        %1080 = vst [vmem:[#allocation2 + $0x198] sm:$0xff] %v1016
        %1081 = vst [vmem:[#allocation2 + $0x1a0] sm:$0xff] %v1017
        %1082 = vst [vmem:[#allocation2 + $0x1a8] sm:$0xff] %v1018
        %1083 = vst [vmem:[#allocation2 + $0x1b0] sm:$0xff] %v1019
        %1084 = vst [vmem:[#allocation2 + $0x1b8] sm:$0xff] %v1020
        %1085 = vst [vmem:[#allocation2 + $0x1c0] sm:$0xff] %v1021
        %1086 = vst [vmem:[#allocation2 + $0x1c8] sm:$0xff] %v1022
        %1087 = vst [vmem:[#allocation2 + $0x1d0] sm:$0xff] %v1023
        %1088 = vst [vmem:[#allocation2 + $0x1d8] sm:$0xff] %v1024
        %1089 = vst [vmem:[#allocation2 + $0x1e0] sm:$0xff] %v1025
        %1090 = vst [vmem:[#allocation2 + $0x1e8] sm:$0xff] %v1026
        %1091 = vst [vmem:[#allocation2 + $0x1f0] sm:$0xff] %v1027
        %1092 = vst [vmem:[#allocation2 + $0x1f8] sm:$0xff] %v1028
        // Predicated region
        $region64: #{generator2_forward.16} parent=54 // pred_check
          %p1093 = pneg %p365
        $region65: #{generator2_forward.16} parent=54 // pred_check_branch
          %1095 = sbr.rel (%p1093) target = $region67
        $region66: #{generator2_forward.16} parent=54 // pred_region
          %v1096 = vld [vmem:[#allocation2] sm:$0xff]
          %v1097 = vld [vmem:[#allocation2 + $0x8] sm:$0xff]
          %v1098 = vld [vmem:[#allocation2 + $0x10] sm:$0xff]
          %v1099 = vld [vmem:[#allocation2 + $0x18] sm:$0xff]
          %v1100 = vld [vmem:[#allocation2 + $0x20] sm:$0xff]
          %v1101 = vld [vmem:[#allocation2 + $0x28] sm:$0xff]
          %v1102 = vld [vmem:[#allocation2 + $0x30] sm:$0xff]
          %v1103 = vld [vmem:[#allocation2 + $0x38] sm:$0xff]
          %v1104 = vld [vmem:[#allocation2 + $0x40] sm:$0xff]
          %v1105 = vld [vmem:[#allocation2 + $0x48] sm:$0xff]
          %v1106 = vld [vmem:[#allocation2 + $0x50] sm:$0xff]
          %v1107 = vld [vmem:[#allocation2 + $0x58] sm:$0xff]
          %v1108 = vld [vmem:[#allocation2 + $0x60] sm:$0xff]
          %v1109 = vld [vmem:[#allocation2 + $0x68] sm:$0xff]
          %v1110 = vld [vmem:[#allocation2 + $0x70] sm:$0xff]
          %v1111 = vld [vmem:[#allocation2 + $0x78] sm:$0xff]
          %v1112 = vld [vmem:[#allocation2 + $0x80] sm:$0xff]
          %v1113 = vld [vmem:[#allocation2 + $0x88] sm:$0xff]
          %v1114 = vld [vmem:[#allocation2 + $0x90] sm:$0xff]
          %v1115 = vld [vmem:[#allocation2 + $0x98] sm:$0xff]
          %v1116 = vld [vmem:[#allocation2 + $0xa0] sm:$0xff]
          %v1117 = vld [vmem:[#allocation2 + $0xa8] sm:$0xff]
          %v1118 = vld [vmem:[#allocation2 + $0xb0] sm:$0xff]
          %v1119 = vld [vmem:[#allocation2 + $0xb8] sm:$0xff]
          %v1120 = vld [vmem:[#allocation2 + $0xc0] sm:$0xff]
          %v1121 = vld [vmem:[#allocation2 + $0xc8] sm:$0xff]
          %v1122 = vld [vmem:[#allocation2 + $0xd0] sm:$0xff]
          %v1123 = vld [vmem:[#allocation2 + $0xd8] sm:$0xff]
          %v1124 = vld [vmem:[#allocation2 + $0xe0] sm:$0xff]
          %v1125 = vld [vmem:[#allocation2 + $0xe8] sm:$0xff]
          %v1126 = vld [vmem:[#allocation2 + $0xf0] sm:$0xff]
          %v1127 = vld [vmem:[#allocation2 + $0xf8] sm:$0xff]
          %v1128 = vld [vmem:[#allocation2 + $0x100] sm:$0xff]
          %v1129 = vld [vmem:[#allocation2 + $0x108] sm:$0xff]
          %v1130 = vld [vmem:[#allocation2 + $0x110] sm:$0xff]
          %v1131 = vld [vmem:[#allocation2 + $0x118] sm:$0xff]
          %v1132 = vld [vmem:[#allocation2 + $0x120] sm:$0xff]
          %v1133 = vld [vmem:[#allocation2 + $0x128] sm:$0xff]
          %v1134 = vld [vmem:[#allocation2 + $0x130] sm:$0xff]
          %v1135 = vld [vmem:[#allocation2 + $0x138] sm:$0xff]
          %v1136 = vld [vmem:[#allocation2 + $0x140] sm:$0xff]
          %v1137 = vld [vmem:[#allocation2 + $0x148] sm:$0xff]
          %v1138 = vld [vmem:[#allocation2 + $0x150] sm:$0xff]
          %v1139 = vld [vmem:[#allocation2 + $0x158] sm:$0xff]
          %v1140 = vld [vmem:[#allocation2 + $0x160] sm:$0xff]
          %v1141 = vld [vmem:[#allocation2 + $0x168] sm:$0xff]
          %v1142 = vld [vmem:[#allocation2 + $0x170] sm:$0xff]
          %v1143 = vld [vmem:[#allocation2 + $0x178] sm:$0xff]
          %v1144 = vld [vmem:[#allocation2 + $0x180] sm:$0xff]
          %v1145 = vld [vmem:[#allocation2 + $0x188] sm:$0xff]
          %v1146 = vld [vmem:[#allocation2 + $0x190] sm:$0xff]
          %v1147 = vld [vmem:[#allocation2 + $0x198] sm:$0xff]
          %v1148 = vld [vmem:[#allocation2 + $0x1a0] sm:$0xff]
          %v1149 = vld [vmem:[#allocation2 + $0x1a8] sm:$0xff]
          %v1150 = vld [vmem:[#allocation2 + $0x1b0] sm:$0xff]
          %v1151 = vld [vmem:[#allocation2 + $0x1b8] sm:$0xff]
          %v1152 = vld [vmem:[#allocation2 + $0x1c0] sm:$0xff]
          %v1153 = vld [vmem:[#allocation2 + $0x1c8] sm:$0xff]
          %v1154 = vld [vmem:[#allocation2 + $0x1d0] sm:$0xff]
          %v1155 = vld [vmem:[#allocation2 + $0x1d8] sm:$0xff]
          %v1156 = vld [vmem:[#allocation2 + $0x1e0] sm:$0xff]
          %v1157 = vld [vmem:[#allocation2 + $0x1e8] sm:$0xff]
          %v1158 = vld [vmem:[#allocation2 + $0x1f0] sm:$0xff]
          %v1159 = vld [vmem:[#allocation2 + $0x1f8] sm:$0xff]
          %1160 = vst [vmem:[%s345] sm:$0xff] %v1096
          %1161 = vst [vmem:[%s345 + $0x8] sm:$0xff] %v1097
          %1162 = vst [vmem:[%s345 + $0x10] sm:$0xff] %v1098
          %1163 = vst [vmem:[%s345 + $0x18] sm:$0xff] %v1099
          %1164 = vst [vmem:[%s345 + $0x20] sm:$0xff] %v1100
          %1165 = vst [vmem:[%s345 + $0x28] sm:$0xff] %v1101
          %1166 = vst [vmem:[%s345 + $0x30] sm:$0xff] %v1102
          %1167 = vst [vmem:[%s345 + $0x38] sm:$0xff] %v1103
          %1168 = vst [vmem:[%s345 + $0x40] sm:$0xff] %v1104
          %1169 = vst [vmem:[%s345 + $0x48] sm:$0xff] %v1105
          %1170 = vst [vmem:[%s345 + $0x50] sm:$0xff] %v1106
          %1171 = vst [vmem:[%s345 + $0x58] sm:$0xff] %v1107
          %1172 = vst [vmem:[%s345 + $0x60] sm:$0xff] %v1108
          %1173 = vst [vmem:[%s345 + $0x68] sm:$0xff] %v1109
          %1174 = vst [vmem:[%s345 + $0x70] sm:$0xff] %v1110
          %1175 = vst [vmem:[%s345 + $0x78] sm:$0xff] %v1111
          %1176 = vst [vmem:[%s345 + $0x80] sm:$0xff] %v1112
          %1177 = vst [vmem:[%s345 + $0x88] sm:$0xff] %v1113
          %1178 = vst [vmem:[%s345 + $0x90] sm:$0xff] %v1114
          %1179 = vst [vmem:[%s345 + $0x98] sm:$0xff] %v1115
          %1180 = vst [vmem:[%s345 + $0xa0] sm:$0xff] %v1116
          %1181 = vst [vmem:[%s345 + $0xa8] sm:$0xff] %v1117
          %1182 = vst [vmem:[%s345 + $0xb0] sm:$0xff] %v1118
          %1183 = vst [vmem:[%s345 + $0xb8] sm:$0xff] %v1119
          %1184 = vst [vmem:[%s345 + $0xc0] sm:$0xff] %v1120
          %1185 = vst [vmem:[%s345 + $0xc8] sm:$0xff] %v1121
          %1186 = vst [vmem:[%s345 + $0xd0] sm:$0xff] %v1122
          %1187 = vst [vmem:[%s345 + $0xd8] sm:$0xff] %v1123
          %1188 = vst [vmem:[%s345 + $0xe0] sm:$0xff] %v1124
          %1189 = vst [vmem:[%s345 + $0xe8] sm:$0xff] %v1125
          %1190 = vst [vmem:[%s345 + $0xf0] sm:$0xff] %v1126
          %1191 = vst [vmem:[%s345 + $0xf8] sm:$0xff] %v1127
          %1192 = vst [vmem:[%s345 + $0x100] sm:$0xff] %v1128
          %1193 = vst [vmem:[%s345 + $0x108] sm:$0xff] %v1129
          %1194 = vst [vmem:[%s345 + $0x110] sm:$0xff] %v1130
          %1195 = vst [vmem:[%s345 + $0x118] sm:$0xff] %v1131
          %1196 = vst [vmem:[%s345 + $0x120] sm:$0xff] %v1132
          %1197 = vst [vmem:[%s345 + $0x128] sm:$0xff] %v1133
          %1198 = vst [vmem:[%s345 + $0x130] sm:$0xff] %v1134
          %1199 = vst [vmem:[%s345 + $0x138] sm:$0xff] %v1135
          %1200 = vst [vmem:[%s345 + $0x140] sm:$0xff] %v1136
          %1201 = vst [vmem:[%s345 + $0x148] sm:$0xff] %v1137
          %1202 = vst [vmem:[%s345 + $0x150] sm:$0xff] %v1138
          %1203 = vst [vmem:[%s345 + $0x158] sm:$0xff] %v1139
          %1204 = vst [vmem:[%s345 + $0x160] sm:$0xff] %v1140
          %1205 = vst [vmem:[%s345 + $0x168] sm:$0xff] %v1141
          %1206 = vst [vmem:[%s345 + $0x170] sm:$0xff] %v1142
          %1207 = vst [vmem:[%s345 + $0x178] sm:$0xff] %v1143
          %1208 = vst [vmem:[%s345 + $0x180] sm:$0xff] %v1144
          %1209 = vst [vmem:[%s345 + $0x188] sm:$0xff] %v1145
          %1210 = vst [vmem:[%s345 + $0x190] sm:$0xff] %v1146
          %1211 = vst [vmem:[%s345 + $0x198] sm:$0xff] %v1147
          %1212 = vst [vmem:[%s345 + $0x1a0] sm:$0xff] %v1148
          %1213 = vst [vmem:[%s345 + $0x1a8] sm:$0xff] %v1149
          %1214 = vst [vmem:[%s345 + $0x1b0] sm:$0xff] %v1150
          %1215 = vst [vmem:[%s345 + $0x1b8] sm:$0xff] %v1151
          %1216 = vst [vmem:[%s345 + $0x1c0] sm:$0xff] %v1152
          %1217 = vst [vmem:[%s345 + $0x1c8] sm:$0xff] %v1153
          %1218 = vst [vmem:[%s345 + $0x1d0] sm:$0xff] %v1154
          %1219 = vst [vmem:[%s345 + $0x1d8] sm:$0xff] %v1155
          %1220 = vst [vmem:[%s345 + $0x1e0] sm:$0xff] %v1156
          %1221 = vst [vmem:[%s345 + $0x1e8] sm:$0xff] %v1157
          %1222 = vst [vmem:[%s345 + $0x1f0] sm:$0xff] %v1158
          %1223 = vst [vmem:[%s345 + $0x1f8] sm:$0xff] %v1159
        $region67: #{generator2_forward.16} parent=54 // pred_fallthru
          _
        %s1224 = sand.u32 %s152, 1
        %s1225 = sand.u32 %s152, 1
        %s1226 = smul.addr %s1225, 512
        %s1227 = scalar_lea.vmem [#allocation4], %s1226
        // Predicated region
        $region68: #{generator2_forward.16} parent=54 // pred_check
          %p1228 = pneg %p162
        $region69: #{generator2_forward.16} parent=54 // pred_check_branch
          %1230 = sbr.rel (%p1228) target = $region71
        $region70: #{generator2_forward.16} parent=54 // pred_region
          %s1231 = smul.u32 16, %s20
          %s1232 = smul.u32 4, %s21
          %s1233 = smul.addr %s1231, 8
          %s1234 = sadd.s32 %s1232, %s1233
          %s1235 = smul.addr %s1234, 8
          %s1236 = scalar_lea.vmem %s4, %s1235
          // Predicated region
          $region72: #{generator2_forward.16} parent=70 // pred_check
            _
          $region73: #{generator2_forward.16} parent=70 // pred_check_branch
            %1238 = sbr.rel (0) target = $region75
          $region74: #{generator2_forward.16} parent=70 // pred_region
            // Predicated region
            $region76: #{generator2_forward.16} parent=74 // pred_check
              _
            $region77: #{generator2_forward.16} parent=74 // pred_check_branch
              %1240 = sbr.rel (0) target = $region79
            $region78: #{generator2_forward.16} parent=74 // pred_region
              loop: start=0, step=1, limit=1
              $region80: #{generator2_forward.16} parent=78 // loop_pre_header
                _
              $region81: #{generator2_forward.16} parent=78 // loop_header
                %s1242 = sphi 0, %s1246
                %p1243 = scmp.ge.s32.totalorder %s1242, 1
                %s1247 = sphi %s1227, %s1227
                %s1248 = sphi %s1236, %s1236
              $region82: #{generator2_forward.16} parent=78 // loop_header_branch
                %1245 = sbr.rel (%p1243) target = $region86
              $region83: #{generator2_forward.16} parent=78 // loop_body
                %v1249 = vld [vmem:[%s1247] sm:$0xff]
                %1250 = vst [vmem:[%s1248] sm:$0xff] %v1249
                %v1251 = vld [vmem:[%s1247 + $0x8] sm:$0xff]
                %1252 = vst [vmem:[%s1248 + $0x8] sm:$0xff] %v1251
                %v1253 = vld [vmem:[%s1247 + $0x10] sm:$0xff]
                %1254 = vst [vmem:[%s1248 + $0x10] sm:$0xff] %v1253
                %v1255 = vld [vmem:[%s1247 + $0x18] sm:$0xff]
                %1256 = vst [vmem:[%s1248 + $0x18] sm:$0xff] %v1255
                %v1257 = vld [vmem:[%s1247 + $0x20] sm:$0xff]
                %1258 = vst [vmem:[%s1248 + $0x40] sm:$0xff] %v1257
                %v1259 = vld [vmem:[%s1247 + $0x28] sm:$0xff]
                %1260 = vst [vmem:[%s1248 + $0x48] sm:$0xff] %v1259
                %v1261 = vld [vmem:[%s1247 + $0x30] sm:$0xff]
                %1262 = vst [vmem:[%s1248 + $0x50] sm:$0xff] %v1261
                %v1263 = vld [vmem:[%s1247 + $0x38] sm:$0xff]
                %1264 = vst [vmem:[%s1248 + $0x58] sm:$0xff] %v1263
                %v1265 = vld [vmem:[%s1247 + $0x40] sm:$0xff]
                %1266 = vst [vmem:[%s1248 + $0x80] sm:$0xff] %v1265
                %v1267 = vld [vmem:[%s1247 + $0x48] sm:$0xff]
                %1268 = vst [vmem:[%s1248 + $0x88] sm:$0xff] %v1267
                %v1269 = vld [vmem:[%s1247 + $0x50] sm:$0xff]
                %1270 = vst [vmem:[%s1248 + $0x90] sm:$0xff] %v1269
                %v1271 = vld [vmem:[%s1247 + $0x58] sm:$0xff]
                %1272 = vst [vmem:[%s1248 + $0x98] sm:$0xff] %v1271
                %v1273 = vld [vmem:[%s1247 + $0x60] sm:$0xff]
                %1274 = vst [vmem:[%s1248 + $0xc0] sm:$0xff] %v1273
                %v1275 = vld [vmem:[%s1247 + $0x68] sm:$0xff]
                %1276 = vst [vmem:[%s1248 + $0xc8] sm:$0xff] %v1275
                %v1277 = vld [vmem:[%s1247 + $0x70] sm:$0xff]
                %1278 = vst [vmem:[%s1248 + $0xd0] sm:$0xff] %v1277
                %v1279 = vld [vmem:[%s1247 + $0x78] sm:$0xff]
                %1280 = vst [vmem:[%s1248 + $0xd8] sm:$0xff] %v1279
                %v1281 = vld [vmem:[%s1247 + $0x80] sm:$0xff]
                %1282 = vst [vmem:[%s1248 + $0x100] sm:$0xff] %v1281
                %v1283 = vld [vmem:[%s1247 + $0x88] sm:$0xff]
                %1284 = vst [vmem:[%s1248 + $0x108] sm:$0xff] %v1283
                %v1285 = vld [vmem:[%s1247 + $0x90] sm:$0xff]
                %1286 = vst [vmem:[%s1248 + $0x110] sm:$0xff] %v1285
                %v1287 = vld [vmem:[%s1247 + $0x98] sm:$0xff]
                %1288 = vst [vmem:[%s1248 + $0x118] sm:$0xff] %v1287
                %v1289 = vld [vmem:[%s1247 + $0xa0] sm:$0xff]
                %1290 = vst [vmem:[%s1248 + $0x140] sm:$0xff] %v1289
                %v1291 = vld [vmem:[%s1247 + $0xa8] sm:$0xff]
                %1292 = vst [vmem:[%s1248 + $0x148] sm:$0xff] %v1291
                %v1293 = vld [vmem:[%s1247 + $0xb0] sm:$0xff]
                %1294 = vst [vmem:[%s1248 + $0x150] sm:$0xff] %v1293
                %v1295 = vld [vmem:[%s1247 + $0xb8] sm:$0xff]
                %1296 = vst [vmem:[%s1248 + $0x158] sm:$0xff] %v1295
                %v1297 = vld [vmem:[%s1247 + $0xc0] sm:$0xff]
                %1298 = vst [vmem:[%s1248 + $0x180] sm:$0xff] %v1297
                %v1299 = vld [vmem:[%s1247 + $0xc8] sm:$0xff]
                %1300 = vst [vmem:[%s1248 + $0x188] sm:$0xff] %v1299
                %v1301 = vld [vmem:[%s1247 + $0xd0] sm:$0xff]
                %1302 = vst [vmem:[%s1248 + $0x190] sm:$0xff] %v1301
                %v1303 = vld [vmem:[%s1247 + $0xd8] sm:$0xff]
                %1304 = vst [vmem:[%s1248 + $0x198] sm:$0xff] %v1303
                %v1305 = vld [vmem:[%s1247 + $0xe0] sm:$0xff]
                %1306 = vst [vmem:[%s1248 + $0x1c0] sm:$0xff] %v1305
                %v1307 = vld [vmem:[%s1247 + $0xe8] sm:$0xff]
                %1308 = vst [vmem:[%s1248 + $0x1c8] sm:$0xff] %v1307
                %v1309 = vld [vmem:[%s1247 + $0xf0] sm:$0xff]
                %1310 = vst [vmem:[%s1248 + $0x1d0] sm:$0xff] %v1309
                %v1311 = vld [vmem:[%s1247 + $0xf8] sm:$0xff]
                %1312 = vst [vmem:[%s1248 + $0x1d8] sm:$0xff] %v1311
                %v1313 = vld [vmem:[%s1247 + $0x100] sm:$0xff]
                %1314 = vst [vmem:[%s1248 + $0x200] sm:$0xff] %v1313
                %v1315 = vld [vmem:[%s1247 + $0x108] sm:$0xff]
                %1316 = vst [vmem:[%s1248 + $0x208] sm:$0xff] %v1315
                %v1317 = vld [vmem:[%s1247 + $0x110] sm:$0xff]
                %1318 = vst [vmem:[%s1248 + $0x210] sm:$0xff] %v1317
                %v1319 = vld [vmem:[%s1247 + $0x118] sm:$0xff]
                %1320 = vst [vmem:[%s1248 + $0x218] sm:$0xff] %v1319
                %v1321 = vld [vmem:[%s1247 + $0x120] sm:$0xff]
                %1322 = vst [vmem:[%s1248 + $0x240] sm:$0xff] %v1321
                %v1323 = vld [vmem:[%s1247 + $0x128] sm:$0xff]
                %1324 = vst [vmem:[%s1248 + $0x248] sm:$0xff] %v1323
                %v1325 = vld [vmem:[%s1247 + $0x130] sm:$0xff]
                %1326 = vst [vmem:[%s1248 + $0x250] sm:$0xff] %v1325
                %v1327 = vld [vmem:[%s1247 + $0x138] sm:$0xff]
                %1328 = vst [vmem:[%s1248 + $0x258] sm:$0xff] %v1327
                %v1329 = vld [vmem:[%s1247 + $0x140] sm:$0xff]
                %1330 = vst [vmem:[%s1248 + $0x280] sm:$0xff] %v1329
                %v1331 = vld [vmem:[%s1247 + $0x148] sm:$0xff]
                %1332 = vst [vmem:[%s1248 + $0x288] sm:$0xff] %v1331
                %v1333 = vld [vmem:[%s1247 + $0x150] sm:$0xff]
                %1334 = vst [vmem:[%s1248 + $0x290] sm:$0xff] %v1333
                %v1335 = vld [vmem:[%s1247 + $0x158] sm:$0xff]
                %1336 = vst [vmem:[%s1248 + $0x298] sm:$0xff] %v1335
                %v1337 = vld [vmem:[%s1247 + $0x160] sm:$0xff]
                %1338 = vst [vmem:[%s1248 + $0x2c0] sm:$0xff] %v1337
                %v1339 = vld [vmem:[%s1247 + $0x168] sm:$0xff]
                %1340 = vst [vmem:[%s1248 + $0x2c8] sm:$0xff] %v1339
                %v1341 = vld [vmem:[%s1247 + $0x170] sm:$0xff]
                %1342 = vst [vmem:[%s1248 + $0x2d0] sm:$0xff] %v1341
                %v1343 = vld [vmem:[%s1247 + $0x178] sm:$0xff]
                %1344 = vst [vmem:[%s1248 + $0x2d8] sm:$0xff] %v1343
                %v1345 = vld [vmem:[%s1247 + $0x180] sm:$0xff]
                %1346 = vst [vmem:[%s1248 + $0x300] sm:$0xff] %v1345
                %v1347 = vld [vmem:[%s1247 + $0x188] sm:$0xff]
                %1348 = vst [vmem:[%s1248 + $0x308] sm:$0xff] %v1347
                %v1349 = vld [vmem:[%s1247 + $0x190] sm:$0xff]
                %1350 = vst [vmem:[%s1248 + $0x310] sm:$0xff] %v1349
                %v1351 = vld [vmem:[%s1247 + $0x198] sm:$0xff]
                %1352 = vst [vmem:[%s1248 + $0x318] sm:$0xff] %v1351
                %v1353 = vld [vmem:[%s1247 + $0x1a0] sm:$0xff]
                %1354 = vst [vmem:[%s1248 + $0x340] sm:$0xff] %v1353
                %v1355 = vld [vmem:[%s1247 + $0x1a8] sm:$0xff]
                %1356 = vst [vmem:[%s1248 + $0x348] sm:$0xff] %v1355
                %v1357 = vld [vmem:[%s1247 + $0x1b0] sm:$0xff]
                %1358 = vst [vmem:[%s1248 + $0x350] sm:$0xff] %v1357
                %v1359 = vld [vmem:[%s1247 + $0x1b8] sm:$0xff]
                %1360 = vst [vmem:[%s1248 + $0x358] sm:$0xff] %v1359
                %v1361 = vld [vmem:[%s1247 + $0x1c0] sm:$0xff]
                %1362 = vst [vmem:[%s1248 + $0x380] sm:$0xff] %v1361
                %v1363 = vld [vmem:[%s1247 + $0x1c8] sm:$0xff]
                %1364 = vst [vmem:[%s1248 + $0x388] sm:$0xff] %v1363
                %v1365 = vld [vmem:[%s1247 + $0x1d0] sm:$0xff]
                %1366 = vst [vmem:[%s1248 + $0x390] sm:$0xff] %v1365
                %v1367 = vld [vmem:[%s1247 + $0x1d8] sm:$0xff]
                %1368 = vst [vmem:[%s1248 + $0x398] sm:$0xff] %v1367
                %v1369 = vld [vmem:[%s1247 + $0x1e0] sm:$0xff]
                %1370 = vst [vmem:[%s1248 + $0x3c0] sm:$0xff] %v1369
                %v1371 = vld [vmem:[%s1247 + $0x1e8] sm:$0xff]
                %1372 = vst [vmem:[%s1248 + $0x3c8] sm:$0xff] %v1371
                %v1373 = vld [vmem:[%s1247 + $0x1f0] sm:$0xff]
                %1374 = vst [vmem:[%s1248 + $0x3d0] sm:$0xff] %v1373
                %v1375 = vld [vmem:[%s1247 + $0x1f8] sm:$0xff]
                %1376 = vst [vmem:[%s1248 + $0x3d8] sm:$0xff] %v1375
              $region84: #{generator2_forward.16} parent=78 // loop_footer
                %s1246 = sadd.s32 1, %s1242
              $region85: #{generator2_forward.16} parent=78 // loop_footer_branch
                %1241 = sbr.rel target = $region81
              $region86: #{generator2_forward.16} parent=78 // loop_exit
                _
            $region79: #{generator2_forward.16} parent=74 // pred_fallthru
              _
            // Predicated region
            $region87: #{generator2_forward.16} parent=74 // pred_check
              _
            $region88: #{generator2_forward.16} parent=74 // pred_check_branch
              %1378 = sbr.rel target = $region90
            $region89: #{generator2_forward.16} parent=74 // pred_region
              _
            $region90: #{generator2_forward.16} parent=74 // pred_fallthru
              _
          $region75: #{generator2_forward.16} parent=70 // pred_fallthru
            _
          %1379 = vnop
        $region71: #{generator2_forward.16} parent=54 // pred_fallthru
          _
      $region55: #{generator2_forward.16} parent=5 // pred_fallthru
        _
      %p1380 = scmp.le.s32.totalorder 2, %s10
      // Predicated region
      $region91: #{generator2_forward.16} parent=5 // pred_check
        %p1381 = pneg %p1380
      $region92: #{generator2_forward.16} parent=5 // pred_check_branch
        %1383 = sbr.rel (%p1381) target = $region94
      $region93: #{generator2_forward.16} parent=5 // pred_region
        %s1384 = ssub.s32 %s10, 2
        // Predicated region
        $region95: #{generator2_forward.16} parent=93 // pred_check
          %p1385 = pneg %p168
        $region96: #{generator2_forward.16} parent=93 // pred_check_branch
          %1387 = sbr.rel (%p1385) target = $region98
        $region97: #{generator2_forward.16} parent=93 // pred_region
          %s1388 = sand.u32 %s153, 1
          %s1389 = sand.u32 %s153, 1
          %s1390 = smul.addr %s1389, 512
          %s1391 = scalar_lea.vmem [#allocation4], %s1390
        $region98: #{generator2_forward.16} parent=93 // pred_fallthru
          _
      $region94: #{generator2_forward.16} parent=5 // pred_fallthru
        _
    $region6: #{generator2_forward.16} parent=1 // loop_footer
      %s14 = sadd.s32 1, %s10
    $region7: #{generator2_forward.16} parent=1 // loop_footer_branch
      %9 = sbr.rel target = $region3
    $region8: #{generator2_forward.16} parent=1 // loop_exit
      _

// kernel: generator2_forward.17
$region0: #{generator2_forward.17}
  #allocation0 [shape = 'u32[]', space=smem, size = 0x4, offset = 0x4, fixed_abs, tag = 'smem constant byte address 0x4 - core index']
  #allocation1 [shape = 'u32[72,128]{1,0:T(1,128)}', space=vmem, size = 0x9000, scoped, tag = 'internal scratch']
  %s0 = inlined_call_operand.vmem [shape: f32[256,128], index: 0, kind: input, shape index: {}]
  %s1 = inlined_call_operand.vmem [shape: f32[1,128], index: 1, kind: output, shape index: {0}]
  %s2 = inlined_call_operand.vmem [shape: f32[1,128], index: 2, kind: output, shape index: {1}]
  %3 = xla_tuple %s1, %s2
  %s4 = sld [smem:[#allocation0]]
  $region26: #{generator2_forward.17} parent=0
    _
  %s6 = ssub.s32 1, %s4
  %s7 = scalar_select 0, %s6, %s4
  // Predicated region
  $region2: #{generator2_forward.17} parent=0 // pred_check
    _
  $region3: #{generator2_forward.17} parent=0 // pred_check_branch
    %9 = sbr.rel (0) target = $region5
  $region4: #{generator2_forward.17} parent=0 // pred_region
    _
  $region5: #{generator2_forward.17} parent=0 // pred_fallthru
    _
  %p10 = scmp.eq.s32.totalorder 0, 0
  // Predicated region
  $region6: #{generator2_forward.17} parent=0 // pred_check
    %p11 = pneg %p10
  $region7: #{generator2_forward.17} parent=0 // pred_check_branch
    %13 = sbr.rel (%p11) target = $region9
  $region8: #{generator2_forward.17} parent=0 // pred_region
    %14 = vst [vmem:[%s1] sm:$0x1] 0.0
    %15 = vst [vmem:[%s2] sm:$0x1] 0.0
  $region9: #{generator2_forward.17} parent=0 // pred_fallthru
    _
  %v16 = vld [vmem:[%s0] sm:$0xff]
  %v17 = vld [vmem:[%s0 + $0x8] sm:$0xff]
  %v18 = vld [vmem:[%s0 + $0x10] sm:$0xff]
  %v19 = vld [vmem:[%s0 + $0x18] sm:$0xff]
  %v20 = vld [vmem:[%s0 + $0x20] sm:$0xff]
  %v21 = vld [vmem:[%s0 + $0x28] sm:$0xff]
  %v22 = vld [vmem:[%s0 + $0x30] sm:$0xff]
  %v23 = vld [vmem:[%s0 + $0x38] sm:$0xff]
  %v24 = vld [vmem:[%s0 + $0x40] sm:$0xff]
  %v25 = vld [vmem:[%s0 + $0x48] sm:$0xff]
  %v26 = vld [vmem:[%s0 + $0x50] sm:$0xff]
  %v27 = vld [vmem:[%s0 + $0x58] sm:$0xff]
  %v28 = vld [vmem:[%s0 + $0x60] sm:$0xff]
  %v29 = vld [vmem:[%s0 + $0x68] sm:$0xff]
  %v30 = vld [vmem:[%s0 + $0x70] sm:$0xff]
  %v31 = vld [vmem:[%s0 + $0x78] sm:$0xff]
  %v32 = vld [vmem:[%s0 + $0x80] sm:$0xff]
  %v33 = vld [vmem:[%s0 + $0x88] sm:$0xff]
  %v34 = vld [vmem:[%s0 + $0x90] sm:$0xff]
  %v35 = vld [vmem:[%s0 + $0x98] sm:$0xff]
  %v36 = vld [vmem:[%s0 + $0xa0] sm:$0xff]
  %v37 = vld [vmem:[%s0 + $0xa8] sm:$0xff]
  %v38 = vld [vmem:[%s0 + $0xb0] sm:$0xff]
  %v39 = vld [vmem:[%s0 + $0xb8] sm:$0xff]
  %v40 = vld [vmem:[%s0 + $0xc0] sm:$0xff]
  %v41 = vld [vmem:[%s0 + $0xc8] sm:$0xff]
  %v42 = vld [vmem:[%s0 + $0xd0] sm:$0xff]
  %v43 = vld [vmem:[%s0 + $0xd8] sm:$0xff]
  %v44 = vld [vmem:[%s0 + $0xe0] sm:$0xff]
  %v45 = vld [vmem:[%s0 + $0xe8] sm:$0xff]
  %v46 = vld [vmem:[%s0 + $0xf0] sm:$0xff]
  %v47 = vld [vmem:[%s0 + $0xf8] sm:$0xff]
  %v48 = vld [vmem:[%s1] sm:$0x1]
  %v49 = vadd.f32 %v16, %v17
  %v50 = vadd.f32 %v49, %v18
  %v51 = vadd.f32 %v50, %v19
  %v52 = vadd.f32 %v51, %v20
  %v53 = vadd.f32 %v52, %v21
  %v54 = vadd.f32 %v53, %v22
  %v55 = vadd.f32 %v54, %v23
  %v56 = vadd.f32 %v55, %v24
  %v57 = vadd.f32 %v56, %v25
  %v58 = vadd.f32 %v57, %v26
  %v59 = vadd.f32 %v58, %v27
  %v60 = vadd.f32 %v59, %v28
  %v61 = vadd.f32 %v60, %v29
  %v62 = vadd.f32 %v61, %v30
  %v63 = vadd.f32 %v62, %v31
  %v64 = vadd.f32 %v63, %v32
  %v65 = vadd.f32 %v64, %v33
  %v66 = vadd.f32 %v65, %v34
  %v67 = vadd.f32 %v66, %v35
  %v68 = vadd.f32 %v67, %v36
  %v69 = vadd.f32 %v68, %v37
  %v70 = vadd.f32 %v69, %v38
  %v71 = vadd.f32 %v70, %v39
  %v72 = vadd.f32 %v71, %v40
  %v73 = vadd.f32 %v72, %v41
  %v74 = vadd.f32 %v73, %v42
  %v75 = vadd.f32 %v74, %v43
  %v76 = vadd.f32 %v75, %v44
  %v77 = vadd.f32 %v76, %v45
  %v78 = vadd.f32 %v77, %v46
  %v79 = vadd.f32 %v78, %v47
  %v80 = vrot.slane %v79, 4
  %v81 = vadd.f32 %v79, %v80
  %v82 = vrot.slane %v81, 2
  %v83 = vadd.f32 %v81, %v82
  %v84 = vrot.slane %v83, 1
  %v85 = vadd.f32 %v83, %v84
  %v86 = vadd.f32 %v48, %v85
  %87 = vst [vmem:[%s1] sm:$0x1] %v86
  %v88 = vld [vmem:[%s2] sm:$0x1]
  %v89 = vmul.f32 %v16, %v16
  %v90 = vmul.f32 %v17, %v17
  %v91 = vmul.f32 %v18, %v18
  %v92 = vmul.f32 %v19, %v19
  %v93 = vmul.f32 %v20, %v20
  %v94 = vmul.f32 %v21, %v21
  %v95 = vmul.f32 %v22, %v22
  %v96 = vmul.f32 %v23, %v23
  %v97 = vmul.f32 %v24, %v24
  %v98 = vmul.f32 %v25, %v25
  %v99 = vmul.f32 %v26, %v26
  %v100 = vmul.f32 %v27, %v27
  %v101 = vmul.f32 %v28, %v28
  %v102 = vmul.f32 %v29, %v29
  %v103 = vmul.f32 %v30, %v30
  %v104 = vmul.f32 %v31, %v31
  %v105 = vmul.f32 %v32, %v32
  %v106 = vmul.f32 %v33, %v33
  %v107 = vmul.f32 %v34, %v34
  %v108 = vmul.f32 %v35, %v35
  %v109 = vmul.f32 %v36, %v36
  %v110 = vmul.f32 %v37, %v37
  %v111 = vmul.f32 %v38, %v38
  %v112 = vmul.f32 %v39, %v39
  %v113 = vmul.f32 %v40, %v40
  %v114 = vmul.f32 %v41, %v41
  %v115 = vmul.f32 %v42, %v42
  %v116 = vmul.f32 %v43, %v43
  %v117 = vmul.f32 %v44, %v44
  %v118 = vmul.f32 %v45, %v45
  %v119 = vmul.f32 %v46, %v46
  %v120 = vmul.f32 %v47, %v47
  %v121 = vadd.f32 %v89, %v90
  %v122 = vadd.f32 %v121, %v91
  %v123 = vadd.f32 %v122, %v92
  %v124 = vadd.f32 %v123, %v93
  %v125 = vadd.f32 %v124, %v94
  %v126 = vadd.f32 %v125, %v95
  %v127 = vadd.f32 %v126, %v96
  %v128 = vadd.f32 %v127, %v97
  %v129 = vadd.f32 %v128, %v98
  %v130 = vadd.f32 %v129, %v99
  %v131 = vadd.f32 %v130, %v100
  %v132 = vadd.f32 %v131, %v101
  %v133 = vadd.f32 %v132, %v102
  %v134 = vadd.f32 %v133, %v103
  %v135 = vadd.f32 %v134, %v104
  %v136 = vadd.f32 %v135, %v105
  %v137 = vadd.f32 %v136, %v106
  %v138 = vadd.f32 %v137, %v107
  %v139 = vadd.f32 %v138, %v108
  %v140 = vadd.f32 %v139, %v109
  %v141 = vadd.f32 %v140, %v110
  %v142 = vadd.f32 %v141, %v111
  %v143 = vadd.f32 %v142, %v112
  %v144 = vadd.f32 %v143, %v113
  %v145 = vadd.f32 %v144, %v114
  %v146 = vadd.f32 %v145, %v115
  %v147 = vadd.f32 %v146, %v116
  %v148 = vadd.f32 %v147, %v117
  %v149 = vadd.f32 %v148, %v118
  %v150 = vadd.f32 %v149, %v119
  %v151 = vadd.f32 %v150, %v120
  %v152 = vrot.slane %v151, 4
  %v153 = vadd.f32 %v151, %v152
  %v154 = vrot.slane %v153, 2
  %v155 = vadd.f32 %v153, %v154
  %v156 = vrot.slane %v155, 1
  %v157 = vadd.f32 %v155, %v156
  %v158 = vadd.f32 %v88, %v157
  %159 = vst [vmem:[%s2] sm:$0x1] %v158
  // Predicated region
  $region10: #{generator2_forward.17} parent=0 // pred_check
    _
  $region11: #{generator2_forward.17} parent=0 // pred_check_branch
    %161 = sbr.rel (0) target = $region13
  $region12: #{generator2_forward.17} parent=0 // pred_region
    _
  $region13: #{generator2_forward.17} parent=0 // pred_fallthru
    _
  // Predicated region
  $region14: #{generator2_forward.17} parent=0 // pred_check
    _
  $region15: #{generator2_forward.17} parent=0 // pred_check_branch
    %163 = sbr.rel (0) target = $region17
  $region16: #{generator2_forward.17} parent=0 // pred_region
    _
  $region17: #{generator2_forward.17} parent=0 // pred_fallthru
    _
  // Predicated region
  $region18: #{generator2_forward.17} parent=0 // pred_check
    _
  $region19: #{generator2_forward.17} parent=0 // pred_check_branch
    %165 = sbr.rel (0) target = $region21
  $region20: #{generator2_forward.17} parent=0 // pred_region
    _
  $region21: #{generator2_forward.17} parent=0 // pred_fallthru
    _
  // Predicated region
  $region22: #{generator2_forward.17} parent=0 // pred_check
    _
  $region23: #{generator2_forward.17} parent=0 // pred_check_branch
    %167 = sbr.rel (0) target = $region25
  $region24: #{generator2_forward.17} parent=0 // pred_region
    _
  $region25: #{generator2_forward.17} parent=0 // pred_fallthru
    _

// kernel: generator2_forward.18
$region0: #{generator2_forward.18}
  #allocation0 [shape = 'u32[]', space=smem, size = 0x4, offset = 0x4, fixed_abs, tag = 'smem constant byte address 0x4 - core index']
  #allocation1 [shape = 'u32[72,128]{1,0:T(1,128)}', space=vmem, size = 0x9000, scoped, tag = 'internal scratch']
  #allocation2 [shape = 'f32[256,512]{1,0:T(8,128)}', space=vmem, size = 0x80000, scoped, tag = 'scratch operand']
  %s0 = inlined_call_operand.vmem [shape: f32[512,64], index: 0, kind: input, shape index: {}]
  %s1 = inlined_call_operand.vmem [shape: bf16[64,512], index: 1, kind: input, shape index: {}]
  %s2 = inlined_call_operand.vmem [shape: f32[1,64], index: 2, kind: input, shape index: {}]
  %s3 = inlined_call_operand.vmem [shape: f32[1,64], index: 3, kind: input, shape index: {}]
  %s4 = inlined_call_operand.vmem [shape: f32[512,512], index: 4, kind: output, shape index: {}]
  %s5 = sld [smem:[#allocation0]]
  $region57: #{generator2_forward.18} parent=0
    _
  %s7 = ssub.s32 1, %s5
  %s8 = scalar_select 0, %s7, %s5
  loop: start=0, step=1, limit=4
  $region2: #{generator2_forward.18} parent=0 // loop_pre_header
    _
  $region3: #{generator2_forward.18} parent=0 // loop_header
    %s10 = sphi 0, %s14
    %p11 = scmp.ge.s32.totalorder %s10, 4
    %s17 = sphi 0, %s36
    %s18 = sphi 0, %s32
    %s19 = sphi 0, %s28
    %s20 = sphi 0, %s17
    %s21 = sphi 0, %s18
    %s22 = sphi 0, %s19
    %s23 = sphi 0, %s20
    %s24 = sphi 0, %s21
    %s25 = sphi 0, %s22
    %s41 = sphi 0, %s43
    %s44 = sphi 0, %s41
    %s45 = sphi 0, %s44
    %s61 = sphi 0, %s45
    %s69 = sphi 0, %s71
    %s72 = sphi 0, %s69
    %s73 = sphi 0, %s72
    %s89 = sphi 0, %s73
    %s95 = sphi 0, %s97
    %s98 = sphi 0, %s95
    %s99 = sphi 0, %s98
    %s115 = sphi 0, %s99
    %s121 = sphi 0, %s123
    %s124 = sphi 0, %s121
    %s125 = sphi 0, %s124
    %s141 = sphi 0, %s125
    %s149 = sphi 0, %s151
    %s152 = sphi 0, %s149
    %s153 = sphi 0, %s152
    %s169 = sphi 0, %s153
  $region4: #{generator2_forward.18} parent=0 // loop_header_branch
    %13 = sbr.rel (%p11) target = $region8
  $region5: #{generator2_forward.18} parent=0 // loop_body
    %s15 = ssub.s32 %s10, 1
    %s16 = ssub.s32 %s10, 2
    %s26 = sadd.s32 1, %s19
    %p27 = scmp.ge.s32.totalorder %s26, 1
    %s28 = scalar_select %p27, 0, %s26
    %s29 = sadd.s32 1, %s18
    %s30 = scalar_select %p27, %s29, %s18
    %p31 = scmp.ge.s32.totalorder %s30, 1
    %s32 = scalar_select %p31, 0, %s30
    %s33 = sadd.s32 1, %s17
    %s34 = scalar_select %p31, %s33, %s17
    %p35 = scmp.ge.s32.totalorder %s34, 2
    %s36 = scalar_select %p35, 0, %s34
    %s37 = ssub.s32 %s17, %s36
    %s38 = ssub.s32 %s19, %s28
    %s39 = sor.u32 %s37, %s38
    %p40 = scmp.eq.s32.totalorder %s39, 0
    %s42 = sadd.s32 %s41, 1
    %s43 = scalar_select %p40, %s41, %s42
    %p46 = pneg %p40
    %p47 = scmp.eq.s32.totalorder %s10, 1
    %p48 = por %p46, %p47
    %p49 = scmp.ne.s32.totalorder %s41, %s44
    %p50 = scmp.eq.s32.totalorder %s10, 0
    %p51 = por %p49, %p50
    %p52 = scmp.ne.s32.totalorder %s41, %s44
    %p53 = scmp.eq.s32.totalorder %s15, 1
    %p54 = por %p52, %p53
    %p55 = scmp.ne.s32.totalorder %s44, %s45
    %p56 = scmp.eq.s32.totalorder %s15, 0
    %p57 = por %p55, %p56
    %p58 = scmp.ne.s32.totalorder %s44, %s45
    %p59 = scmp.eq.s32.totalorder %s16, 1
    %p60 = por %p58, %p59
    %p62 = scmp.ne.s32.totalorder %s45, %s61
    %p63 = scmp.eq.s32.totalorder %s16, 0
    %p64 = por %p62, %p63
    %s65 = ssub.s32 %s19, %s28
    %s66 = ssub.s32 %s18, %s32
    %s67 = sor.u32 %s65, %s66
    %p68 = scmp.eq.s32.totalorder %s67, 0
    %s70 = sadd.s32 %s69, 1
    %s71 = scalar_select %p68, %s69, %s70
    %p74 = pneg %p68
    %p75 = scmp.eq.s32.totalorder %s10, 1
    %p76 = por %p74, %p75
    %p77 = scmp.ne.s32.totalorder %s69, %s72
    %p78 = scmp.eq.s32.totalorder %s10, 0
    %p79 = por %p77, %p78
    %p80 = scmp.ne.s32.totalorder %s69, %s72
    %p81 = scmp.eq.s32.totalorder %s15, 1
    %p82 = por %p80, %p81
    %p83 = scmp.ne.s32.totalorder %s72, %s73
    %p84 = scmp.eq.s32.totalorder %s15, 0
    %p85 = por %p83, %p84
    %p86 = scmp.ne.s32.totalorder %s72, %s73
    %p87 = scmp.eq.s32.totalorder %s16, 1
    %p88 = por %p86, %p87
    %p90 = scmp.ne.s32.totalorder %s73, %s89
    %p91 = scmp.eq.s32.totalorder %s16, 0
    %p92 = por %p90, %p91
    %s93 = ssub.s32 %s19, %s28
    %p94 = scmp.eq.s32.totalorder %s93, 0
    %s96 = sadd.s32 %s95, 1
    %s97 = scalar_select %p94, %s95, %s96
    %p100 = pneg %p94
    %p101 = scmp.eq.s32.totalorder %s10, 1
    %p102 = por %p100, %p101
    %p103 = scmp.ne.s32.totalorder %s95, %s98
    %p104 = scmp.eq.s32.totalorder %s10, 0
    %p105 = por %p103, %p104
    %p106 = scmp.ne.s32.totalorder %s95, %s98
    %p107 = scmp.eq.s32.totalorder %s15, 1
    %p108 = por %p106, %p107
    %p109 = scmp.ne.s32.totalorder %s98, %s99
    %p110 = scmp.eq.s32.totalorder %s15, 0
    %p111 = por %p109, %p110
    %p112 = scmp.ne.s32.totalorder %s98, %s99
    %p113 = scmp.eq.s32.totalorder %s16, 1
    %p114 = por %p112, %p113
    %p116 = scmp.ne.s32.totalorder %s99, %s115
    %p117 = scmp.eq.s32.totalorder %s16, 0
    %p118 = por %p116, %p117
    %s119 = ssub.s32 %s19, %s28
    %p120 = scmp.eq.s32.totalorder %s119, 0
    %s122 = sadd.s32 %s121, 1
    %s123 = scalar_select %p120, %s121, %s122
    %p126 = pneg %p120
    %p127 = scmp.eq.s32.totalorder %s10, 1
    %p128 = por %p126, %p127
    %p129 = scmp.ne.s32.totalorder %s121, %s124
    %p130 = scmp.eq.s32.totalorder %s10, 0
    %p131 = por %p129, %p130
    %p132 = scmp.ne.s32.totalorder %s121, %s124
    %p133 = scmp.eq.s32.totalorder %s15, 1
    %p134 = por %p132, %p133
    %p135 = scmp.ne.s32.totalorder %s124, %s125
    %p136 = scmp.eq.s32.totalorder %s15, 0
    %p137 = por %p135, %p136
    %p138 = scmp.ne.s32.totalorder %s124, %s125
    %p139 = scmp.eq.s32.totalorder %s16, 1
    %p140 = por %p138, %p139
    %p142 = scmp.ne.s32.totalorder %s125, %s141
    %p143 = scmp.eq.s32.totalorder %s16, 0
    %p144 = por %p142, %p143
    %s145 = ssub.s32 %s17, %s36
    %s146 = ssub.s32 %s18, %s32
    %s147 = sor.u32 %s145, %s146
    %p148 = scmp.eq.s32.totalorder %s147, 0
    %s150 = sadd.s32 %s149, 1
    %s151 = scalar_select %p148, %s149, %s150
    %p154 = pneg %p148
    %p155 = scmp.eq.s32.totalorder %s10, 1
    %p156 = por %p154, %p155
    %p157 = scmp.ne.s32.totalorder %s149, %s152
    %p158 = scmp.eq.s32.totalorder %s10, 0
    %p159 = por %p157, %p158
    %p160 = scmp.ne.s32.totalorder %s149, %s152
    %p161 = scmp.eq.s32.totalorder %s15, 1
    %p162 = por %p160, %p161
    %p163 = scmp.ne.s32.totalorder %s152, %s153
    %p164 = scmp.eq.s32.totalorder %s15, 0
    %p165 = por %p163, %p164
    %p166 = scmp.ne.s32.totalorder %s152, %s153
    %p167 = scmp.eq.s32.totalorder %s16, 1
    %p168 = por %p166, %p167
    %p170 = scmp.ne.s32.totalorder %s153, %s169
    %p171 = scmp.eq.s32.totalorder %s16, 0
    %p172 = por %p170, %p171
    %p173 = scmp.le.s32.totalorder 1, %s10
    %p174 = scmp.lt.s32.totalorder %s10, 3
    %p175 = pnand %p173, %p174
    %p176 = pneg %p175
    // Predicated region
    $region9: #{generator2_forward.18} parent=5 // pred_check
      _
    $region10: #{generator2_forward.18} parent=5 // pred_check_branch
      %178 = sbr.rel (%p175) target = $region12
    $region11: #{generator2_forward.18} parent=5 // pred_region
      %s179 = ssub.s32 %s10, 1
      // Predicated region
      $region13: #{generator2_forward.18} parent=11 // pred_check
        %p180 = pneg %p85
      $region14: #{generator2_forward.18} parent=11 // pred_check_branch
        %182 = sbr.rel (%p180) target = $region16
      $region15: #{generator2_forward.18} parent=11 // pred_region
        %s183 = smul.u32 8, %s22
        %s184 = smul.u32 4, %s21
        %p185 = scmp.lt.s32.totalorder %s183, 7
        %s186 = scalar_select %p185, %s183, 7
        %p187 = scmp.lt.s32.totalorder %s184, 3
        %s188 = scalar_select %p187, %s184, 3
        %s189 = smul.addr %s186, 4
        %s190 = sadd.s32 %s188, %s189
        %s191 = smul.addr %s190, 4
        %s192 = scalar_lea.vmem %s1, %s191
        %s193 = smul.u32 8, %s22
        %s194 = smul.u32 4, %s21
      $region16: #{generator2_forward.18} parent=11 // pred_fallthru
        _
      // Predicated region
      $region17: #{generator2_forward.18} parent=11 // pred_check
        %p195 = pneg %p111
      $region18: #{generator2_forward.18} parent=11 // pred_check_branch
        %197 = sbr.rel (%p195) target = $region20
      $region19: #{generator2_forward.18} parent=11 // pred_region
        %p198 = scmp.lt.s32.totalorder %s22, 0
        %s199 = scalar_select %p198, %s22, 0
        %s200 = scalar_lea.vmem %s2, %s199
      $region20: #{generator2_forward.18} parent=11 // pred_fallthru
        _
      // Predicated region
      $region21: #{generator2_forward.18} parent=11 // pred_check
        %p201 = pneg %p137
      $region22: #{generator2_forward.18} parent=11 // pred_check_branch
        %203 = sbr.rel (%p201) target = $region24
      $region23: #{generator2_forward.18} parent=11 // pred_region
        %p204 = scmp.lt.s32.totalorder %s22, 0
        %s205 = scalar_select %p204, %s22, 0
        %s206 = scalar_lea.vmem %s3, %s205
      $region24: #{generator2_forward.18} parent=11 // pred_fallthru
        _
    $region12: #{generator2_forward.18} parent=5 // pred_fallthru
      _
    %p207 = scmp.lt.s32.totalorder %s10, 2
    // Predicated region
    $region25: #{generator2_forward.18} parent=5 // pred_check
      %p208 = pneg %p207
    $region26: #{generator2_forward.18} parent=5 // pred_check_branch
      %210 = sbr.rel (%p208) target = $region28
    $region27: #{generator2_forward.18} parent=5 // pred_region
      // Predicated region
      $region29: #{generator2_forward.18} parent=27 // pred_check
        %p211 = pneg %p51
      $region30: #{generator2_forward.18} parent=27 // pred_check_branch
        %213 = sbr.rel (%p211) target = $region32
      $region31: #{generator2_forward.18} parent=27 // pred_region
        %s214 = smul.u32 32, %s17
        %p215 = scmp.lt.s32.totalorder %s214, 63
        %s216 = scalar_select %p215, %s214, 63
        %p217 = scmp.lt.s32.totalorder %s19, 0
        %s218 = scalar_select %p217, %s19, 0
        %s219 = sadd.s32 %s218, %s216
        %s220 = smul.addr %s219, 8
        %s221 = scalar_lea.vmem %s0, %s220
        %s222 = smul.u32 32, %s17
      $region32: #{generator2_forward.18} parent=27 // pred_fallthru
        _
    $region28: #{generator2_forward.18} parent=5 // pred_fallthru
      _
    %p223 = scmp.le.s32.totalorder 1, %s10
    %p224 = scmp.lt.s32.totalorder %s10, 3
    %p225 = pnand %p223, %p224
    %p226 = pneg %p225
    // Predicated region
    $region33: #{generator2_forward.18} parent=5 // pred_check
      _
    $region34: #{generator2_forward.18} parent=5 // pred_check_branch
      %228 = sbr.rel (%p225) target = $region36
    $region35: #{generator2_forward.18} parent=5 // pred_region
      %s229 = ssub.s32 %s10, 1
      %s230 = smul.u32 32, %s20
      %p231 = scmp.lt.s32.totalorder %s230, 63
      %s232 = scalar_select %p231, %s230, 63
      %p233 = scmp.lt.s32.totalorder %s22, 0
      %s234 = scalar_select %p233, %s22, 0
      %s235 = sadd.s32 %s234, %s232
      %s236 = smul.addr %s235, 8
      %s237 = scalar_lea.vmem %s0, %s236
      %p238 = pneg %p57
      %p239 = pneg %p54
      %s240 = smul.u32 8, %s22
      %s241 = smul.u32 4, %s21
      %p242 = scmp.lt.s32.totalorder %s240, 7
      %s243 = scalar_select %p242, %s240, 7
      %p244 = scmp.lt.s32.totalorder %s241, 3
      %s245 = scalar_select %p244, %s241, 3
      %s246 = smul.addr %s243, 4
      %s247 = sadd.s32 %s245, %s246
      %s248 = smul.addr %s247, 4
      %s249 = scalar_lea.vmem %s1, %s248
      %p250 = pneg %p85
      %p251 = pneg %p82
      %p252 = scmp.lt.s32.totalorder %s22, 0
      %s253 = scalar_select %p252, %s22, 0
      %s254 = scalar_lea.vmem %s2, %s253
      %p255 = pneg %p111
      %p256 = pneg %p108
      %p257 = scmp.lt.s32.totalorder %s22, 0
      %s258 = scalar_select %p257, %s22, 0
      %s259 = scalar_lea.vmem %s3, %s258
      %p260 = pneg %p137
      %p261 = pneg %p134
      %p262 = pneg %p165
      %p263 = pneg %p162
      %s264 = smul.u32 32, %s20
      %s265 = smul.u32 4, %s21
      %p266 = scmp.lt.s32.totalorder %s264, 63
      %s267 = scalar_select %p266, %s264, 63
      %p268 = scmp.lt.s32.totalorder %s265, 3
      %s269 = scalar_select %p268, %s265, 3
      %s270 = smul.addr %s267, 4
      %s271 = sadd.s32 %s269, %s270
      %s272 = smul.addr %s271, 8
      %s273 = scalar_lea.vmem %s4, %s272
      %s274 = smul.u32 32, %s20
      %p275 = scmp.lt.s32.totalorder %s274, 63
      %s276 = scalar_select %p275, %s274, 63
      %p277 = scmp.lt.s32.totalorder %s22, 0
      %s278 = scalar_select %p277, %s22, 0
      %s279 = sadd.s32 %s278, %s276
      %s280 = smul.addr %s279, 8
      %s281 = scalar_lea.vmem %s0, %s280
      %s282 = smul.u32 32, %s20
      %s283 = smul.u32 8, %s22
      %s284 = smul.u32 4, %s21
      %p285 = scmp.lt.s32.totalorder %s283, 7
      %s286 = scalar_select %p285, %s283, 7
      %p287 = scmp.lt.s32.totalorder %s284, 3
      %s288 = scalar_select %p287, %s284, 3
      %s289 = smul.addr %s286, 4
      %s290 = sadd.s32 %s288, %s289
      %s291 = smul.addr %s290, 4
      %s292 = scalar_lea.vmem %s1, %s291
      %s293 = smul.u32 8, %s22
      %s294 = smul.u32 4, %s21
      %p295 = scmp.lt.s32.totalorder %s22, 0
      %s296 = scalar_select %p295, %s22, 0
      %s297 = scalar_lea.vmem %s2, %s296
      %p298 = scmp.lt.s32.totalorder %s22, 0
      %s299 = scalar_select %p298, %s22, 0
      %s300 = scalar_lea.vmem %s3, %s299
      %s301 = smul.u32 32, %s20
      %s302 = smul.u32 4, %s21
      %p303 = scmp.lt.s32.totalorder %s301, 63
      %s304 = scalar_select %p303, %s301, 63
      %p305 = scmp.lt.s32.totalorder %s302, 3
      %s306 = scalar_select %p305, %s302, 3
      %s307 = smul.addr %s304, 4
      %s308 = sadd.s32 %s306, %s307
      %s309 = smul.addr %s308, 8
      %s310 = scalar_lea.vmem %s4, %s309
      %s311 = smul.u32 32, %s20
      %s312 = smul.u32 4, %s21
      %p314 = scmp.eq.s32.totalorder %s22, 0
      // Predicated region
      $region37: #{generator2_forward.18} parent=35 // pred_check
        %p315 = pneg %p314
      $region38: #{generator2_forward.18} parent=35 // pred_check_branch
        %317 = sbr.rel (%p315) target = $region40
      $region39: #{generator2_forward.18} parent=35 // pred_region
        %318 = vst [vmem:[#allocation2] sm:$0xff] 0.0
        %319 = vst [vmem:[#allocation2 + $0x8] sm:$0xff] 0.0
        %320 = vst [vmem:[#allocation2 + $0x10] sm:$0xff] 0.0
        %321 = vst [vmem:[#allocation2 + $0x18] sm:$0xff] 0.0
        %322 = vst [vmem:[#allocation2 + $0x20] sm:$0xff] 0.0
        %323 = vst [vmem:[#allocation2 + $0x28] sm:$0xff] 0.0
        %324 = vst [vmem:[#allocation2 + $0x30] sm:$0xff] 0.0
        %325 = vst [vmem:[#allocation2 + $0x38] sm:$0xff] 0.0
        %326 = vst [vmem:[#allocation2 + $0x40] sm:$0xff] 0.0
        %327 = vst [vmem:[#allocation2 + $0x48] sm:$0xff] 0.0
        %328 = vst [vmem:[#allocation2 + $0x50] sm:$0xff] 0.0
        %329 = vst [vmem:[#allocation2 + $0x58] sm:$0xff] 0.0
        %330 = vst [vmem:[#allocation2 + $0x60] sm:$0xff] 0.0
        %331 = vst [vmem:[#allocation2 + $0x68] sm:$0xff] 0.0
        %332 = vst [vmem:[#allocation2 + $0x70] sm:$0xff] 0.0
        %333 = vst [vmem:[#allocation2 + $0x78] sm:$0xff] 0.0
        %334 = vst [vmem:[#allocation2 + $0x80] sm:$0xff] 0.0
        %335 = vst [vmem:[#allocation2 + $0x88] sm:$0xff] 0.0
        %336 = vst [vmem:[#allocation2 + $0x90] sm:$0xff] 0.0
        %337 = vst [vmem:[#allocation2 + $0x98] sm:$0xff] 0.0
        %338 = vst [vmem:[#allocation2 + $0xa0] sm:$0xff] 0.0
        %339 = vst [vmem:[#allocation2 + $0xa8] sm:$0xff] 0.0
        %340 = vst [vmem:[#allocation2 + $0xb0] sm:$0xff] 0.0
        %341 = vst [vmem:[#allocation2 + $0xb8] sm:$0xff] 0.0
        %342 = vst [vmem:[#allocation2 + $0xc0] sm:$0xff] 0.0
        %343 = vst [vmem:[#allocation2 + $0xc8] sm:$0xff] 0.0
        %344 = vst [vmem:[#allocation2 + $0xd0] sm:$0xff] 0.0
        %345 = vst [vmem:[#allocation2 + $0xd8] sm:$0xff] 0.0
        %346 = vst [vmem:[#allocation2 + $0xe0] sm:$0xff] 0.0
        %347 = vst [vmem:[#allocation2 + $0xe8] sm:$0xff] 0.0
        %348 = vst [vmem:[#allocation2 + $0xf0] sm:$0xff] 0.0
        %349 = vst [vmem:[#allocation2 + $0xf8] sm:$0xff] 0.0
        %350 = vst [vmem:[#allocation2 + $0x100] sm:$0xff] 0.0
        %351 = vst [vmem:[#allocation2 + $0x108] sm:$0xff] 0.0
        %352 = vst [vmem:[#allocation2 + $0x110] sm:$0xff] 0.0
        %353 = vst [vmem:[#allocation2 + $0x118] sm:$0xff] 0.0
        %354 = vst [vmem:[#allocation2 + $0x120] sm:$0xff] 0.0
        %355 = vst [vmem:[#allocation2 + $0x128] sm:$0xff] 0.0
        %356 = vst [vmem:[#allocation2 + $0x130] sm:$0xff] 0.0
        %357 = vst [vmem:[#allocation2 + $0x138] sm:$0xff] 0.0
        %358 = vst [vmem:[#allocation2 + $0x140] sm:$0xff] 0.0
        %359 = vst [vmem:[#allocation2 + $0x148] sm:$0xff] 0.0
        %360 = vst [vmem:[#allocation2 + $0x150] sm:$0xff] 0.0
        %361 = vst [vmem:[#allocation2 + $0x158] sm:$0xff] 0.0
        %362 = vst [vmem:[#allocation2 + $0x160] sm:$0xff] 0.0
        %363 = vst [vmem:[#allocation2 + $0x168] sm:$0xff] 0.0
        %364 = vst [vmem:[#allocation2 + $0x170] sm:$0xff] 0.0
        %365 = vst [vmem:[#allocation2 + $0x178] sm:$0xff] 0.0
        %366 = vst [vmem:[#allocation2 + $0x180] sm:$0xff] 0.0
        %367 = vst [vmem:[#allocation2 + $0x188] sm:$0xff] 0.0
        %368 = vst [vmem:[#allocation2 + $0x190] sm:$0xff] 0.0
        %369 = vst [vmem:[#allocation2 + $0x198] sm:$0xff] 0.0
        %370 = vst [vmem:[#allocation2 + $0x1a0] sm:$0xff] 0.0
        %371 = vst [vmem:[#allocation2 + $0x1a8] sm:$0xff] 0.0
        %372 = vst [vmem:[#allocation2 + $0x1b0] sm:$0xff] 0.0
        %373 = vst [vmem:[#allocation2 + $0x1b8] sm:$0xff] 0.0
        %374 = vst [vmem:[#allocation2 + $0x1c0] sm:$0xff] 0.0
        %375 = vst [vmem:[#allocation2 + $0x1c8] sm:$0xff] 0.0
        %376 = vst [vmem:[#allocation2 + $0x1d0] sm:$0xff] 0.0
        %377 = vst [vmem:[#allocation2 + $0x1d8] sm:$0xff] 0.0
        %378 = vst [vmem:[#allocation2 + $0x1e0] sm:$0xff] 0.0
        %379 = vst [vmem:[#allocation2 + $0x1e8] sm:$0xff] 0.0
        %380 = vst [vmem:[#allocation2 + $0x1f0] sm:$0xff] 0.0
        %381 = vst [vmem:[#allocation2 + $0x1f8] sm:$0xff] 0.0
        %382 = vst [vmem:[#allocation2 + $0x200] sm:$0xff] 0.0
        %383 = vst [vmem:[#allocation2 + $0x208] sm:$0xff] 0.0
        %384 = vst [vmem:[#allocation2 + $0x210] sm:$0xff] 0.0
        %385 = vst [vmem:[#allocation2 + $0x218] sm:$0xff] 0.0
        %386 = vst [vmem:[#allocation2 + $0x220] sm:$0xff] 0.0
        %387 = vst [vmem:[#allocation2 + $0x228] sm:$0xff] 0.0
        %388 = vst [vmem:[#allocation2 + $0x230] sm:$0xff] 0.0
        %389 = vst [vmem:[#allocation2 + $0x238] sm:$0xff] 0.0
        %390 = vst [vmem:[#allocation2 + $0x240] sm:$0xff] 0.0
        %391 = vst [vmem:[#allocation2 + $0x248] sm:$0xff] 0.0
        %392 = vst [vmem:[#allocation2 + $0x250] sm:$0xff] 0.0
        %393 = vst [vmem:[#allocation2 + $0x258] sm:$0xff] 0.0
        %394 = vst [vmem:[#allocation2 + $0x260] sm:$0xff] 0.0
        %395 = vst [vmem:[#allocation2 + $0x268] sm:$0xff] 0.0
        %396 = vst [vmem:[#allocation2 + $0x270] sm:$0xff] 0.0
        %397 = vst [vmem:[#allocation2 + $0x278] sm:$0xff] 0.0
        %398 = vst [vmem:[#allocation2 + $0x280] sm:$0xff] 0.0
        %399 = vst [vmem:[#allocation2 + $0x288] sm:$0xff] 0.0
        %400 = vst [vmem:[#allocation2 + $0x290] sm:$0xff] 0.0
        %401 = vst [vmem:[#allocation2 + $0x298] sm:$0xff] 0.0
        %402 = vst [vmem:[#allocation2 + $0x2a0] sm:$0xff] 0.0
        %403 = vst [vmem:[#allocation2 + $0x2a8] sm:$0xff] 0.0
        %404 = vst [vmem:[#allocation2 + $0x2b0] sm:$0xff] 0.0
        %405 = vst [vmem:[#allocation2 + $0x2b8] sm:$0xff] 0.0
        %406 = vst [vmem:[#allocation2 + $0x2c0] sm:$0xff] 0.0
        %407 = vst [vmem:[#allocation2 + $0x2c8] sm:$0xff] 0.0
        %408 = vst [vmem:[#allocation2 + $0x2d0] sm:$0xff] 0.0
        %409 = vst [vmem:[#allocation2 + $0x2d8] sm:$0xff] 0.0
        %410 = vst [vmem:[#allocation2 + $0x2e0] sm:$0xff] 0.0
        %411 = vst [vmem:[#allocation2 + $0x2e8] sm:$0xff] 0.0
        %412 = vst [vmem:[#allocation2 + $0x2f0] sm:$0xff] 0.0
        %413 = vst [vmem:[#allocation2 + $0x2f8] sm:$0xff] 0.0
        %414 = vst [vmem:[#allocation2 + $0x300] sm:$0xff] 0.0
        %415 = vst [vmem:[#allocation2 + $0x308] sm:$0xff] 0.0
        %416 = vst [vmem:[#allocation2 + $0x310] sm:$0xff] 0.0
        %417 = vst [vmem:[#allocation2 + $0x318] sm:$0xff] 0.0
        %418 = vst [vmem:[#allocation2 + $0x320] sm:$0xff] 0.0
        %419 = vst [vmem:[#allocation2 + $0x328] sm:$0xff] 0.0
        %420 = vst [vmem:[#allocation2 + $0x330] sm:$0xff] 0.0
        %421 = vst [vmem:[#allocation2 + $0x338] sm:$0xff] 0.0
        %422 = vst [vmem:[#allocation2 + $0x340] sm:$0xff] 0.0
        %423 = vst [vmem:[#allocation2 + $0x348] sm:$0xff] 0.0
        %424 = vst [vmem:[#allocation2 + $0x350] sm:$0xff] 0.0
        %425 = vst [vmem:[#allocation2 + $0x358] sm:$0xff] 0.0
        %426 = vst [vmem:[#allocation2 + $0x360] sm:$0xff] 0.0
        %427 = vst [vmem:[#allocation2 + $0x368] sm:$0xff] 0.0
        %428 = vst [vmem:[#allocation2 + $0x370] sm:$0xff] 0.0
        %429 = vst [vmem:[#allocation2 + $0x378] sm:$0xff] 0.0
        %430 = vst [vmem:[#allocation2 + $0x380] sm:$0xff] 0.0
        %431 = vst [vmem:[#allocation2 + $0x388] sm:$0xff] 0.0
        %432 = vst [vmem:[#allocation2 + $0x390] sm:$0xff] 0.0
        %433 = vst [vmem:[#allocation2 + $0x398] sm:$0xff] 0.0
        %434 = vst [vmem:[#allocation2 + $0x3a0] sm:$0xff] 0.0
        %435 = vst [vmem:[#allocation2 + $0x3a8] sm:$0xff] 0.0
        %436 = vst [vmem:[#allocation2 + $0x3b0] sm:$0xff] 0.0
        %437 = vst [vmem:[#allocation2 + $0x3b8] sm:$0xff] 0.0
        %438 = vst [vmem:[#allocation2 + $0x3c0] sm:$0xff] 0.0
        %439 = vst [vmem:[#allocation2 + $0x3c8] sm:$0xff] 0.0
        %440 = vst [vmem:[#allocation2 + $0x3d0] sm:$0xff] 0.0
        %441 = vst [vmem:[#allocation2 + $0x3d8] sm:$0xff] 0.0
        %442 = vst [vmem:[#allocation2 + $0x3e0] sm:$0xff] 0.0
        %443 = vst [vmem:[#allocation2 + $0x3e8] sm:$0xff] 0.0
        %444 = vst [vmem:[#allocation2 + $0x3f0] sm:$0xff] 0.0
        %445 = vst [vmem:[#allocation2 + $0x3f8] sm:$0xff] 0.0
      $region40: #{generator2_forward.18} parent=35 // pred_fallthru
        _
      %v446 = vld [vmem:[%s281] sm:$0xff]
      %v447 = vld [vmem:[%s281 + $0x8] sm:$0xff]
      %v448 = vld [vmem:[%s281 + $0x10] sm:$0xff]
      %v449 = vld [vmem:[%s281 + $0x18] sm:$0xff]
      %v450 = vld [vmem:[%s281 + $0x20] sm:$0xff]
      %v451 = vld [vmem:[%s281 + $0x28] sm:$0xff]
      %v452 = vld [vmem:[%s281 + $0x30] sm:$0xff]
      %v453 = vld [vmem:[%s281 + $0x38] sm:$0xff]
      %v454 = vld [vmem:[%s281 + $0x40] sm:$0xff]
      %v455 = vld [vmem:[%s281 + $0x48] sm:$0xff]
      %v456 = vld [vmem:[%s281 + $0x50] sm:$0xff]
      %v457 = vld [vmem:[%s281 + $0x58] sm:$0xff]
      %v458 = vld [vmem:[%s281 + $0x60] sm:$0xff]
      %v459 = vld [vmem:[%s281 + $0x68] sm:$0xff]
      %v460 = vld [vmem:[%s281 + $0x70] sm:$0xff]
      %v461 = vld [vmem:[%s281 + $0x78] sm:$0xff]
      %v462 = vld [vmem:[%s281 + $0x80] sm:$0xff]
      %v463 = vld [vmem:[%s281 + $0x88] sm:$0xff]
      %v464 = vld [vmem:[%s281 + $0x90] sm:$0xff]
      %v465 = vld [vmem:[%s281 + $0x98] sm:$0xff]
      %v466 = vld [vmem:[%s281 + $0xa0] sm:$0xff]
      %v467 = vld [vmem:[%s281 + $0xa8] sm:$0xff]
      %v468 = vld [vmem:[%s281 + $0xb0] sm:$0xff]
      %v469 = vld [vmem:[%s281 + $0xb8] sm:$0xff]
      %v470 = vld [vmem:[%s281 + $0xc0] sm:$0xff]
      %v471 = vld [vmem:[%s281 + $0xc8] sm:$0xff]
      %v472 = vld [vmem:[%s281 + $0xd0] sm:$0xff]
      %v473 = vld [vmem:[%s281 + $0xd8] sm:$0xff]
      %v474 = vld [vmem:[%s281 + $0xe0] sm:$0xff]
      %v475 = vld [vmem:[%s281 + $0xe8] sm:$0xff]
      %v476 = vld [vmem:[%s281 + $0xf0] sm:$0xff]
      %v477 = vld [vmem:[%s281 + $0xf8] sm:$0xff]
      %v478 = vld [vmem:[%s297] sm:$0x1]
      %v480 = vperm.slane %v478, 0
      %v482 = vmul.f32 %v446, %v480
      %v483 = vmul.f32 %v447, %v480
      %v484 = vmul.f32 %v448, %v480
      %v485 = vmul.f32 %v449, %v480
      %v486 = vmul.f32 %v450, %v480
      %v487 = vmul.f32 %v451, %v480
      %v488 = vmul.f32 %v452, %v480
      %v489 = vmul.f32 %v453, %v480
      %v490 = vmul.f32 %v454, %v480
      %v491 = vmul.f32 %v455, %v480
      %v492 = vmul.f32 %v456, %v480
      %v493 = vmul.f32 %v457, %v480
      %v494 = vmul.f32 %v458, %v480
      %v495 = vmul.f32 %v459, %v480
      %v496 = vmul.f32 %v460, %v480
      %v497 = vmul.f32 %v461, %v480
      %v498 = vmul.f32 %v462, %v480
      %v499 = vmul.f32 %v463, %v480
      %v500 = vmul.f32 %v464, %v480
      %v501 = vmul.f32 %v465, %v480
      %v502 = vmul.f32 %v466, %v480
      %v503 = vmul.f32 %v467, %v480
      %v504 = vmul.f32 %v468, %v480
      %v505 = vmul.f32 %v469, %v480
      %v506 = vmul.f32 %v470, %v480
      %v507 = vmul.f32 %v471, %v480
      %v508 = vmul.f32 %v472, %v480
      %v509 = vmul.f32 %v473, %v480
      %v510 = vmul.f32 %v474, %v480
      %v511 = vmul.f32 %v475, %v480
      %v512 = vmul.f32 %v476, %v480
      %v513 = vmul.f32 %v477, %v480
      %v514 = vld [vmem:[%s300] sm:$0x1]
      %v516 = vperm.slane %v514, 0
      %v518 = vadd.f32 %v482, %v516
      %v519 = vadd.f32 %v483, %v516
      %v520 = vadd.f32 %v484, %v516
      %v521 = vadd.f32 %v485, %v516
      %v522 = vadd.f32 %v486, %v516
      %v523 = vadd.f32 %v487, %v516
      %v524 = vadd.f32 %v488, %v516
      %v525 = vadd.f32 %v489, %v516
      %v526 = vadd.f32 %v490, %v516
      %v527 = vadd.f32 %v491, %v516
      %v528 = vadd.f32 %v492, %v516
      %v529 = vadd.f32 %v493, %v516
      %v530 = vadd.f32 %v494, %v516
      %v531 = vadd.f32 %v495, %v516
      %v532 = vadd.f32 %v496, %v516
      %v533 = vadd.f32 %v497, %v516
      %v534 = vadd.f32 %v498, %v516
      %v535 = vadd.f32 %v499, %v516
      %v536 = vadd.f32 %v500, %v516
      %v537 = vadd.f32 %v501, %v516
      %v538 = vadd.f32 %v502, %v516
      %v539 = vadd.f32 %v503, %v516
      %v540 = vadd.f32 %v504, %v516
      %v541 = vadd.f32 %v505, %v516
      %v542 = vadd.f32 %v506, %v516
      %v543 = vadd.f32 %v507, %v516
      %v544 = vadd.f32 %v508, %v516
      %v545 = vadd.f32 %v509, %v516
      %v546 = vadd.f32 %v510, %v516
      %v547 = vadd.f32 %v511, %v516
      %v548 = vadd.f32 %v512, %v516
      %v549 = vadd.f32 %v513, %v516
      %v550 = vmax.f32 %v518, 0.0
      %v551 = vmax.f32 %v519, 0.0
      %v552 = vmax.f32 %v520, 0.0
      %v553 = vmax.f32 %v521, 0.0
      %v554 = vmax.f32 %v522, 0.0
      %v555 = vmax.f32 %v523, 0.0
      %v556 = vmax.f32 %v524, 0.0
      %v557 = vmax.f32 %v525, 0.0
      %v558 = vmax.f32 %v526, 0.0
      %v559 = vmax.f32 %v527, 0.0
      %v560 = vmax.f32 %v528, 0.0
      %v561 = vmax.f32 %v529, 0.0
      %v562 = vmax.f32 %v530, 0.0
      %v563 = vmax.f32 %v531, 0.0
      %v564 = vmax.f32 %v532, 0.0
      %v565 = vmax.f32 %v533, 0.0
      %v566 = vmax.f32 %v534, 0.0
      %v567 = vmax.f32 %v535, 0.0
      %v568 = vmax.f32 %v536, 0.0
      %v569 = vmax.f32 %v537, 0.0
      %v570 = vmax.f32 %v538, 0.0
      %v571 = vmax.f32 %v539, 0.0
      %v572 = vmax.f32 %v540, 0.0
      %v573 = vmax.f32 %v541, 0.0
      %v574 = vmax.f32 %v542, 0.0
      %v575 = vmax.f32 %v543, 0.0
      %v576 = vmax.f32 %v544, 0.0
      %v577 = vmax.f32 %v545, 0.0
      %v578 = vmax.f32 %v546, 0.0
      %v579 = vmax.f32 %v547, 0.0
      %v580 = vmax.f32 %v548, 0.0
      %v581 = vmax.f32 %v549, 0.0
      %v582 = vld [vmem:[#allocation2] sm:$0xff]
      %v583 = vld [vmem:[#allocation2 + $0x8] sm:$0xff]
      %v584 = vld [vmem:[#allocation2 + $0x10] sm:$0xff]
      %v585 = vld [vmem:[#allocation2 + $0x18] sm:$0xff]
      %v586 = vld [vmem:[#allocation2 + $0x20] sm:$0xff]
      %v587 = vld [vmem:[#allocation2 + $0x28] sm:$0xff]
      %v588 = vld [vmem:[#allocation2 + $0x30] sm:$0xff]
      %v589 = vld [vmem:[#allocation2 + $0x38] sm:$0xff]
      %v590 = vld [vmem:[#allocation2 + $0x40] sm:$0xff]
      %v591 = vld [vmem:[#allocation2 + $0x48] sm:$0xff]
      %v592 = vld [vmem:[#allocation2 + $0x50] sm:$0xff]
      %v593 = vld [vmem:[#allocation2 + $0x58] sm:$0xff]
      %v594 = vld [vmem:[#allocation2 + $0x60] sm:$0xff]
      %v595 = vld [vmem:[#allocation2 + $0x68] sm:$0xff]
      %v596 = vld [vmem:[#allocation2 + $0x70] sm:$0xff]
      %v597 = vld [vmem:[#allocation2 + $0x78] sm:$0xff]
      %v598 = vld [vmem:[#allocation2 + $0x80] sm:$0xff]
      %v599 = vld [vmem:[#allocation2 + $0x88] sm:$0xff]
      %v600 = vld [vmem:[#allocation2 + $0x90] sm:$0xff]
      %v601 = vld [vmem:[#allocation2 + $0x98] sm:$0xff]
      %v602 = vld [vmem:[#allocation2 + $0xa0] sm:$0xff]
      %v603 = vld [vmem:[#allocation2 + $0xa8] sm:$0xff]
      %v604 = vld [vmem:[#allocation2 + $0xb0] sm:$0xff]
      %v605 = vld [vmem:[#allocation2 + $0xb8] sm:$0xff]
      %v606 = vld [vmem:[#allocation2 + $0xc0] sm:$0xff]
      %v607 = vld [vmem:[#allocation2 + $0xc8] sm:$0xff]
      %v608 = vld [vmem:[#allocation2 + $0xd0] sm:$0xff]
      %v609 = vld [vmem:[#allocation2 + $0xd8] sm:$0xff]
      %v610 = vld [vmem:[#allocation2 + $0xe0] sm:$0xff]
      %v611 = vld [vmem:[#allocation2 + $0xe8] sm:$0xff]
      %v612 = vld [vmem:[#allocation2 + $0xf0] sm:$0xff]
      %v613 = vld [vmem:[#allocation2 + $0xf8] sm:$0xff]
      %v614 = vld [vmem:[#allocation2 + $0x100] sm:$0xff]
      %v615 = vld [vmem:[#allocation2 + $0x108] sm:$0xff]
      %v616 = vld [vmem:[#allocation2 + $0x110] sm:$0xff]
      %v617 = vld [vmem:[#allocation2 + $0x118] sm:$0xff]
      %v618 = vld [vmem:[#allocation2 + $0x120] sm:$0xff]
      %v619 = vld [vmem:[#allocation2 + $0x128] sm:$0xff]
      %v620 = vld [vmem:[#allocation2 + $0x130] sm:$0xff]
      %v621 = vld [vmem:[#allocation2 + $0x138] sm:$0xff]
      %v622 = vld [vmem:[#allocation2 + $0x140] sm:$0xff]
      %v623 = vld [vmem:[#allocation2 + $0x148] sm:$0xff]
      %v624 = vld [vmem:[#allocation2 + $0x150] sm:$0xff]
      %v625 = vld [vmem:[#allocation2 + $0x158] sm:$0xff]
      %v626 = vld [vmem:[#allocation2 + $0x160] sm:$0xff]
      %v627 = vld [vmem:[#allocation2 + $0x168] sm:$0xff]
      %v628 = vld [vmem:[#allocation2 + $0x170] sm:$0xff]
      %v629 = vld [vmem:[#allocation2 + $0x178] sm:$0xff]
      %v630 = vld [vmem:[#allocation2 + $0x180] sm:$0xff]
      %v631 = vld [vmem:[#allocation2 + $0x188] sm:$0xff]
      %v632 = vld [vmem:[#allocation2 + $0x190] sm:$0xff]
      %v633 = vld [vmem:[#allocation2 + $0x198] sm:$0xff]
      %v634 = vld [vmem:[#allocation2 + $0x1a0] sm:$0xff]
      %v635 = vld [vmem:[#allocation2 + $0x1a8] sm:$0xff]
      %v636 = vld [vmem:[#allocation2 + $0x1b0] sm:$0xff]
      %v637 = vld [vmem:[#allocation2 + $0x1b8] sm:$0xff]
      %v638 = vld [vmem:[#allocation2 + $0x1c0] sm:$0xff]
      %v639 = vld [vmem:[#allocation2 + $0x1c8] sm:$0xff]
      %v640 = vld [vmem:[#allocation2 + $0x1d0] sm:$0xff]
      %v641 = vld [vmem:[#allocation2 + $0x1d8] sm:$0xff]
      %v642 = vld [vmem:[#allocation2 + $0x1e0] sm:$0xff]
      %v643 = vld [vmem:[#allocation2 + $0x1e8] sm:$0xff]
      %v644 = vld [vmem:[#allocation2 + $0x1f0] sm:$0xff]
      %v645 = vld [vmem:[#allocation2 + $0x1f8] sm:$0xff]
      %v646 = vld [vmem:[#allocation2 + $0x200] sm:$0xff]
      %v647 = vld [vmem:[#allocation2 + $0x208] sm:$0xff]
      %v648 = vld [vmem:[#allocation2 + $0x210] sm:$0xff]
      %v649 = vld [vmem:[#allocation2 + $0x218] sm:$0xff]
      %v650 = vld [vmem:[#allocation2 + $0x220] sm:$0xff]
      %v651 = vld [vmem:[#allocation2 + $0x228] sm:$0xff]
      %v652 = vld [vmem:[#allocation2 + $0x230] sm:$0xff]
      %v653 = vld [vmem:[#allocation2 + $0x238] sm:$0xff]
      %v654 = vld [vmem:[#allocation2 + $0x240] sm:$0xff]
      %v655 = vld [vmem:[#allocation2 + $0x248] sm:$0xff]
      %v656 = vld [vmem:[#allocation2 + $0x250] sm:$0xff]
      %v657 = vld [vmem:[#allocation2 + $0x258] sm:$0xff]
      %v658 = vld [vmem:[#allocation2 + $0x260] sm:$0xff]
      %v659 = vld [vmem:[#allocation2 + $0x268] sm:$0xff]
      %v660 = vld [vmem:[#allocation2 + $0x270] sm:$0xff]
      %v661 = vld [vmem:[#allocation2 + $0x278] sm:$0xff]
      %v662 = vld [vmem:[#allocation2 + $0x280] sm:$0xff]
      %v663 = vld [vmem:[#allocation2 + $0x288] sm:$0xff]
      %v664 = vld [vmem:[#allocation2 + $0x290] sm:$0xff]
      %v665 = vld [vmem:[#allocation2 + $0x298] sm:$0xff]
      %v666 = vld [vmem:[#allocation2 + $0x2a0] sm:$0xff]
      %v667 = vld [vmem:[#allocation2 + $0x2a8] sm:$0xff]
      %v668 = vld [vmem:[#allocation2 + $0x2b0] sm:$0xff]
      %v669 = vld [vmem:[#allocation2 + $0x2b8] sm:$0xff]
      %v670 = vld [vmem:[#allocation2 + $0x2c0] sm:$0xff]
      %v671 = vld [vmem:[#allocation2 + $0x2c8] sm:$0xff]
      %v672 = vld [vmem:[#allocation2 + $0x2d0] sm:$0xff]
      %v673 = vld [vmem:[#allocation2 + $0x2d8] sm:$0xff]
      %v674 = vld [vmem:[#allocation2 + $0x2e0] sm:$0xff]
      %v675 = vld [vmem:[#allocation2 + $0x2e8] sm:$0xff]
      %v676 = vld [vmem:[#allocation2 + $0x2f0] sm:$0xff]
      %v677 = vld [vmem:[#allocation2 + $0x2f8] sm:$0xff]
      %v678 = vld [vmem:[#allocation2 + $0x300] sm:$0xff]
      %v679 = vld [vmem:[#allocation2 + $0x308] sm:$0xff]
      %v680 = vld [vmem:[#allocation2 + $0x310] sm:$0xff]
      %v681 = vld [vmem:[#allocation2 + $0x318] sm:$0xff]
      %v682 = vld [vmem:[#allocation2 + $0x320] sm:$0xff]
      %v683 = vld [vmem:[#allocation2 + $0x328] sm:$0xff]
      %v684 = vld [vmem:[#allocation2 + $0x330] sm:$0xff]
      %v685 = vld [vmem:[#allocation2 + $0x338] sm:$0xff]
      %v686 = vld [vmem:[#allocation2 + $0x340] sm:$0xff]
      %v687 = vld [vmem:[#allocation2 + $0x348] sm:$0xff]
      %v688 = vld [vmem:[#allocation2 + $0x350] sm:$0xff]
      %v689 = vld [vmem:[#allocation2 + $0x358] sm:$0xff]
      %v690 = vld [vmem:[#allocation2 + $0x360] sm:$0xff]
      %v691 = vld [vmem:[#allocation2 + $0x368] sm:$0xff]
      %v692 = vld [vmem:[#allocation2 + $0x370] sm:$0xff]
      %v693 = vld [vmem:[#allocation2 + $0x378] sm:$0xff]
      %v694 = vld [vmem:[#allocation2 + $0x380] sm:$0xff]
      %v695 = vld [vmem:[#allocation2 + $0x388] sm:$0xff]
      %v696 = vld [vmem:[#allocation2 + $0x390] sm:$0xff]
      %v697 = vld [vmem:[#allocation2 + $0x398] sm:$0xff]
      %v698 = vld [vmem:[#allocation2 + $0x3a0] sm:$0xff]
      %v699 = vld [vmem:[#allocation2 + $0x3a8] sm:$0xff]
      %v700 = vld [vmem:[#allocation2 + $0x3b0] sm:$0xff]
      %v701 = vld [vmem:[#allocation2 + $0x3b8] sm:$0xff]
      %v702 = vld [vmem:[#allocation2 + $0x3c0] sm:$0xff]
      %v703 = vld [vmem:[#allocation2 + $0x3c8] sm:$0xff]
      %v704 = vld [vmem:[#allocation2 + $0x3d0] sm:$0xff]
      %v705 = vld [vmem:[#allocation2 + $0x3d8] sm:$0xff]
      %v706 = vld [vmem:[#allocation2 + $0x3e0] sm:$0xff]
      %v707 = vld [vmem:[#allocation2 + $0x3e8] sm:$0xff]
      %v708 = vld [vmem:[#allocation2 + $0x3f0] sm:$0xff]
      %v709 = vld [vmem:[#allocation2 + $0x3f8] sm:$0xff]
      %v710 = vpack.c.bf16 %v551, %v550
      %v711 = vpack.c.bf16 %v553, %v552
      %v712 = vpack.c.bf16 %v555, %v554
      %v713 = vpack.c.bf16 %v557, %v556
      %v714 = vpack.c.bf16 %v559, %v558
      %v715 = vpack.c.bf16 %v561, %v560
      %v716 = vpack.c.bf16 %v563, %v562
      %v717 = vpack.c.bf16 %v565, %v564
      %v718 = vpack.c.bf16 %v567, %v566
      %v719 = vpack.c.bf16 %v569, %v568
      %v720 = vpack.c.bf16 %v571, %v570
      %v721 = vpack.c.bf16 %v573, %v572
      %v722 = vpack.c.bf16 %v575, %v574
      %v723 = vpack.c.bf16 %v577, %v576
      %v724 = vpack.c.bf16 %v579, %v578
      %v725 = vpack.c.bf16 %v581, %v580
      %v726 = vld [vmem:[%s292] sm:$0xff]
      %v727 = vld [vmem:[%s292 + $0x8] sm:$0xff]
      %v728 = vld [vmem:[%s292 + $0x10] sm:$0xff]
      %v729 = vld [vmem:[%s292 + $0x18] sm:$0xff]
      %v730 = vld [vmem:[%s292 + $0x20] sm:$0xff]
      %v731 = vld [vmem:[%s292 + $0x28] sm:$0xff]
      %v732 = vld [vmem:[%s292 + $0x30] sm:$0xff]
      %v733 = vld [vmem:[%s292 + $0x38] sm:$0xff]
      %v734 = vld [vmem:[%s292 + $0x40] sm:$0xff]
      %v735 = vld [vmem:[%s292 + $0x48] sm:$0xff]
      %v736 = vld [vmem:[%s292 + $0x50] sm:$0xff]
      %v737 = vld [vmem:[%s292 + $0x58] sm:$0xff]
      %v738 = vld [vmem:[%s292 + $0x60] sm:$0xff]
      %v739 = vld [vmem:[%s292 + $0x68] sm:$0xff]
      %v740 = vld [vmem:[%s292 + $0x70] sm:$0xff]
      %v741 = vld [vmem:[%s292 + $0x78] sm:$0xff]
      %v758 = vunpack.c.l.b16 %v726
      %v759 = vunpack.c.h.b16 %v726
      %v760 = vunpack.c.l.b16 %v727
      %v761 = vunpack.c.h.b16 %v727
      %v762 = vunpack.c.l.b16 %v728
      %v763 = vunpack.c.h.b16 %v728
      %v764 = vunpack.c.l.b16 %v729
      %v765 = vunpack.c.h.b16 %v729
      %v766 = vunpack.c.l.b16 %v730
      %v767 = vunpack.c.h.b16 %v730
      %v768 = vunpack.c.l.b16 %v731
      %v769 = vunpack.c.h.b16 %v731
      %v770 = vunpack.c.l.b16 %v732
      %v771 = vunpack.c.h.b16 %v732
      %v772 = vunpack.c.l.b16 %v733
      %v773 = vunpack.c.h.b16 %v733
      %v774 = vunpack.c.l.b16 %v734
      %v775 = vunpack.c.h.b16 %v734
      %v776 = vunpack.c.l.b16 %v735
      %v777 = vunpack.c.h.b16 %v735
      %v778 = vunpack.c.l.b16 %v736
      %v779 = vunpack.c.h.b16 %v736
      %v780 = vunpack.c.l.b16 %v737
      %v781 = vunpack.c.h.b16 %v737
      %v782 = vunpack.c.l.b16 %v738
      %v783 = vunpack.c.h.b16 %v738
      %v784 = vunpack.c.l.b16 %v739
      %v785 = vunpack.c.h.b16 %v739
      %v786 = vunpack.c.l.b16 %v740
      %v787 = vunpack.c.h.b16 %v740
      %v788 = vunpack.c.l.b16 %v741
      %v789 = vunpack.c.h.b16 %v741
      %v790 = vpack.c.b16 %v762, %v758
      %v791 = vpack.c.b16 %v763, %v759
      %v792 = vpack.c.b16 %v764, %v760
      %v793 = vpack.c.b16 %v765, %v761
      %v794 = vpack.c.b16 %v770, %v766
      %v795 = vpack.c.b16 %v771, %v767
      %v796 = vpack.c.b16 %v772, %v768
      %v797 = vpack.c.b16 %v773, %v769
      %v798 = vpack.c.b16 %v778, %v774
      %v799 = vpack.c.b16 %v779, %v775
      %v800 = vpack.c.b16 %v780, %v776
      %v801 = vpack.c.b16 %v781, %v777
      %v802 = vpack.c.b16 %v786, %v782
      %v803 = vpack.c.b16 %v787, %v783
      %v804 = vpack.c.b16 %v788, %v784
      %v805 = vpack.c.b16 %v789, %v785
      %vm822 = vcmask 523264
      %v824 = vsel %vm822, %v710, 0
      %v827 = vsel %vm822, %v711, 0
      %v830 = vsel %vm822, %v712, 0
      %v833 = vsel %vm822, %v713, 0
      %v836 = vsel %vm822, %v714, 0
      %v839 = vsel %vm822, %v715, 0
      %v842 = vsel %vm822, %v716, 0
      %v845 = vsel %vm822, %v717, 0
      %v848 = vsel %vm822, %v718, 0
      %v851 = vsel %vm822, %v719, 0
      %v854 = vsel %vm822, %v720, 0
      %v857 = vsel %vm822, %v721, 0
      %v860 = vsel %vm822, %v722, 0
      %v863 = vsel %vm822, %v723, 0
      %v866 = vsel %vm822, %v724, 0
      %v869 = vsel %vm822, %v725, 0
      %871 = vmatpush.bf16.msra.mxu0 0
      %872 = vmatpush.bf16.msra.mxu0 0
      %873 = vmatpush.bf16.msra.mxu0 0
      %874 = vmatpush.bf16.msra.mxu0 0
      %875 = vmatpush.bf16.msra.mxu0 %v802
      %876 = vmatpush.bf16.msra.mxu0 %v798
      %877 = vmatpush.bf16.msra.mxu0 %v794
      %878 = vmatpush.bf16.msra.mxu0 %v790
      %879 = vmatmul.bf16.gmra.mxu0 %v824
      %v880 = vpop.f32.mrf.mxu0
      %v881 = vadd.f32 0.0, %v880
      %v882 = vpop.f32.mrf.mxu0
      %v883 = vadd.f32 0.0, %v882
      %884 = vmatmul.bf16.gmra.mxu0 %v827
      %v885 = vpop.f32.mrf.mxu0
      %v886 = vadd.f32 0.0, %v885
      %v887 = vpop.f32.mrf.mxu0
      %v888 = vadd.f32 0.0, %v887
      %889 = vmatmul.bf16.gmra.mxu0 %v830
      %v890 = vpop.f32.mrf.mxu0
      %v891 = vadd.f32 0.0, %v890
      %v892 = vpop.f32.mrf.mxu0
      %v893 = vadd.f32 0.0, %v892
      %894 = vmatmul.bf16.gmra.mxu0 %v833
      %v895 = vpop.f32.mrf.mxu0
      %v896 = vadd.f32 0.0, %v895
      %v897 = vpop.f32.mrf.mxu0
      %v898 = vadd.f32 0.0, %v897
      %899 = vmatmul.bf16.gmra.mxu0 %v836
      %v900 = vpop.f32.mrf.mxu0
      %v901 = vadd.f32 0.0, %v900
      %v902 = vpop.f32.mrf.mxu0
      %v903 = vadd.f32 0.0, %v902
      %904 = vmatmul.bf16.gmra.mxu0 %v839
      %v905 = vpop.f32.mrf.mxu0
      %v906 = vadd.f32 0.0, %v905
      %v907 = vpop.f32.mrf.mxu0
      %v908 = vadd.f32 0.0, %v907
      %909 = vmatmul.bf16.gmra.mxu0 %v842
      %v910 = vpop.f32.mrf.mxu0
      %v911 = vadd.f32 0.0, %v910
      %v912 = vpop.f32.mrf.mxu0
      %v913 = vadd.f32 0.0, %v912
      %914 = vmatmul.bf16.gmra.mxu0 %v845
      %v915 = vpop.f32.mrf.mxu0
      %v916 = vadd.f32 0.0, %v915
      %v917 = vpop.f32.mrf.mxu0
      %v918 = vadd.f32 0.0, %v917
      %919 = vmatmul.bf16.gmra.mxu0 %v848
      %v920 = vpop.f32.mrf.mxu0
      %v921 = vadd.f32 0.0, %v920
      %v922 = vpop.f32.mrf.mxu0
      %v923 = vadd.f32 0.0, %v922
      %924 = vmatmul.bf16.gmra.mxu0 %v851
      %v925 = vpop.f32.mrf.mxu0
      %v926 = vadd.f32 0.0, %v925
      %v927 = vpop.f32.mrf.mxu0
      %v928 = vadd.f32 0.0, %v927
      %929 = vmatmul.bf16.gmra.mxu0 %v854
      %v930 = vpop.f32.mrf.mxu0
      %v931 = vadd.f32 0.0, %v930
      %v932 = vpop.f32.mrf.mxu0
      %v933 = vadd.f32 0.0, %v932
      %934 = vmatmul.bf16.gmra.mxu0 %v857
      %v935 = vpop.f32.mrf.mxu0
      %v936 = vadd.f32 0.0, %v935
      %v937 = vpop.f32.mrf.mxu0
      %v938 = vadd.f32 0.0, %v937
      %939 = vmatmul.bf16.gmra.mxu0 %v860
      %v940 = vpop.f32.mrf.mxu0
      %v941 = vadd.f32 0.0, %v940
      %v942 = vpop.f32.mrf.mxu0
      %v943 = vadd.f32 0.0, %v942
      %944 = vmatmul.bf16.gmra.mxu0 %v863
      %v945 = vpop.f32.mrf.mxu0
      %v946 = vadd.f32 0.0, %v945
      %v947 = vpop.f32.mrf.mxu0
      %v948 = vadd.f32 0.0, %v947
      %949 = vmatmul.bf16.gmra.mxu0 %v866
      %v950 = vpop.f32.mrf.mxu0
      %v951 = vadd.f32 0.0, %v950
      %v952 = vpop.f32.mrf.mxu0
      %v953 = vadd.f32 0.0, %v952
      %954 = vmatmul.bf16.gmra.mxu0 %v869
      %v955 = vpop.f32.mrf.mxu0
      %v956 = vadd.f32 0.0, %v955
      %v957 = vpop.f32.mrf.mxu0
      %v958 = vadd.f32 0.0, %v957
      %959 = vdwg.mxu0
      %960 = vmatpush.bf16.msra.mxu0 0
      %961 = vmatpush.bf16.msra.mxu0 0
      %962 = vmatpush.bf16.msra.mxu0 0
      %963 = vmatpush.bf16.msra.mxu0 0
      %964 = vmatpush.bf16.msra.mxu0 %v803
      %965 = vmatpush.bf16.msra.mxu0 %v799
      %966 = vmatpush.bf16.msra.mxu0 %v795
      %967 = vmatpush.bf16.msra.mxu0 %v791
      %968 = vmatmul.bf16.gmra.mxu0 %v824
      %v969 = vpop.f32.mrf.mxu0
      %v970 = vadd.f32 0.0, %v969
      %v971 = vpop.f32.mrf.mxu0
      %v972 = vadd.f32 0.0, %v971
      %973 = vmatmul.bf16.gmra.mxu0 %v827
      %v974 = vpop.f32.mrf.mxu0
      %v975 = vadd.f32 0.0, %v974
      %v976 = vpop.f32.mrf.mxu0
      %v977 = vadd.f32 0.0, %v976
      %978 = vmatmul.bf16.gmra.mxu0 %v830
      %v979 = vpop.f32.mrf.mxu0
      %v980 = vadd.f32 0.0, %v979
      %v981 = vpop.f32.mrf.mxu0
      %v982 = vadd.f32 0.0, %v981
      %983 = vmatmul.bf16.gmra.mxu0 %v833
      %v984 = vpop.f32.mrf.mxu0
      %v985 = vadd.f32 0.0, %v984
      %v986 = vpop.f32.mrf.mxu0
      %v987 = vadd.f32 0.0, %v986
      %988 = vmatmul.bf16.gmra.mxu0 %v836
      %v989 = vpop.f32.mrf.mxu0
      %v990 = vadd.f32 0.0, %v989
      %v991 = vpop.f32.mrf.mxu0
      %v992 = vadd.f32 0.0, %v991
      %993 = vmatmul.bf16.gmra.mxu0 %v839
      %v994 = vpop.f32.mrf.mxu0
      %v995 = vadd.f32 0.0, %v994
      %v996 = vpop.f32.mrf.mxu0
      %v997 = vadd.f32 0.0, %v996
      %998 = vmatmul.bf16.gmra.mxu0 %v842
      %v999 = vpop.f32.mrf.mxu0
      %v1000 = vadd.f32 0.0, %v999
      %v1001 = vpop.f32.mrf.mxu0
      %v1002 = vadd.f32 0.0, %v1001
      %1003 = vmatmul.bf16.gmra.mxu0 %v845
      %v1004 = vpop.f32.mrf.mxu0
      %v1005 = vadd.f32 0.0, %v1004
      %v1006 = vpop.f32.mrf.mxu0
      %v1007 = vadd.f32 0.0, %v1006
      %1008 = vmatmul.bf16.gmra.mxu0 %v848
      %v1009 = vpop.f32.mrf.mxu0
      %v1010 = vadd.f32 0.0, %v1009
      %v1011 = vpop.f32.mrf.mxu0
      %v1012 = vadd.f32 0.0, %v1011
      %1013 = vmatmul.bf16.gmra.mxu0 %v851
      %v1014 = vpop.f32.mrf.mxu0
      %v1015 = vadd.f32 0.0, %v1014
      %v1016 = vpop.f32.mrf.mxu0
      %v1017 = vadd.f32 0.0, %v1016
      %1018 = vmatmul.bf16.gmra.mxu0 %v854
      %v1019 = vpop.f32.mrf.mxu0
      %v1020 = vadd.f32 0.0, %v1019
      %v1021 = vpop.f32.mrf.mxu0
      %v1022 = vadd.f32 0.0, %v1021
      %1023 = vmatmul.bf16.gmra.mxu0 %v857
      %v1024 = vpop.f32.mrf.mxu0
      %v1025 = vadd.f32 0.0, %v1024
      %v1026 = vpop.f32.mrf.mxu0
      %v1027 = vadd.f32 0.0, %v1026
      %1028 = vmatmul.bf16.gmra.mxu0 %v860
      %v1029 = vpop.f32.mrf.mxu0
      %v1030 = vadd.f32 0.0, %v1029
      %v1031 = vpop.f32.mrf.mxu0
      %v1032 = vadd.f32 0.0, %v1031
      %1033 = vmatmul.bf16.gmra.mxu0 %v863
      %v1034 = vpop.f32.mrf.mxu0
      %v1035 = vadd.f32 0.0, %v1034
      %v1036 = vpop.f32.mrf.mxu0
      %v1037 = vadd.f32 0.0, %v1036
      %1038 = vmatmul.bf16.gmra.mxu0 %v866
      %v1039 = vpop.f32.mrf.mxu0
      %v1040 = vadd.f32 0.0, %v1039
      %v1041 = vpop.f32.mrf.mxu0
      %v1042 = vadd.f32 0.0, %v1041
      %1043 = vmatmul.bf16.gmra.mxu0 %v869
      %v1044 = vpop.f32.mrf.mxu0
      %v1045 = vadd.f32 0.0, %v1044
      %v1046 = vpop.f32.mrf.mxu0
      %v1047 = vadd.f32 0.0, %v1046
      %1048 = vdwg.mxu0
      %1049 = vmatpush.bf16.msra.mxu0 0
      %1050 = vmatpush.bf16.msra.mxu0 0
      %1051 = vmatpush.bf16.msra.mxu0 0
      %1052 = vmatpush.bf16.msra.mxu0 0
      %1053 = vmatpush.bf16.msra.mxu0 %v804
      %1054 = vmatpush.bf16.msra.mxu0 %v800
      %1055 = vmatpush.bf16.msra.mxu0 %v796
      %1056 = vmatpush.bf16.msra.mxu0 %v792
      %1057 = vmatmul.bf16.gmra.mxu0 %v824
      %v1058 = vpop.f32.mrf.mxu0
      %v1059 = vadd.f32 0.0, %v1058
      %v1060 = vpop.f32.mrf.mxu0
      %v1061 = vadd.f32 0.0, %v1060
      %1062 = vmatmul.bf16.gmra.mxu0 %v827
      %v1063 = vpop.f32.mrf.mxu0
      %v1064 = vadd.f32 0.0, %v1063
      %v1065 = vpop.f32.mrf.mxu0
      %v1066 = vadd.f32 0.0, %v1065
      %1067 = vmatmul.bf16.gmra.mxu0 %v830
      %v1068 = vpop.f32.mrf.mxu0
      %v1069 = vadd.f32 0.0, %v1068
      %v1070 = vpop.f32.mrf.mxu0
      %v1071 = vadd.f32 0.0, %v1070
      %1072 = vmatmul.bf16.gmra.mxu0 %v833
      %v1073 = vpop.f32.mrf.mxu0
      %v1074 = vadd.f32 0.0, %v1073
      %v1075 = vpop.f32.mrf.mxu0
      %v1076 = vadd.f32 0.0, %v1075
      %1077 = vmatmul.bf16.gmra.mxu0 %v836
      %v1078 = vpop.f32.mrf.mxu0
      %v1079 = vadd.f32 0.0, %v1078
      %v1080 = vpop.f32.mrf.mxu0
      %v1081 = vadd.f32 0.0, %v1080
      %1082 = vmatmul.bf16.gmra.mxu0 %v839
      %v1083 = vpop.f32.mrf.mxu0
      %v1084 = vadd.f32 0.0, %v1083
      %v1085 = vpop.f32.mrf.mxu0
      %v1086 = vadd.f32 0.0, %v1085
      %1087 = vmatmul.bf16.gmra.mxu0 %v842
      %v1088 = vpop.f32.mrf.mxu0
      %v1089 = vadd.f32 0.0, %v1088
      %v1090 = vpop.f32.mrf.mxu0
      %v1091 = vadd.f32 0.0, %v1090
      %1092 = vmatmul.bf16.gmra.mxu0 %v845
      %v1093 = vpop.f32.mrf.mxu0
      %v1094 = vadd.f32 0.0, %v1093
      %v1095 = vpop.f32.mrf.mxu0
      %v1096 = vadd.f32 0.0, %v1095
      %1097 = vmatmul.bf16.gmra.mxu0 %v848
      %v1098 = vpop.f32.mrf.mxu0
      %v1099 = vadd.f32 0.0, %v1098
      %v1100 = vpop.f32.mrf.mxu0
      %v1101 = vadd.f32 0.0, %v1100
      %1102 = vmatmul.bf16.gmra.mxu0 %v851
      %v1103 = vpop.f32.mrf.mxu0
      %v1104 = vadd.f32 0.0, %v1103
      %v1105 = vpop.f32.mrf.mxu0
      %v1106 = vadd.f32 0.0, %v1105
      %1107 = vmatmul.bf16.gmra.mxu0 %v854
      %v1108 = vpop.f32.mrf.mxu0
      %v1109 = vadd.f32 0.0, %v1108
      %v1110 = vpop.f32.mrf.mxu0
      %v1111 = vadd.f32 0.0, %v1110
      %1112 = vmatmul.bf16.gmra.mxu0 %v857
      %v1113 = vpop.f32.mrf.mxu0
      %v1114 = vadd.f32 0.0, %v1113
      %v1115 = vpop.f32.mrf.mxu0
      %v1116 = vadd.f32 0.0, %v1115
      %1117 = vmatmul.bf16.gmra.mxu0 %v860
      %v1118 = vpop.f32.mrf.mxu0
      %v1119 = vadd.f32 0.0, %v1118
      %v1120 = vpop.f32.mrf.mxu0
      %v1121 = vadd.f32 0.0, %v1120
      %1122 = vmatmul.bf16.gmra.mxu0 %v863
      %v1123 = vpop.f32.mrf.mxu0
      %v1124 = vadd.f32 0.0, %v1123
      %v1125 = vpop.f32.mrf.mxu0
      %v1126 = vadd.f32 0.0, %v1125
      %1127 = vmatmul.bf16.gmra.mxu0 %v866
      %v1128 = vpop.f32.mrf.mxu0
      %v1129 = vadd.f32 0.0, %v1128
      %v1130 = vpop.f32.mrf.mxu0
      %v1131 = vadd.f32 0.0, %v1130
      %1132 = vmatmul.bf16.gmra.mxu0 %v869
      %v1133 = vpop.f32.mrf.mxu0
      %v1134 = vadd.f32 0.0, %v1133
      %v1135 = vpop.f32.mrf.mxu0
      %v1136 = vadd.f32 0.0, %v1135
      %1137 = vdwg.mxu0
      %1138 = vmatpush.bf16.msra.mxu0 0
      %1139 = vmatpush.bf16.msra.mxu0 0
      %1140 = vmatpush.bf16.msra.mxu0 0
      %1141 = vmatpush.bf16.msra.mxu0 0
      %1142 = vmatpush.bf16.msra.mxu0 %v805
      %1143 = vmatpush.bf16.msra.mxu0 %v801
      %1144 = vmatpush.bf16.msra.mxu0 %v797
      %1145 = vmatpush.bf16.msra.mxu0 %v793
      %1146 = vmatmul.bf16.gmra.mxu0 %v824
      %v1147 = vpop.f32.mrf.mxu0
      %v1148 = vadd.f32 0.0, %v1147
      %v1149 = vpop.f32.mrf.mxu0
      %v1150 = vadd.f32 0.0, %v1149
      %1151 = vmatmul.bf16.gmra.mxu0 %v827
      %v1152 = vpop.f32.mrf.mxu0
      %v1153 = vadd.f32 0.0, %v1152
      %v1154 = vpop.f32.mrf.mxu0
      %v1155 = vadd.f32 0.0, %v1154
      %1156 = vmatmul.bf16.gmra.mxu0 %v830
      %v1157 = vpop.f32.mrf.mxu0
      %v1158 = vadd.f32 0.0, %v1157
      %v1159 = vpop.f32.mrf.mxu0
      %v1160 = vadd.f32 0.0, %v1159
      %1161 = vmatmul.bf16.gmra.mxu0 %v833
      %v1162 = vpop.f32.mrf.mxu0
      %v1163 = vadd.f32 0.0, %v1162
      %v1164 = vpop.f32.mrf.mxu0
      %v1165 = vadd.f32 0.0, %v1164
      %1166 = vmatmul.bf16.gmra.mxu0 %v836
      %v1167 = vpop.f32.mrf.mxu0
      %v1168 = vadd.f32 0.0, %v1167
      %v1169 = vpop.f32.mrf.mxu0
      %v1170 = vadd.f32 0.0, %v1169
      %1171 = vmatmul.bf16.gmra.mxu0 %v839
      %v1172 = vpop.f32.mrf.mxu0
      %v1173 = vadd.f32 0.0, %v1172
      %v1174 = vpop.f32.mrf.mxu0
      %v1175 = vadd.f32 0.0, %v1174
      %1176 = vmatmul.bf16.gmra.mxu0 %v842
      %v1177 = vpop.f32.mrf.mxu0
      %v1178 = vadd.f32 0.0, %v1177
      %v1179 = vpop.f32.mrf.mxu0
      %v1180 = vadd.f32 0.0, %v1179
      %1181 = vmatmul.bf16.gmra.mxu0 %v845
      %v1182 = vpop.f32.mrf.mxu0
      %v1183 = vadd.f32 0.0, %v1182
      %v1184 = vpop.f32.mrf.mxu0
      %v1185 = vadd.f32 0.0, %v1184
      %1186 = vmatmul.bf16.gmra.mxu0 %v848
      %v1187 = vpop.f32.mrf.mxu0
      %v1188 = vadd.f32 0.0, %v1187
      %v1189 = vpop.f32.mrf.mxu0
      %v1190 = vadd.f32 0.0, %v1189
      %1191 = vmatmul.bf16.gmra.mxu0 %v851
      %v1192 = vpop.f32.mrf.mxu0
      %v1193 = vadd.f32 0.0, %v1192
      %v1194 = vpop.f32.mrf.mxu0
      %v1195 = vadd.f32 0.0, %v1194
      %1196 = vmatmul.bf16.gmra.mxu0 %v854
      %v1197 = vpop.f32.mrf.mxu0
      %v1198 = vadd.f32 0.0, %v1197
      %v1199 = vpop.f32.mrf.mxu0
      %v1200 = vadd.f32 0.0, %v1199
      %1201 = vmatmul.bf16.gmra.mxu0 %v857
      %v1202 = vpop.f32.mrf.mxu0
      %v1203 = vadd.f32 0.0, %v1202
      %v1204 = vpop.f32.mrf.mxu0
      %v1205 = vadd.f32 0.0, %v1204
      %1206 = vmatmul.bf16.gmra.mxu0 %v860
      %v1207 = vpop.f32.mrf.mxu0
      %v1208 = vadd.f32 0.0, %v1207
      %v1209 = vpop.f32.mrf.mxu0
      %v1210 = vadd.f32 0.0, %v1209
      %1211 = vmatmul.bf16.gmra.mxu0 %v863
      %v1212 = vpop.f32.mrf.mxu0
      %v1213 = vadd.f32 0.0, %v1212
      %v1214 = vpop.f32.mrf.mxu0
      %v1215 = vadd.f32 0.0, %v1214
      %1216 = vmatmul.bf16.gmra.mxu0 %v866
      %v1217 = vpop.f32.mrf.mxu0
      %v1218 = vadd.f32 0.0, %v1217
      %v1219 = vpop.f32.mrf.mxu0
      %v1220 = vadd.f32 0.0, %v1219
      %1221 = vmatmul.bf16.gmra.mxu0 %v869
      %v1222 = vpop.f32.mrf.mxu0
      %v1223 = vadd.f32 0.0, %v1222
      %v1224 = vpop.f32.mrf.mxu0
      %v1225 = vadd.f32 0.0, %v1224
      %1226 = vdwg.mxu0
      %v1227 = vadd.f32 %v582, %v881
      %v1228 = vadd.f32 %v583, %v970
      %v1229 = vadd.f32 %v584, %v1059
      %v1230 = vadd.f32 %v585, %v1148
      %v1231 = vadd.f32 %v586, %v883
      %v1232 = vadd.f32 %v587, %v972
      %v1233 = vadd.f32 %v588, %v1061
      %v1234 = vadd.f32 %v589, %v1150
      %v1235 = vadd.f32 %v590, %v886
      %v1236 = vadd.f32 %v591, %v975
      %v1237 = vadd.f32 %v592, %v1064
      %v1238 = vadd.f32 %v593, %v1153
      %v1239 = vadd.f32 %v594, %v888
      %v1240 = vadd.f32 %v595, %v977
      %v1241 = vadd.f32 %v596, %v1066
      %v1242 = vadd.f32 %v597, %v1155
      %v1243 = vadd.f32 %v598, %v891
      %v1244 = vadd.f32 %v599, %v980
      %v1245 = vadd.f32 %v600, %v1069
      %v1246 = vadd.f32 %v601, %v1158
      %v1247 = vadd.f32 %v602, %v893
      %v1248 = vadd.f32 %v603, %v982
      %v1249 = vadd.f32 %v604, %v1071
      %v1250 = vadd.f32 %v605, %v1160
      %v1251 = vadd.f32 %v606, %v896
      %v1252 = vadd.f32 %v607, %v985
      %v1253 = vadd.f32 %v608, %v1074
      %v1254 = vadd.f32 %v609, %v1163
      %v1255 = vadd.f32 %v610, %v898
      %v1256 = vadd.f32 %v611, %v987
      %v1257 = vadd.f32 %v612, %v1076
      %v1258 = vadd.f32 %v613, %v1165
      %v1259 = vadd.f32 %v614, %v901
      %v1260 = vadd.f32 %v615, %v990
      %v1261 = vadd.f32 %v616, %v1079
      %v1262 = vadd.f32 %v617, %v1168
      %v1263 = vadd.f32 %v618, %v903
      %v1264 = vadd.f32 %v619, %v992
      %v1265 = vadd.f32 %v620, %v1081
      %v1266 = vadd.f32 %v621, %v1170
      %v1267 = vadd.f32 %v622, %v906
      %v1268 = vadd.f32 %v623, %v995
      %v1269 = vadd.f32 %v624, %v1084
      %v1270 = vadd.f32 %v625, %v1173
      %v1271 = vadd.f32 %v626, %v908
      %v1272 = vadd.f32 %v627, %v997
      %v1273 = vadd.f32 %v628, %v1086
      %v1274 = vadd.f32 %v629, %v1175
      %v1275 = vadd.f32 %v630, %v911
      %v1276 = vadd.f32 %v631, %v1000
      %v1277 = vadd.f32 %v632, %v1089
      %v1278 = vadd.f32 %v633, %v1178
      %v1279 = vadd.f32 %v634, %v913
      %v1280 = vadd.f32 %v635, %v1002
      %v1281 = vadd.f32 %v636, %v1091
      %v1282 = vadd.f32 %v637, %v1180
      %v1283 = vadd.f32 %v638, %v916
      %v1284 = vadd.f32 %v639, %v1005
      %v1285 = vadd.f32 %v640, %v1094
      %v1286 = vadd.f32 %v641, %v1183
      %v1287 = vadd.f32 %v642, %v918
      %v1288 = vadd.f32 %v643, %v1007
      %v1289 = vadd.f32 %v644, %v1096
      %v1290 = vadd.f32 %v645, %v1185
      %v1291 = vadd.f32 %v646, %v921
      %v1292 = vadd.f32 %v647, %v1010
      %v1293 = vadd.f32 %v648, %v1099
      %v1294 = vadd.f32 %v649, %v1188
      %v1295 = vadd.f32 %v650, %v923
      %v1296 = vadd.f32 %v651, %v1012
      %v1297 = vadd.f32 %v652, %v1101
      %v1298 = vadd.f32 %v653, %v1190
      %v1299 = vadd.f32 %v654, %v926
      %v1300 = vadd.f32 %v655, %v1015
      %v1301 = vadd.f32 %v656, %v1104
      %v1302 = vadd.f32 %v657, %v1193
      %v1303 = vadd.f32 %v658, %v928
      %v1304 = vadd.f32 %v659, %v1017
      %v1305 = vadd.f32 %v660, %v1106
      %v1306 = vadd.f32 %v661, %v1195
      %v1307 = vadd.f32 %v662, %v931
      %v1308 = vadd.f32 %v663, %v1020
      %v1309 = vadd.f32 %v664, %v1109
      %v1310 = vadd.f32 %v665, %v1198
      %v1311 = vadd.f32 %v666, %v933
      %v1312 = vadd.f32 %v667, %v1022
      %v1313 = vadd.f32 %v668, %v1111
      %v1314 = vadd.f32 %v669, %v1200
      %v1315 = vadd.f32 %v670, %v936
      %v1316 = vadd.f32 %v671, %v1025
      %v1317 = vadd.f32 %v672, %v1114
      %v1318 = vadd.f32 %v673, %v1203
      %v1319 = vadd.f32 %v674, %v938
      %v1320 = vadd.f32 %v675, %v1027
      %v1321 = vadd.f32 %v676, %v1116
      %v1322 = vadd.f32 %v677, %v1205
      %v1323 = vadd.f32 %v678, %v941
      %v1324 = vadd.f32 %v679, %v1030
      %v1325 = vadd.f32 %v680, %v1119
      %v1326 = vadd.f32 %v681, %v1208
      %v1327 = vadd.f32 %v682, %v943
      %v1328 = vadd.f32 %v683, %v1032
      %v1329 = vadd.f32 %v684, %v1121
      %v1330 = vadd.f32 %v685, %v1210
      %v1331 = vadd.f32 %v686, %v946
      %v1332 = vadd.f32 %v687, %v1035
      %v1333 = vadd.f32 %v688, %v1124
      %v1334 = vadd.f32 %v689, %v1213
      %v1335 = vadd.f32 %v690, %v948
      %v1336 = vadd.f32 %v691, %v1037
      %v1337 = vadd.f32 %v692, %v1126
      %v1338 = vadd.f32 %v693, %v1215
      %v1339 = vadd.f32 %v694, %v951
      %v1340 = vadd.f32 %v695, %v1040
      %v1341 = vadd.f32 %v696, %v1129
      %v1342 = vadd.f32 %v697, %v1218
      %v1343 = vadd.f32 %v698, %v953
      %v1344 = vadd.f32 %v699, %v1042
      %v1345 = vadd.f32 %v700, %v1131
      %v1346 = vadd.f32 %v701, %v1220
      %v1347 = vadd.f32 %v702, %v956
      %v1348 = vadd.f32 %v703, %v1045
      %v1349 = vadd.f32 %v704, %v1134
      %v1350 = vadd.f32 %v705, %v1223
      %v1351 = vadd.f32 %v706, %v958
      %v1352 = vadd.f32 %v707, %v1047
      %v1353 = vadd.f32 %v708, %v1136
      %v1354 = vadd.f32 %v709, %v1225
      %1355 = vst [vmem:[#allocation2] sm:$0xff] %v1227
      %1356 = vst [vmem:[#allocation2 + $0x8] sm:$0xff] %v1228
      %1357 = vst [vmem:[#allocation2 + $0x10] sm:$0xff] %v1229
      %1358 = vst [vmem:[#allocation2 + $0x18] sm:$0xff] %v1230
      %1359 = vst [vmem:[#allocation2 + $0x20] sm:$0xff] %v1231
      %1360 = vst [vmem:[#allocation2 + $0x28] sm:$0xff] %v1232
      %1361 = vst [vmem:[#allocation2 + $0x30] sm:$0xff] %v1233
      %1362 = vst [vmem:[#allocation2 + $0x38] sm:$0xff] %v1234
      %1363 = vst [vmem:[#allocation2 + $0x40] sm:$0xff] %v1235
      %1364 = vst [vmem:[#allocation2 + $0x48] sm:$0xff] %v1236
      %1365 = vst [vmem:[#allocation2 + $0x50] sm:$0xff] %v1237
      %1366 = vst [vmem:[#allocation2 + $0x58] sm:$0xff] %v1238
      %1367 = vst [vmem:[#allocation2 + $0x60] sm:$0xff] %v1239
      %1368 = vst [vmem:[#allocation2 + $0x68] sm:$0xff] %v1240
      %1369 = vst [vmem:[#allocation2 + $0x70] sm:$0xff] %v1241
      %1370 = vst [vmem:[#allocation2 + $0x78] sm:$0xff] %v1242
      %1371 = vst [vmem:[#allocation2 + $0x80] sm:$0xff] %v1243
      %1372 = vst [vmem:[#allocation2 + $0x88] sm:$0xff] %v1244
      %1373 = vst [vmem:[#allocation2 + $0x90] sm:$0xff] %v1245
      %1374 = vst [vmem:[#allocation2 + $0x98] sm:$0xff] %v1246
      %1375 = vst [vmem:[#allocation2 + $0xa0] sm:$0xff] %v1247
      %1376 = vst [vmem:[#allocation2 + $0xa8] sm:$0xff] %v1248
      %1377 = vst [vmem:[#allocation2 + $0xb0] sm:$0xff] %v1249
      %1378 = vst [vmem:[#allocation2 + $0xb8] sm:$0xff] %v1250
      %1379 = vst [vmem:[#allocation2 + $0xc0] sm:$0xff] %v1251
      %1380 = vst [vmem:[#allocation2 + $0xc8] sm:$0xff] %v1252
      %1381 = vst [vmem:[#allocation2 + $0xd0] sm:$0xff] %v1253
      %1382 = vst [vmem:[#allocation2 + $0xd8] sm:$0xff] %v1254
      %1383 = vst [vmem:[#allocation2 + $0xe0] sm:$0xff] %v1255
      %1384 = vst [vmem:[#allocation2 + $0xe8] sm:$0xff] %v1256
      %1385 = vst [vmem:[#allocation2 + $0xf0] sm:$0xff] %v1257
      %1386 = vst [vmem:[#allocation2 + $0xf8] sm:$0xff] %v1258
      %1387 = vst [vmem:[#allocation2 + $0x100] sm:$0xff] %v1259
      %1388 = vst [vmem:[#allocation2 + $0x108] sm:$0xff] %v1260
      %1389 = vst [vmem:[#allocation2 + $0x110] sm:$0xff] %v1261
      %1390 = vst [vmem:[#allocation2 + $0x118] sm:$0xff] %v1262
      %1391 = vst [vmem:[#allocation2 + $0x120] sm:$0xff] %v1263
      %1392 = vst [vmem:[#allocation2 + $0x128] sm:$0xff] %v1264
      %1393 = vst [vmem:[#allocation2 + $0x130] sm:$0xff] %v1265
      %1394 = vst [vmem:[#allocation2 + $0x138] sm:$0xff] %v1266
      %1395 = vst [vmem:[#allocation2 + $0x140] sm:$0xff] %v1267
      %1396 = vst [vmem:[#allocation2 + $0x148] sm:$0xff] %v1268
      %1397 = vst [vmem:[#allocation2 + $0x150] sm:$0xff] %v1269
      %1398 = vst [vmem:[#allocation2 + $0x158] sm:$0xff] %v1270
      %1399 = vst [vmem:[#allocation2 + $0x160] sm:$0xff] %v1271
      %1400 = vst [vmem:[#allocation2 + $0x168] sm:$0xff] %v1272
      %1401 = vst [vmem:[#allocation2 + $0x170] sm:$0xff] %v1273
      %1402 = vst [vmem:[#allocation2 + $0x178] sm:$0xff] %v1274
      %1403 = vst [vmem:[#allocation2 + $0x180] sm:$0xff] %v1275
      %1404 = vst [vmem:[#allocation2 + $0x188] sm:$0xff] %v1276
      %1405 = vst [vmem:[#allocation2 + $0x190] sm:$0xff] %v1277
      %1406 = vst [vmem:[#allocation2 + $0x198] sm:$0xff] %v1278
      %1407 = vst [vmem:[#allocation2 + $0x1a0] sm:$0xff] %v1279
      %1408 = vst [vmem:[#allocation2 + $0x1a8] sm:$0xff] %v1280
      %1409 = vst [vmem:[#allocation2 + $0x1b0] sm:$0xff] %v1281
      %1410 = vst [vmem:[#allocation2 + $0x1b8] sm:$0xff] %v1282
      %1411 = vst [vmem:[#allocation2 + $0x1c0] sm:$0xff] %v1283
      %1412 = vst [vmem:[#allocation2 + $0x1c8] sm:$0xff] %v1284
      %1413 = vst [vmem:[#allocation2 + $0x1d0] sm:$0xff] %v1285
      %1414 = vst [vmem:[#allocation2 + $0x1d8] sm:$0xff] %v1286
      %1415 = vst [vmem:[#allocation2 + $0x1e0] sm:$0xff] %v1287
      %1416 = vst [vmem:[#allocation2 + $0x1e8] sm:$0xff] %v1288
      %1417 = vst [vmem:[#allocation2 + $0x1f0] sm:$0xff] %v1289
      %1418 = vst [vmem:[#allocation2 + $0x1f8] sm:$0xff] %v1290
      %1419 = vst [vmem:[#allocation2 + $0x200] sm:$0xff] %v1291
      %1420 = vst [vmem:[#allocation2 + $0x208] sm:$0xff] %v1292
      %1421 = vst [vmem:[#allocation2 + $0x210] sm:$0xff] %v1293
      %1422 = vst [vmem:[#allocation2 + $0x218] sm:$0xff] %v1294
      %1423 = vst [vmem:[#allocation2 + $0x220] sm:$0xff] %v1295
      %1424 = vst [vmem:[#allocation2 + $0x228] sm:$0xff] %v1296
      %1425 = vst [vmem:[#allocation2 + $0x230] sm:$0xff] %v1297
      %1426 = vst [vmem:[#allocation2 + $0x238] sm:$0xff] %v1298
      %1427 = vst [vmem:[#allocation2 + $0x240] sm:$0xff] %v1299
      %1428 = vst [vmem:[#allocation2 + $0x248] sm:$0xff] %v1300
      %1429 = vst [vmem:[#allocation2 + $0x250] sm:$0xff] %v1301
      %1430 = vst [vmem:[#allocation2 + $0x258] sm:$0xff] %v1302
      %1431 = vst [vmem:[#allocation2 + $0x260] sm:$0xff] %v1303
      %1432 = vst [vmem:[#allocation2 + $0x268] sm:$0xff] %v1304
      %1433 = vst [vmem:[#allocation2 + $0x270] sm:$0xff] %v1305
      %1434 = vst [vmem:[#allocation2 + $0x278] sm:$0xff] %v1306
      %1435 = vst [vmem:[#allocation2 + $0x280] sm:$0xff] %v1307
      %1436 = vst [vmem:[#allocation2 + $0x288] sm:$0xff] %v1308
      %1437 = vst [vmem:[#allocation2 + $0x290] sm:$0xff] %v1309
      %1438 = vst [vmem:[#allocation2 + $0x298] sm:$0xff] %v1310
      %1439 = vst [vmem:[#allocation2 + $0x2a0] sm:$0xff] %v1311
      %1440 = vst [vmem:[#allocation2 + $0x2a8] sm:$0xff] %v1312
      %1441 = vst [vmem:[#allocation2 + $0x2b0] sm:$0xff] %v1313
      %1442 = vst [vmem:[#allocation2 + $0x2b8] sm:$0xff] %v1314
      %1443 = vst [vmem:[#allocation2 + $0x2c0] sm:$0xff] %v1315
      %1444 = vst [vmem:[#allocation2 + $0x2c8] sm:$0xff] %v1316
      %1445 = vst [vmem:[#allocation2 + $0x2d0] sm:$0xff] %v1317
      %1446 = vst [vmem:[#allocation2 + $0x2d8] sm:$0xff] %v1318
      %1447 = vst [vmem:[#allocation2 + $0x2e0] sm:$0xff] %v1319
      %1448 = vst [vmem:[#allocation2 + $0x2e8] sm:$0xff] %v1320
      %1449 = vst [vmem:[#allocation2 + $0x2f0] sm:$0xff] %v1321
      %1450 = vst [vmem:[#allocation2 + $0x2f8] sm:$0xff] %v1322
      %1451 = vst [vmem:[#allocation2 + $0x300] sm:$0xff] %v1323
      %1452 = vst [vmem:[#allocation2 + $0x308] sm:$0xff] %v1324
      %1453 = vst [vmem:[#allocation2 + $0x310] sm:$0xff] %v1325
      %1454 = vst [vmem:[#allocation2 + $0x318] sm:$0xff] %v1326
      %1455 = vst [vmem:[#allocation2 + $0x320] sm:$0xff] %v1327
      %1456 = vst [vmem:[#allocation2 + $0x328] sm:$0xff] %v1328
      %1457 = vst [vmem:[#allocation2 + $0x330] sm:$0xff] %v1329
      %1458 = vst [vmem:[#allocation2 + $0x338] sm:$0xff] %v1330
      %1459 = vst [vmem:[#allocation2 + $0x340] sm:$0xff] %v1331
      %1460 = vst [vmem:[#allocation2 + $0x348] sm:$0xff] %v1332
      %1461 = vst [vmem:[#allocation2 + $0x350] sm:$0xff] %v1333
      %1462 = vst [vmem:[#allocation2 + $0x358] sm:$0xff] %v1334
      %1463 = vst [vmem:[#allocation2 + $0x360] sm:$0xff] %v1335
      %1464 = vst [vmem:[#allocation2 + $0x368] sm:$0xff] %v1336
      %1465 = vst [vmem:[#allocation2 + $0x370] sm:$0xff] %v1337
      %1466 = vst [vmem:[#allocation2 + $0x378] sm:$0xff] %v1338
      %1467 = vst [vmem:[#allocation2 + $0x380] sm:$0xff] %v1339
      %1468 = vst [vmem:[#allocation2 + $0x388] sm:$0xff] %v1340
      %1469 = vst [vmem:[#allocation2 + $0x390] sm:$0xff] %v1341
      %1470 = vst [vmem:[#allocation2 + $0x398] sm:$0xff] %v1342
      %1471 = vst [vmem:[#allocation2 + $0x3a0] sm:$0xff] %v1343
      %1472 = vst [vmem:[#allocation2 + $0x3a8] sm:$0xff] %v1344
      %1473 = vst [vmem:[#allocation2 + $0x3b0] sm:$0xff] %v1345
      %1474 = vst [vmem:[#allocation2 + $0x3b8] sm:$0xff] %v1346
      %1475 = vst [vmem:[#allocation2 + $0x3c0] sm:$0xff] %v1347
      %1476 = vst [vmem:[#allocation2 + $0x3c8] sm:$0xff] %v1348
      %1477 = vst [vmem:[#allocation2 + $0x3d0] sm:$0xff] %v1349
      %1478 = vst [vmem:[#allocation2 + $0x3d8] sm:$0xff] %v1350
      %1479 = vst [vmem:[#allocation2 + $0x3e0] sm:$0xff] %v1351
      %1480 = vst [vmem:[#allocation2 + $0x3e8] sm:$0xff] %v1352
      %1481 = vst [vmem:[#allocation2 + $0x3f0] sm:$0xff] %v1353
      %1482 = vst [vmem:[#allocation2 + $0x3f8] sm:$0xff] %v1354
      // Predicated region
      $region41: #{generator2_forward.18} parent=35 // pred_check
        %p1483 = pneg %p314
      $region42: #{generator2_forward.18} parent=35 // pred_check_branch
        %1485 = sbr.rel (%p1483) target = $region44
      $region43: #{generator2_forward.18} parent=35 // pred_region
        %v1486 = vld [vmem:[#allocation2] sm:$0xff]
        %v1487 = vld [vmem:[#allocation2 + $0x8] sm:$0xff]
        %v1488 = vld [vmem:[#allocation2 + $0x10] sm:$0xff]
        %v1489 = vld [vmem:[#allocation2 + $0x18] sm:$0xff]
        %v1490 = vld [vmem:[#allocation2 + $0x20] sm:$0xff]
        %v1491 = vld [vmem:[#allocation2 + $0x28] sm:$0xff]
        %v1492 = vld [vmem:[#allocation2 + $0x30] sm:$0xff]
        %v1493 = vld [vmem:[#allocation2 + $0x38] sm:$0xff]
        %v1494 = vld [vmem:[#allocation2 + $0x40] sm:$0xff]
        %v1495 = vld [vmem:[#allocation2 + $0x48] sm:$0xff]
        %v1496 = vld [vmem:[#allocation2 + $0x50] sm:$0xff]
        %v1497 = vld [vmem:[#allocation2 + $0x58] sm:$0xff]
        %v1498 = vld [vmem:[#allocation2 + $0x60] sm:$0xff]
        %v1499 = vld [vmem:[#allocation2 + $0x68] sm:$0xff]
        %v1500 = vld [vmem:[#allocation2 + $0x70] sm:$0xff]
        %v1501 = vld [vmem:[#allocation2 + $0x78] sm:$0xff]
        %v1502 = vld [vmem:[#allocation2 + $0x80] sm:$0xff]
        %v1503 = vld [vmem:[#allocation2 + $0x88] sm:$0xff]
        %v1504 = vld [vmem:[#allocation2 + $0x90] sm:$0xff]
        %v1505 = vld [vmem:[#allocation2 + $0x98] sm:$0xff]
        %v1506 = vld [vmem:[#allocation2 + $0xa0] sm:$0xff]
        %v1507 = vld [vmem:[#allocation2 + $0xa8] sm:$0xff]
        %v1508 = vld [vmem:[#allocation2 + $0xb0] sm:$0xff]
        %v1509 = vld [vmem:[#allocation2 + $0xb8] sm:$0xff]
        %v1510 = vld [vmem:[#allocation2 + $0xc0] sm:$0xff]
        %v1511 = vld [vmem:[#allocation2 + $0xc8] sm:$0xff]
        %v1512 = vld [vmem:[#allocation2 + $0xd0] sm:$0xff]
        %v1513 = vld [vmem:[#allocation2 + $0xd8] sm:$0xff]
        %v1514 = vld [vmem:[#allocation2 + $0xe0] sm:$0xff]
        %v1515 = vld [vmem:[#allocation2 + $0xe8] sm:$0xff]
        %v1516 = vld [vmem:[#allocation2 + $0xf0] sm:$0xff]
        %v1517 = vld [vmem:[#allocation2 + $0xf8] sm:$0xff]
        %v1518 = vld [vmem:[#allocation2 + $0x100] sm:$0xff]
        %v1519 = vld [vmem:[#allocation2 + $0x108] sm:$0xff]
        %v1520 = vld [vmem:[#allocation2 + $0x110] sm:$0xff]
        %v1521 = vld [vmem:[#allocation2 + $0x118] sm:$0xff]
        %v1522 = vld [vmem:[#allocation2 + $0x120] sm:$0xff]
        %v1523 = vld [vmem:[#allocation2 + $0x128] sm:$0xff]
        %v1524 = vld [vmem:[#allocation2 + $0x130] sm:$0xff]
        %v1525 = vld [vmem:[#allocation2 + $0x138] sm:$0xff]
        %v1526 = vld [vmem:[#allocation2 + $0x140] sm:$0xff]
        %v1527 = vld [vmem:[#allocation2 + $0x148] sm:$0xff]
        %v1528 = vld [vmem:[#allocation2 + $0x150] sm:$0xff]
        %v1529 = vld [vmem:[#allocation2 + $0x158] sm:$0xff]
        %v1530 = vld [vmem:[#allocation2 + $0x160] sm:$0xff]
        %v1531 = vld [vmem:[#allocation2 + $0x168] sm:$0xff]
        %v1532 = vld [vmem:[#allocation2 + $0x170] sm:$0xff]
        %v1533 = vld [vmem:[#allocation2 + $0x178] sm:$0xff]
        %v1534 = vld [vmem:[#allocation2 + $0x180] sm:$0xff]
        %v1535 = vld [vmem:[#allocation2 + $0x188] sm:$0xff]
        %v1536 = vld [vmem:[#allocation2 + $0x190] sm:$0xff]
        %v1537 = vld [vmem:[#allocation2 + $0x198] sm:$0xff]
        %v1538 = vld [vmem:[#allocation2 + $0x1a0] sm:$0xff]
        %v1539 = vld [vmem:[#allocation2 + $0x1a8] sm:$0xff]
        %v1540 = vld [vmem:[#allocation2 + $0x1b0] sm:$0xff]
        %v1541 = vld [vmem:[#allocation2 + $0x1b8] sm:$0xff]
        %v1542 = vld [vmem:[#allocation2 + $0x1c0] sm:$0xff]
        %v1543 = vld [vmem:[#allocation2 + $0x1c8] sm:$0xff]
        %v1544 = vld [vmem:[#allocation2 + $0x1d0] sm:$0xff]
        %v1545 = vld [vmem:[#allocation2 + $0x1d8] sm:$0xff]
        %v1546 = vld [vmem:[#allocation2 + $0x1e0] sm:$0xff]
        %v1547 = vld [vmem:[#allocation2 + $0x1e8] sm:$0xff]
        %v1548 = vld [vmem:[#allocation2 + $0x1f0] sm:$0xff]
        %v1549 = vld [vmem:[#allocation2 + $0x1f8] sm:$0xff]
        %v1550 = vld [vmem:[#allocation2 + $0x200] sm:$0xff]
        %v1551 = vld [vmem:[#allocation2 + $0x208] sm:$0xff]
        %v1552 = vld [vmem:[#allocation2 + $0x210] sm:$0xff]
        %v1553 = vld [vmem:[#allocation2 + $0x218] sm:$0xff]
        %v1554 = vld [vmem:[#allocation2 + $0x220] sm:$0xff]
        %v1555 = vld [vmem:[#allocation2 + $0x228] sm:$0xff]
        %v1556 = vld [vmem:[#allocation2 + $0x230] sm:$0xff]
        %v1557 = vld [vmem:[#allocation2 + $0x238] sm:$0xff]
        %v1558 = vld [vmem:[#allocation2 + $0x240] sm:$0xff]
        %v1559 = vld [vmem:[#allocation2 + $0x248] sm:$0xff]
        %v1560 = vld [vmem:[#allocation2 + $0x250] sm:$0xff]
        %v1561 = vld [vmem:[#allocation2 + $0x258] sm:$0xff]
        %v1562 = vld [vmem:[#allocation2 + $0x260] sm:$0xff]
        %v1563 = vld [vmem:[#allocation2 + $0x268] sm:$0xff]
        %v1564 = vld [vmem:[#allocation2 + $0x270] sm:$0xff]
        %v1565 = vld [vmem:[#allocation2 + $0x278] sm:$0xff]
        %v1566 = vld [vmem:[#allocation2 + $0x280] sm:$0xff]
        %v1567 = vld [vmem:[#allocation2 + $0x288] sm:$0xff]
        %v1568 = vld [vmem:[#allocation2 + $0x290] sm:$0xff]
        %v1569 = vld [vmem:[#allocation2 + $0x298] sm:$0xff]
        %v1570 = vld [vmem:[#allocation2 + $0x2a0] sm:$0xff]
        %v1571 = vld [vmem:[#allocation2 + $0x2a8] sm:$0xff]
        %v1572 = vld [vmem:[#allocation2 + $0x2b0] sm:$0xff]
        %v1573 = vld [vmem:[#allocation2 + $0x2b8] sm:$0xff]
        %v1574 = vld [vmem:[#allocation2 + $0x2c0] sm:$0xff]
        %v1575 = vld [vmem:[#allocation2 + $0x2c8] sm:$0xff]
        %v1576 = vld [vmem:[#allocation2 + $0x2d0] sm:$0xff]
        %v1577 = vld [vmem:[#allocation2 + $0x2d8] sm:$0xff]
        %v1578 = vld [vmem:[#allocation2 + $0x2e0] sm:$0xff]
        %v1579 = vld [vmem:[#allocation2 + $0x2e8] sm:$0xff]
        %v1580 = vld [vmem:[#allocation2 + $0x2f0] sm:$0xff]
        %v1581 = vld [vmem:[#allocation2 + $0x2f8] sm:$0xff]
        %v1582 = vld [vmem:[#allocation2 + $0x300] sm:$0xff]
        %v1583 = vld [vmem:[#allocation2 + $0x308] sm:$0xff]
        %v1584 = vld [vmem:[#allocation2 + $0x310] sm:$0xff]
        %v1585 = vld [vmem:[#allocation2 + $0x318] sm:$0xff]
        %v1586 = vld [vmem:[#allocation2 + $0x320] sm:$0xff]
        %v1587 = vld [vmem:[#allocation2 + $0x328] sm:$0xff]
        %v1588 = vld [vmem:[#allocation2 + $0x330] sm:$0xff]
        %v1589 = vld [vmem:[#allocation2 + $0x338] sm:$0xff]
        %v1590 = vld [vmem:[#allocation2 + $0x340] sm:$0xff]
        %v1591 = vld [vmem:[#allocation2 + $0x348] sm:$0xff]
        %v1592 = vld [vmem:[#allocation2 + $0x350] sm:$0xff]
        %v1593 = vld [vmem:[#allocation2 + $0x358] sm:$0xff]
        %v1594 = vld [vmem:[#allocation2 + $0x360] sm:$0xff]
        %v1595 = vld [vmem:[#allocation2 + $0x368] sm:$0xff]
        %v1596 = vld [vmem:[#allocation2 + $0x370] sm:$0xff]
        %v1597 = vld [vmem:[#allocation2 + $0x378] sm:$0xff]
        %v1598 = vld [vmem:[#allocation2 + $0x380] sm:$0xff]
        %v1599 = vld [vmem:[#allocation2 + $0x388] sm:$0xff]
        %v1600 = vld [vmem:[#allocation2 + $0x390] sm:$0xff]
        %v1601 = vld [vmem:[#allocation2 + $0x398] sm:$0xff]
        %v1602 = vld [vmem:[#allocation2 + $0x3a0] sm:$0xff]
        %v1603 = vld [vmem:[#allocation2 + $0x3a8] sm:$0xff]
        %v1604 = vld [vmem:[#allocation2 + $0x3b0] sm:$0xff]
        %v1605 = vld [vmem:[#allocation2 + $0x3b8] sm:$0xff]
        %v1606 = vld [vmem:[#allocation2 + $0x3c0] sm:$0xff]
        %v1607 = vld [vmem:[#allocation2 + $0x3c8] sm:$0xff]
        %v1608 = vld [vmem:[#allocation2 + $0x3d0] sm:$0xff]
        %v1609 = vld [vmem:[#allocation2 + $0x3d8] sm:$0xff]
        %v1610 = vld [vmem:[#allocation2 + $0x3e0] sm:$0xff]
        %v1611 = vld [vmem:[#allocation2 + $0x3e8] sm:$0xff]
        %v1612 = vld [vmem:[#allocation2 + $0x3f0] sm:$0xff]
        %v1613 = vld [vmem:[#allocation2 + $0x3f8] sm:$0xff]
        %1614 = vst [vmem:[%s310] sm:$0xff] %v1486
        %1615 = vst [vmem:[%s310 + $0x8] sm:$0xff] %v1487
        %1616 = vst [vmem:[%s310 + $0x10] sm:$0xff] %v1488
        %1617 = vst [vmem:[%s310 + $0x18] sm:$0xff] %v1489
        %1618 = vst [vmem:[%s310 + $0x20] sm:$0xff] %v1490
        %1619 = vst [vmem:[%s310 + $0x28] sm:$0xff] %v1491
        %1620 = vst [vmem:[%s310 + $0x30] sm:$0xff] %v1492
        %1621 = vst [vmem:[%s310 + $0x38] sm:$0xff] %v1493
        %1622 = vst [vmem:[%s310 + $0x40] sm:$0xff] %v1494
        %1623 = vst [vmem:[%s310 + $0x48] sm:$0xff] %v1495
        %1624 = vst [vmem:[%s310 + $0x50] sm:$0xff] %v1496
        %1625 = vst [vmem:[%s310 + $0x58] sm:$0xff] %v1497
        %1626 = vst [vmem:[%s310 + $0x60] sm:$0xff] %v1498
        %1627 = vst [vmem:[%s310 + $0x68] sm:$0xff] %v1499
        %1628 = vst [vmem:[%s310 + $0x70] sm:$0xff] %v1500
        %1629 = vst [vmem:[%s310 + $0x78] sm:$0xff] %v1501
        %1630 = vst [vmem:[%s310 + $0x80] sm:$0xff] %v1502
        %1631 = vst [vmem:[%s310 + $0x88] sm:$0xff] %v1503
        %1632 = vst [vmem:[%s310 + $0x90] sm:$0xff] %v1504
        %1633 = vst [vmem:[%s310 + $0x98] sm:$0xff] %v1505
        %1634 = vst [vmem:[%s310 + $0xa0] sm:$0xff] %v1506
        %1635 = vst [vmem:[%s310 + $0xa8] sm:$0xff] %v1507
        %1636 = vst [vmem:[%s310 + $0xb0] sm:$0xff] %v1508
        %1637 = vst [vmem:[%s310 + $0xb8] sm:$0xff] %v1509
        %1638 = vst [vmem:[%s310 + $0xc0] sm:$0xff] %v1510
        %1639 = vst [vmem:[%s310 + $0xc8] sm:$0xff] %v1511
        %1640 = vst [vmem:[%s310 + $0xd0] sm:$0xff] %v1512
        %1641 = vst [vmem:[%s310 + $0xd8] sm:$0xff] %v1513
        %1642 = vst [vmem:[%s310 + $0xe0] sm:$0xff] %v1514
        %1643 = vst [vmem:[%s310 + $0xe8] sm:$0xff] %v1515
        %1644 = vst [vmem:[%s310 + $0xf0] sm:$0xff] %v1516
        %1645 = vst [vmem:[%s310 + $0xf8] sm:$0xff] %v1517
        %1646 = vst [vmem:[%s310 + $0x100] sm:$0xff] %v1518
        %1647 = vst [vmem:[%s310 + $0x108] sm:$0xff] %v1519
        %1648 = vst [vmem:[%s310 + $0x110] sm:$0xff] %v1520
        %1649 = vst [vmem:[%s310 + $0x118] sm:$0xff] %v1521
        %1650 = vst [vmem:[%s310 + $0x120] sm:$0xff] %v1522
        %1651 = vst [vmem:[%s310 + $0x128] sm:$0xff] %v1523
        %1652 = vst [vmem:[%s310 + $0x130] sm:$0xff] %v1524
        %1653 = vst [vmem:[%s310 + $0x138] sm:$0xff] %v1525
        %1654 = vst [vmem:[%s310 + $0x140] sm:$0xff] %v1526
        %1655 = vst [vmem:[%s310 + $0x148] sm:$0xff] %v1527
        %1656 = vst [vmem:[%s310 + $0x150] sm:$0xff] %v1528
        %1657 = vst [vmem:[%s310 + $0x158] sm:$0xff] %v1529
        %1658 = vst [vmem:[%s310 + $0x160] sm:$0xff] %v1530
        %1659 = vst [vmem:[%s310 + $0x168] sm:$0xff] %v1531
        %1660 = vst [vmem:[%s310 + $0x170] sm:$0xff] %v1532
        %1661 = vst [vmem:[%s310 + $0x178] sm:$0xff] %v1533
        %1662 = vst [vmem:[%s310 + $0x180] sm:$0xff] %v1534
        %1663 = vst [vmem:[%s310 + $0x188] sm:$0xff] %v1535
        %1664 = vst [vmem:[%s310 + $0x190] sm:$0xff] %v1536
        %1665 = vst [vmem:[%s310 + $0x198] sm:$0xff] %v1537
        %1666 = vst [vmem:[%s310 + $0x1a0] sm:$0xff] %v1538
        %1667 = vst [vmem:[%s310 + $0x1a8] sm:$0xff] %v1539
        %1668 = vst [vmem:[%s310 + $0x1b0] sm:$0xff] %v1540
        %1669 = vst [vmem:[%s310 + $0x1b8] sm:$0xff] %v1541
        %1670 = vst [vmem:[%s310 + $0x1c0] sm:$0xff] %v1542
        %1671 = vst [vmem:[%s310 + $0x1c8] sm:$0xff] %v1543
        %1672 = vst [vmem:[%s310 + $0x1d0] sm:$0xff] %v1544
        %1673 = vst [vmem:[%s310 + $0x1d8] sm:$0xff] %v1545
        %1674 = vst [vmem:[%s310 + $0x1e0] sm:$0xff] %v1546
        %1675 = vst [vmem:[%s310 + $0x1e8] sm:$0xff] %v1547
        %1676 = vst [vmem:[%s310 + $0x1f0] sm:$0xff] %v1548
        %1677 = vst [vmem:[%s310 + $0x1f8] sm:$0xff] %v1549
        %1678 = vst [vmem:[%s310 + $0x200] sm:$0xff] %v1550
        %1679 = vst [vmem:[%s310 + $0x208] sm:$0xff] %v1551
        %1680 = vst [vmem:[%s310 + $0x210] sm:$0xff] %v1552
        %1681 = vst [vmem:[%s310 + $0x218] sm:$0xff] %v1553
        %1682 = vst [vmem:[%s310 + $0x220] sm:$0xff] %v1554
        %1683 = vst [vmem:[%s310 + $0x228] sm:$0xff] %v1555
        %1684 = vst [vmem:[%s310 + $0x230] sm:$0xff] %v1556
        %1685 = vst [vmem:[%s310 + $0x238] sm:$0xff] %v1557
        %1686 = vst [vmem:[%s310 + $0x240] sm:$0xff] %v1558
        %1687 = vst [vmem:[%s310 + $0x248] sm:$0xff] %v1559
        %1688 = vst [vmem:[%s310 + $0x250] sm:$0xff] %v1560
        %1689 = vst [vmem:[%s310 + $0x258] sm:$0xff] %v1561
        %1690 = vst [vmem:[%s310 + $0x260] sm:$0xff] %v1562
        %1691 = vst [vmem:[%s310 + $0x268] sm:$0xff] %v1563
        %1692 = vst [vmem:[%s310 + $0x270] sm:$0xff] %v1564
        %1693 = vst [vmem:[%s310 + $0x278] sm:$0xff] %v1565
        %1694 = vst [vmem:[%s310 + $0x280] sm:$0xff] %v1566
        %1695 = vst [vmem:[%s310 + $0x288] sm:$0xff] %v1567
        %1696 = vst [vmem:[%s310 + $0x290] sm:$0xff] %v1568
        %1697 = vst [vmem:[%s310 + $0x298] sm:$0xff] %v1569
        %1698 = vst [vmem:[%s310 + $0x2a0] sm:$0xff] %v1570
        %1699 = vst [vmem:[%s310 + $0x2a8] sm:$0xff] %v1571
        %1700 = vst [vmem:[%s310 + $0x2b0] sm:$0xff] %v1572
        %1701 = vst [vmem:[%s310 + $0x2b8] sm:$0xff] %v1573
        %1702 = vst [vmem:[%s310 + $0x2c0] sm:$0xff] %v1574
        %1703 = vst [vmem:[%s310 + $0x2c8] sm:$0xff] %v1575
        %1704 = vst [vmem:[%s310 + $0x2d0] sm:$0xff] %v1576
        %1705 = vst [vmem:[%s310 + $0x2d8] sm:$0xff] %v1577
        %1706 = vst [vmem:[%s310 + $0x2e0] sm:$0xff] %v1578
        %1707 = vst [vmem:[%s310 + $0x2e8] sm:$0xff] %v1579
        %1708 = vst [vmem:[%s310 + $0x2f0] sm:$0xff] %v1580
        %1709 = vst [vmem:[%s310 + $0x2f8] sm:$0xff] %v1581
        %1710 = vst [vmem:[%s310 + $0x300] sm:$0xff] %v1582
        %1711 = vst [vmem:[%s310 + $0x308] sm:$0xff] %v1583
        %1712 = vst [vmem:[%s310 + $0x310] sm:$0xff] %v1584
        %1713 = vst [vmem:[%s310 + $0x318] sm:$0xff] %v1585
        %1714 = vst [vmem:[%s310 + $0x320] sm:$0xff] %v1586
        %1715 = vst [vmem:[%s310 + $0x328] sm:$0xff] %v1587
        %1716 = vst [vmem:[%s310 + $0x330] sm:$0xff] %v1588
        %1717 = vst [vmem:[%s310 + $0x338] sm:$0xff] %v1589
        %1718 = vst [vmem:[%s310 + $0x340] sm:$0xff] %v1590
        %1719 = vst [vmem:[%s310 + $0x348] sm:$0xff] %v1591
        %1720 = vst [vmem:[%s310 + $0x350] sm:$0xff] %v1592
        %1721 = vst [vmem:[%s310 + $0x358] sm:$0xff] %v1593
        %1722 = vst [vmem:[%s310 + $0x360] sm:$0xff] %v1594
        %1723 = vst [vmem:[%s310 + $0x368] sm:$0xff] %v1595
        %1724 = vst [vmem:[%s310 + $0x370] sm:$0xff] %v1596
        %1725 = vst [vmem:[%s310 + $0x378] sm:$0xff] %v1597
        %1726 = vst [vmem:[%s310 + $0x380] sm:$0xff] %v1598
        %1727 = vst [vmem:[%s310 + $0x388] sm:$0xff] %v1599
        %1728 = vst [vmem:[%s310 + $0x390] sm:$0xff] %v1600
        %1729 = vst [vmem:[%s310 + $0x398] sm:$0xff] %v1601
        %1730 = vst [vmem:[%s310 + $0x3a0] sm:$0xff] %v1602
        %1731 = vst [vmem:[%s310 + $0x3a8] sm:$0xff] %v1603
        %1732 = vst [vmem:[%s310 + $0x3b0] sm:$0xff] %v1604
        %1733 = vst [vmem:[%s310 + $0x3b8] sm:$0xff] %v1605
        %1734 = vst [vmem:[%s310 + $0x3c0] sm:$0xff] %v1606
        %1735 = vst [vmem:[%s310 + $0x3c8] sm:$0xff] %v1607
        %1736 = vst [vmem:[%s310 + $0x3d0] sm:$0xff] %v1608
        %1737 = vst [vmem:[%s310 + $0x3d8] sm:$0xff] %v1609
        %1738 = vst [vmem:[%s310 + $0x3e0] sm:$0xff] %v1610
        %1739 = vst [vmem:[%s310 + $0x3e8] sm:$0xff] %v1611
        %1740 = vst [vmem:[%s310 + $0x3f0] sm:$0xff] %v1612
        %1741 = vst [vmem:[%s310 + $0x3f8] sm:$0xff] %v1613
      $region44: #{generator2_forward.18} parent=35 // pred_fallthru
        _
      %s1742 = smul.u32 32, %s20
      %s1743 = smul.u32 4, %s21
      %p1744 = scmp.lt.s32.totalorder %s1742, 63
      %s1745 = scalar_select %p1744, %s1742, 63
      %p1746 = scmp.lt.s32.totalorder %s1743, 3
      %s1747 = scalar_select %p1746, %s1743, 3
      %s1748 = smul.addr %s1745, 4
      %s1749 = sadd.s32 %s1747, %s1748
      %s1750 = smul.addr %s1749, 8
      %s1751 = scalar_lea.vmem %s4, %s1750
      // Predicated region
      $region45: #{generator2_forward.18} parent=35 // pred_check
        %p1752 = pneg %p162
      $region46: #{generator2_forward.18} parent=35 // pred_check_branch
        %1754 = sbr.rel (%p1752) target = $region48
      $region47: #{generator2_forward.18} parent=35 // pred_region
        %s1755 = smul.u32 32, %s20
        %s1756 = smul.u32 4, %s21
      $region48: #{generator2_forward.18} parent=35 // pred_fallthru
        _
    $region36: #{generator2_forward.18} parent=5 // pred_fallthru
      _
    %p1757 = scmp.le.s32.totalorder 2, %s10
    // Predicated region
    $region49: #{generator2_forward.18} parent=5 // pred_check
      %p1758 = pneg %p1757
    $region50: #{generator2_forward.18} parent=5 // pred_check_branch
      %1760 = sbr.rel (%p1758) target = $region52
    $region51: #{generator2_forward.18} parent=5 // pred_region
      %s1761 = ssub.s32 %s10, 2
      // Predicated region
      $region53: #{generator2_forward.18} parent=51 // pred_check
        %p1762 = pneg %p168
      $region54: #{generator2_forward.18} parent=51 // pred_check_branch
        %1764 = sbr.rel (%p1762) target = $region56
      $region55: #{generator2_forward.18} parent=51 // pred_region
        %s1765 = smul.u32 32, %s23
        %s1766 = smul.u32 4, %s24
        %p1767 = scmp.lt.s32.totalorder %s1765, 63
        %s1768 = scalar_select %p1767, %s1765, 63
        %p1769 = scmp.lt.s32.totalorder %s1766, 3
        %s1770 = scalar_select %p1769, %s1766, 3
        %s1771 = smul.addr %s1768, 4
        %s1772 = sadd.s32 %s1770, %s1771
        %s1773 = smul.addr %s1772, 8
        %s1774 = scalar_lea.vmem %s4, %s1773
      $region56: #{generator2_forward.18} parent=51 // pred_fallthru
        _
    $region52: #{generator2_forward.18} parent=5 // pred_fallthru
      _
  $region6: #{generator2_forward.18} parent=0 // loop_footer
    %s14 = sadd.s32 1, %s10
  $region7: #{generator2_forward.18} parent=0 // loop_footer_branch
    %9 = sbr.rel target = $region3
  $region8: #{generator2_forward.18} parent=0 // loop_exit
    _

// kernel: generator2_forward.19
$region0: #{generator2_forward.19}
  #allocation0 [shape = 'u32[]', space=smem, size = 0x4, offset = 0x4, fixed_abs, tag = 'smem constant byte address 0x4 - core index']
  #allocation1 [shape = 'u32[72,128]{1,0:T(1,128)}', space=vmem, size = 0x9000, scoped, tag = 'internal scratch']
  %s0 = inlined_call_operand.vmem [shape: f32[512,128], index: 0, kind: input, shape index: {}]
  %s1 = inlined_call_operand.vmem [shape: f32[1,128], index: 1, kind: output, shape index: {0}]
  %s2 = inlined_call_operand.vmem [shape: f32[1,128], index: 2, kind: output, shape index: {1}]
  %3 = xla_tuple %s1, %s2
  %s4 = sld [smem:[#allocation0]]
  $region26: #{generator2_forward.19} parent=0
    _
  %s6 = ssub.s32 1, %s4
  %s7 = scalar_select 0, %s6, %s4
  // Predicated region
  $region2: #{generator2_forward.19} parent=0 // pred_check
    _
  $region3: #{generator2_forward.19} parent=0 // pred_check_branch
    %9 = sbr.rel (0) target = $region5
  $region4: #{generator2_forward.19} parent=0 // pred_region
    _
  $region5: #{generator2_forward.19} parent=0 // pred_fallthru
    _
  %p10 = scmp.eq.s32.totalorder 0, 0
  // Predicated region
  $region6: #{generator2_forward.19} parent=0 // pred_check
    %p11 = pneg %p10
  $region7: #{generator2_forward.19} parent=0 // pred_check_branch
    %13 = sbr.rel (%p11) target = $region9
  $region8: #{generator2_forward.19} parent=0 // pred_region
    %14 = vst [vmem:[%s1] sm:$0x1] 0.0
    %15 = vst [vmem:[%s2] sm:$0x1] 0.0
  $region9: #{generator2_forward.19} parent=0 // pred_fallthru
    _
  %v16 = vld [vmem:[%s0] sm:$0xff]
  %v17 = vld [vmem:[%s0 + $0x8] sm:$0xff]
  %v18 = vld [vmem:[%s0 + $0x10] sm:$0xff]
  %v19 = vld [vmem:[%s0 + $0x18] sm:$0xff]
  %v20 = vld [vmem:[%s0 + $0x20] sm:$0xff]
  %v21 = vld [vmem:[%s0 + $0x28] sm:$0xff]
  %v22 = vld [vmem:[%s0 + $0x30] sm:$0xff]
  %v23 = vld [vmem:[%s0 + $0x38] sm:$0xff]
  %v24 = vld [vmem:[%s0 + $0x40] sm:$0xff]
  %v25 = vld [vmem:[%s0 + $0x48] sm:$0xff]
  %v26 = vld [vmem:[%s0 + $0x50] sm:$0xff]
  %v27 = vld [vmem:[%s0 + $0x58] sm:$0xff]
  %v28 = vld [vmem:[%s0 + $0x60] sm:$0xff]
  %v29 = vld [vmem:[%s0 + $0x68] sm:$0xff]
  %v30 = vld [vmem:[%s0 + $0x70] sm:$0xff]
  %v31 = vld [vmem:[%s0 + $0x78] sm:$0xff]
  %v32 = vld [vmem:[%s0 + $0x80] sm:$0xff]
  %v33 = vld [vmem:[%s0 + $0x88] sm:$0xff]
  %v34 = vld [vmem:[%s0 + $0x90] sm:$0xff]
  %v35 = vld [vmem:[%s0 + $0x98] sm:$0xff]
  %v36 = vld [vmem:[%s0 + $0xa0] sm:$0xff]
  %v37 = vld [vmem:[%s0 + $0xa8] sm:$0xff]
  %v38 = vld [vmem:[%s0 + $0xb0] sm:$0xff]
  %v39 = vld [vmem:[%s0 + $0xb8] sm:$0xff]
  %v40 = vld [vmem:[%s0 + $0xc0] sm:$0xff]
  %v41 = vld [vmem:[%s0 + $0xc8] sm:$0xff]
  %v42 = vld [vmem:[%s0 + $0xd0] sm:$0xff]
  %v43 = vld [vmem:[%s0 + $0xd8] sm:$0xff]
  %v44 = vld [vmem:[%s0 + $0xe0] sm:$0xff]
  %v45 = vld [vmem:[%s0 + $0xe8] sm:$0xff]
  %v46 = vld [vmem:[%s0 + $0xf0] sm:$0xff]
  %v47 = vld [vmem:[%s0 + $0xf8] sm:$0xff]
  %v48 = vld [vmem:[%s0 + $0x100] sm:$0xff]
  %v49 = vld [vmem:[%s0 + $0x108] sm:$0xff]
  %v50 = vld [vmem:[%s0 + $0x110] sm:$0xff]
  %v51 = vld [vmem:[%s0 + $0x118] sm:$0xff]
  %v52 = vld [vmem:[%s0 + $0x120] sm:$0xff]
  %v53 = vld [vmem:[%s0 + $0x128] sm:$0xff]
  %v54 = vld [vmem:[%s0 + $0x130] sm:$0xff]
  %v55 = vld [vmem:[%s0 + $0x138] sm:$0xff]
  %v56 = vld [vmem:[%s0 + $0x140] sm:$0xff]
  %v57 = vld [vmem:[%s0 + $0x148] sm:$0xff]
  %v58 = vld [vmem:[%s0 + $0x150] sm:$0xff]
  %v59 = vld [vmem:[%s0 + $0x158] sm:$0xff]
  %v60 = vld [vmem:[%s0 + $0x160] sm:$0xff]
  %v61 = vld [vmem:[%s0 + $0x168] sm:$0xff]
  %v62 = vld [vmem:[%s0 + $0x170] sm:$0xff]
  %v63 = vld [vmem:[%s0 + $0x178] sm:$0xff]
  %v64 = vld [vmem:[%s0 + $0x180] sm:$0xff]
  %v65 = vld [vmem:[%s0 + $0x188] sm:$0xff]
  %v66 = vld [vmem:[%s0 + $0x190] sm:$0xff]
  %v67 = vld [vmem:[%s0 + $0x198] sm:$0xff]
  %v68 = vld [vmem:[%s0 + $0x1a0] sm:$0xff]
  %v69 = vld [vmem:[%s0 + $0x1a8] sm:$0xff]
  %v70 = vld [vmem:[%s0 + $0x1b0] sm:$0xff]
  %v71 = vld [vmem:[%s0 + $0x1b8] sm:$0xff]
  %v72 = vld [vmem:[%s0 + $0x1c0] sm:$0xff]
  %v73 = vld [vmem:[%s0 + $0x1c8] sm:$0xff]
  %v74 = vld [vmem:[%s0 + $0x1d0] sm:$0xff]
  %v75 = vld [vmem:[%s0 + $0x1d8] sm:$0xff]
  %v76 = vld [vmem:[%s0 + $0x1e0] sm:$0xff]
  %v77 = vld [vmem:[%s0 + $0x1e8] sm:$0xff]
  %v78 = vld [vmem:[%s0 + $0x1f0] sm:$0xff]
  %v79 = vld [vmem:[%s0 + $0x1f8] sm:$0xff]
  %v80 = vld [vmem:[%s1] sm:$0x1]
  %v81 = vadd.f32 %v16, %v17
  %v82 = vadd.f32 %v81, %v18
  %v83 = vadd.f32 %v82, %v19
  %v84 = vadd.f32 %v83, %v20
  %v85 = vadd.f32 %v84, %v21
  %v86 = vadd.f32 %v85, %v22
  %v87 = vadd.f32 %v86, %v23
  %v88 = vadd.f32 %v87, %v24
  %v89 = vadd.f32 %v88, %v25
  %v90 = vadd.f32 %v89, %v26
  %v91 = vadd.f32 %v90, %v27
  %v92 = vadd.f32 %v91, %v28
  %v93 = vadd.f32 %v92, %v29
  %v94 = vadd.f32 %v93, %v30
  %v95 = vadd.f32 %v94, %v31
  %v96 = vadd.f32 %v95, %v32
  %v97 = vadd.f32 %v96, %v33
  %v98 = vadd.f32 %v97, %v34
  %v99 = vadd.f32 %v98, %v35
  %v100 = vadd.f32 %v99, %v36
  %v101 = vadd.f32 %v100, %v37
  %v102 = vadd.f32 %v101, %v38
  %v103 = vadd.f32 %v102, %v39
  %v104 = vadd.f32 %v103, %v40
  %v105 = vadd.f32 %v104, %v41
  %v106 = vadd.f32 %v105, %v42
  %v107 = vadd.f32 %v106, %v43
  %v108 = vadd.f32 %v107, %v44
  %v109 = vadd.f32 %v108, %v45
  %v110 = vadd.f32 %v109, %v46
  %v111 = vadd.f32 %v110, %v47
  %v112 = vadd.f32 %v111, %v48
  %v113 = vadd.f32 %v112, %v49
  %v114 = vadd.f32 %v113, %v50
  %v115 = vadd.f32 %v114, %v51
  %v116 = vadd.f32 %v115, %v52
  %v117 = vadd.f32 %v116, %v53
  %v118 = vadd.f32 %v117, %v54
  %v119 = vadd.f32 %v118, %v55
  %v120 = vadd.f32 %v119, %v56
  %v121 = vadd.f32 %v120, %v57
  %v122 = vadd.f32 %v121, %v58
  %v123 = vadd.f32 %v122, %v59
  %v124 = vadd.f32 %v123, %v60
  %v125 = vadd.f32 %v124, %v61
  %v126 = vadd.f32 %v125, %v62
  %v127 = vadd.f32 %v126, %v63
  %v128 = vadd.f32 %v127, %v64
  %v129 = vadd.f32 %v128, %v65
  %v130 = vadd.f32 %v129, %v66
  %v131 = vadd.f32 %v130, %v67
  %v132 = vadd.f32 %v131, %v68
  %v133 = vadd.f32 %v132, %v69
  %v134 = vadd.f32 %v133, %v70
  %v135 = vadd.f32 %v134, %v71
  %v136 = vadd.f32 %v135, %v72
  %v137 = vadd.f32 %v136, %v73
  %v138 = vadd.f32 %v137, %v74
  %v139 = vadd.f32 %v138, %v75
  %v140 = vadd.f32 %v139, %v76
  %v141 = vadd.f32 %v140, %v77
  %v142 = vadd.f32 %v141, %v78
  %v143 = vadd.f32 %v142, %v79
  %v144 = vrot.slane %v143, 4
  %v145 = vadd.f32 %v143, %v144
  %v146 = vrot.slane %v145, 2
  %v147 = vadd.f32 %v145, %v146
  %v148 = vrot.slane %v147, 1
  %v149 = vadd.f32 %v147, %v148
  %v150 = vadd.f32 %v80, %v149
  %151 = vst [vmem:[%s1] sm:$0x1] %v150
  %v152 = vld [vmem:[%s2] sm:$0x1]
  %v153 = vmul.f32 %v16, %v16
  %v154 = vmul.f32 %v17, %v17
  %v155 = vmul.f32 %v18, %v18
  %v156 = vmul.f32 %v19, %v19
  %v157 = vmul.f32 %v20, %v20
  %v158 = vmul.f32 %v21, %v21
  %v159 = vmul.f32 %v22, %v22
  %v160 = vmul.f32 %v23, %v23
  %v161 = vmul.f32 %v24, %v24
  %v162 = vmul.f32 %v25, %v25
  %v163 = vmul.f32 %v26, %v26
  %v164 = vmul.f32 %v27, %v27
  %v165 = vmul.f32 %v28, %v28
  %v166 = vmul.f32 %v29, %v29
  %v167 = vmul.f32 %v30, %v30
  %v168 = vmul.f32 %v31, %v31
  %v169 = vmul.f32 %v32, %v32
  %v170 = vmul.f32 %v33, %v33
  %v171 = vmul.f32 %v34, %v34
  %v172 = vmul.f32 %v35, %v35
  %v173 = vmul.f32 %v36, %v36
  %v174 = vmul.f32 %v37, %v37
  %v175 = vmul.f32 %v38, %v38
  %v176 = vmul.f32 %v39, %v39
  %v177 = vmul.f32 %v40, %v40
  %v178 = vmul.f32 %v41, %v41
  %v179 = vmul.f32 %v42, %v42
  %v180 = vmul.f32 %v43, %v43
  %v181 = vmul.f32 %v44, %v44
  %v182 = vmul.f32 %v45, %v45
  %v183 = vmul.f32 %v46, %v46
  %v184 = vmul.f32 %v47, %v47
  %v185 = vmul.f32 %v48, %v48
  %v186 = vmul.f32 %v49, %v49
  %v187 = vmul.f32 %v50, %v50
  %v188 = vmul.f32 %v51, %v51
  %v189 = vmul.f32 %v52, %v52
  %v190 = vmul.f32 %v53, %v53
  %v191 = vmul.f32 %v54, %v54
  %v192 = vmul.f32 %v55, %v55
  %v193 = vmul.f32 %v56, %v56
  %v194 = vmul.f32 %v57, %v57
  %v195 = vmul.f32 %v58, %v58
  %v196 = vmul.f32 %v59, %v59
  %v197 = vmul.f32 %v60, %v60
  %v198 = vmul.f32 %v61, %v61
  %v199 = vmul.f32 %v62, %v62
  %v200 = vmul.f32 %v63, %v63
  %v201 = vmul.f32 %v64, %v64
  %v202 = vmul.f32 %v65, %v65
  %v203 = vmul.f32 %v66, %v66
  %v204 = vmul.f32 %v67, %v67
  %v205 = vmul.f32 %v68, %v68
  %v206 = vmul.f32 %v69, %v69
  %v207 = vmul.f32 %v70, %v70
  %v208 = vmul.f32 %v71, %v71
  %v209 = vmul.f32 %v72, %v72
  %v210 = vmul.f32 %v73, %v73
  %v211 = vmul.f32 %v74, %v74
  %v212 = vmul.f32 %v75, %v75
  %v213 = vmul.f32 %v76, %v76
  %v214 = vmul.f32 %v77, %v77
  %v215 = vmul.f32 %v78, %v78
  %v216 = vmul.f32 %v79, %v79
  %v217 = vadd.f32 %v153, %v154
  %v218 = vadd.f32 %v217, %v155
  %v219 = vadd.f32 %v218, %v156
  %v220 = vadd.f32 %v219, %v157
  %v221 = vadd.f32 %v220, %v158
  %v222 = vadd.f32 %v221, %v159
  %v223 = vadd.f32 %v222, %v160
  %v224 = vadd.f32 %v223, %v161
  %v225 = vadd.f32 %v224, %v162
  %v226 = vadd.f32 %v225, %v163
  %v227 = vadd.f32 %v226, %v164
  %v228 = vadd.f32 %v227, %v165
  %v229 = vadd.f32 %v228, %v166
  %v230 = vadd.f32 %v229, %v167
  %v231 = vadd.f32 %v230, %v168
  %v232 = vadd.f32 %v231, %v169
  %v233 = vadd.f32 %v232, %v170
  %v234 = vadd.f32 %v233, %v171
  %v235 = vadd.f32 %v234, %v172
  %v236 = vadd.f32 %v235, %v173
  %v237 = vadd.f32 %v236, %v174
  %v238 = vadd.f32 %v237, %v175
  %v239 = vadd.f32 %v238, %v176
  %v240 = vadd.f32 %v239, %v177
  %v241 = vadd.f32 %v240, %v178
  %v242 = vadd.f32 %v241, %v179
  %v243 = vadd.f32 %v242, %v180
  %v244 = vadd.f32 %v243, %v181
  %v245 = vadd.f32 %v244, %v182
  %v246 = vadd.f32 %v245, %v183
  %v247 = vadd.f32 %v246, %v184
  %v248 = vadd.f32 %v247, %v185
  %v249 = vadd.f32 %v248, %v186
  %v250 = vadd.f32 %v249, %v187
  %v251 = vadd.f32 %v250, %v188
  %v252 = vadd.f32 %v251, %v189
  %v253 = vadd.f32 %v252, %v190
  %v254 = vadd.f32 %v253, %v191
  %v255 = vadd.f32 %v254, %v192
  %v256 = vadd.f32 %v255, %v193
  %v257 = vadd.f32 %v256, %v194
  %v258 = vadd.f32 %v257, %v195
  %v259 = vadd.f32 %v258, %v196
  %v260 = vadd.f32 %v259, %v197
  %v261 = vadd.f32 %v260, %v198
  %v262 = vadd.f32 %v261, %v199
  %v263 = vadd.f32 %v262, %v200
  %v264 = vadd.f32 %v263, %v201
  %v265 = vadd.f32 %v264, %v202
  %v266 = vadd.f32 %v265, %v203
  %v267 = vadd.f32 %v266, %v204
  %v268 = vadd.f32 %v267, %v205
  %v269 = vadd.f32 %v268, %v206
  %v270 = vadd.f32 %v269, %v207
  %v271 = vadd.f32 %v270, %v208
  %v272 = vadd.f32 %v271, %v209
  %v273 = vadd.f32 %v272, %v210
  %v274 = vadd.f32 %v273, %v211
  %v275 = vadd.f32 %v274, %v212
  %v276 = vadd.f32 %v275, %v213
  %v277 = vadd.f32 %v276, %v214
  %v278 = vadd.f32 %v277, %v215
  %v279 = vadd.f32 %v278, %v216
  %v280 = vrot.slane %v279, 4
  %v281 = vadd.f32 %v279, %v280
  %v282 = vrot.slane %v281, 2
  %v283 = vadd.f32 %v281, %v282
  %v284 = vrot.slane %v283, 1
  %v285 = vadd.f32 %v283, %v284
  %v286 = vadd.f32 %v152, %v285
  %287 = vst [vmem:[%s2] sm:$0x1] %v286
  // Predicated region
  $region10: #{generator2_forward.19} parent=0 // pred_check
    _
  $region11: #{generator2_forward.19} parent=0 // pred_check_branch
    %289 = sbr.rel (0) target = $region13
  $region12: #{generator2_forward.19} parent=0 // pred_region
    _
  $region13: #{generator2_forward.19} parent=0 // pred_fallthru
    _
  // Predicated region
  $region14: #{generator2_forward.19} parent=0 // pred_check
    _
  $region15: #{generator2_forward.19} parent=0 // pred_check_branch
    %291 = sbr.rel (0) target = $region17
  $region16: #{generator2_forward.19} parent=0 // pred_region
    _
  $region17: #{generator2_forward.19} parent=0 // pred_fallthru
    _
  // Predicated region
  $region18: #{generator2_forward.19} parent=0 // pred_check
    _
  $region19: #{generator2_forward.19} parent=0 // pred_check_branch
    %293 = sbr.rel (0) target = $region21
  $region20: #{generator2_forward.19} parent=0 // pred_region
    _
  $region21: #{generator2_forward.19} parent=0 // pred_fallthru
    _
  // Predicated region
  $region22: #{generator2_forward.19} parent=0 // pred_check
    _
  $region23: #{generator2_forward.19} parent=0 // pred_check_branch
    %295 = sbr.rel (0) target = $region25
  $region24: #{generator2_forward.19} parent=0 // pred_region
    _
  $region25: #{generator2_forward.19} parent=0 // pred_fallthru
    _

// kernel: generator2_forward.20
$region0: #{generator2_forward.20}
  #allocation0 [shape = 'u32[]', space=smem, size = 0x4, offset = 0x4, fixed_abs, tag = 'smem constant byte address 0x4 - core index']
  #allocation1 [shape = 'u32[72,128]{1,0:T(1,128)}', space=vmem, size = 0x9000, scoped, tag = 'internal scratch']
  #allocation2 [shape = 'f32[512,128]{1,0:T(8,128)}', space=vmem, size = 0x40000, scoped, tag = 'scratch operand']
  %s0 = inlined_call_operand.vmem [shape: f32[2048,32], index: 0, kind: input, shape index: {}]
  %s1 = inlined_call_operand.vmem [shape: bf16[32,128], index: 1, kind: input, shape index: {}]
  %s2 = inlined_call_operand.vmem [shape: f32[1,32], index: 2, kind: input, shape index: {}]
  %s3 = inlined_call_operand.vmem [shape: f32[1,32], index: 3, kind: input, shape index: {}]
  %s4 = inlined_call_operand.vmem [shape: f32[2048,128], index: 4, kind: output, shape index: {}]
  %s5 = sld [smem:[#allocation0]]
  $region57: #{generator2_forward.20} parent=0
    _
  %s7 = ssub.s32 1, %s5
  %s8 = scalar_select 0, %s7, %s5
  loop: start=0, step=1, limit=6
  $region2: #{generator2_forward.20} parent=0 // loop_pre_header
    _
  $region3: #{generator2_forward.20} parent=0 // loop_header
    %s10 = sphi 0, %s14
    %p11 = scmp.ge.s32.totalorder %s10, 6
    %s17 = sphi 0, %s36
    %s18 = sphi 0, %s32
    %s19 = sphi 0, %s28
    %s20 = sphi 0, %s17
    %s21 = sphi 0, %s18
    %s22 = sphi 0, %s19
    %s23 = sphi 0, %s20
    %s24 = sphi 0, %s21
    %s25 = sphi 0, %s22
    %s41 = sphi 0, %s43
    %s44 = sphi 0, %s41
    %s45 = sphi 0, %s44
    %s61 = sphi 0, %s45
    %s69 = sphi 0, %s71
    %s72 = sphi 0, %s69
    %s73 = sphi 0, %s72
    %s89 = sphi 0, %s73
    %s95 = sphi 0, %s97
    %s98 = sphi 0, %s95
    %s99 = sphi 0, %s98
    %s115 = sphi 0, %s99
    %s121 = sphi 0, %s123
    %s124 = sphi 0, %s121
    %s125 = sphi 0, %s124
    %s141 = sphi 0, %s125
    %s149 = sphi 0, %s151
    %s152 = sphi 0, %s149
    %s153 = sphi 0, %s152
    %s169 = sphi 0, %s153
  $region4: #{generator2_forward.20} parent=0 // loop_header_branch
    %13 = sbr.rel (%p11) target = $region8
  $region5: #{generator2_forward.20} parent=0 // loop_body
    %s15 = ssub.s32 %s10, 1
    %s16 = ssub.s32 %s10, 2
    %s26 = sadd.s32 1, %s19
    %p27 = scmp.ge.s32.totalorder %s26, 1
    %s28 = scalar_select %p27, 0, %s26
    %s29 = sadd.s32 1, %s18
    %s30 = scalar_select %p27, %s29, %s18
    %p31 = scmp.ge.s32.totalorder %s30, 1
    %s32 = scalar_select %p31, 0, %s30
    %s33 = sadd.s32 1, %s17
    %s34 = scalar_select %p31, %s33, %s17
    %p35 = scmp.ge.s32.totalorder %s34, 4
    %s36 = scalar_select %p35, 0, %s34
    %s37 = ssub.s32 %s17, %s36
    %s38 = ssub.s32 %s19, %s28
    %s39 = sor.u32 %s37, %s38
    %p40 = scmp.eq.s32.totalorder %s39, 0
    %s42 = sadd.s32 %s41, 1
    %s43 = scalar_select %p40, %s41, %s42
    %p46 = pneg %p40
    %p47 = scmp.eq.s32.totalorder %s10, 3
    %p48 = por %p46, %p47
    %p49 = scmp.ne.s32.totalorder %s41, %s44
    %p50 = scmp.eq.s32.totalorder %s10, 0
    %p51 = por %p49, %p50
    %p52 = scmp.ne.s32.totalorder %s41, %s44
    %p53 = scmp.eq.s32.totalorder %s15, 3
    %p54 = por %p52, %p53
    %p55 = scmp.ne.s32.totalorder %s44, %s45
    %p56 = scmp.eq.s32.totalorder %s15, 0
    %p57 = por %p55, %p56
    %p58 = scmp.ne.s32.totalorder %s44, %s45
    %p59 = scmp.eq.s32.totalorder %s16, 3
    %p60 = por %p58, %p59
    %p62 = scmp.ne.s32.totalorder %s45, %s61
    %p63 = scmp.eq.s32.totalorder %s16, 0
    %p64 = por %p62, %p63
    %s65 = ssub.s32 %s19, %s28
    %s66 = ssub.s32 %s18, %s32
    %s67 = sor.u32 %s65, %s66
    %p68 = scmp.eq.s32.totalorder %s67, 0
    %s70 = sadd.s32 %s69, 1
    %s71 = scalar_select %p68, %s69, %s70
    %p74 = pneg %p68
    %p75 = scmp.eq.s32.totalorder %s10, 3
    %p76 = por %p74, %p75
    %p77 = scmp.ne.s32.totalorder %s69, %s72
    %p78 = scmp.eq.s32.totalorder %s10, 0
    %p79 = por %p77, %p78
    %p80 = scmp.ne.s32.totalorder %s69, %s72
    %p81 = scmp.eq.s32.totalorder %s15, 3
    %p82 = por %p80, %p81
    %p83 = scmp.ne.s32.totalorder %s72, %s73
    %p84 = scmp.eq.s32.totalorder %s15, 0
    %p85 = por %p83, %p84
    %p86 = scmp.ne.s32.totalorder %s72, %s73
    %p87 = scmp.eq.s32.totalorder %s16, 3
    %p88 = por %p86, %p87
    %p90 = scmp.ne.s32.totalorder %s73, %s89
    %p91 = scmp.eq.s32.totalorder %s16, 0
    %p92 = por %p90, %p91
    %s93 = ssub.s32 %s19, %s28
    %p94 = scmp.eq.s32.totalorder %s93, 0
    %s96 = sadd.s32 %s95, 1
    %s97 = scalar_select %p94, %s95, %s96
    %p100 = pneg %p94
    %p101 = scmp.eq.s32.totalorder %s10, 3
    %p102 = por %p100, %p101
    %p103 = scmp.ne.s32.totalorder %s95, %s98
    %p104 = scmp.eq.s32.totalorder %s10, 0
    %p105 = por %p103, %p104
    %p106 = scmp.ne.s32.totalorder %s95, %s98
    %p107 = scmp.eq.s32.totalorder %s15, 3
    %p108 = por %p106, %p107
    %p109 = scmp.ne.s32.totalorder %s98, %s99
    %p110 = scmp.eq.s32.totalorder %s15, 0
    %p111 = por %p109, %p110
    %p112 = scmp.ne.s32.totalorder %s98, %s99
    %p113 = scmp.eq.s32.totalorder %s16, 3
    %p114 = por %p112, %p113
    %p116 = scmp.ne.s32.totalorder %s99, %s115
    %p117 = scmp.eq.s32.totalorder %s16, 0
    %p118 = por %p116, %p117
    %s119 = ssub.s32 %s19, %s28
    %p120 = scmp.eq.s32.totalorder %s119, 0
    %s122 = sadd.s32 %s121, 1
    %s123 = scalar_select %p120, %s121, %s122
    %p126 = pneg %p120
    %p127 = scmp.eq.s32.totalorder %s10, 3
    %p128 = por %p126, %p127
    %p129 = scmp.ne.s32.totalorder %s121, %s124
    %p130 = scmp.eq.s32.totalorder %s10, 0
    %p131 = por %p129, %p130
    %p132 = scmp.ne.s32.totalorder %s121, %s124
    %p133 = scmp.eq.s32.totalorder %s15, 3
    %p134 = por %p132, %p133
    %p135 = scmp.ne.s32.totalorder %s124, %s125
    %p136 = scmp.eq.s32.totalorder %s15, 0
    %p137 = por %p135, %p136
    %p138 = scmp.ne.s32.totalorder %s124, %s125
    %p139 = scmp.eq.s32.totalorder %s16, 3
    %p140 = por %p138, %p139
    %p142 = scmp.ne.s32.totalorder %s125, %s141
    %p143 = scmp.eq.s32.totalorder %s16, 0
    %p144 = por %p142, %p143
    %s145 = ssub.s32 %s17, %s36
    %s146 = ssub.s32 %s18, %s32
    %s147 = sor.u32 %s145, %s146
    %p148 = scmp.eq.s32.totalorder %s147, 0
    %s150 = sadd.s32 %s149, 1
    %s151 = scalar_select %p148, %s149, %s150
    %p154 = pneg %p148
    %p155 = scmp.eq.s32.totalorder %s10, 3
    %p156 = por %p154, %p155
    %p157 = scmp.ne.s32.totalorder %s149, %s152
    %p158 = scmp.eq.s32.totalorder %s10, 0
    %p159 = por %p157, %p158
    %p160 = scmp.ne.s32.totalorder %s149, %s152
    %p161 = scmp.eq.s32.totalorder %s15, 3
    %p162 = por %p160, %p161
    %p163 = scmp.ne.s32.totalorder %s152, %s153
    %p164 = scmp.eq.s32.totalorder %s15, 0
    %p165 = por %p163, %p164
    %p166 = scmp.ne.s32.totalorder %s152, %s153
    %p167 = scmp.eq.s32.totalorder %s16, 3
    %p168 = por %p166, %p167
    %p170 = scmp.ne.s32.totalorder %s153, %s169
    %p171 = scmp.eq.s32.totalorder %s16, 0
    %p172 = por %p170, %p171
    %p173 = scmp.le.s32.totalorder 1, %s10
    %p174 = scmp.lt.s32.totalorder %s10, 5
    %p175 = pnand %p173, %p174
    %p176 = pneg %p175
    // Predicated region
    $region9: #{generator2_forward.20} parent=5 // pred_check
      _
    $region10: #{generator2_forward.20} parent=5 // pred_check_branch
      %178 = sbr.rel (%p175) target = $region12
    $region11: #{generator2_forward.20} parent=5 // pred_region
      %s179 = ssub.s32 %s10, 1
      // Predicated region
      $region13: #{generator2_forward.20} parent=11 // pred_check
        %p180 = pneg %p85
      $region14: #{generator2_forward.20} parent=11 // pred_check_branch
        %182 = sbr.rel (%p180) target = $region16
      $region15: #{generator2_forward.20} parent=11 // pred_region
        %s183 = smul.u32 4, %s22
        %p184 = scmp.lt.s32.totalorder %s183, 3
        %s185 = scalar_select %p184, %s183, 3
        %p186 = scmp.lt.s32.totalorder %s21, 0
        %s187 = scalar_select %p186, %s21, 0
        %s188 = sadd.s32 %s187, %s185
        %s189 = smul.addr %s188, 4
        %s190 = scalar_lea.vmem %s1, %s189
        %s191 = smul.u32 4, %s22
      $region16: #{generator2_forward.20} parent=11 // pred_fallthru
        _
      // Predicated region
      $region17: #{generator2_forward.20} parent=11 // pred_check
        %p192 = pneg %p111
      $region18: #{generator2_forward.20} parent=11 // pred_check_branch
        %194 = sbr.rel (%p192) target = $region20
      $region19: #{generator2_forward.20} parent=11 // pred_region
        %p195 = scmp.lt.s32.totalorder %s22, 0
        %s196 = scalar_select %p195, %s22, 0
        %s197 = scalar_lea.vmem %s2, %s196
      $region20: #{generator2_forward.20} parent=11 // pred_fallthru
        _
      // Predicated region
      $region21: #{generator2_forward.20} parent=11 // pred_check
        %p198 = pneg %p137
      $region22: #{generator2_forward.20} parent=11 // pred_check_branch
        %200 = sbr.rel (%p198) target = $region24
      $region23: #{generator2_forward.20} parent=11 // pred_region
        %p201 = scmp.lt.s32.totalorder %s22, 0
        %s202 = scalar_select %p201, %s22, 0
        %s203 = scalar_lea.vmem %s3, %s202
      $region24: #{generator2_forward.20} parent=11 // pred_fallthru
        _
    $region12: #{generator2_forward.20} parent=5 // pred_fallthru
      _
    %p204 = scmp.lt.s32.totalorder %s10, 4
    // Predicated region
    $region25: #{generator2_forward.20} parent=5 // pred_check
      %p205 = pneg %p204
    $region26: #{generator2_forward.20} parent=5 // pred_check_branch
      %207 = sbr.rel (%p205) target = $region28
    $region27: #{generator2_forward.20} parent=5 // pred_region
      // Predicated region
      $region29: #{generator2_forward.20} parent=27 // pred_check
        %p208 = pneg %p51
      $region30: #{generator2_forward.20} parent=27 // pred_check_branch
        %210 = sbr.rel (%p208) target = $region32
      $region31: #{generator2_forward.20} parent=27 // pred_region
        %s211 = smul.u32 64, %s17
        %p212 = scmp.lt.s32.totalorder %s211, 255
        %s213 = scalar_select %p212, %s211, 255
        %p214 = scmp.lt.s32.totalorder %s19, 0
        %s215 = scalar_select %p214, %s19, 0
        %s216 = sadd.s32 %s215, %s213
        %s217 = smul.addr %s216, 8
        %s218 = scalar_lea.vmem %s0, %s217
        %s219 = smul.u32 64, %s17
      $region32: #{generator2_forward.20} parent=27 // pred_fallthru
        _
    $region28: #{generator2_forward.20} parent=5 // pred_fallthru
      _
    %p220 = scmp.le.s32.totalorder 1, %s10
    %p221 = scmp.lt.s32.totalorder %s10, 5
    %p222 = pnand %p220, %p221
    %p223 = pneg %p222
    // Predicated region
    $region33: #{generator2_forward.20} parent=5 // pred_check
      _
    $region34: #{generator2_forward.20} parent=5 // pred_check_branch
      %225 = sbr.rel (%p222) target = $region36
    $region35: #{generator2_forward.20} parent=5 // pred_region
      %s226 = ssub.s32 %s10, 1
      %s227 = smul.u32 64, %s20
      %p228 = scmp.lt.s32.totalorder %s227, 255
      %s229 = scalar_select %p228, %s227, 255
      %p230 = scmp.lt.s32.totalorder %s22, 0
      %s231 = scalar_select %p230, %s22, 0
      %s232 = sadd.s32 %s231, %s229
      %s233 = smul.addr %s232, 8
      %s234 = scalar_lea.vmem %s0, %s233
      %p235 = pneg %p57
      %p236 = pneg %p54
      %s237 = smul.u32 4, %s22
      %p238 = scmp.lt.s32.totalorder %s237, 3
      %s239 = scalar_select %p238, %s237, 3
      %p240 = scmp.lt.s32.totalorder %s21, 0
      %s241 = scalar_select %p240, %s21, 0
      %s242 = sadd.s32 %s241, %s239
      %s243 = smul.addr %s242, 4
      %s244 = scalar_lea.vmem %s1, %s243
      %p245 = pneg %p85
      %p246 = pneg %p82
      %p247 = scmp.lt.s32.totalorder %s22, 0
      %s248 = scalar_select %p247, %s22, 0
      %s249 = scalar_lea.vmem %s2, %s248
      %p250 = pneg %p111
      %p251 = pneg %p108
      %p252 = scmp.lt.s32.totalorder %s22, 0
      %s253 = scalar_select %p252, %s22, 0
      %s254 = scalar_lea.vmem %s3, %s253
      %p255 = pneg %p137
      %p256 = pneg %p134
      %p257 = pneg %p165
      %p258 = pneg %p162
      %s259 = smul.u32 64, %s20
      %p260 = scmp.lt.s32.totalorder %s259, 255
      %s261 = scalar_select %p260, %s259, 255
      %p262 = scmp.lt.s32.totalorder %s21, 0
      %s263 = scalar_select %p262, %s21, 0
      %s264 = sadd.s32 %s263, %s261
      %s265 = smul.addr %s264, 8
      %s266 = scalar_lea.vmem %s4, %s265
      %s267 = smul.u32 64, %s20
      %p268 = scmp.lt.s32.totalorder %s267, 255
      %s269 = scalar_select %p268, %s267, 255
      %p270 = scmp.lt.s32.totalorder %s22, 0
      %s271 = scalar_select %p270, %s22, 0
      %s272 = sadd.s32 %s271, %s269
      %s273 = smul.addr %s272, 8
      %s274 = scalar_lea.vmem %s0, %s273
      %s275 = smul.u32 64, %s20
      %s276 = smul.u32 4, %s22
      %p277 = scmp.lt.s32.totalorder %s276, 3
      %s278 = scalar_select %p277, %s276, 3
      %p279 = scmp.lt.s32.totalorder %s21, 0
      %s280 = scalar_select %p279, %s21, 0
      %s281 = sadd.s32 %s280, %s278
      %s282 = smul.addr %s281, 4
      %s283 = scalar_lea.vmem %s1, %s282
      %s284 = smul.u32 4, %s22
      %p285 = scmp.lt.s32.totalorder %s22, 0
      %s286 = scalar_select %p285, %s22, 0
      %s287 = scalar_lea.vmem %s2, %s286
      %p288 = scmp.lt.s32.totalorder %s22, 0
      %s289 = scalar_select %p288, %s22, 0
      %s290 = scalar_lea.vmem %s3, %s289
      %s291 = smul.u32 64, %s20
      %p292 = scmp.lt.s32.totalorder %s291, 255
      %s293 = scalar_select %p292, %s291, 255
      %p294 = scmp.lt.s32.totalorder %s21, 0
      %s295 = scalar_select %p294, %s21, 0
      %s296 = sadd.s32 %s295, %s293
      %s297 = smul.addr %s296, 8
      %s298 = scalar_lea.vmem %s4, %s297
      %s299 = smul.u32 64, %s20
      %p301 = scmp.eq.s32.totalorder %s22, 0
      // Predicated region
      $region37: #{generator2_forward.20} parent=35 // pred_check
        %p302 = pneg %p301
      $region38: #{generator2_forward.20} parent=35 // pred_check_branch
        %304 = sbr.rel (%p302) target = $region40
      $region39: #{generator2_forward.20} parent=35 // pred_region
        %305 = vst [vmem:[#allocation2] sm:$0xff] 0.0
        %306 = vst [vmem:[#allocation2 + $0x8] sm:$0xff] 0.0
        %307 = vst [vmem:[#allocation2 + $0x10] sm:$0xff] 0.0
        %308 = vst [vmem:[#allocation2 + $0x18] sm:$0xff] 0.0
        %309 = vst [vmem:[#allocation2 + $0x20] sm:$0xff] 0.0
        %310 = vst [vmem:[#allocation2 + $0x28] sm:$0xff] 0.0
        %311 = vst [vmem:[#allocation2 + $0x30] sm:$0xff] 0.0
        %312 = vst [vmem:[#allocation2 + $0x38] sm:$0xff] 0.0
        %313 = vst [vmem:[#allocation2 + $0x40] sm:$0xff] 0.0
        %314 = vst [vmem:[#allocation2 + $0x48] sm:$0xff] 0.0
        %315 = vst [vmem:[#allocation2 + $0x50] sm:$0xff] 0.0
        %316 = vst [vmem:[#allocation2 + $0x58] sm:$0xff] 0.0
        %317 = vst [vmem:[#allocation2 + $0x60] sm:$0xff] 0.0
        %318 = vst [vmem:[#allocation2 + $0x68] sm:$0xff] 0.0
        %319 = vst [vmem:[#allocation2 + $0x70] sm:$0xff] 0.0
        %320 = vst [vmem:[#allocation2 + $0x78] sm:$0xff] 0.0
        %321 = vst [vmem:[#allocation2 + $0x80] sm:$0xff] 0.0
        %322 = vst [vmem:[#allocation2 + $0x88] sm:$0xff] 0.0
        %323 = vst [vmem:[#allocation2 + $0x90] sm:$0xff] 0.0
        %324 = vst [vmem:[#allocation2 + $0x98] sm:$0xff] 0.0
        %325 = vst [vmem:[#allocation2 + $0xa0] sm:$0xff] 0.0
        %326 = vst [vmem:[#allocation2 + $0xa8] sm:$0xff] 0.0
        %327 = vst [vmem:[#allocation2 + $0xb0] sm:$0xff] 0.0
        %328 = vst [vmem:[#allocation2 + $0xb8] sm:$0xff] 0.0
        %329 = vst [vmem:[#allocation2 + $0xc0] sm:$0xff] 0.0
        %330 = vst [vmem:[#allocation2 + $0xc8] sm:$0xff] 0.0
        %331 = vst [vmem:[#allocation2 + $0xd0] sm:$0xff] 0.0
        %332 = vst [vmem:[#allocation2 + $0xd8] sm:$0xff] 0.0
        %333 = vst [vmem:[#allocation2 + $0xe0] sm:$0xff] 0.0
        %334 = vst [vmem:[#allocation2 + $0xe8] sm:$0xff] 0.0
        %335 = vst [vmem:[#allocation2 + $0xf0] sm:$0xff] 0.0
        %336 = vst [vmem:[#allocation2 + $0xf8] sm:$0xff] 0.0
        %337 = vst [vmem:[#allocation2 + $0x100] sm:$0xff] 0.0
        %338 = vst [vmem:[#allocation2 + $0x108] sm:$0xff] 0.0
        %339 = vst [vmem:[#allocation2 + $0x110] sm:$0xff] 0.0
        %340 = vst [vmem:[#allocation2 + $0x118] sm:$0xff] 0.0
        %341 = vst [vmem:[#allocation2 + $0x120] sm:$0xff] 0.0
        %342 = vst [vmem:[#allocation2 + $0x128] sm:$0xff] 0.0
        %343 = vst [vmem:[#allocation2 + $0x130] sm:$0xff] 0.0
        %344 = vst [vmem:[#allocation2 + $0x138] sm:$0xff] 0.0
        %345 = vst [vmem:[#allocation2 + $0x140] sm:$0xff] 0.0
        %346 = vst [vmem:[#allocation2 + $0x148] sm:$0xff] 0.0
        %347 = vst [vmem:[#allocation2 + $0x150] sm:$0xff] 0.0
        %348 = vst [vmem:[#allocation2 + $0x158] sm:$0xff] 0.0
        %349 = vst [vmem:[#allocation2 + $0x160] sm:$0xff] 0.0
        %350 = vst [vmem:[#allocation2 + $0x168] sm:$0xff] 0.0
        %351 = vst [vmem:[#allocation2 + $0x170] sm:$0xff] 0.0
        %352 = vst [vmem:[#allocation2 + $0x178] sm:$0xff] 0.0
        %353 = vst [vmem:[#allocation2 + $0x180] sm:$0xff] 0.0
        %354 = vst [vmem:[#allocation2 + $0x188] sm:$0xff] 0.0
        %355 = vst [vmem:[#allocation2 + $0x190] sm:$0xff] 0.0
        %356 = vst [vmem:[#allocation2 + $0x198] sm:$0xff] 0.0
        %357 = vst [vmem:[#allocation2 + $0x1a0] sm:$0xff] 0.0
        %358 = vst [vmem:[#allocation2 + $0x1a8] sm:$0xff] 0.0
        %359 = vst [vmem:[#allocation2 + $0x1b0] sm:$0xff] 0.0
        %360 = vst [vmem:[#allocation2 + $0x1b8] sm:$0xff] 0.0
        %361 = vst [vmem:[#allocation2 + $0x1c0] sm:$0xff] 0.0
        %362 = vst [vmem:[#allocation2 + $0x1c8] sm:$0xff] 0.0
        %363 = vst [vmem:[#allocation2 + $0x1d0] sm:$0xff] 0.0
        %364 = vst [vmem:[#allocation2 + $0x1d8] sm:$0xff] 0.0
        %365 = vst [vmem:[#allocation2 + $0x1e0] sm:$0xff] 0.0
        %366 = vst [vmem:[#allocation2 + $0x1e8] sm:$0xff] 0.0
        %367 = vst [vmem:[#allocation2 + $0x1f0] sm:$0xff] 0.0
        %368 = vst [vmem:[#allocation2 + $0x1f8] sm:$0xff] 0.0
      $region40: #{generator2_forward.20} parent=35 // pred_fallthru
        _
      %v369 = vld [vmem:[%s274] sm:$0xff]
      %v370 = vld [vmem:[%s274 + $0x8] sm:$0xff]
      %v371 = vld [vmem:[%s274 + $0x10] sm:$0xff]
      %v372 = vld [vmem:[%s274 + $0x18] sm:$0xff]
      %v373 = vld [vmem:[%s274 + $0x20] sm:$0xff]
      %v374 = vld [vmem:[%s274 + $0x28] sm:$0xff]
      %v375 = vld [vmem:[%s274 + $0x30] sm:$0xff]
      %v376 = vld [vmem:[%s274 + $0x38] sm:$0xff]
      %v377 = vld [vmem:[%s274 + $0x40] sm:$0xff]
      %v378 = vld [vmem:[%s274 + $0x48] sm:$0xff]
      %v379 = vld [vmem:[%s274 + $0x50] sm:$0xff]
      %v380 = vld [vmem:[%s274 + $0x58] sm:$0xff]
      %v381 = vld [vmem:[%s274 + $0x60] sm:$0xff]
      %v382 = vld [vmem:[%s274 + $0x68] sm:$0xff]
      %v383 = vld [vmem:[%s274 + $0x70] sm:$0xff]
      %v384 = vld [vmem:[%s274 + $0x78] sm:$0xff]
      %v385 = vld [vmem:[%s274 + $0x80] sm:$0xff]
      %v386 = vld [vmem:[%s274 + $0x88] sm:$0xff]
      %v387 = vld [vmem:[%s274 + $0x90] sm:$0xff]
      %v388 = vld [vmem:[%s274 + $0x98] sm:$0xff]
      %v389 = vld [vmem:[%s274 + $0xa0] sm:$0xff]
      %v390 = vld [vmem:[%s274 + $0xa8] sm:$0xff]
      %v391 = vld [vmem:[%s274 + $0xb0] sm:$0xff]
      %v392 = vld [vmem:[%s274 + $0xb8] sm:$0xff]
      %v393 = vld [vmem:[%s274 + $0xc0] sm:$0xff]
      %v394 = vld [vmem:[%s274 + $0xc8] sm:$0xff]
      %v395 = vld [vmem:[%s274 + $0xd0] sm:$0xff]
      %v396 = vld [vmem:[%s274 + $0xd8] sm:$0xff]
      %v397 = vld [vmem:[%s274 + $0xe0] sm:$0xff]
      %v398 = vld [vmem:[%s274 + $0xe8] sm:$0xff]
      %v399 = vld [vmem:[%s274 + $0xf0] sm:$0xff]
      %v400 = vld [vmem:[%s274 + $0xf8] sm:$0xff]
      %v401 = vld [vmem:[%s274 + $0x100] sm:$0xff]
      %v402 = vld [vmem:[%s274 + $0x108] sm:$0xff]
      %v403 = vld [vmem:[%s274 + $0x110] sm:$0xff]
      %v404 = vld [vmem:[%s274 + $0x118] sm:$0xff]
      %v405 = vld [vmem:[%s274 + $0x120] sm:$0xff]
      %v406 = vld [vmem:[%s274 + $0x128] sm:$0xff]
      %v407 = vld [vmem:[%s274 + $0x130] sm:$0xff]
      %v408 = vld [vmem:[%s274 + $0x138] sm:$0xff]
      %v409 = vld [vmem:[%s274 + $0x140] sm:$0xff]
      %v410 = vld [vmem:[%s274 + $0x148] sm:$0xff]
      %v411 = vld [vmem:[%s274 + $0x150] sm:$0xff]
      %v412 = vld [vmem:[%s274 + $0x158] sm:$0xff]
      %v413 = vld [vmem:[%s274 + $0x160] sm:$0xff]
      %v414 = vld [vmem:[%s274 + $0x168] sm:$0xff]
      %v415 = vld [vmem:[%s274 + $0x170] sm:$0xff]
      %v416 = vld [vmem:[%s274 + $0x178] sm:$0xff]
      %v417 = vld [vmem:[%s274 + $0x180] sm:$0xff]
      %v418 = vld [vmem:[%s274 + $0x188] sm:$0xff]
      %v419 = vld [vmem:[%s274 + $0x190] sm:$0xff]
      %v420 = vld [vmem:[%s274 + $0x198] sm:$0xff]
      %v421 = vld [vmem:[%s274 + $0x1a0] sm:$0xff]
      %v422 = vld [vmem:[%s274 + $0x1a8] sm:$0xff]
      %v423 = vld [vmem:[%s274 + $0x1b0] sm:$0xff]
      %v424 = vld [vmem:[%s274 + $0x1b8] sm:$0xff]
      %v425 = vld [vmem:[%s274 + $0x1c0] sm:$0xff]
      %v426 = vld [vmem:[%s274 + $0x1c8] sm:$0xff]
      %v427 = vld [vmem:[%s274 + $0x1d0] sm:$0xff]
      %v428 = vld [vmem:[%s274 + $0x1d8] sm:$0xff]
      %v429 = vld [vmem:[%s274 + $0x1e0] sm:$0xff]
      %v430 = vld [vmem:[%s274 + $0x1e8] sm:$0xff]
      %v431 = vld [vmem:[%s274 + $0x1f0] sm:$0xff]
      %v432 = vld [vmem:[%s274 + $0x1f8] sm:$0xff]
      %v433 = vld [vmem:[%s287] sm:$0x1]
      %v435 = vperm.slane %v433, 0
      %v437 = vmul.f32 %v369, %v435
      %v438 = vmul.f32 %v370, %v435
      %v439 = vmul.f32 %v371, %v435
      %v440 = vmul.f32 %v372, %v435
      %v441 = vmul.f32 %v373, %v435
      %v442 = vmul.f32 %v374, %v435
      %v443 = vmul.f32 %v375, %v435
      %v444 = vmul.f32 %v376, %v435
      %v445 = vmul.f32 %v377, %v435
      %v446 = vmul.f32 %v378, %v435
      %v447 = vmul.f32 %v379, %v435
      %v448 = vmul.f32 %v380, %v435
      %v449 = vmul.f32 %v381, %v435
      %v450 = vmul.f32 %v382, %v435
      %v451 = vmul.f32 %v383, %v435
      %v452 = vmul.f32 %v384, %v435
      %v453 = vmul.f32 %v385, %v435
      %v454 = vmul.f32 %v386, %v435
      %v455 = vmul.f32 %v387, %v435
      %v456 = vmul.f32 %v388, %v435
      %v457 = vmul.f32 %v389, %v435
      %v458 = vmul.f32 %v390, %v435
      %v459 = vmul.f32 %v391, %v435
      %v460 = vmul.f32 %v392, %v435
      %v461 = vmul.f32 %v393, %v435
      %v462 = vmul.f32 %v394, %v435
      %v463 = vmul.f32 %v395, %v435
      %v464 = vmul.f32 %v396, %v435
      %v465 = vmul.f32 %v397, %v435
      %v466 = vmul.f32 %v398, %v435
      %v467 = vmul.f32 %v399, %v435
      %v468 = vmul.f32 %v400, %v435
      %v469 = vmul.f32 %v401, %v435
      %v470 = vmul.f32 %v402, %v435
      %v471 = vmul.f32 %v403, %v435
      %v472 = vmul.f32 %v404, %v435
      %v473 = vmul.f32 %v405, %v435
      %v474 = vmul.f32 %v406, %v435
      %v475 = vmul.f32 %v407, %v435
      %v476 = vmul.f32 %v408, %v435
      %v477 = vmul.f32 %v409, %v435
      %v478 = vmul.f32 %v410, %v435
      %v479 = vmul.f32 %v411, %v435
      %v480 = vmul.f32 %v412, %v435
      %v481 = vmul.f32 %v413, %v435
      %v482 = vmul.f32 %v414, %v435
      %v483 = vmul.f32 %v415, %v435
      %v484 = vmul.f32 %v416, %v435
      %v485 = vmul.f32 %v417, %v435
      %v486 = vmul.f32 %v418, %v435
      %v487 = vmul.f32 %v419, %v435
      %v488 = vmul.f32 %v420, %v435
      %v489 = vmul.f32 %v421, %v435
      %v490 = vmul.f32 %v422, %v435
      %v491 = vmul.f32 %v423, %v435
      %v492 = vmul.f32 %v424, %v435
      %v493 = vmul.f32 %v425, %v435
      %v494 = vmul.f32 %v426, %v435
      %v495 = vmul.f32 %v427, %v435
      %v496 = vmul.f32 %v428, %v435
      %v497 = vmul.f32 %v429, %v435
      %v498 = vmul.f32 %v430, %v435
      %v499 = vmul.f32 %v431, %v435
      %v500 = vmul.f32 %v432, %v435
      %v501 = vld [vmem:[%s290] sm:$0x1]
      %v503 = vperm.slane %v501, 0
      %v505 = vadd.f32 %v437, %v503
      %v506 = vadd.f32 %v438, %v503
      %v507 = vadd.f32 %v439, %v503
      %v508 = vadd.f32 %v440, %v503
      %v509 = vadd.f32 %v441, %v503
      %v510 = vadd.f32 %v442, %v503
      %v511 = vadd.f32 %v443, %v503
      %v512 = vadd.f32 %v444, %v503
      %v513 = vadd.f32 %v445, %v503
      %v514 = vadd.f32 %v446, %v503
      %v515 = vadd.f32 %v447, %v503
      %v516 = vadd.f32 %v448, %v503
      %v517 = vadd.f32 %v449, %v503
      %v518 = vadd.f32 %v450, %v503
      %v519 = vadd.f32 %v451, %v503
      %v520 = vadd.f32 %v452, %v503
      %v521 = vadd.f32 %v453, %v503
      %v522 = vadd.f32 %v454, %v503
      %v523 = vadd.f32 %v455, %v503
      %v524 = vadd.f32 %v456, %v503
      %v525 = vadd.f32 %v457, %v503
      %v526 = vadd.f32 %v458, %v503
      %v527 = vadd.f32 %v459, %v503
      %v528 = vadd.f32 %v460, %v503
      %v529 = vadd.f32 %v461, %v503
      %v530 = vadd.f32 %v462, %v503
      %v531 = vadd.f32 %v463, %v503
      %v532 = vadd.f32 %v464, %v503
      %v533 = vadd.f32 %v465, %v503
      %v534 = vadd.f32 %v466, %v503
      %v535 = vadd.f32 %v467, %v503
      %v536 = vadd.f32 %v468, %v503
      %v537 = vadd.f32 %v469, %v503
      %v538 = vadd.f32 %v470, %v503
      %v539 = vadd.f32 %v471, %v503
      %v540 = vadd.f32 %v472, %v503
      %v541 = vadd.f32 %v473, %v503
      %v542 = vadd.f32 %v474, %v503
      %v543 = vadd.f32 %v475, %v503
      %v544 = vadd.f32 %v476, %v503
      %v545 = vadd.f32 %v477, %v503
      %v546 = vadd.f32 %v478, %v503
      %v547 = vadd.f32 %v479, %v503
      %v548 = vadd.f32 %v480, %v503
      %v549 = vadd.f32 %v481, %v503
      %v550 = vadd.f32 %v482, %v503
      %v551 = vadd.f32 %v483, %v503
      %v552 = vadd.f32 %v484, %v503
      %v553 = vadd.f32 %v485, %v503
      %v554 = vadd.f32 %v486, %v503
      %v555 = vadd.f32 %v487, %v503
      %v556 = vadd.f32 %v488, %v503
      %v557 = vadd.f32 %v489, %v503
      %v558 = vadd.f32 %v490, %v503
      %v559 = vadd.f32 %v491, %v503
      %v560 = vadd.f32 %v492, %v503
      %v561 = vadd.f32 %v493, %v503
      %v562 = vadd.f32 %v494, %v503
      %v563 = vadd.f32 %v495, %v503
      %v564 = vadd.f32 %v496, %v503
      %v565 = vadd.f32 %v497, %v503
      %v566 = vadd.f32 %v498, %v503
      %v567 = vadd.f32 %v499, %v503
      %v568 = vadd.f32 %v500, %v503
      %v569 = vmax.f32 %v505, 0.0
      %v570 = vmax.f32 %v506, 0.0
      %v571 = vmax.f32 %v507, 0.0
      %v572 = vmax.f32 %v508, 0.0
      %v573 = vmax.f32 %v509, 0.0
      %v574 = vmax.f32 %v510, 0.0
      %v575 = vmax.f32 %v511, 0.0
      %v576 = vmax.f32 %v512, 0.0
      %v577 = vmax.f32 %v513, 0.0
      %v578 = vmax.f32 %v514, 0.0
      %v579 = vmax.f32 %v515, 0.0
      %v580 = vmax.f32 %v516, 0.0
      %v581 = vmax.f32 %v517, 0.0
      %v582 = vmax.f32 %v518, 0.0
      %v583 = vmax.f32 %v519, 0.0
      %v584 = vmax.f32 %v520, 0.0
      %v585 = vmax.f32 %v521, 0.0
      %v586 = vmax.f32 %v522, 0.0
      %v587 = vmax.f32 %v523, 0.0
      %v588 = vmax.f32 %v524, 0.0
      %v589 = vmax.f32 %v525, 0.0
      %v590 = vmax.f32 %v526, 0.0
      %v591 = vmax.f32 %v527, 0.0
      %v592 = vmax.f32 %v528, 0.0
      %v593 = vmax.f32 %v529, 0.0
      %v594 = vmax.f32 %v530, 0.0
      %v595 = vmax.f32 %v531, 0.0
      %v596 = vmax.f32 %v532, 0.0
      %v597 = vmax.f32 %v533, 0.0
      %v598 = vmax.f32 %v534, 0.0
      %v599 = vmax.f32 %v535, 0.0
      %v600 = vmax.f32 %v536, 0.0
      %v601 = vmax.f32 %v537, 0.0
      %v602 = vmax.f32 %v538, 0.0
      %v603 = vmax.f32 %v539, 0.0
      %v604 = vmax.f32 %v540, 0.0
      %v605 = vmax.f32 %v541, 0.0
      %v606 = vmax.f32 %v542, 0.0
      %v607 = vmax.f32 %v543, 0.0
      %v608 = vmax.f32 %v544, 0.0
      %v609 = vmax.f32 %v545, 0.0
      %v610 = vmax.f32 %v546, 0.0
      %v611 = vmax.f32 %v547, 0.0
      %v612 = vmax.f32 %v548, 0.0
      %v613 = vmax.f32 %v549, 0.0
      %v614 = vmax.f32 %v550, 0.0
      %v615 = vmax.f32 %v551, 0.0
      %v616 = vmax.f32 %v552, 0.0
      %v617 = vmax.f32 %v553, 0.0
      %v618 = vmax.f32 %v554, 0.0
      %v619 = vmax.f32 %v555, 0.0
      %v620 = vmax.f32 %v556, 0.0
      %v621 = vmax.f32 %v557, 0.0
      %v622 = vmax.f32 %v558, 0.0
      %v623 = vmax.f32 %v559, 0.0
      %v624 = vmax.f32 %v560, 0.0
      %v625 = vmax.f32 %v561, 0.0
      %v626 = vmax.f32 %v562, 0.0
      %v627 = vmax.f32 %v563, 0.0
      %v628 = vmax.f32 %v564, 0.0
      %v629 = vmax.f32 %v565, 0.0
      %v630 = vmax.f32 %v566, 0.0
      %v631 = vmax.f32 %v567, 0.0
      %v632 = vmax.f32 %v568, 0.0
      %v633 = vld [vmem:[#allocation2] sm:$0xff]
      %v634 = vld [vmem:[#allocation2 + $0x8] sm:$0xff]
      %v635 = vld [vmem:[#allocation2 + $0x10] sm:$0xff]
      %v636 = vld [vmem:[#allocation2 + $0x18] sm:$0xff]
      %v637 = vld [vmem:[#allocation2 + $0x20] sm:$0xff]
      %v638 = vld [vmem:[#allocation2 + $0x28] sm:$0xff]
      %v639 = vld [vmem:[#allocation2 + $0x30] sm:$0xff]
      %v640 = vld [vmem:[#allocation2 + $0x38] sm:$0xff]
      %v641 = vld [vmem:[#allocation2 + $0x40] sm:$0xff]
      %v642 = vld [vmem:[#allocation2 + $0x48] sm:$0xff]
      %v643 = vld [vmem:[#allocation2 + $0x50] sm:$0xff]
      %v644 = vld [vmem:[#allocation2 + $0x58] sm:$0xff]
      %v645 = vld [vmem:[#allocation2 + $0x60] sm:$0xff]
      %v646 = vld [vmem:[#allocation2 + $0x68] sm:$0xff]
      %v647 = vld [vmem:[#allocation2 + $0x70] sm:$0xff]
      %v648 = vld [vmem:[#allocation2 + $0x78] sm:$0xff]
      %v649 = vld [vmem:[#allocation2 + $0x80] sm:$0xff]
      %v650 = vld [vmem:[#allocation2 + $0x88] sm:$0xff]
      %v651 = vld [vmem:[#allocation2 + $0x90] sm:$0xff]
      %v652 = vld [vmem:[#allocation2 + $0x98] sm:$0xff]
      %v653 = vld [vmem:[#allocation2 + $0xa0] sm:$0xff]
      %v654 = vld [vmem:[#allocation2 + $0xa8] sm:$0xff]
      %v655 = vld [vmem:[#allocation2 + $0xb0] sm:$0xff]
      %v656 = vld [vmem:[#allocation2 + $0xb8] sm:$0xff]
      %v657 = vld [vmem:[#allocation2 + $0xc0] sm:$0xff]
      %v658 = vld [vmem:[#allocation2 + $0xc8] sm:$0xff]
      %v659 = vld [vmem:[#allocation2 + $0xd0] sm:$0xff]
      %v660 = vld [vmem:[#allocation2 + $0xd8] sm:$0xff]
      %v661 = vld [vmem:[#allocation2 + $0xe0] sm:$0xff]
      %v662 = vld [vmem:[#allocation2 + $0xe8] sm:$0xff]
      %v663 = vld [vmem:[#allocation2 + $0xf0] sm:$0xff]
      %v664 = vld [vmem:[#allocation2 + $0xf8] sm:$0xff]
      %v665 = vld [vmem:[#allocation2 + $0x100] sm:$0xff]
      %v666 = vld [vmem:[#allocation2 + $0x108] sm:$0xff]
      %v667 = vld [vmem:[#allocation2 + $0x110] sm:$0xff]
      %v668 = vld [vmem:[#allocation2 + $0x118] sm:$0xff]
      %v669 = vld [vmem:[#allocation2 + $0x120] sm:$0xff]
      %v670 = vld [vmem:[#allocation2 + $0x128] sm:$0xff]
      %v671 = vld [vmem:[#allocation2 + $0x130] sm:$0xff]
      %v672 = vld [vmem:[#allocation2 + $0x138] sm:$0xff]
      %v673 = vld [vmem:[#allocation2 + $0x140] sm:$0xff]
      %v674 = vld [vmem:[#allocation2 + $0x148] sm:$0xff]
      %v675 = vld [vmem:[#allocation2 + $0x150] sm:$0xff]
      %v676 = vld [vmem:[#allocation2 + $0x158] sm:$0xff]
      %v677 = vld [vmem:[#allocation2 + $0x160] sm:$0xff]
      %v678 = vld [vmem:[#allocation2 + $0x168] sm:$0xff]
      %v679 = vld [vmem:[#allocation2 + $0x170] sm:$0xff]
      %v680 = vld [vmem:[#allocation2 + $0x178] sm:$0xff]
      %v681 = vld [vmem:[#allocation2 + $0x180] sm:$0xff]
      %v682 = vld [vmem:[#allocation2 + $0x188] sm:$0xff]
      %v683 = vld [vmem:[#allocation2 + $0x190] sm:$0xff]
      %v684 = vld [vmem:[#allocation2 + $0x198] sm:$0xff]
      %v685 = vld [vmem:[#allocation2 + $0x1a0] sm:$0xff]
      %v686 = vld [vmem:[#allocation2 + $0x1a8] sm:$0xff]
      %v687 = vld [vmem:[#allocation2 + $0x1b0] sm:$0xff]
      %v688 = vld [vmem:[#allocation2 + $0x1b8] sm:$0xff]
      %v689 = vld [vmem:[#allocation2 + $0x1c0] sm:$0xff]
      %v690 = vld [vmem:[#allocation2 + $0x1c8] sm:$0xff]
      %v691 = vld [vmem:[#allocation2 + $0x1d0] sm:$0xff]
      %v692 = vld [vmem:[#allocation2 + $0x1d8] sm:$0xff]
      %v693 = vld [vmem:[#allocation2 + $0x1e0] sm:$0xff]
      %v694 = vld [vmem:[#allocation2 + $0x1e8] sm:$0xff]
      %v695 = vld [vmem:[#allocation2 + $0x1f0] sm:$0xff]
      %v696 = vld [vmem:[#allocation2 + $0x1f8] sm:$0xff]
      %v697 = vpack.c.bf16 %v570, %v569
      %v698 = vpack.c.bf16 %v572, %v571
      %v699 = vpack.c.bf16 %v574, %v573
      %v700 = vpack.c.bf16 %v576, %v575
      %v701 = vpack.c.bf16 %v578, %v577
      %v702 = vpack.c.bf16 %v580, %v579
      %v703 = vpack.c.bf16 %v582, %v581
      %v704 = vpack.c.bf16 %v584, %v583
      %v705 = vpack.c.bf16 %v586, %v585
      %v706 = vpack.c.bf16 %v588, %v587
      %v707 = vpack.c.bf16 %v590, %v589
      %v708 = vpack.c.bf16 %v592, %v591
      %v709 = vpack.c.bf16 %v594, %v593
      %v710 = vpack.c.bf16 %v596, %v595
      %v711 = vpack.c.bf16 %v598, %v597
      %v712 = vpack.c.bf16 %v600, %v599
      %v713 = vpack.c.bf16 %v602, %v601
      %v714 = vpack.c.bf16 %v604, %v603
      %v715 = vpack.c.bf16 %v606, %v605
      %v716 = vpack.c.bf16 %v608, %v607
      %v717 = vpack.c.bf16 %v610, %v609
      %v718 = vpack.c.bf16 %v612, %v611
      %v719 = vpack.c.bf16 %v614, %v613
      %v720 = vpack.c.bf16 %v616, %v615
      %v721 = vpack.c.bf16 %v618, %v617
      %v722 = vpack.c.bf16 %v620, %v619
      %v723 = vpack.c.bf16 %v622, %v621
      %v724 = vpack.c.bf16 %v624, %v623
      %v725 = vpack.c.bf16 %v626, %v625
      %v726 = vpack.c.bf16 %v628, %v627
      %v727 = vpack.c.bf16 %v630, %v629
      %v728 = vpack.c.bf16 %v632, %v631
      %v729 = vld [vmem:[%s283] sm:$0xf]
      %v730 = vld [vmem:[%s283 + $0x4] sm:$0xf]
      %v731 = vld [vmem:[%s283 + $0x8] sm:$0xf]
      %v732 = vld [vmem:[%s283 + $0xc] sm:$0xf]
      %v737 = vunpack.c.l.b16 %v729
      %v738 = vunpack.c.l.b16 %v730
      %v739 = vunpack.c.l.b16 %v731
      %v740 = vunpack.c.l.b16 %v732
      %v741 = vpack.c.b16 %v738, %v737
      %v742 = vpack.c.b16 %v740, %v739
      %vm745 = vcmask 261120
      %v747 = vsel %vm745, %v697, 0
      %v750 = vsel %vm745, %v698, 0
      %v753 = vsel %vm745, %v699, 0
      %v756 = vsel %vm745, %v700, 0
      %v759 = vsel %vm745, %v701, 0
      %v762 = vsel %vm745, %v702, 0
      %v765 = vsel %vm745, %v703, 0
      %v768 = vsel %vm745, %v704, 0
      %v771 = vsel %vm745, %v705, 0
      %v774 = vsel %vm745, %v706, 0
      %v777 = vsel %vm745, %v707, 0
      %v780 = vsel %vm745, %v708, 0
      %v783 = vsel %vm745, %v709, 0
      %v786 = vsel %vm745, %v710, 0
      %v789 = vsel %vm745, %v711, 0
      %v792 = vsel %vm745, %v712, 0
      %v795 = vsel %vm745, %v713, 0
      %v798 = vsel %vm745, %v714, 0
      %v801 = vsel %vm745, %v715, 0
      %v804 = vsel %vm745, %v716, 0
      %v807 = vsel %vm745, %v717, 0
      %v810 = vsel %vm745, %v718, 0
      %v813 = vsel %vm745, %v719, 0
      %v816 = vsel %vm745, %v720, 0
      %v819 = vsel %vm745, %v721, 0
      %v822 = vsel %vm745, %v722, 0
      %v825 = vsel %vm745, %v723, 0
      %v828 = vsel %vm745, %v724, 0
      %v831 = vsel %vm745, %v725, 0
      %v834 = vsel %vm745, %v726, 0
      %v837 = vsel %vm745, %v727, 0
      %v840 = vsel %vm745, %v728, 0
      %842 = vmatpush.bf16.msra.mxu0 0
      %843 = vmatpush.bf16.msra.mxu0 0
      %844 = vmatpush.bf16.msra.mxu0 0
      %845 = vmatpush.bf16.msra.mxu0 0
      %846 = vmatpush.bf16.msra.mxu0 0
      %847 = vmatpush.bf16.msra.mxu0 0
      %848 = vmatpush.bf16.msra.mxu0 %v742
      %849 = vmatpush.bf16.msra.mxu0 %v741
      %850 = vmatmul.bf16.gmra.mxu0 %v747
      %v851 = vpop.f32.mrf.mxu0
      %v852 = vadd.f32 0.0, %v851
      %v853 = vpop.f32.mrf.mxu0
      %v854 = vadd.f32 0.0, %v853
      %855 = vmatmul.bf16.gmra.mxu0 %v750
      %v856 = vpop.f32.mrf.mxu0
      %v857 = vadd.f32 0.0, %v856
      %v858 = vpop.f32.mrf.mxu0
      %v859 = vadd.f32 0.0, %v858
      %860 = vmatmul.bf16.gmra.mxu0 %v753
      %v861 = vpop.f32.mrf.mxu0
      %v862 = vadd.f32 0.0, %v861
      %v863 = vpop.f32.mrf.mxu0
      %v864 = vadd.f32 0.0, %v863
      %865 = vmatmul.bf16.gmra.mxu0 %v756
      %v866 = vpop.f32.mrf.mxu0
      %v867 = vadd.f32 0.0, %v866
      %v868 = vpop.f32.mrf.mxu0
      %v869 = vadd.f32 0.0, %v868
      %870 = vmatmul.bf16.gmra.mxu0 %v759
      %v871 = vpop.f32.mrf.mxu0
      %v872 = vadd.f32 0.0, %v871
      %v873 = vpop.f32.mrf.mxu0
      %v874 = vadd.f32 0.0, %v873
      %875 = vmatmul.bf16.gmra.mxu0 %v762
      %v876 = vpop.f32.mrf.mxu0
      %v877 = vadd.f32 0.0, %v876
      %v878 = vpop.f32.mrf.mxu0
      %v879 = vadd.f32 0.0, %v878
      %880 = vmatmul.bf16.gmra.mxu0 %v765
      %v881 = vpop.f32.mrf.mxu0
      %v882 = vadd.f32 0.0, %v881
      %v883 = vpop.f32.mrf.mxu0
      %v884 = vadd.f32 0.0, %v883
      %885 = vmatmul.bf16.gmra.mxu0 %v768
      %v886 = vpop.f32.mrf.mxu0
      %v887 = vadd.f32 0.0, %v886
      %v888 = vpop.f32.mrf.mxu0
      %v889 = vadd.f32 0.0, %v888
      %890 = vmatmul.bf16.gmra.mxu0 %v771
      %v891 = vpop.f32.mrf.mxu0
      %v892 = vadd.f32 0.0, %v891
      %v893 = vpop.f32.mrf.mxu0
      %v894 = vadd.f32 0.0, %v893
      %895 = vmatmul.bf16.gmra.mxu0 %v774
      %v896 = vpop.f32.mrf.mxu0
      %v897 = vadd.f32 0.0, %v896
      %v898 = vpop.f32.mrf.mxu0
      %v899 = vadd.f32 0.0, %v898
      %900 = vmatmul.bf16.gmra.mxu0 %v777
      %v901 = vpop.f32.mrf.mxu0
      %v902 = vadd.f32 0.0, %v901
      %v903 = vpop.f32.mrf.mxu0
      %v904 = vadd.f32 0.0, %v903
      %905 = vmatmul.bf16.gmra.mxu0 %v780
      %v906 = vpop.f32.mrf.mxu0
      %v907 = vadd.f32 0.0, %v906
      %v908 = vpop.f32.mrf.mxu0
      %v909 = vadd.f32 0.0, %v908
      %910 = vmatmul.bf16.gmra.mxu0 %v783
      %v911 = vpop.f32.mrf.mxu0
      %v912 = vadd.f32 0.0, %v911
      %v913 = vpop.f32.mrf.mxu0
      %v914 = vadd.f32 0.0, %v913
      %915 = vmatmul.bf16.gmra.mxu0 %v786
      %v916 = vpop.f32.mrf.mxu0
      %v917 = vadd.f32 0.0, %v916
      %v918 = vpop.f32.mrf.mxu0
      %v919 = vadd.f32 0.0, %v918
      %920 = vmatmul.bf16.gmra.mxu0 %v789
      %v921 = vpop.f32.mrf.mxu0
      %v922 = vadd.f32 0.0, %v921
      %v923 = vpop.f32.mrf.mxu0
      %v924 = vadd.f32 0.0, %v923
      %925 = vmatmul.bf16.gmra.mxu0 %v792
      %v926 = vpop.f32.mrf.mxu0
      %v927 = vadd.f32 0.0, %v926
      %v928 = vpop.f32.mrf.mxu0
      %v929 = vadd.f32 0.0, %v928
      %930 = vmatmul.bf16.gmra.mxu0 %v795
      %v931 = vpop.f32.mrf.mxu0
      %v932 = vadd.f32 0.0, %v931
      %v933 = vpop.f32.mrf.mxu0
      %v934 = vadd.f32 0.0, %v933
      %935 = vmatmul.bf16.gmra.mxu0 %v798
      %v936 = vpop.f32.mrf.mxu0
      %v937 = vadd.f32 0.0, %v936
      %v938 = vpop.f32.mrf.mxu0
      %v939 = vadd.f32 0.0, %v938
      %940 = vmatmul.bf16.gmra.mxu0 %v801
      %v941 = vpop.f32.mrf.mxu0
      %v942 = vadd.f32 0.0, %v941
      %v943 = vpop.f32.mrf.mxu0
      %v944 = vadd.f32 0.0, %v943
      %945 = vmatmul.bf16.gmra.mxu0 %v804
      %v946 = vpop.f32.mrf.mxu0
      %v947 = vadd.f32 0.0, %v946
      %v948 = vpop.f32.mrf.mxu0
      %v949 = vadd.f32 0.0, %v948
      %950 = vmatmul.bf16.gmra.mxu0 %v807
      %v951 = vpop.f32.mrf.mxu0
      %v952 = vadd.f32 0.0, %v951
      %v953 = vpop.f32.mrf.mxu0
      %v954 = vadd.f32 0.0, %v953
      %955 = vmatmul.bf16.gmra.mxu0 %v810
      %v956 = vpop.f32.mrf.mxu0
      %v957 = vadd.f32 0.0, %v956
      %v958 = vpop.f32.mrf.mxu0
      %v959 = vadd.f32 0.0, %v958
      %960 = vmatmul.bf16.gmra.mxu0 %v813
      %v961 = vpop.f32.mrf.mxu0
      %v962 = vadd.f32 0.0, %v961
      %v963 = vpop.f32.mrf.mxu0
      %v964 = vadd.f32 0.0, %v963
      %965 = vmatmul.bf16.gmra.mxu0 %v816
      %v966 = vpop.f32.mrf.mxu0
      %v967 = vadd.f32 0.0, %v966
      %v968 = vpop.f32.mrf.mxu0
      %v969 = vadd.f32 0.0, %v968
      %970 = vmatmul.bf16.gmra.mxu0 %v819
      %v971 = vpop.f32.mrf.mxu0
      %v972 = vadd.f32 0.0, %v971
      %v973 = vpop.f32.mrf.mxu0
      %v974 = vadd.f32 0.0, %v973
      %975 = vmatmul.bf16.gmra.mxu0 %v822
      %v976 = vpop.f32.mrf.mxu0
      %v977 = vadd.f32 0.0, %v976
      %v978 = vpop.f32.mrf.mxu0
      %v979 = vadd.f32 0.0, %v978
      %980 = vmatmul.bf16.gmra.mxu0 %v825
      %v981 = vpop.f32.mrf.mxu0
      %v982 = vadd.f32 0.0, %v981
      %v983 = vpop.f32.mrf.mxu0
      %v984 = vadd.f32 0.0, %v983
      %985 = vmatmul.bf16.gmra.mxu0 %v828
      %v986 = vpop.f32.mrf.mxu0
      %v987 = vadd.f32 0.0, %v986
      %v988 = vpop.f32.mrf.mxu0
      %v989 = vadd.f32 0.0, %v988
      %990 = vmatmul.bf16.gmra.mxu0 %v831
      %v991 = vpop.f32.mrf.mxu0
      %v992 = vadd.f32 0.0, %v991
      %v993 = vpop.f32.mrf.mxu0
      %v994 = vadd.f32 0.0, %v993
      %995 = vmatmul.bf16.gmra.mxu0 %v834
      %v996 = vpop.f32.mrf.mxu0
      %v997 = vadd.f32 0.0, %v996
      %v998 = vpop.f32.mrf.mxu0
      %v999 = vadd.f32 0.0, %v998
      %1000 = vmatmul.bf16.gmra.mxu0 %v837
      %v1001 = vpop.f32.mrf.mxu0
      %v1002 = vadd.f32 0.0, %v1001
      %v1003 = vpop.f32.mrf.mxu0
      %v1004 = vadd.f32 0.0, %v1003
      %1005 = vmatmul.bf16.gmra.mxu0 %v840
      %v1006 = vpop.f32.mrf.mxu0
      %v1007 = vadd.f32 0.0, %v1006
      %v1008 = vpop.f32.mrf.mxu0
      %v1009 = vadd.f32 0.0, %v1008
      %1010 = vdwg.mxu0
      %v1011 = vadd.f32 %v633, %v852
      %v1012 = vadd.f32 %v634, %v854
      %v1013 = vadd.f32 %v635, %v857
      %v1014 = vadd.f32 %v636, %v859
      %v1015 = vadd.f32 %v637, %v862
      %v1016 = vadd.f32 %v638, %v864
      %v1017 = vadd.f32 %v639, %v867
      %v1018 = vadd.f32 %v640, %v869
      %v1019 = vadd.f32 %v641, %v872
      %v1020 = vadd.f32 %v642, %v874
      %v1021 = vadd.f32 %v643, %v877
      %v1022 = vadd.f32 %v644, %v879
      %v1023 = vadd.f32 %v645, %v882
      %v1024 = vadd.f32 %v646, %v884
      %v1025 = vadd.f32 %v647, %v887
      %v1026 = vadd.f32 %v648, %v889
      %v1027 = vadd.f32 %v649, %v892
      %v1028 = vadd.f32 %v650, %v894
      %v1029 = vadd.f32 %v651, %v897
      %v1030 = vadd.f32 %v652, %v899
      %v1031 = vadd.f32 %v653, %v902
      %v1032 = vadd.f32 %v654, %v904
      %v1033 = vadd.f32 %v655, %v907
      %v1034 = vadd.f32 %v656, %v909
      %v1035 = vadd.f32 %v657, %v912
      %v1036 = vadd.f32 %v658, %v914
      %v1037 = vadd.f32 %v659, %v917
      %v1038 = vadd.f32 %v660, %v919
      %v1039 = vadd.f32 %v661, %v922
      %v1040 = vadd.f32 %v662, %v924
      %v1041 = vadd.f32 %v663, %v927
      %v1042 = vadd.f32 %v664, %v929
      %v1043 = vadd.f32 %v665, %v932
      %v1044 = vadd.f32 %v666, %v934
      %v1045 = vadd.f32 %v667, %v937
      %v1046 = vadd.f32 %v668, %v939
      %v1047 = vadd.f32 %v669, %v942
      %v1048 = vadd.f32 %v670, %v944
      %v1049 = vadd.f32 %v671, %v947
      %v1050 = vadd.f32 %v672, %v949
      %v1051 = vadd.f32 %v673, %v952
      %v1052 = vadd.f32 %v674, %v954
      %v1053 = vadd.f32 %v675, %v957
      %v1054 = vadd.f32 %v676, %v959
      %v1055 = vadd.f32 %v677, %v962
      %v1056 = vadd.f32 %v678, %v964
      %v1057 = vadd.f32 %v679, %v967
      %v1058 = vadd.f32 %v680, %v969
      %v1059 = vadd.f32 %v681, %v972
      %v1060 = vadd.f32 %v682, %v974
      %v1061 = vadd.f32 %v683, %v977
      %v1062 = vadd.f32 %v684, %v979
      %v1063 = vadd.f32 %v685, %v982
      %v1064 = vadd.f32 %v686, %v984
      %v1065 = vadd.f32 %v687, %v987
      %v1066 = vadd.f32 %v688, %v989
      %v1067 = vadd.f32 %v689, %v992
      %v1068 = vadd.f32 %v690, %v994
      %v1069 = vadd.f32 %v691, %v997
      %v1070 = vadd.f32 %v692, %v999
      %v1071 = vadd.f32 %v693, %v1002
      %v1072 = vadd.f32 %v694, %v1004
      %v1073 = vadd.f32 %v695, %v1007
      %v1074 = vadd.f32 %v696, %v1009
      %1075 = vst [vmem:[#allocation2] sm:$0xff] %v1011
      %1076 = vst [vmem:[#allocation2 + $0x8] sm:$0xff] %v1012
      %1077 = vst [vmem:[#allocation2 + $0x10] sm:$0xff] %v1013
      %1078 = vst [vmem:[#allocation2 + $0x18] sm:$0xff] %v1014
      %1079 = vst [vmem:[#allocation2 + $0x20] sm:$0xff] %v1015
      %1080 = vst [vmem:[#allocation2 + $0x28] sm:$0xff] %v1016
      %1081 = vst [vmem:[#allocation2 + $0x30] sm:$0xff] %v1017
      %1082 = vst [vmem:[#allocation2 + $0x38] sm:$0xff] %v1018
      %1083 = vst [vmem:[#allocation2 + $0x40] sm:$0xff] %v1019
      %1084 = vst [vmem:[#allocation2 + $0x48] sm:$0xff] %v1020
      %1085 = vst [vmem:[#allocation2 + $0x50] sm:$0xff] %v1021
      %1086 = vst [vmem:[#allocation2 + $0x58] sm:$0xff] %v1022
      %1087 = vst [vmem:[#allocation2 + $0x60] sm:$0xff] %v1023
      %1088 = vst [vmem:[#allocation2 + $0x68] sm:$0xff] %v1024
      %1089 = vst [vmem:[#allocation2 + $0x70] sm:$0xff] %v1025
      %1090 = vst [vmem:[#allocation2 + $0x78] sm:$0xff] %v1026
      %1091 = vst [vmem:[#allocation2 + $0x80] sm:$0xff] %v1027
      %1092 = vst [vmem:[#allocation2 + $0x88] sm:$0xff] %v1028
      %1093 = vst [vmem:[#allocation2 + $0x90] sm:$0xff] %v1029
      %1094 = vst [vmem:[#allocation2 + $0x98] sm:$0xff] %v1030
      %1095 = vst [vmem:[#allocation2 + $0xa0] sm:$0xff] %v1031
      %1096 = vst [vmem:[#allocation2 + $0xa8] sm:$0xff] %v1032
      %1097 = vst [vmem:[#allocation2 + $0xb0] sm:$0xff] %v1033
      %1098 = vst [vmem:[#allocation2 + $0xb8] sm:$0xff] %v1034
      %1099 = vst [vmem:[#allocation2 + $0xc0] sm:$0xff] %v1035
      %1100 = vst [vmem:[#allocation2 + $0xc8] sm:$0xff] %v1036
      %1101 = vst [vmem:[#allocation2 + $0xd0] sm:$0xff] %v1037
      %1102 = vst [vmem:[#allocation2 + $0xd8] sm:$0xff] %v1038
      %1103 = vst [vmem:[#allocation2 + $0xe0] sm:$0xff] %v1039
      %1104 = vst [vmem:[#allocation2 + $0xe8] sm:$0xff] %v1040
      %1105 = vst [vmem:[#allocation2 + $0xf0] sm:$0xff] %v1041
      %1106 = vst [vmem:[#allocation2 + $0xf8] sm:$0xff] %v1042
      %1107 = vst [vmem:[#allocation2 + $0x100] sm:$0xff] %v1043
      %1108 = vst [vmem:[#allocation2 + $0x108] sm:$0xff] %v1044
      %1109 = vst [vmem:[#allocation2 + $0x110] sm:$0xff] %v1045
      %1110 = vst [vmem:[#allocation2 + $0x118] sm:$0xff] %v1046
      %1111 = vst [vmem:[#allocation2 + $0x120] sm:$0xff] %v1047
      %1112 = vst [vmem:[#allocation2 + $0x128] sm:$0xff] %v1048
      %1113 = vst [vmem:[#allocation2 + $0x130] sm:$0xff] %v1049
      %1114 = vst [vmem:[#allocation2 + $0x138] sm:$0xff] %v1050
      %1115 = vst [vmem:[#allocation2 + $0x140] sm:$0xff] %v1051
      %1116 = vst [vmem:[#allocation2 + $0x148] sm:$0xff] %v1052
      %1117 = vst [vmem:[#allocation2 + $0x150] sm:$0xff] %v1053
      %1118 = vst [vmem:[#allocation2 + $0x158] sm:$0xff] %v1054
      %1119 = vst [vmem:[#allocation2 + $0x160] sm:$0xff] %v1055
      %1120 = vst [vmem:[#allocation2 + $0x168] sm:$0xff] %v1056
      %1121 = vst [vmem:[#allocation2 + $0x170] sm:$0xff] %v1057
      %1122 = vst [vmem:[#allocation2 + $0x178] sm:$0xff] %v1058
      %1123 = vst [vmem:[#allocation2 + $0x180] sm:$0xff] %v1059
      %1124 = vst [vmem:[#allocation2 + $0x188] sm:$0xff] %v1060
      %1125 = vst [vmem:[#allocation2 + $0x190] sm:$0xff] %v1061
      %1126 = vst [vmem:[#allocation2 + $0x198] sm:$0xff] %v1062
      %1127 = vst [vmem:[#allocation2 + $0x1a0] sm:$0xff] %v1063
      %1128 = vst [vmem:[#allocation2 + $0x1a8] sm:$0xff] %v1064
      %1129 = vst [vmem:[#allocation2 + $0x1b0] sm:$0xff] %v1065
      %1130 = vst [vmem:[#allocation2 + $0x1b8] sm:$0xff] %v1066
      %1131 = vst [vmem:[#allocation2 + $0x1c0] sm:$0xff] %v1067
      %1132 = vst [vmem:[#allocation2 + $0x1c8] sm:$0xff] %v1068
      %1133 = vst [vmem:[#allocation2 + $0x1d0] sm:$0xff] %v1069
      %1134 = vst [vmem:[#allocation2 + $0x1d8] sm:$0xff] %v1070
      %1135 = vst [vmem:[#allocation2 + $0x1e0] sm:$0xff] %v1071
      %1136 = vst [vmem:[#allocation2 + $0x1e8] sm:$0xff] %v1072
      %1137 = vst [vmem:[#allocation2 + $0x1f0] sm:$0xff] %v1073
      %1138 = vst [vmem:[#allocation2 + $0x1f8] sm:$0xff] %v1074
      // Predicated region
      $region41: #{generator2_forward.20} parent=35 // pred_check
        %p1139 = pneg %p301
      $region42: #{generator2_forward.20} parent=35 // pred_check_branch
        %1141 = sbr.rel (%p1139) target = $region44
      $region43: #{generator2_forward.20} parent=35 // pred_region
        %v1142 = vld [vmem:[#allocation2] sm:$0xff]
        %v1143 = vld [vmem:[#allocation2 + $0x8] sm:$0xff]
        %v1144 = vld [vmem:[#allocation2 + $0x10] sm:$0xff]
        %v1145 = vld [vmem:[#allocation2 + $0x18] sm:$0xff]
        %v1146 = vld [vmem:[#allocation2 + $0x20] sm:$0xff]
        %v1147 = vld [vmem:[#allocation2 + $0x28] sm:$0xff]
        %v1148 = vld [vmem:[#allocation2 + $0x30] sm:$0xff]
        %v1149 = vld [vmem:[#allocation2 + $0x38] sm:$0xff]
        %v1150 = vld [vmem:[#allocation2 + $0x40] sm:$0xff]
        %v1151 = vld [vmem:[#allocation2 + $0x48] sm:$0xff]
        %v1152 = vld [vmem:[#allocation2 + $0x50] sm:$0xff]
        %v1153 = vld [vmem:[#allocation2 + $0x58] sm:$0xff]
        %v1154 = vld [vmem:[#allocation2 + $0x60] sm:$0xff]
        %v1155 = vld [vmem:[#allocation2 + $0x68] sm:$0xff]
        %v1156 = vld [vmem:[#allocation2 + $0x70] sm:$0xff]
        %v1157 = vld [vmem:[#allocation2 + $0x78] sm:$0xff]
        %v1158 = vld [vmem:[#allocation2 + $0x80] sm:$0xff]
        %v1159 = vld [vmem:[#allocation2 + $0x88] sm:$0xff]
        %v1160 = vld [vmem:[#allocation2 + $0x90] sm:$0xff]
        %v1161 = vld [vmem:[#allocation2 + $0x98] sm:$0xff]
        %v1162 = vld [vmem:[#allocation2 + $0xa0] sm:$0xff]
        %v1163 = vld [vmem:[#allocation2 + $0xa8] sm:$0xff]
        %v1164 = vld [vmem:[#allocation2 + $0xb0] sm:$0xff]
        %v1165 = vld [vmem:[#allocation2 + $0xb8] sm:$0xff]
        %v1166 = vld [vmem:[#allocation2 + $0xc0] sm:$0xff]
        %v1167 = vld [vmem:[#allocation2 + $0xc8] sm:$0xff]
        %v1168 = vld [vmem:[#allocation2 + $0xd0] sm:$0xff]
        %v1169 = vld [vmem:[#allocation2 + $0xd8] sm:$0xff]
        %v1170 = vld [vmem:[#allocation2 + $0xe0] sm:$0xff]
        %v1171 = vld [vmem:[#allocation2 + $0xe8] sm:$0xff]
        %v1172 = vld [vmem:[#allocation2 + $0xf0] sm:$0xff]
        %v1173 = vld [vmem:[#allocation2 + $0xf8] sm:$0xff]
        %v1174 = vld [vmem:[#allocation2 + $0x100] sm:$0xff]
        %v1175 = vld [vmem:[#allocation2 + $0x108] sm:$0xff]
        %v1176 = vld [vmem:[#allocation2 + $0x110] sm:$0xff]
        %v1177 = vld [vmem:[#allocation2 + $0x118] sm:$0xff]
        %v1178 = vld [vmem:[#allocation2 + $0x120] sm:$0xff]
        %v1179 = vld [vmem:[#allocation2 + $0x128] sm:$0xff]
        %v1180 = vld [vmem:[#allocation2 + $0x130] sm:$0xff]
        %v1181 = vld [vmem:[#allocation2 + $0x138] sm:$0xff]
        %v1182 = vld [vmem:[#allocation2 + $0x140] sm:$0xff]
        %v1183 = vld [vmem:[#allocation2 + $0x148] sm:$0xff]
        %v1184 = vld [vmem:[#allocation2 + $0x150] sm:$0xff]
        %v1185 = vld [vmem:[#allocation2 + $0x158] sm:$0xff]
        %v1186 = vld [vmem:[#allocation2 + $0x160] sm:$0xff]
        %v1187 = vld [vmem:[#allocation2 + $0x168] sm:$0xff]
        %v1188 = vld [vmem:[#allocation2 + $0x170] sm:$0xff]
        %v1189 = vld [vmem:[#allocation2 + $0x178] sm:$0xff]
        %v1190 = vld [vmem:[#allocation2 + $0x180] sm:$0xff]
        %v1191 = vld [vmem:[#allocation2 + $0x188] sm:$0xff]
        %v1192 = vld [vmem:[#allocation2 + $0x190] sm:$0xff]
        %v1193 = vld [vmem:[#allocation2 + $0x198] sm:$0xff]
        %v1194 = vld [vmem:[#allocation2 + $0x1a0] sm:$0xff]
        %v1195 = vld [vmem:[#allocation2 + $0x1a8] sm:$0xff]
        %v1196 = vld [vmem:[#allocation2 + $0x1b0] sm:$0xff]
        %v1197 = vld [vmem:[#allocation2 + $0x1b8] sm:$0xff]
        %v1198 = vld [vmem:[#allocation2 + $0x1c0] sm:$0xff]
        %v1199 = vld [vmem:[#allocation2 + $0x1c8] sm:$0xff]
        %v1200 = vld [vmem:[#allocation2 + $0x1d0] sm:$0xff]
        %v1201 = vld [vmem:[#allocation2 + $0x1d8] sm:$0xff]
        %v1202 = vld [vmem:[#allocation2 + $0x1e0] sm:$0xff]
        %v1203 = vld [vmem:[#allocation2 + $0x1e8] sm:$0xff]
        %v1204 = vld [vmem:[#allocation2 + $0x1f0] sm:$0xff]
        %v1205 = vld [vmem:[#allocation2 + $0x1f8] sm:$0xff]
        %1206 = vst [vmem:[%s298] sm:$0xff] %v1142
        %1207 = vst [vmem:[%s298 + $0x8] sm:$0xff] %v1143
        %1208 = vst [vmem:[%s298 + $0x10] sm:$0xff] %v1144
        %1209 = vst [vmem:[%s298 + $0x18] sm:$0xff] %v1145
        %1210 = vst [vmem:[%s298 + $0x20] sm:$0xff] %v1146
        %1211 = vst [vmem:[%s298 + $0x28] sm:$0xff] %v1147
        %1212 = vst [vmem:[%s298 + $0x30] sm:$0xff] %v1148
        %1213 = vst [vmem:[%s298 + $0x38] sm:$0xff] %v1149
        %1214 = vst [vmem:[%s298 + $0x40] sm:$0xff] %v1150
        %1215 = vst [vmem:[%s298 + $0x48] sm:$0xff] %v1151
        %1216 = vst [vmem:[%s298 + $0x50] sm:$0xff] %v1152
        %1217 = vst [vmem:[%s298 + $0x58] sm:$0xff] %v1153
        %1218 = vst [vmem:[%s298 + $0x60] sm:$0xff] %v1154
        %1219 = vst [vmem:[%s298 + $0x68] sm:$0xff] %v1155
        %1220 = vst [vmem:[%s298 + $0x70] sm:$0xff] %v1156
        %1221 = vst [vmem:[%s298 + $0x78] sm:$0xff] %v1157
        %1222 = vst [vmem:[%s298 + $0x80] sm:$0xff] %v1158
        %1223 = vst [vmem:[%s298 + $0x88] sm:$0xff] %v1159
        %1224 = vst [vmem:[%s298 + $0x90] sm:$0xff] %v1160
        %1225 = vst [vmem:[%s298 + $0x98] sm:$0xff] %v1161
        %1226 = vst [vmem:[%s298 + $0xa0] sm:$0xff] %v1162
        %1227 = vst [vmem:[%s298 + $0xa8] sm:$0xff] %v1163
        %1228 = vst [vmem:[%s298 + $0xb0] sm:$0xff] %v1164
        %1229 = vst [vmem:[%s298 + $0xb8] sm:$0xff] %v1165
        %1230 = vst [vmem:[%s298 + $0xc0] sm:$0xff] %v1166
        %1231 = vst [vmem:[%s298 + $0xc8] sm:$0xff] %v1167
        %1232 = vst [vmem:[%s298 + $0xd0] sm:$0xff] %v1168
        %1233 = vst [vmem:[%s298 + $0xd8] sm:$0xff] %v1169
        %1234 = vst [vmem:[%s298 + $0xe0] sm:$0xff] %v1170
        %1235 = vst [vmem:[%s298 + $0xe8] sm:$0xff] %v1171
        %1236 = vst [vmem:[%s298 + $0xf0] sm:$0xff] %v1172
        %1237 = vst [vmem:[%s298 + $0xf8] sm:$0xff] %v1173
        %1238 = vst [vmem:[%s298 + $0x100] sm:$0xff] %v1174
        %1239 = vst [vmem:[%s298 + $0x108] sm:$0xff] %v1175
        %1240 = vst [vmem:[%s298 + $0x110] sm:$0xff] %v1176
        %1241 = vst [vmem:[%s298 + $0x118] sm:$0xff] %v1177
        %1242 = vst [vmem:[%s298 + $0x120] sm:$0xff] %v1178
        %1243 = vst [vmem:[%s298 + $0x128] sm:$0xff] %v1179
        %1244 = vst [vmem:[%s298 + $0x130] sm:$0xff] %v1180
        %1245 = vst [vmem:[%s298 + $0x138] sm:$0xff] %v1181
        %1246 = vst [vmem:[%s298 + $0x140] sm:$0xff] %v1182
        %1247 = vst [vmem:[%s298 + $0x148] sm:$0xff] %v1183
        %1248 = vst [vmem:[%s298 + $0x150] sm:$0xff] %v1184
        %1249 = vst [vmem:[%s298 + $0x158] sm:$0xff] %v1185
        %1250 = vst [vmem:[%s298 + $0x160] sm:$0xff] %v1186
        %1251 = vst [vmem:[%s298 + $0x168] sm:$0xff] %v1187
        %1252 = vst [vmem:[%s298 + $0x170] sm:$0xff] %v1188
        %1253 = vst [vmem:[%s298 + $0x178] sm:$0xff] %v1189
        %1254 = vst [vmem:[%s298 + $0x180] sm:$0xff] %v1190
        %1255 = vst [vmem:[%s298 + $0x188] sm:$0xff] %v1191
        %1256 = vst [vmem:[%s298 + $0x190] sm:$0xff] %v1192
        %1257 = vst [vmem:[%s298 + $0x198] sm:$0xff] %v1193
        %1258 = vst [vmem:[%s298 + $0x1a0] sm:$0xff] %v1194
        %1259 = vst [vmem:[%s298 + $0x1a8] sm:$0xff] %v1195
        %1260 = vst [vmem:[%s298 + $0x1b0] sm:$0xff] %v1196
        %1261 = vst [vmem:[%s298 + $0x1b8] sm:$0xff] %v1197
        %1262 = vst [vmem:[%s298 + $0x1c0] sm:$0xff] %v1198
        %1263 = vst [vmem:[%s298 + $0x1c8] sm:$0xff] %v1199
        %1264 = vst [vmem:[%s298 + $0x1d0] sm:$0xff] %v1200
        %1265 = vst [vmem:[%s298 + $0x1d8] sm:$0xff] %v1201
        %1266 = vst [vmem:[%s298 + $0x1e0] sm:$0xff] %v1202
        %1267 = vst [vmem:[%s298 + $0x1e8] sm:$0xff] %v1203
        %1268 = vst [vmem:[%s298 + $0x1f0] sm:$0xff] %v1204
        %1269 = vst [vmem:[%s298 + $0x1f8] sm:$0xff] %v1205
      $region44: #{generator2_forward.20} parent=35 // pred_fallthru
        _
      %s1270 = smul.u32 64, %s20
      %p1271 = scmp.lt.s32.totalorder %s1270, 255
      %s1272 = scalar_select %p1271, %s1270, 255
      %p1273 = scmp.lt.s32.totalorder %s21, 0
      %s1274 = scalar_select %p1273, %s21, 0
      %s1275 = sadd.s32 %s1274, %s1272
      %s1276 = smul.addr %s1275, 8
      %s1277 = scalar_lea.vmem %s4, %s1276
      // Predicated region
      $region45: #{generator2_forward.20} parent=35 // pred_check
        %p1278 = pneg %p162
      $region46: #{generator2_forward.20} parent=35 // pred_check_branch
        %1280 = sbr.rel (%p1278) target = $region48
      $region47: #{generator2_forward.20} parent=35 // pred_region
        %s1281 = smul.u32 64, %s20
      $region48: #{generator2_forward.20} parent=35 // pred_fallthru
        _
    $region36: #{generator2_forward.20} parent=5 // pred_fallthru
      _
    %p1282 = scmp.le.s32.totalorder 2, %s10
    // Predicated region
    $region49: #{generator2_forward.20} parent=5 // pred_check
      %p1283 = pneg %p1282
    $region50: #{generator2_forward.20} parent=5 // pred_check_branch
      %1285 = sbr.rel (%p1283) target = $region52
    $region51: #{generator2_forward.20} parent=5 // pred_region
      %s1286 = ssub.s32 %s10, 2
      // Predicated region
      $region53: #{generator2_forward.20} parent=51 // pred_check
        %p1287 = pneg %p168
      $region54: #{generator2_forward.20} parent=51 // pred_check_branch
        %1289 = sbr.rel (%p1287) target = $region56
      $region55: #{generator2_forward.20} parent=51 // pred_region
        %s1290 = smul.u32 64, %s23
        %p1291 = scmp.lt.s32.totalorder %s1290, 255
        %s1292 = scalar_select %p1291, %s1290, 255
        %p1293 = scmp.lt.s32.totalorder %s24, 0
        %s1294 = scalar_select %p1293, %s24, 0
        %s1295 = sadd.s32 %s1294, %s1292
        %s1296 = smul.addr %s1295, 8
        %s1297 = scalar_lea.vmem %s4, %s1296
      $region56: #{generator2_forward.20} parent=51 // pred_fallthru
        _
    $region52: #{generator2_forward.20} parent=5 // pred_fallthru
      _
  $region6: #{generator2_forward.20} parent=0 // loop_footer
    %s14 = sadd.s32 1, %s10
  $region7: #{generator2_forward.20} parent=0 // loop_footer_branch
    %9 = sbr.rel target = $region3
  $region8: #{generator2_forward.20} parent=0 // loop_exit
    _

// kernel: generator2_forward.21
$region0: #{generator2_forward.21}
  #allocation0 [shape = 'u32[]', space=smem, size = 0x4, offset = 0x4, fixed_abs, tag = 'smem constant byte address 0x4 - core index']
  #allocation1 [shape = 'u32[72,128]{1,0:T(1,128)}', space=vmem, size = 0x9000, scoped, tag = 'internal scratch']
  %s0 = inlined_call_operand.vmem [shape: f32[192,128], index: 0, kind: input, shape index: {}]
  %s1 = inlined_call_operand.vmem [shape: f32[192,128], index: 1, kind: output, shape index: {}]
  %s2 = sld [smem:[#allocation0]]
  $region14: #{generator2_forward.21} parent=0
    _
  %s4 = ssub.s32 1, %s2
  %s5 = scalar_select 0, %s4, %s2
  // Predicated region
  $region2: #{generator2_forward.21} parent=0 // pred_check
    _
  $region3: #{generator2_forward.21} parent=0 // pred_check_branch
    %7 = sbr.rel (0) target = $region5
  $region4: #{generator2_forward.21} parent=0 // pred_region
    _
  $region5: #{generator2_forward.21} parent=0 // pred_fallthru
    _
  %v8 = vld [vmem:[%s0] sm:$0xff]
  %v9 = vld [vmem:[%s0 + $0x8] sm:$0xff]
  %v10 = vld [vmem:[%s0 + $0x10] sm:$0xff]
  %v11 = vld [vmem:[%s0 + $0x18] sm:$0xff]
  %v12 = vld [vmem:[%s0 + $0x20] sm:$0xff]
  %v13 = vld [vmem:[%s0 + $0x28] sm:$0xff]
  %v14 = vld [vmem:[%s0 + $0x30] sm:$0xff]
  %v15 = vld [vmem:[%s0 + $0x38] sm:$0xff]
  %v16 = vld [vmem:[%s0 + $0x40] sm:$0xff]
  %v17 = vld [vmem:[%s0 + $0x48] sm:$0xff]
  %v18 = vld [vmem:[%s0 + $0x50] sm:$0xff]
  %v19 = vld [vmem:[%s0 + $0x58] sm:$0xff]
  %v20 = vld [vmem:[%s0 + $0x60] sm:$0xff]
  %v21 = vld [vmem:[%s0 + $0x68] sm:$0xff]
  %v22 = vld [vmem:[%s0 + $0x70] sm:$0xff]
  %v23 = vld [vmem:[%s0 + $0x78] sm:$0xff]
  %v24 = vld [vmem:[%s0 + $0x80] sm:$0xff]
  %v25 = vld [vmem:[%s0 + $0x88] sm:$0xff]
  %v26 = vld [vmem:[%s0 + $0x90] sm:$0xff]
  %v27 = vld [vmem:[%s0 + $0x98] sm:$0xff]
  %v28 = vld [vmem:[%s0 + $0xa0] sm:$0xff]
  %v29 = vld [vmem:[%s0 + $0xa8] sm:$0xff]
  %v30 = vld [vmem:[%s0 + $0xb0] sm:$0xff]
  %v31 = vld [vmem:[%s0 + $0xb8] sm:$0xff]
  %v32 = vtanh.pop %v8
  %v33 = vtanh.pop %v9
  %v34 = vtanh.pop %v10
  %v35 = vtanh.pop %v11
  %v36 = vtanh.pop %v12
  %v37 = vtanh.pop %v13
  %v38 = vtanh.pop %v14
  %v39 = vtanh.pop %v15
  %v40 = vtanh.pop %v16
  %v41 = vtanh.pop %v17
  %v42 = vtanh.pop %v18
  %v43 = vtanh.pop %v19
  %v44 = vtanh.pop %v20
  %v45 = vtanh.pop %v21
  %v46 = vtanh.pop %v22
  %v47 = vtanh.pop %v23
  %v48 = vtanh.pop %v24
  %v49 = vtanh.pop %v25
  %v50 = vtanh.pop %v26
  %v51 = vtanh.pop %v27
  %v52 = vtanh.pop %v28
  %v53 = vtanh.pop %v29
  %v54 = vtanh.pop %v30
  %v55 = vtanh.pop %v31
  %56 = vst [vmem:[%s1] sm:$0xff] %v32
  %57 = vst [vmem:[%s1 + $0x8] sm:$0xff] %v33
  %58 = vst [vmem:[%s1 + $0x10] sm:$0xff] %v34
  %59 = vst [vmem:[%s1 + $0x18] sm:$0xff] %v35
  %60 = vst [vmem:[%s1 + $0x20] sm:$0xff] %v36
  %61 = vst [vmem:[%s1 + $0x28] sm:$0xff] %v37
  %62 = vst [vmem:[%s1 + $0x30] sm:$0xff] %v38
  %63 = vst [vmem:[%s1 + $0x38] sm:$0xff] %v39
  %64 = vst [vmem:[%s1 + $0x40] sm:$0xff] %v40
  %65 = vst [vmem:[%s1 + $0x48] sm:$0xff] %v41
  %66 = vst [vmem:[%s1 + $0x50] sm:$0xff] %v42
  %67 = vst [vmem:[%s1 + $0x58] sm:$0xff] %v43
  %68 = vst [vmem:[%s1 + $0x60] sm:$0xff] %v44
  %69 = vst [vmem:[%s1 + $0x68] sm:$0xff] %v45
  %70 = vst [vmem:[%s1 + $0x70] sm:$0xff] %v46
  %71 = vst [vmem:[%s1 + $0x78] sm:$0xff] %v47
  %72 = vst [vmem:[%s1 + $0x80] sm:$0xff] %v48
  %73 = vst [vmem:[%s1 + $0x88] sm:$0xff] %v49
  %74 = vst [vmem:[%s1 + $0x90] sm:$0xff] %v50
  %75 = vst [vmem:[%s1 + $0x98] sm:$0xff] %v51
  %76 = vst [vmem:[%s1 + $0xa0] sm:$0xff] %v52
  %77 = vst [vmem:[%s1 + $0xa8] sm:$0xff] %v53
  %78 = vst [vmem:[%s1 + $0xb0] sm:$0xff] %v54
  %79 = vst [vmem:[%s1 + $0xb8] sm:$0xff] %v55
  // Predicated region
  $region6: #{generator2_forward.21} parent=0 // pred_check
    _
  $region7: #{generator2_forward.21} parent=0 // pred_check_branch
    %81 = sbr.rel (0) target = $region9
  $region8: #{generator2_forward.21} parent=0 // pred_region
    _
  $region9: #{generator2_forward.21} parent=0 // pred_fallthru
    _
  // Predicated region
  $region10: #{generator2_forward.21} parent=0 // pred_check
    _
  $region11: #{generator2_forward.21} parent=0 // pred_check_branch
    %83 = sbr.rel (0) target = $region13
  $region12: #{generator2_forward.21} parent=0 // pred_region
    _
  $region13: #{generator2_forward.21} parent=0 // pred_fallthru
    _

</llo_original>
